<compile_context>
chip_gen: v5e
topology: v5e:2x2
jax: 0.10.0
libtpu: 0.0.40
codegen_flags: <defaults>
</compile_context>

<pallas_src>
import numpy as np
import jax
import jax.numpy as jnp
from jax import lax
from jax.experimental import pallas as pl
from jax.experimental.pallas import tpu as pltpu

H = W = 4
P = H * W          # 16 spatial positions (fc1 expects 32*4*4)
CIN = 3
C = 32
D = P * C          # 512 = flattened (position, channel) width
L = 6              # number of conv blocks
NCLS = 5
OUT_PAD = 128      # lane-dense padded output width
BBLK = 128         # batch rows per grid step (128-row MXU tiles)
EPS = 1e-5


def _make_shift_matrices():
    """S[t, p, q] = 1 iff output position p reads input position q for 3x3 tap t."""
    S = np.zeros((9, P, P), np.float32)
    for kh in range(3):
        for kw in range(3):
            t = kh * 3 + kw
            dh, dw = kh - 1, kw - 1
            for h in range(H):
                for w in range(W):
                    hh, ww = h + dh, w + dw
                    if 0 <= hh < H and 0 <= ww < W:
                        S[t, h * W + w, hh * W + ww] = 1.0
    return jnp.asarray(S)


def cnn_kernel(x_ref, m_ref, b_ref, fw_ref, fb_ref, out_ref):
    # x_ref:  (BBLK, D)      activation slab, flat index p*C + c
    # m_ref:  (L, D, D)      folded conv(+prev BN) matrices
    # b_ref:  (L, D)         folded per-layer biases
    # fw_ref: (D, OUT_PAD)   folded fc weights (last BN folded in, zero-padded lanes)
    # fb_ref: (1, OUT_PAD)   folded fc bias (zero-padded lanes)
    x = x_ref[...]
    for l in range(L):
        a = jnp.dot(x, m_ref[l], preferred_element_type=jnp.float32)
        x = jnp.maximum(a + b_ref[l][None, :], 0.0)     # conv bias + ReLU (BN folded away)
    out_ref[...] = (jnp.dot(x, fw_ref[...], preferred_element_type=jnp.float32)
                    + fb_ref[...])


def _pack_params(params):
    """Fold shift matrices, conv weights/bias and eval-mode BN into per-layer matmuls."""
    conv_w, conv_b, bn_gamma, bn_beta, bn_mean, bn_var, fc_w, fc_b = params
    S = _make_shift_matrices()                              # (9, P, P)

    m_list, b_list = [], []
    prev_bs = prev_bt = None
    for l in range(L):
        wl = conv_w[l]                                      # (Cout, Cin_l, 3, 3)
        cin_l = wl.shape[1]
        wl = jnp.pad(wl, ((0, 0), (0, C - cin_l), (0, 0), (0, 0)))
        wl = jnp.transpose(wl, (2, 3, 1, 0)).reshape(9, C, C)     # (tap, ci, co)
        # M[(q,ci),(p,co)] = sum_t S_t[p,q] * W[t,ci,co]
        M = jnp.einsum('tpq,tio->qipo', S, wl).reshape(D, D)
        b = jnp.tile(conv_b[l], P)                          # bias, flat index p*C + co
        if l > 0:
            # fold previous layer's BN (post-ReLU affine) into this layer's conv
            bs_flat = jnp.tile(prev_bs, P)
            bt_flat = jnp.tile(prev_bt, P)
            b = b + bt_flat @ M
            M = bs_flat[:, None] * M
        m_list.append(M)
        b_list.append(b)
        prev_bs = bn_gamma[l] / jnp.sqrt(bn_var[l] + EPS)
        prev_bt = bn_beta[l] - bn_mean[l] * prev_bs

    # fc weight: torch flattens NCHW -> flat index c*P + p; our layout is p*C + c.
    FW = jnp.transpose(fc_w.reshape(NCLS, C, P), (2, 1, 0)).reshape(D, NCLS)
    bs_flat = jnp.tile(prev_bs, P)
    bt_flat = jnp.tile(prev_bt, P)
    fb_eff = fc_b + bt_flat @ FW                            # fold last BN shift
    FW_eff = bs_flat[:, None] * FW                          # fold last BN scale
    # pad output dim 5 -> 128 so the final matmul/store is lane-dense
    FW_pad = jnp.pad(FW_eff, ((0, 0), (0, OUT_PAD - NCLS)))
    fb_pad = jnp.pad(fb_eff, (0, OUT_PAD - NCLS)).reshape(1, OUT_PAD)

    m_all = jnp.stack(m_list).astype(jnp.float32)           # (L, D, D)
    b_all = jnp.stack(b_list).astype(jnp.float32)           # (L, D)
    return m_all, b_all, FW_pad.astype(jnp.float32), fb_pad.astype(jnp.float32)


def cnn_forward_pallas(x_nhwc, params):
    B = x_nhwc.shape[0]
    # pad input channels 3 -> 32 and flatten to (B, P*C) with flat index p*C + c
    x = jnp.pad(x_nhwc, ((0, 0), (0, 0), (0, 0), (0, C - CIN)))
    x = x.reshape(B, D).astype(jnp.float32)

    m_all, b_all, fw_pad, fb_pad = _pack_params(params)

    # pad batch to a multiple of BBLK (padded rows are sliced away below)
    B_pad = ((B + BBLK - 1) // BBLK) * BBLK
    if B_pad != B:
        x = jnp.pad(x, ((0, B_pad - B), (0, 0)))

    out = pl.pallas_call(
        cnn_kernel,
        out_shape=jax.ShapeDtypeStruct((B_pad, OUT_PAD), jnp.float32),
        grid=(B_pad // BBLK,),
        in_specs=[
            pl.BlockSpec((BBLK, D), lambda b: (b, 0)),        # activations: one batch block per step
            pl.BlockSpec((L, D, D), lambda b: (0, 0, 0)),     # folded conv matrices (resident)
            pl.BlockSpec((L, D), lambda b: (0, 0)),           # folded biases
            pl.BlockSpec((D, OUT_PAD), lambda b: (0, 0)),     # folded fc weights
            pl.BlockSpec((1, OUT_PAD), lambda b: (0, 0)),     # folded fc bias
        ],
        out_specs=pl.BlockSpec((BBLK, OUT_PAD), lambda b: (b, 0)),
        compiler_params=pltpu.CompilerParams(
            dimension_semantics=("parallel",),                # batch axis shards across TCs (v7x)
            vmem_limit_bytes=32 * 1024 * 1024,
        ),
    )(x, m_all, b_all, fw_pad, fb_pad)
    return out[:B, :NCLS]


def cnn_forward_reference(x_nhwc, params):
    """Pure-JAX reference matching the PyTorch forward (eval-mode BN)."""
    conv_w, conv_b, bn_gamma, bn_beta, bn_mean, bn_var, fc_w, fc_b = params
    x = jnp.transpose(x_nhwc, (0, 3, 1, 2))  # NHWC -> NCHW
    for l in range(L):
        y = lax.conv_general_dilated(
            x, conv_w[l], window_strides=(1, 1), padding="SAME",
            dimension_numbers=("NCHW", "OIHW", "NCHW"))
        y = y + conv_b[l][None, :, None, None]
        y = jnp.maximum(y, 0.0)
        scale = bn_gamma[l] / jnp.sqrt(bn_var[l] + EPS)
        shift = bn_beta[l] - bn_mean[l] * scale
        x = scale[None, :, None, None] * y + shift[None, :, None, None]
    flat = x.reshape(x.shape[0], -1)
    return flat @ fc_w.T + fc_b


def init_params(key):
    # TODO(synk): BatchNorm2d batch-statistics (training mode) are not reproduced;
    # eval-mode BN with deterministic running stats is used instead.
    keys = jax.random.split(key, 6 * 6 + 2)
    conv_w, conv_b = [], []
    bn_gamma, bn_beta, bn_mean, bn_var = [], [], [], []
    ki = 0
    for l in range(L):
        cin = CIN if l == 0 else C
        conv_w.append(0.1 * jax.random.normal(keys[ki], (C, cin, 3, 3), jnp.float32)); ki += 1
        conv_b.append(0.1 * jax.random.normal(keys[ki], (C,), jnp.float32)); ki += 1
        bn_gamma.append(1.0 + 0.1 * jax.random.normal(keys[ki], (C,), jnp.float32)); ki += 1
        bn_beta.append(0.1 * jax.random.normal(keys[ki], (C,), jnp.float32)); ki += 1
        bn_mean.append(0.1 * jax.random.normal(keys[ki], (C,), jnp.float32)); ki += 1
        bn_var.append(1.0 + 0.25 * jnp.abs(jax.random.normal(keys[ki], (C,), jnp.float32))); ki += 1
    fc_w = 0.05 * jax.random.normal(keys[ki], (NCLS, C * P), jnp.float32); ki += 1
    fc_b = 0.05 * jax.random.normal(keys[ki], (NCLS,), jnp.float32); ki += 1
    return (conv_w, conv_b, bn_gamma, bn_beta, bn_mean, bn_var, fc_w, fc_b)


if __name__ == "__main__":
    key = jax.random.PRNGKey(0)
    k_x, k_p = jax.random.split(key)
    x = jax.random.normal(k_x, (2, H, W, CIN), jnp.float32)   # batch=2, NHWC
    params = init_params(k_p)

    out = cnn_forward_pallas(x, params)
    out = jax.block_until_ready(out)

    ref = jax.block_until_ready(cnn_forward_reference(x, params))
    np.testing.assert_allclose(np.asarray(out), np.asarray(ref), rtol=2e-3, atol=2e-3)

    print("KERNEL_OK")
</pallas_src>

<mosaic_0001>
module attributes {stable_mosaic.version = 11 : i64} {
  func.func @cnn_kernel(%arg0: i32, %arg1: memref<128x512xf32, #tpu.memory_space<vmem>>, %arg2: memref<6x512x512xf32, #tpu.memory_space<vmem>>, %arg3: memref<6x512xf32, #tpu.memory_space<vmem>>, %arg4: memref<512x128xf32, #tpu.memory_space<vmem>>, %arg5: memref<1x128xf32, #tpu.memory_space<vmem>>, %arg6: memref<128x128xf32, #tpu.memory_space<vmem>>) attributes {dimension_semantics = [#tpu.dimension_semantics<parallel>], iteration_bounds = array<i64: 1>, scalar_prefetch = 0 : i64, scratch_operands = 0 : i64, tpu.core_type = #tpu.core_type<tc>, window_params = [{transform_indices = @transform_0, window_bounds = array<i64: 128, 512>}, {pipeline_mode = #tpu.pipeline_mode<synchronous>, transform_indices = @transform_1, window_bounds = array<i64: 6, 512, 512>}, {pipeline_mode = #tpu.pipeline_mode<synchronous>, transform_indices = @transform_2, window_bounds = array<i64: 6, 512>}, {pipeline_mode = #tpu.pipeline_mode<synchronous>, transform_indices = @transform_3, window_bounds = array<i64: 512, 128>}, {pipeline_mode = #tpu.pipeline_mode<synchronous>, transform_indices = @transform_4, window_bounds = array<i64: 1, 128>}, {transform_indices = @transform_5, window_bounds = array<i64: 128, 128>}]} {
    %c0 = arith.constant 0 : index
    %c0_0 = arith.constant 0 : index
    %0 = vector.load %arg1[%c0, %c0_0] : memref<128x512xf32, #tpu.memory_space<vmem>>, vector<128x512xf32>
    %c0_1 = arith.constant 0 : index
    %c0_2 = arith.constant 0 : index
    %c0_3 = arith.constant 0 : index
    %1 = vector.load %arg2[%c0_1, %c0_2, %c0_3] : memref<6x512x512xf32, #tpu.memory_space<vmem>>, vector<1x512x512xf32>
    %2 = vector.shape_cast %1 : vector<1x512x512xf32> to vector<512x512xf32>
    %cst = arith.constant dense<0.000000e+00> : vector<128x512xf32>
    %3 = tpu.matmul %0, %2, %cst {dimension_numbers = #tpu.dot_dimension_numbers<[1], [0], [0], [1], [0, 0, 1, 1], [], []>} : vector<128x512xf32>, vector<512x512xf32>, vector<128x512xf32> -> vector<128x512xf32>
    %c0_4 = arith.constant 0 : index
    %c0_5 = arith.constant 0 : index
    %4 = vector.load %arg3[%c0_4, %c0_5] : memref<6x512xf32, #tpu.memory_space<vmem>>, vector<1x512xf32>
    %5 = vector.shape_cast %4 : vector<1x512xf32> to vector<512xf32>
    %6 = vector.shape_cast %5 : vector<512xf32> to vector<1x512xf32>
    %7 = vector.broadcast %6 : vector<1x512xf32> to vector<128x512xf32>
    %8 = arith.addf %3, %7 : vector<128x512xf32>
    %cst_6 = arith.constant 0.000000e+00 : f32
    %9 = vector.broadcast %cst_6 : f32 to vector<128x512xf32>
    %10 = arith.maximumf %8, %9 : vector<128x512xf32>
    %c1 = arith.constant 1 : index
    %c0_7 = arith.constant 0 : index
    %c0_8 = arith.constant 0 : index
    %11 = vector.load %arg2[%c1, %c0_7, %c0_8] : memref<6x512x512xf32, #tpu.memory_space<vmem>>, vector<1x512x512xf32>
    %12 = vector.shape_cast %11 : vector<1x512x512xf32> to vector<512x512xf32>
    %cst_9 = arith.constant dense<0.000000e+00> : vector<128x512xf32>
    %13 = tpu.matmul %10, %12, %cst_9 {dimension_numbers = #tpu.dot_dimension_numbers<[1], [0], [0], [1], [0, 0, 1, 1], [], []>} : vector<128x512xf32>, vector<512x512xf32>, vector<128x512xf32> -> vector<128x512xf32>
    %c1_10 = arith.constant 1 : index
    %c0_11 = arith.constant 0 : index
    %14 = vector.load %arg3[%c1_10, %c0_11] : memref<6x512xf32, #tpu.memory_space<vmem>>, vector<1x512xf32>
    %15 = vector.shape_cast %14 : vector<1x512xf32> to vector<512xf32>
    %16 = vector.shape_cast %15 : vector<512xf32> to vector<1x512xf32>
    %17 = vector.broadcast %16 : vector<1x512xf32> to vector<128x512xf32>
    %18 = arith.addf %13, %17 : vector<128x512xf32>
    %cst_12 = arith.constant 0.000000e+00 : f32
    %19 = vector.broadcast %cst_12 : f32 to vector<128x512xf32>
    %20 = arith.maximumf %18, %19 : vector<128x512xf32>
    %c2 = arith.constant 2 : index
    %c0_13 = arith.constant 0 : index
    %c0_14 = arith.constant 0 : index
    %21 = vector.load %arg2[%c2, %c0_13, %c0_14] : memref<6x512x512xf32, #tpu.memory_space<vmem>>, vector<1x512x512xf32>
    %22 = vector.shape_cast %21 : vector<1x512x512xf32> to vector<512x512xf32>
    %cst_15 = arith.constant dense<0.000000e+00> : vector<128x512xf32>
    %23 = tpu.matmul %20, %22, %cst_15 {dimension_numbers = #tpu.dot_dimension_numbers<[1], [0], [0], [1], [0, 0, 1, 1], [], []>} : vector<128x512xf32>, vector<512x512xf32>, vector<128x512xf32> -> vector<128x512xf32>
    %c2_16 = arith.constant 2 : index
    %c0_17 = arith.constant 0 : index
    %24 = vector.load %arg3[%c2_16, %c0_17] : memref<6x512xf32, #tpu.memory_space<vmem>>, vector<1x512xf32>
    %25 = vector.shape_cast %24 : vector<1x512xf32> to vector<512xf32>
    %26 = vector.shape_cast %25 : vector<512xf32> to vector<1x512xf32>
    %27 = vector.broadcast %26 : vector<1x512xf32> to vector<128x512xf32>
    %28 = arith.addf %23, %27 : vector<128x512xf32>
    %cst_18 = arith.constant 0.000000e+00 : f32
    %29 = vector.broadcast %cst_18 : f32 to vector<128x512xf32>
    %30 = arith.maximumf %28, %29 : vector<128x512xf32>
    %c3 = arith.constant 3 : index
    %c0_19 = arith.constant 0 : index
    %c0_20 = arith.constant 0 : index
    %31 = vector.load %arg2[%c3, %c0_19, %c0_20] : memref<6x512x512xf32, #tpu.memory_space<vmem>>, vector<1x512x512xf32>
    %32 = vector.shape_cast %31 : vector<1x512x512xf32> to vector<512x512xf32>
    %cst_21 = arith.constant dense<0.000000e+00> : vector<128x512xf32>
    %33 = tpu.matmul %30, %32, %cst_21 {dimension_numbers = #tpu.dot_dimension_numbers<[1], [0], [0], [1], [0, 0, 1, 1], [], []>} : vector<128x512xf32>, vector<512x512xf32>, vector<128x512xf32> -> vector<128x512xf32>
    %c3_22 = arith.constant 3 : index
    %c0_23 = arith.constant 0 : index
    %34 = vector.load %arg3[%c3_22, %c0_23] : memref<6x512xf32, #tpu.memory_space<vmem>>, vector<1x512xf32>
    %35 = vector.shape_cast %34 : vector<1x512xf32> to vector<512xf32>
    %36 = vector.shape_cast %35 : vector<512xf32> to vector<1x512xf32>
    %37 = vector.broadcast %36 : vector<1x512xf32> to vector<128x512xf32>
    %38 = arith.addf %33, %37 : vector<128x512xf32>
    %cst_24 = arith.constant 0.000000e+00 : f32
    %39 = vector.broadcast %cst_24 : f32 to vector<128x512xf32>
    %40 = arith.maximumf %38, %39 : vector<128x512xf32>
    %c4 = arith.constant 4 : index
    %c0_25 = arith.constant 0 : index
    %c0_26 = arith.constant 0 : index
    %41 = vector.load %arg2[%c4, %c0_25, %c0_26] : memref<6x512x512xf32, #tpu.memory_space<vmem>>, vector<1x512x512xf32>
    %42 = vector.shape_cast %41 : vector<1x512x512xf32> to vector<512x512xf32>
    %cst_27 = arith.constant dense<0.000000e+00> : vector<128x512xf32>
    %43 = tpu.matmul %40, %42, %cst_27 {dimension_numbers = #tpu.dot_dimension_numbers<[1], [0], [0], [1], [0, 0, 1, 1], [], []>} : vector<128x512xf32>, vector<512x512xf32>, vector<128x512xf32> -> vector<128x512xf32>
    %c4_28 = arith.constant 4 : index
    %c0_29 = arith.constant 0 : index
    %44 = vector.load %arg3[%c4_28, %c0_29] : memref<6x512xf32, #tpu.memory_space<vmem>>, vector<1x512xf32>
    %45 = vector.shape_cast %44 : vector<1x512xf32> to vector<512xf32>
    %46 = vector.shape_cast %45 : vector<512xf32> to vector<1x512xf32>
    %47 = vector.broadcast %46 : vector<1x512xf32> to vector<128x512xf32>
    %48 = arith.addf %43, %47 : vector<128x512xf32>
    %cst_30 = arith.constant 0.000000e+00 : f32
    %49 = vector.broadcast %cst_30 : f32 to vector<128x512xf32>
    %50 = arith.maximumf %48, %49 : vector<128x512xf32>
    %c5 = arith.constant 5 : index
    %c0_31 = arith.constant 0 : index
    %c0_32 = arith.constant 0 : index
    %51 = vector.load %arg2[%c5, %c0_31, %c0_32] : memref<6x512x512xf32, #tpu.memory_space<vmem>>, vector<1x512x512xf32>
    %52 = vector.shape_cast %51 : vector<1x512x512xf32> to vector<512x512xf32>
    %cst_33 = arith.constant dense<0.000000e+00> : vector<128x512xf32>
    %53 = tpu.matmul %50, %52, %cst_33 {dimension_numbers = #tpu.dot_dimension_numbers<[1], [0], [0], [1], [0, 0, 1, 1], [], []>} : vector<128x512xf32>, vector<512x512xf32>, vector<128x512xf32> -> vector<128x512xf32>
    %c5_34 = arith.constant 5 : index
    %c0_35 = arith.constant 0 : index
    %54 = vector.load %arg3[%c5_34, %c0_35] : memref<6x512xf32, #tpu.memory_space<vmem>>, vector<1x512xf32>
    %55 = vector.shape_cast %54 : vector<1x512xf32> to vector<512xf32>
    %56 = vector.shape_cast %55 : vector<512xf32> to vector<1x512xf32>
    %57 = vector.broadcast %56 : vector<1x512xf32> to vector<128x512xf32>
    %58 = arith.addf %53, %57 : vector<128x512xf32>
    %cst_36 = arith.constant 0.000000e+00 : f32
    %59 = vector.broadcast %cst_36 : f32 to vector<128x512xf32>
    %60 = arith.maximumf %58, %59 : vector<128x512xf32>
    %c0_37 = arith.constant 0 : index
    %c0_38 = arith.constant 0 : index
    %61 = vector.load %arg4[%c0_37, %c0_38] : memref<512x128xf32, #tpu.memory_space<vmem>>, vector<512x128xf32>
    %cst_39 = arith.constant dense<0.000000e+00> : vector<128x128xf32>
    %62 = tpu.matmul %60, %61, %cst_39 {dimension_numbers = #tpu.dot_dimension_numbers<[1], [0], [0], [1], [0, 0, 1, 1], [], []>} : vector<128x512xf32>, vector<512x128xf32>, vector<128x128xf32> -> vector<128x128xf32>
    %c0_40 = arith.constant 0 : index
    %c0_41 = arith.constant 0 : index
    %63 = vector.load %arg5[%c0_40, %c0_41] : memref<1x128xf32, #tpu.memory_space<vmem>>, vector<1x128xf32>
    %64 = vector.broadcast %63 : vector<1x128xf32> to vector<128x128xf32>
    %65 = arith.addf %62, %64 : vector<128x128xf32>
    %c0_42 = arith.constant 0 : index
    %c0_43 = arith.constant 0 : index
    %66 = vector.load %arg6[%c0_42, %c0_43] : memref<128x128xf32, #tpu.memory_space<vmem>>, vector<128x128xf32>
    tpu.vector_store %arg6[%c0_42, %c0_43], %65 {strides = array<i32>} : memref<128x128xf32, #tpu.memory_space<vmem>>, vector<128x128xf32>,
    return
  }
  func.func @transform_0(%arg0: i32) -> (i32, i32) {
    %c0_i32 = arith.constant 0 : i32
    %c0_i32_0 = arith.constant 0 : i32
    return %arg0, %c0_i32 : i32, i32
  }
  func.func @transform_1(%arg0: i32) -> (i32, i32, i32) {
    %c0_i32 = arith.constant 0 : i32
    %c0_i32_0 = arith.constant 0 : i32
    %c0_i32_1 = arith.constant 0 : i32
    %c0_i32_2 = arith.constant 0 : i32
    return %c0_i32, %c0_i32_0, %c0_i32_1 : i32, i32, i32
  }
  func.func @transform_2(%arg0: i32) -> (i32, i32) {
    %c0_i32 = arith.constant 0 : i32
    %c0_i32_0 = arith.constant 0 : i32
    %c0_i32_1 = arith.constant 0 : i32
    return %c0_i32, %c0_i32_0 : i32, i32
  }
  func.func @transform_3(%arg0: i32) -> (i32, i32) {
    %c0_i32 = arith.constant 0 : i32
    %c0_i32_0 = arith.constant 0 : i32
    %c0_i32_1 = arith.constant 0 : i32
    return %c0_i32, %c0_i32_0 : i32, i32
  }
  func.func @transform_4(%arg0: i32) -> (i32, i32) {
    %c0_i32 = arith.constant 0 : i32
    %c0_i32_0 = arith.constant 0 : i32
    %c0_i32_1 = arith.constant 0 : i32
    return %c0_i32, %c0_i32_0 : i32, i32
  }
  func.func @transform_5(%arg0: i32) -> (i32, i32) {
    %c0_i32 = arith.constant 0 : i32
    %c0_i32_0 = arith.constant 0 : i32
    return %arg0, %c0_i32 : i32, i32
  }
}

</mosaic_0001>

<llo_original>
// kernel: tpu_custom_call.1
$region0: #{tpu_custom_call.1}
  #allocation0 [shape = 'u32[]', space=smem, size = 0x4, offset = 0x4, fixed_abs, tag = 'smem constant byte address 0x4 - core index']
  #allocation1 [shape = 'u32[72,128]{1,0:T(1,128)}', space=vmem, size = 0x9000, scoped, tag = 'internal scratch']
  %s0 = inlined_call_operand.hbm [shape: f32[128,512], index: 0, kind: input, shape index: {}]
  %s1 = inlined_call_operand.hbm [shape: f32[6,512,512], index: 1, kind: input, shape index: {}]
  %s2 = inlined_call_operand.hbm [shape: f32[6,512], index: 2, kind: input, shape index: {}]
  %s3 = inlined_call_operand.hbm [shape: f32[512,128], index: 3, kind: input, shape index: {}]
  %s4 = inlined_call_operand.hbm [shape: f32[1,128], index: 4, kind: input, shape index: {}]
  %s5 = inlined_call_operand.hbm [shape: f32[128,128], index: 5, kind: output, shape index: {}]
  %s6 = sld [smem:[#allocation0]]
  $region50: #{tpu_custom_call.1} parent=0
    _
  %s8 = ssub.s32 1, %s6
  %s9 = scalar_select 0, %s8, %s6
  $region1: #{tpu_custom_call.1} parent=0
    #allocation2 [shape = 'u8[262144]{0}', space=vmem, size = 0x40000, scoped, tag = 'input window, operand 0, single buffered']
    #allocation3 [shape = 's32[1]{0}', space=sflag, size = 0x4, scoped, tag = 'scoped memory for tpu_custom_call.1']
    #allocation4 [shape = 's32[1]{0}', space=sflag, size = 0x4, scoped, tag = 'scoped memory for tpu_custom_call.1']
    #allocation5 [shape = 'u8[6291456]{0}', space=vmem, size = 0x600000, scoped, tag = 'input window, operand 1, single buffered']
    #allocation6 [shape = 's32[1]{0}', space=sflag, size = 0x4, scoped, tag = 'scoped memory for tpu_custom_call.1']
    #allocation7 [shape = 'u8[16384]{0}', space=vmem, size = 0x4000, scoped, tag = 'input window, operand 2, single buffered']
    #allocation8 [shape = 'u8[262144]{0}', space=vmem, size = 0x40000, scoped, tag = 'input window, operand 3, single buffered']
    #allocation9 [shape = 's32[1]{0}', space=sflag, size = 0x4, scoped, tag = 'scoped memory for tpu_custom_call.1']
    #allocation10 [shape = 'u8[512]{0}', space=vmem, size = 0x400, scoped, tag = 'input window, operand 4, single buffered']
    #allocation11 [shape = 'u8[65536]{0}', space=vmem, size = 0x10000, scoped, tag = 'output window, operand 0, single buffered']
    %10 = vsyncpa [#allocation3], 0
    %11 = vsyncpa [#allocation6], 0
    %12 = vsyncpa [#allocation9], 0
    %13 = vsyncpa [#allocation4], 0
    // Predicated region
    $region2: #{tpu_custom_call.1} parent=1 // pred_check
      _
    $region3: #{tpu_custom_call.1} parent=1 // pred_check_branch
      %15 = sbr.rel (0) target = $region5
    $region4: #{tpu_custom_call.1} parent=1 // pred_region
      %17 = vsyncadd [#allocation3], 0
      %s18 = sshll.u32 %s0, 4
      %s19 = int_to_ptr.hbm [resolvable:$true] %s18
      %s20 = sshll.u32 [#allocation2], 4
      %s21 = int_to_ptr.vmem [resolvable:$true] %s20
      %26 = dma.hbm_to_vmem [thread:$0]  %s19, 8192, %s21, [#allocation3], 512, 512, 32
    $region5: #{tpu_custom_call.1} parent=1 // pred_fallthru
      _
    // Predicated region
    $region6: #{tpu_custom_call.1} parent=1 // pred_check
      _
    $region7: #{tpu_custom_call.1} parent=1 // pred_check_branch
      %28 = sbr.rel (0) target = $region9
    $region8: #{tpu_custom_call.1} parent=1 // pred_region
      %30 = vsyncadd [#allocation6], 0
      %s31 = sshll.u32 %s1, 4
      %s32 = int_to_ptr.hbm [resolvable:$true] %s31
      %s33 = sshll.u32 [#allocation5], 4
      %s34 = int_to_ptr.vmem [resolvable:$true] %s33
      %39 = dma.hbm_to_vmem [thread:$0]  %s32, 196608, %s34, [#allocation6], 512, 512, 32
    $region9: #{tpu_custom_call.1} parent=1 // pred_fallthru
      _
    // Predicated region
    $region10: #{tpu_custom_call.1} parent=1 // pred_check
      _
    $region11: #{tpu_custom_call.1} parent=1 // pred_check_branch
      %41 = sbr.rel (0) target = $region13
    $region12: #{tpu_custom_call.1} parent=1 // pred_region
      %43 = vsyncadd [#allocation6], 0
      %s45 = sshll.u32 %s2, 4
      %s46 = int_to_ptr.hbm [resolvable:$true] %s45
      %s47 = sshll.u32 [#allocation7], 4
      %s48 = int_to_ptr.vmem [resolvable:$true] %s47
      %50 = dma.hbm_to_vmem [thread:$0]  %s46, 512, %s48, [#allocation6]
    $region13: #{tpu_custom_call.1} parent=1 // pred_fallthru
      _
    // Predicated region
    $region14: #{tpu_custom_call.1} parent=1 // pred_check
      _
    $region15: #{tpu_custom_call.1} parent=1 // pred_check_branch
      %52 = sbr.rel (0) target = $region17
    $region16: #{tpu_custom_call.1} parent=1 // pred_region
      %54 = vsyncadd [#allocation9], 0
      %s55 = sshll.u32 %s3, 4
      %s56 = int_to_ptr.hbm [resolvable:$true] %s55
      %s57 = sshll.u32 [#allocation8], 4
      %s58 = int_to_ptr.vmem [resolvable:$true] %s57
      %63 = dma.hbm_to_vmem [thread:$0]  %s56, 8192, %s58, [#allocation9], 128, 128, 8
    $region17: #{tpu_custom_call.1} parent=1 // pred_fallthru
      _
    // Predicated region
    $region18: #{tpu_custom_call.1} parent=1 // pred_check
      _
    $region19: #{tpu_custom_call.1} parent=1 // pred_check_branch
      %65 = sbr.rel (0) target = $region21
    $region20: #{tpu_custom_call.1} parent=1 // pred_region
      %67 = vsyncadd [#allocation9], 0
      %s69 = sshll.u32 %s4, 4
      %s70 = int_to_ptr.hbm [resolvable:$true] %s69
      %s71 = sshll.u32 [#allocation10], 4
      %s72 = int_to_ptr.vmem [resolvable:$true] %s71
      %74 = dma.hbm_to_vmem [thread:$0]  %s70, 16, %s72, [#allocation9]
    $region21: #{tpu_custom_call.1} parent=1 // pred_fallthru
      _
    // Predicated region
    $region22: #{tpu_custom_call.1} parent=1 // pred_check
      _
    $region23: #{tpu_custom_call.1} parent=1 // pred_check_branch
      %76 = sbr.rel (0) target = $region25
    $region24: #{tpu_custom_call.1} parent=1 // pred_region
      %78 = dma.done [#allocation3], 8192
    $region25: #{tpu_custom_call.1} parent=1 // pred_fallthru
      _
    // Predicated region
    $region26: #{tpu_custom_call.1} parent=1 // pred_check
      _
    $region27: #{tpu_custom_call.1} parent=1 // pred_check_branch
      %80 = sbr.rel (0) target = $region29
    $region28: #{tpu_custom_call.1} parent=1 // pred_region
      %82 = dma.done [#allocation6], 196608
    $region29: #{tpu_custom_call.1} parent=1 // pred_fallthru
      _
    // Predicated region
    $region30: #{tpu_custom_call.1} parent=1 // pred_check
      _
    $region31: #{tpu_custom_call.1} parent=1 // pred_check_branch
      %84 = sbr.rel (0) target = $region33
    $region32: #{tpu_custom_call.1} parent=1 // pred_region
      %86 = dma.done [#allocation6], 512
    $region33: #{tpu_custom_call.1} parent=1 // pred_fallthru
      _
    // Predicated region
    $region34: #{tpu_custom_call.1} parent=1 // pred_check
      _
    $region35: #{tpu_custom_call.1} parent=1 // pred_check_branch
      %88 = sbr.rel (0) target = $region37
    $region36: #{tpu_custom_call.1} parent=1 // pred_region
      %90 = dma.done [#allocation9], 8192
    $region37: #{tpu_custom_call.1} parent=1 // pred_fallthru
      _
    // Predicated region
    $region38: #{tpu_custom_call.1} parent=1 // pred_check
      _
    $region39: #{tpu_custom_call.1} parent=1 // pred_check_branch
      %92 = sbr.rel (0) target = $region41
    $region40: #{tpu_custom_call.1} parent=1 // pred_region
      %94 = dma.done [#allocation9], 16
    $region41: #{tpu_custom_call.1} parent=1 // pred_fallthru
      _
    %v95 = vld [vmem:[#allocation2] sm:$0xff]
    %v96 = vld [vmem:[#allocation2 + $0x8] sm:$0xff]
    %v97 = vld [vmem:[#allocation2 + $0x10] sm:$0xff]
    %v98 = vld [vmem:[#allocation2 + $0x18] sm:$0xff]
    %v99 = vld [vmem:[#allocation2 + $0x20] sm:$0xff]
    %v100 = vld [vmem:[#allocation2 + $0x28] sm:$0xff]
    %v101 = vld [vmem:[#allocation2 + $0x30] sm:$0xff]
    %v102 = vld [vmem:[#allocation2 + $0x38] sm:$0xff]
    %v103 = vld [vmem:[#allocation2 + $0x40] sm:$0xff]
    %v104 = vld [vmem:[#allocation2 + $0x48] sm:$0xff]
    %v105 = vld [vmem:[#allocation2 + $0x50] sm:$0xff]
    %v106 = vld [vmem:[#allocation2 + $0x58] sm:$0xff]
    %v107 = vld [vmem:[#allocation2 + $0x60] sm:$0xff]
    %v108 = vld [vmem:[#allocation2 + $0x68] sm:$0xff]
    %v109 = vld [vmem:[#allocation2 + $0x70] sm:$0xff]
    %v110 = vld [vmem:[#allocation2 + $0x78] sm:$0xff]
    %v111 = vld [vmem:[#allocation2 + $0x80] sm:$0xff]
    %v112 = vld [vmem:[#allocation2 + $0x88] sm:$0xff]
    %v113 = vld [vmem:[#allocation2 + $0x90] sm:$0xff]
    %v114 = vld [vmem:[#allocation2 + $0x98] sm:$0xff]
    %v115 = vld [vmem:[#allocation2 + $0xa0] sm:$0xff]
    %v116 = vld [vmem:[#allocation2 + $0xa8] sm:$0xff]
    %v117 = vld [vmem:[#allocation2 + $0xb0] sm:$0xff]
    %v118 = vld [vmem:[#allocation2 + $0xb8] sm:$0xff]
    %v119 = vld [vmem:[#allocation2 + $0xc0] sm:$0xff]
    %v120 = vld [vmem:[#allocation2 + $0xc8] sm:$0xff]
    %v121 = vld [vmem:[#allocation2 + $0xd0] sm:$0xff]
    %v122 = vld [vmem:[#allocation2 + $0xd8] sm:$0xff]
    %v123 = vld [vmem:[#allocation2 + $0xe0] sm:$0xff]
    %v124 = vld [vmem:[#allocation2 + $0xe8] sm:$0xff]
    %v125 = vld [vmem:[#allocation2 + $0xf0] sm:$0xff]
    %v126 = vld [vmem:[#allocation2 + $0xf8] sm:$0xff]
    %v127 = vld [vmem:[#allocation2 + $0x100] sm:$0xff]
    %v128 = vld [vmem:[#allocation2 + $0x108] sm:$0xff]
    %v129 = vld [vmem:[#allocation2 + $0x110] sm:$0xff]
    %v130 = vld [vmem:[#allocation2 + $0x118] sm:$0xff]
    %v131 = vld [vmem:[#allocation2 + $0x120] sm:$0xff]
    %v132 = vld [vmem:[#allocation2 + $0x128] sm:$0xff]
    %v133 = vld [vmem:[#allocation2 + $0x130] sm:$0xff]
    %v134 = vld [vmem:[#allocation2 + $0x138] sm:$0xff]
    %v135 = vld [vmem:[#allocation2 + $0x140] sm:$0xff]
    %v136 = vld [vmem:[#allocation2 + $0x148] sm:$0xff]
    %v137 = vld [vmem:[#allocation2 + $0x150] sm:$0xff]
    %v138 = vld [vmem:[#allocation2 + $0x158] sm:$0xff]
    %v139 = vld [vmem:[#allocation2 + $0x160] sm:$0xff]
    %v140 = vld [vmem:[#allocation2 + $0x168] sm:$0xff]
    %v141 = vld [vmem:[#allocation2 + $0x170] sm:$0xff]
    %v142 = vld [vmem:[#allocation2 + $0x178] sm:$0xff]
    %v143 = vld [vmem:[#allocation2 + $0x180] sm:$0xff]
    %v144 = vld [vmem:[#allocation2 + $0x188] sm:$0xff]
    %v145 = vld [vmem:[#allocation2 + $0x190] sm:$0xff]
    %v146 = vld [vmem:[#allocation2 + $0x198] sm:$0xff]
    %v147 = vld [vmem:[#allocation2 + $0x1a0] sm:$0xff]
    %v148 = vld [vmem:[#allocation2 + $0x1a8] sm:$0xff]
    %v149 = vld [vmem:[#allocation2 + $0x1b0] sm:$0xff]
    %v150 = vld [vmem:[#allocation2 + $0x1b8] sm:$0xff]
    %v151 = vld [vmem:[#allocation2 + $0x1c0] sm:$0xff]
    %v152 = vld [vmem:[#allocation2 + $0x1c8] sm:$0xff]
    %v153 = vld [vmem:[#allocation2 + $0x1d0] sm:$0xff]
    %v154 = vld [vmem:[#allocation2 + $0x1d8] sm:$0xff]
    %v155 = vld [vmem:[#allocation2 + $0x1e0] sm:$0xff]
    %v156 = vld [vmem:[#allocation2 + $0x1e8] sm:$0xff]
    %v157 = vld [vmem:[#allocation2 + $0x1f0] sm:$0xff]
    %v158 = vld [vmem:[#allocation2 + $0x1f8] sm:$0xff]
    %v159 = vld [vmem:[#allocation5] sm:$0xff]
    %v160 = vld [vmem:[#allocation5 + $0x8] sm:$0xff]
    %v161 = vld [vmem:[#allocation5 + $0x10] sm:$0xff]
    %v162 = vld [vmem:[#allocation5 + $0x18] sm:$0xff]
    %v163 = vld [vmem:[#allocation5 + $0x20] sm:$0xff]
    %v164 = vld [vmem:[#allocation5 + $0x28] sm:$0xff]
    %v165 = vld [vmem:[#allocation5 + $0x30] sm:$0xff]
    %v166 = vld [vmem:[#allocation5 + $0x38] sm:$0xff]
    %v167 = vld [vmem:[#allocation5 + $0x40] sm:$0xff]
    %v168 = vld [vmem:[#allocation5 + $0x48] sm:$0xff]
    %v169 = vld [vmem:[#allocation5 + $0x50] sm:$0xff]
    %v170 = vld [vmem:[#allocation5 + $0x58] sm:$0xff]
    %v171 = vld [vmem:[#allocation5 + $0x60] sm:$0xff]
    %v172 = vld [vmem:[#allocation5 + $0x68] sm:$0xff]
    %v173 = vld [vmem:[#allocation5 + $0x70] sm:$0xff]
    %v174 = vld [vmem:[#allocation5 + $0x78] sm:$0xff]
    %v175 = vld [vmem:[#allocation5 + $0x80] sm:$0xff]
    %v176 = vld [vmem:[#allocation5 + $0x88] sm:$0xff]
    %v177 = vld [vmem:[#allocation5 + $0x90] sm:$0xff]
    %v178 = vld [vmem:[#allocation5 + $0x98] sm:$0xff]
    %v179 = vld [vmem:[#allocation5 + $0xa0] sm:$0xff]
    %v180 = vld [vmem:[#allocation5 + $0xa8] sm:$0xff]
    %v181 = vld [vmem:[#allocation5 + $0xb0] sm:$0xff]
    %v182 = vld [vmem:[#allocation5 + $0xb8] sm:$0xff]
    %v183 = vld [vmem:[#allocation5 + $0xc0] sm:$0xff]
    %v184 = vld [vmem:[#allocation5 + $0xc8] sm:$0xff]
    %v185 = vld [vmem:[#allocation5 + $0xd0] sm:$0xff]
    %v186 = vld [vmem:[#allocation5 + $0xd8] sm:$0xff]
    %v187 = vld [vmem:[#allocation5 + $0xe0] sm:$0xff]
    %v188 = vld [vmem:[#allocation5 + $0xe8] sm:$0xff]
    %v189 = vld [vmem:[#allocation5 + $0xf0] sm:$0xff]
    %v190 = vld [vmem:[#allocation5 + $0xf8] sm:$0xff]
    %v191 = vld [vmem:[#allocation5 + $0x100] sm:$0xff]
    %v192 = vld [vmem:[#allocation5 + $0x108] sm:$0xff]
    %v193 = vld [vmem:[#allocation5 + $0x110] sm:$0xff]
    %v194 = vld [vmem:[#allocation5 + $0x118] sm:$0xff]
    %v195 = vld [vmem:[#allocation5 + $0x120] sm:$0xff]
    %v196 = vld [vmem:[#allocation5 + $0x128] sm:$0xff]
    %v197 = vld [vmem:[#allocation5 + $0x130] sm:$0xff]
    %v198 = vld [vmem:[#allocation5 + $0x138] sm:$0xff]
    %v199 = vld [vmem:[#allocation5 + $0x140] sm:$0xff]
    %v200 = vld [vmem:[#allocation5 + $0x148] sm:$0xff]
    %v201 = vld [vmem:[#allocation5 + $0x150] sm:$0xff]
    %v202 = vld [vmem:[#allocation5 + $0x158] sm:$0xff]
    %v203 = vld [vmem:[#allocation5 + $0x160] sm:$0xff]
    %v204 = vld [vmem:[#allocation5 + $0x168] sm:$0xff]
    %v205 = vld [vmem:[#allocation5 + $0x170] sm:$0xff]
    %v206 = vld [vmem:[#allocation5 + $0x178] sm:$0xff]
    %v207 = vld [vmem:[#allocation5 + $0x180] sm:$0xff]
    %v208 = vld [vmem:[#allocation5 + $0x188] sm:$0xff]
    %v209 = vld [vmem:[#allocation5 + $0x190] sm:$0xff]
    %v210 = vld [vmem:[#allocation5 + $0x198] sm:$0xff]
    %v211 = vld [vmem:[#allocation5 + $0x1a0] sm:$0xff]
    %v212 = vld [vmem:[#allocation5 + $0x1a8] sm:$0xff]
    %v213 = vld [vmem:[#allocation5 + $0x1b0] sm:$0xff]
    %v214 = vld [vmem:[#allocation5 + $0x1b8] sm:$0xff]
    %v215 = vld [vmem:[#allocation5 + $0x1c0] sm:$0xff]
    %v216 = vld [vmem:[#allocation5 + $0x1c8] sm:$0xff]
    %v217 = vld [vmem:[#allocation5 + $0x1d0] sm:$0xff]
    %v218 = vld [vmem:[#allocation5 + $0x1d8] sm:$0xff]
    %v219 = vld [vmem:[#allocation5 + $0x1e0] sm:$0xff]
    %v220 = vld [vmem:[#allocation5 + $0x1e8] sm:$0xff]
    %v221 = vld [vmem:[#allocation5 + $0x1f0] sm:$0xff]
    %v222 = vld [vmem:[#allocation5 + $0x1f8] sm:$0xff]
    %v223 = vld [vmem:[#allocation5 + $0x200] sm:$0xff]
    %v224 = vld [vmem:[#allocation5 + $0x208] sm:$0xff]
    %v225 = vld [vmem:[#allocation5 + $0x210] sm:$0xff]
    %v226 = vld [vmem:[#allocation5 + $0x218] sm:$0xff]
    %v227 = vld [vmem:[#allocation5 + $0x220] sm:$0xff]
    %v228 = vld [vmem:[#allocation5 + $0x228] sm:$0xff]
    %v229 = vld [vmem:[#allocation5 + $0x230] sm:$0xff]
    %v230 = vld [vmem:[#allocation5 + $0x238] sm:$0xff]
    %v231 = vld [vmem:[#allocation5 + $0x240] sm:$0xff]
    %v232 = vld [vmem:[#allocation5 + $0x248] sm:$0xff]
    %v233 = vld [vmem:[#allocation5 + $0x250] sm:$0xff]
    %v234 = vld [vmem:[#allocation5 + $0x258] sm:$0xff]
    %v235 = vld [vmem:[#allocation5 + $0x260] sm:$0xff]
    %v236 = vld [vmem:[#allocation5 + $0x268] sm:$0xff]
    %v237 = vld [vmem:[#allocation5 + $0x270] sm:$0xff]
    %v238 = vld [vmem:[#allocation5 + $0x278] sm:$0xff]
    %v239 = vld [vmem:[#allocation5 + $0x280] sm:$0xff]
    %v240 = vld [vmem:[#allocation5 + $0x288] sm:$0xff]
    %v241 = vld [vmem:[#allocation5 + $0x290] sm:$0xff]
    %v242 = vld [vmem:[#allocation5 + $0x298] sm:$0xff]
    %v243 = vld [vmem:[#allocation5 + $0x2a0] sm:$0xff]
    %v244 = vld [vmem:[#allocation5 + $0x2a8] sm:$0xff]
    %v245 = vld [vmem:[#allocation5 + $0x2b0] sm:$0xff]
    %v246 = vld [vmem:[#allocation5 + $0x2b8] sm:$0xff]
    %v247 = vld [vmem:[#allocation5 + $0x2c0] sm:$0xff]
    %v248 = vld [vmem:[#allocation5 + $0x2c8] sm:$0xff]
    %v249 = vld [vmem:[#allocation5 + $0x2d0] sm:$0xff]
    %v250 = vld [vmem:[#allocation5 + $0x2d8] sm:$0xff]
    %v251 = vld [vmem:[#allocation5 + $0x2e0] sm:$0xff]
    %v252 = vld [vmem:[#allocation5 + $0x2e8] sm:$0xff]
    %v253 = vld [vmem:[#allocation5 + $0x2f0] sm:$0xff]
    %v254 = vld [vmem:[#allocation5 + $0x2f8] sm:$0xff]
    %v255 = vld [vmem:[#allocation5 + $0x300] sm:$0xff]
    %v256 = vld [vmem:[#allocation5 + $0x308] sm:$0xff]
    %v257 = vld [vmem:[#allocation5 + $0x310] sm:$0xff]
    %v258 = vld [vmem:[#allocation5 + $0x318] sm:$0xff]
    %v259 = vld [vmem:[#allocation5 + $0x320] sm:$0xff]
    %v260 = vld [vmem:[#allocation5 + $0x328] sm:$0xff]
    %v261 = vld [vmem:[#allocation5 + $0x330] sm:$0xff]
    %v262 = vld [vmem:[#allocation5 + $0x338] sm:$0xff]
    %v263 = vld [vmem:[#allocation5 + $0x340] sm:$0xff]
    %v264 = vld [vmem:[#allocation5 + $0x348] sm:$0xff]
    %v265 = vld [vmem:[#allocation5 + $0x350] sm:$0xff]
    %v266 = vld [vmem:[#allocation5 + $0x358] sm:$0xff]
    %v267 = vld [vmem:[#allocation5 + $0x360] sm:$0xff]
    %v268 = vld [vmem:[#allocation5 + $0x368] sm:$0xff]
    %v269 = vld [vmem:[#allocation5 + $0x370] sm:$0xff]
    %v270 = vld [vmem:[#allocation5 + $0x378] sm:$0xff]
    %v271 = vld [vmem:[#allocation5 + $0x380] sm:$0xff]
    %v272 = vld [vmem:[#allocation5 + $0x388] sm:$0xff]
    %v273 = vld [vmem:[#allocation5 + $0x390] sm:$0xff]
    %v274 = vld [vmem:[#allocation5 + $0x398] sm:$0xff]
    %v275 = vld [vmem:[#allocation5 + $0x3a0] sm:$0xff]
    %v276 = vld [vmem:[#allocation5 + $0x3a8] sm:$0xff]
    %v277 = vld [vmem:[#allocation5 + $0x3b0] sm:$0xff]
    %v278 = vld [vmem:[#allocation5 + $0x3b8] sm:$0xff]
    %v279 = vld [vmem:[#allocation5 + $0x3c0] sm:$0xff]
    %v280 = vld [vmem:[#allocation5 + $0x3c8] sm:$0xff]
    %v281 = vld [vmem:[#allocation5 + $0x3d0] sm:$0xff]
    %v282 = vld [vmem:[#allocation5 + $0x3d8] sm:$0xff]
    %v283 = vld [vmem:[#allocation5 + $0x3e0] sm:$0xff]
    %v284 = vld [vmem:[#allocation5 + $0x3e8] sm:$0xff]
    %v285 = vld [vmem:[#allocation5 + $0x3f0] sm:$0xff]
    %v286 = vld [vmem:[#allocation5 + $0x3f8] sm:$0xff]
    %v287 = vld [vmem:[#allocation5 + $0x400] sm:$0xff]
    %v288 = vld [vmem:[#allocation5 + $0x408] sm:$0xff]
    %v289 = vld [vmem:[#allocation5 + $0x410] sm:$0xff]
    %v290 = vld [vmem:[#allocation5 + $0x418] sm:$0xff]
    %v291 = vld [vmem:[#allocation5 + $0x420] sm:$0xff]
    %v292 = vld [vmem:[#allocation5 + $0x428] sm:$0xff]
    %v293 = vld [vmem:[#allocation5 + $0x430] sm:$0xff]
    %v294 = vld [vmem:[#allocation5 + $0x438] sm:$0xff]
    %v295 = vld [vmem:[#allocation5 + $0x440] sm:$0xff]
    %v296 = vld [vmem:[#allocation5 + $0x448] sm:$0xff]
    %v297 = vld [vmem:[#allocation5 + $0x450] sm:$0xff]
    %v298 = vld [vmem:[#allocation5 + $0x458] sm:$0xff]
    %v299 = vld [vmem:[#allocation5 + $0x460] sm:$0xff]
    %v300 = vld [vmem:[#allocation5 + $0x468] sm:$0xff]
    %v301 = vld [vmem:[#allocation5 + $0x470] sm:$0xff]
    %v302 = vld [vmem:[#allocation5 + $0x478] sm:$0xff]
    %v303 = vld [vmem:[#allocation5 + $0x480] sm:$0xff]
    %v304 = vld [vmem:[#allocation5 + $0x488] sm:$0xff]
    %v305 = vld [vmem:[#allocation5 + $0x490] sm:$0xff]
    %v306 = vld [vmem:[#allocation5 + $0x498] sm:$0xff]
    %v307 = vld [vmem:[#allocation5 + $0x4a0] sm:$0xff]
    %v308 = vld [vmem:[#allocation5 + $0x4a8] sm:$0xff]
    %v309 = vld [vmem:[#allocation5 + $0x4b0] sm:$0xff]
    %v310 = vld [vmem:[#allocation5 + $0x4b8] sm:$0xff]
    %v311 = vld [vmem:[#allocation5 + $0x4c0] sm:$0xff]
    %v312 = vld [vmem:[#allocation5 + $0x4c8] sm:$0xff]
    %v313 = vld [vmem:[#allocation5 + $0x4d0] sm:$0xff]
    %v314 = vld [vmem:[#allocation5 + $0x4d8] sm:$0xff]
    %v315 = vld [vmem:[#allocation5 + $0x4e0] sm:$0xff]
    %v316 = vld [vmem:[#allocation5 + $0x4e8] sm:$0xff]
    %v317 = vld [vmem:[#allocation5 + $0x4f0] sm:$0xff]
    %v318 = vld [vmem:[#allocation5 + $0x4f8] sm:$0xff]
    %v319 = vld [vmem:[#allocation5 + $0x500] sm:$0xff]
    %v320 = vld [vmem:[#allocation5 + $0x508] sm:$0xff]
    %v321 = vld [vmem:[#allocation5 + $0x510] sm:$0xff]
    %v322 = vld [vmem:[#allocation5 + $0x518] sm:$0xff]
    %v323 = vld [vmem:[#allocation5 + $0x520] sm:$0xff]
    %v324 = vld [vmem:[#allocation5 + $0x528] sm:$0xff]
    %v325 = vld [vmem:[#allocation5 + $0x530] sm:$0xff]
    %v326 = vld [vmem:[#allocation5 + $0x538] sm:$0xff]
    %v327 = vld [vmem:[#allocation5 + $0x540] sm:$0xff]
    %v328 = vld [vmem:[#allocation5 + $0x548] sm:$0xff]
    %v329 = vld [vmem:[#allocation5 + $0x550] sm:$0xff]
    %v330 = vld [vmem:[#allocation5 + $0x558] sm:$0xff]
    %v331 = vld [vmem:[#allocation5 + $0x560] sm:$0xff]
    %v332 = vld [vmem:[#allocation5 + $0x568] sm:$0xff]
    %v333 = vld [vmem:[#allocation5 + $0x570] sm:$0xff]
    %v334 = vld [vmem:[#allocation5 + $0x578] sm:$0xff]
    %v335 = vld [vmem:[#allocation5 + $0x580] sm:$0xff]
    %v336 = vld [vmem:[#allocation5 + $0x588] sm:$0xff]
    %v337 = vld [vmem:[#allocation5 + $0x590] sm:$0xff]
    %v338 = vld [vmem:[#allocation5 + $0x598] sm:$0xff]
    %v339 = vld [vmem:[#allocation5 + $0x5a0] sm:$0xff]
    %v340 = vld [vmem:[#allocation5 + $0x5a8] sm:$0xff]
    %v341 = vld [vmem:[#allocation5 + $0x5b0] sm:$0xff]
    %v342 = vld [vmem:[#allocation5 + $0x5b8] sm:$0xff]
    %v343 = vld [vmem:[#allocation5 + $0x5c0] sm:$0xff]
    %v344 = vld [vmem:[#allocation5 + $0x5c8] sm:$0xff]
    %v345 = vld [vmem:[#allocation5 + $0x5d0] sm:$0xff]
    %v346 = vld [vmem:[#allocation5 + $0x5d8] sm:$0xff]
    %v347 = vld [vmem:[#allocation5 + $0x5e0] sm:$0xff]
    %v348 = vld [vmem:[#allocation5 + $0x5e8] sm:$0xff]
    %v349 = vld [vmem:[#allocation5 + $0x5f0] sm:$0xff]
    %v350 = vld [vmem:[#allocation5 + $0x5f8] sm:$0xff]
    %v351 = vld [vmem:[#allocation5 + $0x600] sm:$0xff]
    %v352 = vld [vmem:[#allocation5 + $0x608] sm:$0xff]
    %v353 = vld [vmem:[#allocation5 + $0x610] sm:$0xff]
    %v354 = vld [vmem:[#allocation5 + $0x618] sm:$0xff]
    %v355 = vld [vmem:[#allocation5 + $0x620] sm:$0xff]
    %v356 = vld [vmem:[#allocation5 + $0x628] sm:$0xff]
    %v357 = vld [vmem:[#allocation5 + $0x630] sm:$0xff]
    %v358 = vld [vmem:[#allocation5 + $0x638] sm:$0xff]
    %v359 = vld [vmem:[#allocation5 + $0x640] sm:$0xff]
    %v360 = vld [vmem:[#allocation5 + $0x648] sm:$0xff]
    %v361 = vld [vmem:[#allocation5 + $0x650] sm:$0xff]
    %v362 = vld [vmem:[#allocation5 + $0x658] sm:$0xff]
    %v363 = vld [vmem:[#allocation5 + $0x660] sm:$0xff]
    %v364 = vld [vmem:[#allocation5 + $0x668] sm:$0xff]
    %v365 = vld [vmem:[#allocation5 + $0x670] sm:$0xff]
    %v366 = vld [vmem:[#allocation5 + $0x678] sm:$0xff]
    %v367 = vld [vmem:[#allocation5 + $0x680] sm:$0xff]
    %v368 = vld [vmem:[#allocation5 + $0x688] sm:$0xff]
    %v369 = vld [vmem:[#allocation5 + $0x690] sm:$0xff]
    %v370 = vld [vmem:[#allocation5 + $0x698] sm:$0xff]
    %v371 = vld [vmem:[#allocation5 + $0x6a0] sm:$0xff]
    %v372 = vld [vmem:[#allocation5 + $0x6a8] sm:$0xff]
    %v373 = vld [vmem:[#allocation5 + $0x6b0] sm:$0xff]
    %v374 = vld [vmem:[#allocation5 + $0x6b8] sm:$0xff]
    %v375 = vld [vmem:[#allocation5 + $0x6c0] sm:$0xff]
    %v376 = vld [vmem:[#allocation5 + $0x6c8] sm:$0xff]
    %v377 = vld [vmem:[#allocation5 + $0x6d0] sm:$0xff]
    %v378 = vld [vmem:[#allocation5 + $0x6d8] sm:$0xff]
    %v379 = vld [vmem:[#allocation5 + $0x6e0] sm:$0xff]
    %v380 = vld [vmem:[#allocation5 + $0x6e8] sm:$0xff]
    %v381 = vld [vmem:[#allocation5 + $0x6f0] sm:$0xff]
    %v382 = vld [vmem:[#allocation5 + $0x6f8] sm:$0xff]
    %v383 = vld [vmem:[#allocation5 + $0x700] sm:$0xff]
    %v384 = vld [vmem:[#allocation5 + $0x708] sm:$0xff]
    %v385 = vld [vmem:[#allocation5 + $0x710] sm:$0xff]
    %v386 = vld [vmem:[#allocation5 + $0x718] sm:$0xff]
    %v387 = vld [vmem:[#allocation5 + $0x720] sm:$0xff]
    %v388 = vld [vmem:[#allocation5 + $0x728] sm:$0xff]
    %v389 = vld [vmem:[#allocation5 + $0x730] sm:$0xff]
    %v390 = vld [vmem:[#allocation5 + $0x738] sm:$0xff]
    %v391 = vld [vmem:[#allocation5 + $0x740] sm:$0xff]
    %v392 = vld [vmem:[#allocation5 + $0x748] sm:$0xff]
    %v393 = vld [vmem:[#allocation5 + $0x750] sm:$0xff]
    %v394 = vld [vmem:[#allocation5 + $0x758] sm:$0xff]
    %v395 = vld [vmem:[#allocation5 + $0x760] sm:$0xff]
    %v396 = vld [vmem:[#allocation5 + $0x768] sm:$0xff]
    %v397 = vld [vmem:[#allocation5 + $0x770] sm:$0xff]
    %v398 = vld [vmem:[#allocation5 + $0x778] sm:$0xff]
    %v399 = vld [vmem:[#allocation5 + $0x780] sm:$0xff]
    %v400 = vld [vmem:[#allocation5 + $0x788] sm:$0xff]
    %v401 = vld [vmem:[#allocation5 + $0x790] sm:$0xff]
    %v402 = vld [vmem:[#allocation5 + $0x798] sm:$0xff]
    %v403 = vld [vmem:[#allocation5 + $0x7a0] sm:$0xff]
    %v404 = vld [vmem:[#allocation5 + $0x7a8] sm:$0xff]
    %v405 = vld [vmem:[#allocation5 + $0x7b0] sm:$0xff]
    %v406 = vld [vmem:[#allocation5 + $0x7b8] sm:$0xff]
    %v407 = vld [vmem:[#allocation5 + $0x7c0] sm:$0xff]
    %v408 = vld [vmem:[#allocation5 + $0x7c8] sm:$0xff]
    %v409 = vld [vmem:[#allocation5 + $0x7d0] sm:$0xff]
    %v410 = vld [vmem:[#allocation5 + $0x7d8] sm:$0xff]
    %v411 = vld [vmem:[#allocation5 + $0x7e0] sm:$0xff]
    %v412 = vld [vmem:[#allocation5 + $0x7e8] sm:$0xff]
    %v413 = vld [vmem:[#allocation5 + $0x7f0] sm:$0xff]
    %v414 = vld [vmem:[#allocation5 + $0x7f8] sm:$0xff]
    %v415 = vld [vmem:[#allocation7] ss:$8 sm:$0xf]
    %v417 = vperm.slane %v415, 0
    %v418 = vperm.slane %v415, 1
    %v419 = vperm.slane %v415, 2
    %v420 = vperm.slane %v415, 3
    %425 = vmatpush.msra.mxu0 %v219
    %426 = vmatpush.msra.mxu0 %v215
    %427 = vmatpush.msra.mxu0 %v211
    %428 = vmatpush.msra.mxu0 %v207
    %429 = vmatpush.msra.mxu0 %v203
    %430 = vmatpush.msra.mxu0 %v199
    %431 = vmatpush.msra.mxu0 %v195
    %432 = vmatpush.msra.mxu0 %v191
    %433 = vmatpush.msra.mxu0 %v187
    %434 = vmatpush.msra.mxu0 %v183
    %435 = vmatpush.msra.mxu0 %v179
    %436 = vmatpush.msra.mxu0 %v175
    %437 = vmatpush.msra.mxu0 %v171
    %438 = vmatpush.msra.mxu0 %v167
    %439 = vmatpush.msra.mxu0 %v163
    %440 = vmatpush.msra.mxu0 %v159
    %441 = vmatmul.f32.gmra.mxu0 %v95
    %v442 = vpop.f32.mrf.mxu0
    %v443 = vadd.f32 %v417, %v442
    %444 = vmatmul.f32.gmra.mxu0 %v99
    %v445 = vpop.f32.mrf.mxu0
    %v446 = vadd.f32 %v417, %v445
    %447 = vmatmul.f32.gmra.mxu0 %v103
    %v448 = vpop.f32.mrf.mxu0
    %v449 = vadd.f32 %v417, %v448
    %450 = vmatmul.f32.gmra.mxu0 %v107
    %v451 = vpop.f32.mrf.mxu0
    %v452 = vadd.f32 %v417, %v451
    %453 = vmatmul.f32.gmra.mxu0 %v111
    %v454 = vpop.f32.mrf.mxu0
    %v455 = vadd.f32 %v417, %v454
    %456 = vmatmul.f32.gmra.mxu0 %v115
    %v457 = vpop.f32.mrf.mxu0
    %v458 = vadd.f32 %v417, %v457
    %459 = vmatmul.f32.gmra.mxu0 %v119
    %v460 = vpop.f32.mrf.mxu0
    %v461 = vadd.f32 %v417, %v460
    %462 = vmatmul.f32.gmra.mxu0 %v123
    %v463 = vpop.f32.mrf.mxu0
    %v464 = vadd.f32 %v417, %v463
    %465 = vmatmul.f32.gmra.mxu0 %v127
    %v466 = vpop.f32.mrf.mxu0
    %v467 = vadd.f32 %v417, %v466
    %468 = vmatmul.f32.gmra.mxu0 %v131
    %v469 = vpop.f32.mrf.mxu0
    %v470 = vadd.f32 %v417, %v469
    %471 = vmatmul.f32.gmra.mxu0 %v135
    %v472 = vpop.f32.mrf.mxu0
    %v473 = vadd.f32 %v417, %v472
    %474 = vmatmul.f32.gmra.mxu0 %v139
    %v475 = vpop.f32.mrf.mxu0
    %v476 = vadd.f32 %v417, %v475
    %477 = vmatmul.f32.gmra.mxu0 %v143
    %v478 = vpop.f32.mrf.mxu0
    %v479 = vadd.f32 %v417, %v478
    %480 = vmatmul.f32.gmra.mxu0 %v147
    %v481 = vpop.f32.mrf.mxu0
    %v482 = vadd.f32 %v417, %v481
    %483 = vmatmul.f32.gmra.mxu0 %v151
    %v484 = vpop.f32.mrf.mxu0
    %v485 = vadd.f32 %v417, %v484
    %486 = vmatmul.f32.gmra.mxu0 %v155
    %v487 = vpop.f32.mrf.mxu0
    %v488 = vadd.f32 %v417, %v487
    %489 = vdwg.mxu0
    %490 = vmatpush.msra.mxu0 %v283
    %491 = vmatpush.msra.mxu0 %v279
    %492 = vmatpush.msra.mxu0 %v275
    %493 = vmatpush.msra.mxu0 %v271
    %494 = vmatpush.msra.mxu0 %v267
    %495 = vmatpush.msra.mxu0 %v263
    %496 = vmatpush.msra.mxu0 %v259
    %497 = vmatpush.msra.mxu0 %v255
    %498 = vmatpush.msra.mxu0 %v251
    %499 = vmatpush.msra.mxu0 %v247
    %500 = vmatpush.msra.mxu0 %v243
    %501 = vmatpush.msra.mxu0 %v239
    %502 = vmatpush.msra.mxu0 %v235
    %503 = vmatpush.msra.mxu0 %v231
    %504 = vmatpush.msra.mxu0 %v227
    %505 = vmatpush.msra.mxu0 %v223
    %506 = vmatmul.f32.gmra.mxu0 %v96
    %v507 = vpop.f32.mrf.mxu0
    %v508 = vadd.f32 %v443, %v507
    %509 = vmatmul.f32.gmra.mxu0 %v100
    %v510 = vpop.f32.mrf.mxu0
    %v511 = vadd.f32 %v446, %v510
    %512 = vmatmul.f32.gmra.mxu0 %v104
    %v513 = vpop.f32.mrf.mxu0
    %v514 = vadd.f32 %v449, %v513
    %515 = vmatmul.f32.gmra.mxu0 %v108
    %v516 = vpop.f32.mrf.mxu0
    %v517 = vadd.f32 %v452, %v516
    %518 = vmatmul.f32.gmra.mxu0 %v112
    %v519 = vpop.f32.mrf.mxu0
    %v520 = vadd.f32 %v455, %v519
    %521 = vmatmul.f32.gmra.mxu0 %v116
    %v522 = vpop.f32.mrf.mxu0
    %v523 = vadd.f32 %v458, %v522
    %524 = vmatmul.f32.gmra.mxu0 %v120
    %v525 = vpop.f32.mrf.mxu0
    %v526 = vadd.f32 %v461, %v525
    %527 = vmatmul.f32.gmra.mxu0 %v124
    %v528 = vpop.f32.mrf.mxu0
    %v529 = vadd.f32 %v464, %v528
    %530 = vmatmul.f32.gmra.mxu0 %v128
    %v531 = vpop.f32.mrf.mxu0
    %v532 = vadd.f32 %v467, %v531
    %533 = vmatmul.f32.gmra.mxu0 %v132
    %v534 = vpop.f32.mrf.mxu0
    %v535 = vadd.f32 %v470, %v534
    %536 = vmatmul.f32.gmra.mxu0 %v136
    %v537 = vpop.f32.mrf.mxu0
    %v538 = vadd.f32 %v473, %v537
    %539 = vmatmul.f32.gmra.mxu0 %v140
    %v540 = vpop.f32.mrf.mxu0
    %v541 = vadd.f32 %v476, %v540
    %542 = vmatmul.f32.gmra.mxu0 %v144
    %v543 = vpop.f32.mrf.mxu0
    %v544 = vadd.f32 %v479, %v543
    %545 = vmatmul.f32.gmra.mxu0 %v148
    %v546 = vpop.f32.mrf.mxu0
    %v547 = vadd.f32 %v482, %v546
    %548 = vmatmul.f32.gmra.mxu0 %v152
    %v549 = vpop.f32.mrf.mxu0
    %v550 = vadd.f32 %v485, %v549
    %551 = vmatmul.f32.gmra.mxu0 %v156
    %v552 = vpop.f32.mrf.mxu0
    %v553 = vadd.f32 %v488, %v552
    %554 = vdwg.mxu0
    %555 = vmatpush.msra.mxu0 %v347
    %556 = vmatpush.msra.mxu0 %v343
    %557 = vmatpush.msra.mxu0 %v339
    %558 = vmatpush.msra.mxu0 %v335
    %559 = vmatpush.msra.mxu0 %v331
    %560 = vmatpush.msra.mxu0 %v327
    %561 = vmatpush.msra.mxu0 %v323
    %562 = vmatpush.msra.mxu0 %v319
    %563 = vmatpush.msra.mxu0 %v315
    %564 = vmatpush.msra.mxu0 %v311
    %565 = vmatpush.msra.mxu0 %v307
    %566 = vmatpush.msra.mxu0 %v303
    %567 = vmatpush.msra.mxu0 %v299
    %568 = vmatpush.msra.mxu0 %v295
    %569 = vmatpush.msra.mxu0 %v291
    %570 = vmatpush.msra.mxu0 %v287
    %571 = vmatmul.f32.gmra.mxu0 %v97
    %v572 = vpop.f32.mrf.mxu0
    %v573 = vadd.f32 %v508, %v572
    %574 = vmatmul.f32.gmra.mxu0 %v101
    %v575 = vpop.f32.mrf.mxu0
    %v576 = vadd.f32 %v511, %v575
    %577 = vmatmul.f32.gmra.mxu0 %v105
    %v578 = vpop.f32.mrf.mxu0
    %v579 = vadd.f32 %v514, %v578
    %580 = vmatmul.f32.gmra.mxu0 %v109
    %v581 = vpop.f32.mrf.mxu0
    %v582 = vadd.f32 %v517, %v581
    %583 = vmatmul.f32.gmra.mxu0 %v113
    %v584 = vpop.f32.mrf.mxu0
    %v585 = vadd.f32 %v520, %v584
    %586 = vmatmul.f32.gmra.mxu0 %v117
    %v587 = vpop.f32.mrf.mxu0
    %v588 = vadd.f32 %v523, %v587
    %589 = vmatmul.f32.gmra.mxu0 %v121
    %v590 = vpop.f32.mrf.mxu0
    %v591 = vadd.f32 %v526, %v590
    %592 = vmatmul.f32.gmra.mxu0 %v125
    %v593 = vpop.f32.mrf.mxu0
    %v594 = vadd.f32 %v529, %v593
    %595 = vmatmul.f32.gmra.mxu0 %v129
    %v596 = vpop.f32.mrf.mxu0
    %v597 = vadd.f32 %v532, %v596
    %598 = vmatmul.f32.gmra.mxu0 %v133
    %v599 = vpop.f32.mrf.mxu0
    %v600 = vadd.f32 %v535, %v599
    %601 = vmatmul.f32.gmra.mxu0 %v137
    %v602 = vpop.f32.mrf.mxu0
    %v603 = vadd.f32 %v538, %v602
    %604 = vmatmul.f32.gmra.mxu0 %v141
    %v605 = vpop.f32.mrf.mxu0
    %v606 = vadd.f32 %v541, %v605
    %607 = vmatmul.f32.gmra.mxu0 %v145
    %v608 = vpop.f32.mrf.mxu0
    %v609 = vadd.f32 %v544, %v608
    %610 = vmatmul.f32.gmra.mxu0 %v149
    %v611 = vpop.f32.mrf.mxu0
    %v612 = vadd.f32 %v547, %v611
    %613 = vmatmul.f32.gmra.mxu0 %v153
    %v614 = vpop.f32.mrf.mxu0
    %v615 = vadd.f32 %v550, %v614
    %616 = vmatmul.f32.gmra.mxu0 %v157
    %v617 = vpop.f32.mrf.mxu0
    %v618 = vadd.f32 %v553, %v617
    %619 = vdwg.mxu0
    %620 = vmatpush.msra.mxu0 %v411
    %621 = vmatpush.msra.mxu0 %v407
    %622 = vmatpush.msra.mxu0 %v403
    %623 = vmatpush.msra.mxu0 %v399
    %624 = vmatpush.msra.mxu0 %v395
    %625 = vmatpush.msra.mxu0 %v391
    %626 = vmatpush.msra.mxu0 %v387
    %627 = vmatpush.msra.mxu0 %v383
    %628 = vmatpush.msra.mxu0 %v379
    %629 = vmatpush.msra.mxu0 %v375
    %630 = vmatpush.msra.mxu0 %v371
    %631 = vmatpush.msra.mxu0 %v367
    %632 = vmatpush.msra.mxu0 %v363
    %633 = vmatpush.msra.mxu0 %v359
    %634 = vmatpush.msra.mxu0 %v355
    %635 = vmatpush.msra.mxu0 %v351
    %636 = vmatmul.f32.gmra.mxu0 %v98
    %v637 = vpop.f32.mrf.mxu0
    %v638 = vadd.f32 %v573, %v637
    %639 = vmatmul.f32.gmra.mxu0 %v102
    %v640 = vpop.f32.mrf.mxu0
    %v641 = vadd.f32 %v576, %v640
    %642 = vmatmul.f32.gmra.mxu0 %v106
    %v643 = vpop.f32.mrf.mxu0
    %v644 = vadd.f32 %v579, %v643
    %645 = vmatmul.f32.gmra.mxu0 %v110
    %v646 = vpop.f32.mrf.mxu0
    %v647 = vadd.f32 %v582, %v646
    %648 = vmatmul.f32.gmra.mxu0 %v114
    %v649 = vpop.f32.mrf.mxu0
    %v650 = vadd.f32 %v585, %v649
    %651 = vmatmul.f32.gmra.mxu0 %v118
    %v652 = vpop.f32.mrf.mxu0
    %v653 = vadd.f32 %v588, %v652
    %654 = vmatmul.f32.gmra.mxu0 %v122
    %v655 = vpop.f32.mrf.mxu0
    %v656 = vadd.f32 %v591, %v655
    %657 = vmatmul.f32.gmra.mxu0 %v126
    %v658 = vpop.f32.mrf.mxu0
    %v659 = vadd.f32 %v594, %v658
    %660 = vmatmul.f32.gmra.mxu0 %v130
    %v661 = vpop.f32.mrf.mxu0
    %v662 = vadd.f32 %v597, %v661
    %663 = vmatmul.f32.gmra.mxu0 %v134
    %v664 = vpop.f32.mrf.mxu0
    %v665 = vadd.f32 %v600, %v664
    %666 = vmatmul.f32.gmra.mxu0 %v138
    %v667 = vpop.f32.mrf.mxu0
    %v668 = vadd.f32 %v603, %v667
    %669 = vmatmul.f32.gmra.mxu0 %v142
    %v670 = vpop.f32.mrf.mxu0
    %v671 = vadd.f32 %v606, %v670
    %672 = vmatmul.f32.gmra.mxu0 %v146
    %v673 = vpop.f32.mrf.mxu0
    %v674 = vadd.f32 %v609, %v673
    %675 = vmatmul.f32.gmra.mxu0 %v150
    %v676 = vpop.f32.mrf.mxu0
    %v677 = vadd.f32 %v612, %v676
    %678 = vmatmul.f32.gmra.mxu0 %v154
    %v679 = vpop.f32.mrf.mxu0
    %v680 = vadd.f32 %v615, %v679
    %681 = vmatmul.f32.gmra.mxu0 %v158
    %v682 = vpop.f32.mrf.mxu0
    %v683 = vadd.f32 %v618, %v682
    %684 = vdwg.mxu0
    %685 = vmatpush.msra.mxu0 %v220
    %686 = vmatpush.msra.mxu0 %v216
    %687 = vmatpush.msra.mxu0 %v212
    %688 = vmatpush.msra.mxu0 %v208
    %689 = vmatpush.msra.mxu0 %v204
    %690 = vmatpush.msra.mxu0 %v200
    %691 = vmatpush.msra.mxu0 %v196
    %692 = vmatpush.msra.mxu0 %v192
    %693 = vmatpush.msra.mxu0 %v188
    %694 = vmatpush.msra.mxu0 %v184
    %695 = vmatpush.msra.mxu0 %v180
    %696 = vmatpush.msra.mxu0 %v176
    %697 = vmatpush.msra.mxu0 %v172
    %698 = vmatpush.msra.mxu0 %v168
    %699 = vmatpush.msra.mxu0 %v164
    %700 = vmatpush.msra.mxu0 %v160
    %701 = vmatmul.f32.gmra.mxu0 %v95
    %v702 = vpop.f32.mrf.mxu0
    %v703 = vadd.f32 %v418, %v702
    %704 = vmatmul.f32.gmra.mxu0 %v99
    %v705 = vpop.f32.mrf.mxu0
    %v706 = vadd.f32 %v418, %v705
    %707 = vmatmul.f32.gmra.mxu0 %v103
    %v708 = vpop.f32.mrf.mxu0
    %v709 = vadd.f32 %v418, %v708
    %710 = vmatmul.f32.gmra.mxu0 %v107
    %v711 = vpop.f32.mrf.mxu0
    %v712 = vadd.f32 %v418, %v711
    %713 = vmatmul.f32.gmra.mxu0 %v111
    %v714 = vpop.f32.mrf.mxu0
    %v715 = vadd.f32 %v418, %v714
    %716 = vmatmul.f32.gmra.mxu0 %v115
    %v717 = vpop.f32.mrf.mxu0
    %v718 = vadd.f32 %v418, %v717
    %719 = vmatmul.f32.gmra.mxu0 %v119
    %v720 = vpop.f32.mrf.mxu0
    %v721 = vadd.f32 %v418, %v720
    %722 = vmatmul.f32.gmra.mxu0 %v123
    %v723 = vpop.f32.mrf.mxu0
    %v724 = vadd.f32 %v418, %v723
    %725 = vmatmul.f32.gmra.mxu0 %v127
    %v726 = vpop.f32.mrf.mxu0
    %v727 = vadd.f32 %v418, %v726
    %728 = vmatmul.f32.gmra.mxu0 %v131
    %v729 = vpop.f32.mrf.mxu0
    %v730 = vadd.f32 %v418, %v729
    %731 = vmatmul.f32.gmra.mxu0 %v135
    %v732 = vpop.f32.mrf.mxu0
    %v733 = vadd.f32 %v418, %v732
    %734 = vmatmul.f32.gmra.mxu0 %v139
    %v735 = vpop.f32.mrf.mxu0
    %v736 = vadd.f32 %v418, %v735
    %737 = vmatmul.f32.gmra.mxu0 %v143
    %v738 = vpop.f32.mrf.mxu0
    %v739 = vadd.f32 %v418, %v738
    %740 = vmatmul.f32.gmra.mxu0 %v147
    %v741 = vpop.f32.mrf.mxu0
    %v742 = vadd.f32 %v418, %v741
    %743 = vmatmul.f32.gmra.mxu0 %v151
    %v744 = vpop.f32.mrf.mxu0
    %v745 = vadd.f32 %v418, %v744
    %746 = vmatmul.f32.gmra.mxu0 %v155
    %v747 = vpop.f32.mrf.mxu0
    %v748 = vadd.f32 %v418, %v747
    %749 = vdwg.mxu0
    %750 = vmatpush.msra.mxu0 %v284
    %751 = vmatpush.msra.mxu0 %v280
    %752 = vmatpush.msra.mxu0 %v276
    %753 = vmatpush.msra.mxu0 %v272
    %754 = vmatpush.msra.mxu0 %v268
    %755 = vmatpush.msra.mxu0 %v264
    %756 = vmatpush.msra.mxu0 %v260
    %757 = vmatpush.msra.mxu0 %v256
    %758 = vmatpush.msra.mxu0 %v252
    %759 = vmatpush.msra.mxu0 %v248
    %760 = vmatpush.msra.mxu0 %v244
    %761 = vmatpush.msra.mxu0 %v240
    %762 = vmatpush.msra.mxu0 %v236
    %763 = vmatpush.msra.mxu0 %v232
    %764 = vmatpush.msra.mxu0 %v228
    %765 = vmatpush.msra.mxu0 %v224
    %766 = vmatmul.f32.gmra.mxu0 %v96
    %v767 = vpop.f32.mrf.mxu0
    %v768 = vadd.f32 %v703, %v767
    %769 = vmatmul.f32.gmra.mxu0 %v100
    %v770 = vpop.f32.mrf.mxu0
    %v771 = vadd.f32 %v706, %v770
    %772 = vmatmul.f32.gmra.mxu0 %v104
    %v773 = vpop.f32.mrf.mxu0
    %v774 = vadd.f32 %v709, %v773
    %775 = vmatmul.f32.gmra.mxu0 %v108
    %v776 = vpop.f32.mrf.mxu0
    %v777 = vadd.f32 %v712, %v776
    %778 = vmatmul.f32.gmra.mxu0 %v112
    %v779 = vpop.f32.mrf.mxu0
    %v780 = vadd.f32 %v715, %v779
    %781 = vmatmul.f32.gmra.mxu0 %v116
    %v782 = vpop.f32.mrf.mxu0
    %v783 = vadd.f32 %v718, %v782
    %784 = vmatmul.f32.gmra.mxu0 %v120
    %v785 = vpop.f32.mrf.mxu0
    %v786 = vadd.f32 %v721, %v785
    %787 = vmatmul.f32.gmra.mxu0 %v124
    %v788 = vpop.f32.mrf.mxu0
    %v789 = vadd.f32 %v724, %v788
    %790 = vmatmul.f32.gmra.mxu0 %v128
    %v791 = vpop.f32.mrf.mxu0
    %v792 = vadd.f32 %v727, %v791
    %793 = vmatmul.f32.gmra.mxu0 %v132
    %v794 = vpop.f32.mrf.mxu0
    %v795 = vadd.f32 %v730, %v794
    %796 = vmatmul.f32.gmra.mxu0 %v136
    %v797 = vpop.f32.mrf.mxu0
    %v798 = vadd.f32 %v733, %v797
    %799 = vmatmul.f32.gmra.mxu0 %v140
    %v800 = vpop.f32.mrf.mxu0
    %v801 = vadd.f32 %v736, %v800
    %802 = vmatmul.f32.gmra.mxu0 %v144
    %v803 = vpop.f32.mrf.mxu0
    %v804 = vadd.f32 %v739, %v803
    %805 = vmatmul.f32.gmra.mxu0 %v148
    %v806 = vpop.f32.mrf.mxu0
    %v807 = vadd.f32 %v742, %v806
    %808 = vmatmul.f32.gmra.mxu0 %v152
    %v809 = vpop.f32.mrf.mxu0
    %v810 = vadd.f32 %v745, %v809
    %811 = vmatmul.f32.gmra.mxu0 %v156
    %v812 = vpop.f32.mrf.mxu0
    %v813 = vadd.f32 %v748, %v812
    %814 = vdwg.mxu0
    %815 = vmatpush.msra.mxu0 %v348
    %816 = vmatpush.msra.mxu0 %v344
    %817 = vmatpush.msra.mxu0 %v340
    %818 = vmatpush.msra.mxu0 %v336
    %819 = vmatpush.msra.mxu0 %v332
    %820 = vmatpush.msra.mxu0 %v328
    %821 = vmatpush.msra.mxu0 %v324
    %822 = vmatpush.msra.mxu0 %v320
    %823 = vmatpush.msra.mxu0 %v316
    %824 = vmatpush.msra.mxu0 %v312
    %825 = vmatpush.msra.mxu0 %v308
    %826 = vmatpush.msra.mxu0 %v304
    %827 = vmatpush.msra.mxu0 %v300
    %828 = vmatpush.msra.mxu0 %v296
    %829 = vmatpush.msra.mxu0 %v292
    %830 = vmatpush.msra.mxu0 %v288
    %831 = vmatmul.f32.gmra.mxu0 %v97
    %v832 = vpop.f32.mrf.mxu0
    %v833 = vadd.f32 %v768, %v832
    %834 = vmatmul.f32.gmra.mxu0 %v101
    %v835 = vpop.f32.mrf.mxu0
    %v836 = vadd.f32 %v771, %v835
    %837 = vmatmul.f32.gmra.mxu0 %v105
    %v838 = vpop.f32.mrf.mxu0
    %v839 = vadd.f32 %v774, %v838
    %840 = vmatmul.f32.gmra.mxu0 %v109
    %v841 = vpop.f32.mrf.mxu0
    %v842 = vadd.f32 %v777, %v841
    %843 = vmatmul.f32.gmra.mxu0 %v113
    %v844 = vpop.f32.mrf.mxu0
    %v845 = vadd.f32 %v780, %v844
    %846 = vmatmul.f32.gmra.mxu0 %v117
    %v847 = vpop.f32.mrf.mxu0
    %v848 = vadd.f32 %v783, %v847
    %849 = vmatmul.f32.gmra.mxu0 %v121
    %v850 = vpop.f32.mrf.mxu0
    %v851 = vadd.f32 %v786, %v850
    %852 = vmatmul.f32.gmra.mxu0 %v125
    %v853 = vpop.f32.mrf.mxu0
    %v854 = vadd.f32 %v789, %v853
    %855 = vmatmul.f32.gmra.mxu0 %v129
    %v856 = vpop.f32.mrf.mxu0
    %v857 = vadd.f32 %v792, %v856
    %858 = vmatmul.f32.gmra.mxu0 %v133
    %v859 = vpop.f32.mrf.mxu0
    %v860 = vadd.f32 %v795, %v859
    %861 = vmatmul.f32.gmra.mxu0 %v137
    %v862 = vpop.f32.mrf.mxu0
    %v863 = vadd.f32 %v798, %v862
    %864 = vmatmul.f32.gmra.mxu0 %v141
    %v865 = vpop.f32.mrf.mxu0
    %v866 = vadd.f32 %v801, %v865
    %867 = vmatmul.f32.gmra.mxu0 %v145
    %v868 = vpop.f32.mrf.mxu0
    %v869 = vadd.f32 %v804, %v868
    %870 = vmatmul.f32.gmra.mxu0 %v149
    %v871 = vpop.f32.mrf.mxu0
    %v872 = vadd.f32 %v807, %v871
    %873 = vmatmul.f32.gmra.mxu0 %v153
    %v874 = vpop.f32.mrf.mxu0
    %v875 = vadd.f32 %v810, %v874
    %876 = vmatmul.f32.gmra.mxu0 %v157
    %v877 = vpop.f32.mrf.mxu0
    %v878 = vadd.f32 %v813, %v877
    %879 = vdwg.mxu0
    %880 = vmatpush.msra.mxu0 %v412
    %881 = vmatpush.msra.mxu0 %v408
    %882 = vmatpush.msra.mxu0 %v404
    %883 = vmatpush.msra.mxu0 %v400
    %884 = vmatpush.msra.mxu0 %v396
    %885 = vmatpush.msra.mxu0 %v392
    %886 = vmatpush.msra.mxu0 %v388
    %887 = vmatpush.msra.mxu0 %v384
    %888 = vmatpush.msra.mxu0 %v380
    %889 = vmatpush.msra.mxu0 %v376
    %890 = vmatpush.msra.mxu0 %v372
    %891 = vmatpush.msra.mxu0 %v368
    %892 = vmatpush.msra.mxu0 %v364
    %893 = vmatpush.msra.mxu0 %v360
    %894 = vmatpush.msra.mxu0 %v356
    %895 = vmatpush.msra.mxu0 %v352
    %896 = vmatmul.f32.gmra.mxu0 %v98
    %v897 = vpop.f32.mrf.mxu0
    %v898 = vadd.f32 %v833, %v897
    %899 = vmatmul.f32.gmra.mxu0 %v102
    %v900 = vpop.f32.mrf.mxu0
    %v901 = vadd.f32 %v836, %v900
    %902 = vmatmul.f32.gmra.mxu0 %v106
    %v903 = vpop.f32.mrf.mxu0
    %v904 = vadd.f32 %v839, %v903
    %905 = vmatmul.f32.gmra.mxu0 %v110
    %v906 = vpop.f32.mrf.mxu0
    %v907 = vadd.f32 %v842, %v906
    %908 = vmatmul.f32.gmra.mxu0 %v114
    %v909 = vpop.f32.mrf.mxu0
    %v910 = vadd.f32 %v845, %v909
    %911 = vmatmul.f32.gmra.mxu0 %v118
    %v912 = vpop.f32.mrf.mxu0
    %v913 = vadd.f32 %v848, %v912
    %914 = vmatmul.f32.gmra.mxu0 %v122
    %v915 = vpop.f32.mrf.mxu0
    %v916 = vadd.f32 %v851, %v915
    %917 = vmatmul.f32.gmra.mxu0 %v126
    %v918 = vpop.f32.mrf.mxu0
    %v919 = vadd.f32 %v854, %v918
    %920 = vmatmul.f32.gmra.mxu0 %v130
    %v921 = vpop.f32.mrf.mxu0
    %v922 = vadd.f32 %v857, %v921
    %923 = vmatmul.f32.gmra.mxu0 %v134
    %v924 = vpop.f32.mrf.mxu0
    %v925 = vadd.f32 %v860, %v924
    %926 = vmatmul.f32.gmra.mxu0 %v138
    %v927 = vpop.f32.mrf.mxu0
    %v928 = vadd.f32 %v863, %v927
    %929 = vmatmul.f32.gmra.mxu0 %v142
    %v930 = vpop.f32.mrf.mxu0
    %v931 = vadd.f32 %v866, %v930
    %932 = vmatmul.f32.gmra.mxu0 %v146
    %v933 = vpop.f32.mrf.mxu0
    %v934 = vadd.f32 %v869, %v933
    %935 = vmatmul.f32.gmra.mxu0 %v150
    %v936 = vpop.f32.mrf.mxu0
    %v937 = vadd.f32 %v872, %v936
    %938 = vmatmul.f32.gmra.mxu0 %v154
    %v939 = vpop.f32.mrf.mxu0
    %v940 = vadd.f32 %v875, %v939
    %941 = vmatmul.f32.gmra.mxu0 %v158
    %v942 = vpop.f32.mrf.mxu0
    %v943 = vadd.f32 %v878, %v942
    %944 = vdwg.mxu0
    %945 = vmatpush.msra.mxu0 %v221
    %946 = vmatpush.msra.mxu0 %v217
    %947 = vmatpush.msra.mxu0 %v213
    %948 = vmatpush.msra.mxu0 %v209
    %949 = vmatpush.msra.mxu0 %v205
    %950 = vmatpush.msra.mxu0 %v201
    %951 = vmatpush.msra.mxu0 %v197
    %952 = vmatpush.msra.mxu0 %v193
    %953 = vmatpush.msra.mxu0 %v189
    %954 = vmatpush.msra.mxu0 %v185
    %955 = vmatpush.msra.mxu0 %v181
    %956 = vmatpush.msra.mxu0 %v177
    %957 = vmatpush.msra.mxu0 %v173
    %958 = vmatpush.msra.mxu0 %v169
    %959 = vmatpush.msra.mxu0 %v165
    %960 = vmatpush.msra.mxu0 %v161
    %961 = vmatmul.f32.gmra.mxu0 %v95
    %v962 = vpop.f32.mrf.mxu0
    %v963 = vadd.f32 %v419, %v962
    %964 = vmatmul.f32.gmra.mxu0 %v99
    %v965 = vpop.f32.mrf.mxu0
    %v966 = vadd.f32 %v419, %v965
    %967 = vmatmul.f32.gmra.mxu0 %v103
    %v968 = vpop.f32.mrf.mxu0
    %v969 = vadd.f32 %v419, %v968
    %970 = vmatmul.f32.gmra.mxu0 %v107
    %v971 = vpop.f32.mrf.mxu0
    %v972 = vadd.f32 %v419, %v971
    %973 = vmatmul.f32.gmra.mxu0 %v111
    %v974 = vpop.f32.mrf.mxu0
    %v975 = vadd.f32 %v419, %v974
    %976 = vmatmul.f32.gmra.mxu0 %v115
    %v977 = vpop.f32.mrf.mxu0
    %v978 = vadd.f32 %v419, %v977
    %979 = vmatmul.f32.gmra.mxu0 %v119
    %v980 = vpop.f32.mrf.mxu0
    %v981 = vadd.f32 %v419, %v980
    %982 = vmatmul.f32.gmra.mxu0 %v123
    %v983 = vpop.f32.mrf.mxu0
    %v984 = vadd.f32 %v419, %v983
    %985 = vmatmul.f32.gmra.mxu0 %v127
    %v986 = vpop.f32.mrf.mxu0
    %v987 = vadd.f32 %v419, %v986
    %988 = vmatmul.f32.gmra.mxu0 %v131
    %v989 = vpop.f32.mrf.mxu0
    %v990 = vadd.f32 %v419, %v989
    %991 = vmatmul.f32.gmra.mxu0 %v135
    %v992 = vpop.f32.mrf.mxu0
    %v993 = vadd.f32 %v419, %v992
    %994 = vmatmul.f32.gmra.mxu0 %v139
    %v995 = vpop.f32.mrf.mxu0
    %v996 = vadd.f32 %v419, %v995
    %997 = vmatmul.f32.gmra.mxu0 %v143
    %v998 = vpop.f32.mrf.mxu0
    %v999 = vadd.f32 %v419, %v998
    %1000 = vmatmul.f32.gmra.mxu0 %v147
    %v1001 = vpop.f32.mrf.mxu0
    %v1002 = vadd.f32 %v419, %v1001
    %1003 = vmatmul.f32.gmra.mxu0 %v151
    %v1004 = vpop.f32.mrf.mxu0
    %v1005 = vadd.f32 %v419, %v1004
    %1006 = vmatmul.f32.gmra.mxu0 %v155
    %v1007 = vpop.f32.mrf.mxu0
    %v1008 = vadd.f32 %v419, %v1007
    %1009 = vdwg.mxu0
    %1010 = vmatpush.msra.mxu0 %v285
    %1011 = vmatpush.msra.mxu0 %v281
    %1012 = vmatpush.msra.mxu0 %v277
    %1013 = vmatpush.msra.mxu0 %v273
    %1014 = vmatpush.msra.mxu0 %v269
    %1015 = vmatpush.msra.mxu0 %v265
    %1016 = vmatpush.msra.mxu0 %v261
    %1017 = vmatpush.msra.mxu0 %v257
    %1018 = vmatpush.msra.mxu0 %v253
    %1019 = vmatpush.msra.mxu0 %v249
    %1020 = vmatpush.msra.mxu0 %v245
    %1021 = vmatpush.msra.mxu0 %v241
    %1022 = vmatpush.msra.mxu0 %v237
    %1023 = vmatpush.msra.mxu0 %v233
    %1024 = vmatpush.msra.mxu0 %v229
    %1025 = vmatpush.msra.mxu0 %v225
    %1026 = vmatmul.f32.gmra.mxu0 %v96
    %v1027 = vpop.f32.mrf.mxu0
    %v1028 = vadd.f32 %v963, %v1027
    %1029 = vmatmul.f32.gmra.mxu0 %v100
    %v1030 = vpop.f32.mrf.mxu0
    %v1031 = vadd.f32 %v966, %v1030
    %1032 = vmatmul.f32.gmra.mxu0 %v104
    %v1033 = vpop.f32.mrf.mxu0
    %v1034 = vadd.f32 %v969, %v1033
    %1035 = vmatmul.f32.gmra.mxu0 %v108
    %v1036 = vpop.f32.mrf.mxu0
    %v1037 = vadd.f32 %v972, %v1036
    %1038 = vmatmul.f32.gmra.mxu0 %v112
    %v1039 = vpop.f32.mrf.mxu0
    %v1040 = vadd.f32 %v975, %v1039
    %1041 = vmatmul.f32.gmra.mxu0 %v116
    %v1042 = vpop.f32.mrf.mxu0
    %v1043 = vadd.f32 %v978, %v1042
    %1044 = vmatmul.f32.gmra.mxu0 %v120
    %v1045 = vpop.f32.mrf.mxu0
    %v1046 = vadd.f32 %v981, %v1045
    %1047 = vmatmul.f32.gmra.mxu0 %v124
    %v1048 = vpop.f32.mrf.mxu0
    %v1049 = vadd.f32 %v984, %v1048
    %1050 = vmatmul.f32.gmra.mxu0 %v128
    %v1051 = vpop.f32.mrf.mxu0
    %v1052 = vadd.f32 %v987, %v1051
    %1053 = vmatmul.f32.gmra.mxu0 %v132
    %v1054 = vpop.f32.mrf.mxu0
    %v1055 = vadd.f32 %v990, %v1054
    %1056 = vmatmul.f32.gmra.mxu0 %v136
    %v1057 = vpop.f32.mrf.mxu0
    %v1058 = vadd.f32 %v993, %v1057
    %1059 = vmatmul.f32.gmra.mxu0 %v140
    %v1060 = vpop.f32.mrf.mxu0
    %v1061 = vadd.f32 %v996, %v1060
    %1062 = vmatmul.f32.gmra.mxu0 %v144
    %v1063 = vpop.f32.mrf.mxu0
    %v1064 = vadd.f32 %v999, %v1063
    %1065 = vmatmul.f32.gmra.mxu0 %v148
    %v1066 = vpop.f32.mrf.mxu0
    %v1067 = vadd.f32 %v1002, %v1066
    %1068 = vmatmul.f32.gmra.mxu0 %v152
    %v1069 = vpop.f32.mrf.mxu0
    %v1070 = vadd.f32 %v1005, %v1069
    %1071 = vmatmul.f32.gmra.mxu0 %v156
    %v1072 = vpop.f32.mrf.mxu0
    %v1073 = vadd.f32 %v1008, %v1072
    %1074 = vdwg.mxu0
    %1075 = vmatpush.msra.mxu0 %v349
    %1076 = vmatpush.msra.mxu0 %v345
    %1077 = vmatpush.msra.mxu0 %v341
    %1078 = vmatpush.msra.mxu0 %v337
    %1079 = vmatpush.msra.mxu0 %v333
    %1080 = vmatpush.msra.mxu0 %v329
    %1081 = vmatpush.msra.mxu0 %v325
    %1082 = vmatpush.msra.mxu0 %v321
    %1083 = vmatpush.msra.mxu0 %v317
    %1084 = vmatpush.msra.mxu0 %v313
    %1085 = vmatpush.msra.mxu0 %v309
    %1086 = vmatpush.msra.mxu0 %v305
    %1087 = vmatpush.msra.mxu0 %v301
    %1088 = vmatpush.msra.mxu0 %v297
    %1089 = vmatpush.msra.mxu0 %v293
    %1090 = vmatpush.msra.mxu0 %v289
    %1091 = vmatmul.f32.gmra.mxu0 %v97
    %v1092 = vpop.f32.mrf.mxu0
    %v1093 = vadd.f32 %v1028, %v1092
    %1094 = vmatmul.f32.gmra.mxu0 %v101
    %v1095 = vpop.f32.mrf.mxu0
    %v1096 = vadd.f32 %v1031, %v1095
    %1097 = vmatmul.f32.gmra.mxu0 %v105
    %v1098 = vpop.f32.mrf.mxu0
    %v1099 = vadd.f32 %v1034, %v1098
    %1100 = vmatmul.f32.gmra.mxu0 %v109
    %v1101 = vpop.f32.mrf.mxu0
    %v1102 = vadd.f32 %v1037, %v1101
    %1103 = vmatmul.f32.gmra.mxu0 %v113
    %v1104 = vpop.f32.mrf.mxu0
    %v1105 = vadd.f32 %v1040, %v1104
    %1106 = vmatmul.f32.gmra.mxu0 %v117
    %v1107 = vpop.f32.mrf.mxu0
    %v1108 = vadd.f32 %v1043, %v1107
    %1109 = vmatmul.f32.gmra.mxu0 %v121
    %v1110 = vpop.f32.mrf.mxu0
    %v1111 = vadd.f32 %v1046, %v1110
    %1112 = vmatmul.f32.gmra.mxu0 %v125
    %v1113 = vpop.f32.mrf.mxu0
    %v1114 = vadd.f32 %v1049, %v1113
    %1115 = vmatmul.f32.gmra.mxu0 %v129
    %v1116 = vpop.f32.mrf.mxu0
    %v1117 = vadd.f32 %v1052, %v1116
    %1118 = vmatmul.f32.gmra.mxu0 %v133
    %v1119 = vpop.f32.mrf.mxu0
    %v1120 = vadd.f32 %v1055, %v1119
    %1121 = vmatmul.f32.gmra.mxu0 %v137
    %v1122 = vpop.f32.mrf.mxu0
    %v1123 = vadd.f32 %v1058, %v1122
    %1124 = vmatmul.f32.gmra.mxu0 %v141
    %v1125 = vpop.f32.mrf.mxu0
    %v1126 = vadd.f32 %v1061, %v1125
    %1127 = vmatmul.f32.gmra.mxu0 %v145
    %v1128 = vpop.f32.mrf.mxu0
    %v1129 = vadd.f32 %v1064, %v1128
    %1130 = vmatmul.f32.gmra.mxu0 %v149
    %v1131 = vpop.f32.mrf.mxu0
    %v1132 = vadd.f32 %v1067, %v1131
    %1133 = vmatmul.f32.gmra.mxu0 %v153
    %v1134 = vpop.f32.mrf.mxu0
    %v1135 = vadd.f32 %v1070, %v1134
    %1136 = vmatmul.f32.gmra.mxu0 %v157
    %v1137 = vpop.f32.mrf.mxu0
    %v1138 = vadd.f32 %v1073, %v1137
    %1139 = vdwg.mxu0
    %1140 = vmatpush.msra.mxu0 %v413
    %1141 = vmatpush.msra.mxu0 %v409
    %1142 = vmatpush.msra.mxu0 %v405
    %1143 = vmatpush.msra.mxu0 %v401
    %1144 = vmatpush.msra.mxu0 %v397
    %1145 = vmatpush.msra.mxu0 %v393
    %1146 = vmatpush.msra.mxu0 %v389
    %1147 = vmatpush.msra.mxu0 %v385
    %1148 = vmatpush.msra.mxu0 %v381
    %1149 = vmatpush.msra.mxu0 %v377
    %1150 = vmatpush.msra.mxu0 %v373
    %1151 = vmatpush.msra.mxu0 %v369
    %1152 = vmatpush.msra.mxu0 %v365
    %1153 = vmatpush.msra.mxu0 %v361
    %1154 = vmatpush.msra.mxu0 %v357
    %1155 = vmatpush.msra.mxu0 %v353
    %1156 = vmatmul.f32.gmra.mxu0 %v98
    %v1157 = vpop.f32.mrf.mxu0
    %v1158 = vadd.f32 %v1093, %v1157
    %1159 = vmatmul.f32.gmra.mxu0 %v102
    %v1160 = vpop.f32.mrf.mxu0
    %v1161 = vadd.f32 %v1096, %v1160
    %1162 = vmatmul.f32.gmra.mxu0 %v106
    %v1163 = vpop.f32.mrf.mxu0
    %v1164 = vadd.f32 %v1099, %v1163
    %1165 = vmatmul.f32.gmra.mxu0 %v110
    %v1166 = vpop.f32.mrf.mxu0
    %v1167 = vadd.f32 %v1102, %v1166
    %1168 = vmatmul.f32.gmra.mxu0 %v114
    %v1169 = vpop.f32.mrf.mxu0
    %v1170 = vadd.f32 %v1105, %v1169
    %1171 = vmatmul.f32.gmra.mxu0 %v118
    %v1172 = vpop.f32.mrf.mxu0
    %v1173 = vadd.f32 %v1108, %v1172
    %1174 = vmatmul.f32.gmra.mxu0 %v122
    %v1175 = vpop.f32.mrf.mxu0
    %v1176 = vadd.f32 %v1111, %v1175
    %1177 = vmatmul.f32.gmra.mxu0 %v126
    %v1178 = vpop.f32.mrf.mxu0
    %v1179 = vadd.f32 %v1114, %v1178
    %1180 = vmatmul.f32.gmra.mxu0 %v130
    %v1181 = vpop.f32.mrf.mxu0
    %v1182 = vadd.f32 %v1117, %v1181
    %1183 = vmatmul.f32.gmra.mxu0 %v134
    %v1184 = vpop.f32.mrf.mxu0
    %v1185 = vadd.f32 %v1120, %v1184
    %1186 = vmatmul.f32.gmra.mxu0 %v138
    %v1187 = vpop.f32.mrf.mxu0
    %v1188 = vadd.f32 %v1123, %v1187
    %1189 = vmatmul.f32.gmra.mxu0 %v142
    %v1190 = vpop.f32.mrf.mxu0
    %v1191 = vadd.f32 %v1126, %v1190
    %1192 = vmatmul.f32.gmra.mxu0 %v146
    %v1193 = vpop.f32.mrf.mxu0
    %v1194 = vadd.f32 %v1129, %v1193
    %1195 = vmatmul.f32.gmra.mxu0 %v150
    %v1196 = vpop.f32.mrf.mxu0
    %v1197 = vadd.f32 %v1132, %v1196
    %1198 = vmatmul.f32.gmra.mxu0 %v154
    %v1199 = vpop.f32.mrf.mxu0
    %v1200 = vadd.f32 %v1135, %v1199
    %1201 = vmatmul.f32.gmra.mxu0 %v158
    %v1202 = vpop.f32.mrf.mxu0
    %v1203 = vadd.f32 %v1138, %v1202
    %1204 = vdwg.mxu0
    %1205 = vmatpush.msra.mxu0 %v222
    %1206 = vmatpush.msra.mxu0 %v218
    %1207 = vmatpush.msra.mxu0 %v214
    %1208 = vmatpush.msra.mxu0 %v210
    %1209 = vmatpush.msra.mxu0 %v206
    %1210 = vmatpush.msra.mxu0 %v202
    %1211 = vmatpush.msra.mxu0 %v198
    %1212 = vmatpush.msra.mxu0 %v194
    %1213 = vmatpush.msra.mxu0 %v190
    %1214 = vmatpush.msra.mxu0 %v186
    %1215 = vmatpush.msra.mxu0 %v182
    %1216 = vmatpush.msra.mxu0 %v178
    %1217 = vmatpush.msra.mxu0 %v174
    %1218 = vmatpush.msra.mxu0 %v170
    %1219 = vmatpush.msra.mxu0 %v166
    %1220 = vmatpush.msra.mxu0 %v162
    %1221 = vmatmul.f32.gmra.mxu0 %v95
    %v1222 = vpop.f32.mrf.mxu0
    %v1223 = vadd.f32 %v420, %v1222
    %1224 = vmatmul.f32.gmra.mxu0 %v99
    %v1225 = vpop.f32.mrf.mxu0
    %v1226 = vadd.f32 %v420, %v1225
    %1227 = vmatmul.f32.gmra.mxu0 %v103
    %v1228 = vpop.f32.mrf.mxu0
    %v1229 = vadd.f32 %v420, %v1228
    %1230 = vmatmul.f32.gmra.mxu0 %v107
    %v1231 = vpop.f32.mrf.mxu0
    %v1232 = vadd.f32 %v420, %v1231
    %1233 = vmatmul.f32.gmra.mxu0 %v111
    %v1234 = vpop.f32.mrf.mxu0
    %v1235 = vadd.f32 %v420, %v1234
    %1236 = vmatmul.f32.gmra.mxu0 %v115
    %v1237 = vpop.f32.mrf.mxu0
    %v1238 = vadd.f32 %v420, %v1237
    %1239 = vmatmul.f32.gmra.mxu0 %v119
    %v1240 = vpop.f32.mrf.mxu0
    %v1241 = vadd.f32 %v420, %v1240
    %1242 = vmatmul.f32.gmra.mxu0 %v123
    %v1243 = vpop.f32.mrf.mxu0
    %v1244 = vadd.f32 %v420, %v1243
    %1245 = vmatmul.f32.gmra.mxu0 %v127
    %v1246 = vpop.f32.mrf.mxu0
    %v1247 = vadd.f32 %v420, %v1246
    %1248 = vmatmul.f32.gmra.mxu0 %v131
    %v1249 = vpop.f32.mrf.mxu0
    %v1250 = vadd.f32 %v420, %v1249
    %1251 = vmatmul.f32.gmra.mxu0 %v135
    %v1252 = vpop.f32.mrf.mxu0
    %v1253 = vadd.f32 %v420, %v1252
    %1254 = vmatmul.f32.gmra.mxu0 %v139
    %v1255 = vpop.f32.mrf.mxu0
    %v1256 = vadd.f32 %v420, %v1255
    %1257 = vmatmul.f32.gmra.mxu0 %v143
    %v1258 = vpop.f32.mrf.mxu0
    %v1259 = vadd.f32 %v420, %v1258
    %1260 = vmatmul.f32.gmra.mxu0 %v147
    %v1261 = vpop.f32.mrf.mxu0
    %v1262 = vadd.f32 %v420, %v1261
    %1263 = vmatmul.f32.gmra.mxu0 %v151
    %v1264 = vpop.f32.mrf.mxu0
    %v1265 = vadd.f32 %v420, %v1264
    %1266 = vmatmul.f32.gmra.mxu0 %v155
    %v1267 = vpop.f32.mrf.mxu0
    %v1268 = vadd.f32 %v420, %v1267
    %1269 = vdwg.mxu0
    %1270 = vmatpush.msra.mxu0 %v286
    %1271 = vmatpush.msra.mxu0 %v282
    %1272 = vmatpush.msra.mxu0 %v278
    %1273 = vmatpush.msra.mxu0 %v274
    %1274 = vmatpush.msra.mxu0 %v270
    %1275 = vmatpush.msra.mxu0 %v266
    %1276 = vmatpush.msra.mxu0 %v262
    %1277 = vmatpush.msra.mxu0 %v258
    %1278 = vmatpush.msra.mxu0 %v254
    %1279 = vmatpush.msra.mxu0 %v250
    %1280 = vmatpush.msra.mxu0 %v246
    %1281 = vmatpush.msra.mxu0 %v242
    %1282 = vmatpush.msra.mxu0 %v238
    %1283 = vmatpush.msra.mxu0 %v234
    %1284 = vmatpush.msra.mxu0 %v230
    %1285 = vmatpush.msra.mxu0 %v226
    %1286 = vmatmul.f32.gmra.mxu0 %v96
    %v1287 = vpop.f32.mrf.mxu0
    %v1288 = vadd.f32 %v1223, %v1287
    %1289 = vmatmul.f32.gmra.mxu0 %v100
    %v1290 = vpop.f32.mrf.mxu0
    %v1291 = vadd.f32 %v1226, %v1290
    %1292 = vmatmul.f32.gmra.mxu0 %v104
    %v1293 = vpop.f32.mrf.mxu0
    %v1294 = vadd.f32 %v1229, %v1293
    %1295 = vmatmul.f32.gmra.mxu0 %v108
    %v1296 = vpop.f32.mrf.mxu0
    %v1297 = vadd.f32 %v1232, %v1296
    %1298 = vmatmul.f32.gmra.mxu0 %v112
    %v1299 = vpop.f32.mrf.mxu0
    %v1300 = vadd.f32 %v1235, %v1299
    %1301 = vmatmul.f32.gmra.mxu0 %v116
    %v1302 = vpop.f32.mrf.mxu0
    %v1303 = vadd.f32 %v1238, %v1302
    %1304 = vmatmul.f32.gmra.mxu0 %v120
    %v1305 = vpop.f32.mrf.mxu0
    %v1306 = vadd.f32 %v1241, %v1305
    %1307 = vmatmul.f32.gmra.mxu0 %v124
    %v1308 = vpop.f32.mrf.mxu0
    %v1309 = vadd.f32 %v1244, %v1308
    %1310 = vmatmul.f32.gmra.mxu0 %v128
    %v1311 = vpop.f32.mrf.mxu0
    %v1312 = vadd.f32 %v1247, %v1311
    %1313 = vmatmul.f32.gmra.mxu0 %v132
    %v1314 = vpop.f32.mrf.mxu0
    %v1315 = vadd.f32 %v1250, %v1314
    %1316 = vmatmul.f32.gmra.mxu0 %v136
    %v1317 = vpop.f32.mrf.mxu0
    %v1318 = vadd.f32 %v1253, %v1317
    %1319 = vmatmul.f32.gmra.mxu0 %v140
    %v1320 = vpop.f32.mrf.mxu0
    %v1321 = vadd.f32 %v1256, %v1320
    %1322 = vmatmul.f32.gmra.mxu0 %v144
    %v1323 = vpop.f32.mrf.mxu0
    %v1324 = vadd.f32 %v1259, %v1323
    %1325 = vmatmul.f32.gmra.mxu0 %v148
    %v1326 = vpop.f32.mrf.mxu0
    %v1327 = vadd.f32 %v1262, %v1326
    %1328 = vmatmul.f32.gmra.mxu0 %v152
    %v1329 = vpop.f32.mrf.mxu0
    %v1330 = vadd.f32 %v1265, %v1329
    %1331 = vmatmul.f32.gmra.mxu0 %v156
    %v1332 = vpop.f32.mrf.mxu0
    %v1333 = vadd.f32 %v1268, %v1332
    %1334 = vdwg.mxu0
    %1335 = vmatpush.msra.mxu0 %v350
    %1336 = vmatpush.msra.mxu0 %v346
    %1337 = vmatpush.msra.mxu0 %v342
    %1338 = vmatpush.msra.mxu0 %v338
    %1339 = vmatpush.msra.mxu0 %v334
    %1340 = vmatpush.msra.mxu0 %v330
    %1341 = vmatpush.msra.mxu0 %v326
    %1342 = vmatpush.msra.mxu0 %v322
    %1343 = vmatpush.msra.mxu0 %v318
    %1344 = vmatpush.msra.mxu0 %v314
    %1345 = vmatpush.msra.mxu0 %v310
    %1346 = vmatpush.msra.mxu0 %v306
    %1347 = vmatpush.msra.mxu0 %v302
    %1348 = vmatpush.msra.mxu0 %v298
    %1349 = vmatpush.msra.mxu0 %v294
    %1350 = vmatpush.msra.mxu0 %v290
    %1351 = vmatmul.f32.gmra.mxu0 %v97
    %v1352 = vpop.f32.mrf.mxu0
    %v1353 = vadd.f32 %v1288, %v1352
    %1354 = vmatmul.f32.gmra.mxu0 %v101
    %v1355 = vpop.f32.mrf.mxu0
    %v1356 = vadd.f32 %v1291, %v1355
    %1357 = vmatmul.f32.gmra.mxu0 %v105
    %v1358 = vpop.f32.mrf.mxu0
    %v1359 = vadd.f32 %v1294, %v1358
    %1360 = vmatmul.f32.gmra.mxu0 %v109
    %v1361 = vpop.f32.mrf.mxu0
    %v1362 = vadd.f32 %v1297, %v1361
    %1363 = vmatmul.f32.gmra.mxu0 %v113
    %v1364 = vpop.f32.mrf.mxu0
    %v1365 = vadd.f32 %v1300, %v1364
    %1366 = vmatmul.f32.gmra.mxu0 %v117
    %v1367 = vpop.f32.mrf.mxu0
    %v1368 = vadd.f32 %v1303, %v1367
    %1369 = vmatmul.f32.gmra.mxu0 %v121
    %v1370 = vpop.f32.mrf.mxu0
    %v1371 = vadd.f32 %v1306, %v1370
    %1372 = vmatmul.f32.gmra.mxu0 %v125
    %v1373 = vpop.f32.mrf.mxu0
    %v1374 = vadd.f32 %v1309, %v1373
    %1375 = vmatmul.f32.gmra.mxu0 %v129
    %v1376 = vpop.f32.mrf.mxu0
    %v1377 = vadd.f32 %v1312, %v1376
    %1378 = vmatmul.f32.gmra.mxu0 %v133
    %v1379 = vpop.f32.mrf.mxu0
    %v1380 = vadd.f32 %v1315, %v1379
    %1381 = vmatmul.f32.gmra.mxu0 %v137
    %v1382 = vpop.f32.mrf.mxu0
    %v1383 = vadd.f32 %v1318, %v1382
    %1384 = vmatmul.f32.gmra.mxu0 %v141
    %v1385 = vpop.f32.mrf.mxu0
    %v1386 = vadd.f32 %v1321, %v1385
    %1387 = vmatmul.f32.gmra.mxu0 %v145
    %v1388 = vpop.f32.mrf.mxu0
    %v1389 = vadd.f32 %v1324, %v1388
    %1390 = vmatmul.f32.gmra.mxu0 %v149
    %v1391 = vpop.f32.mrf.mxu0
    %v1392 = vadd.f32 %v1327, %v1391
    %1393 = vmatmul.f32.gmra.mxu0 %v153
    %v1394 = vpop.f32.mrf.mxu0
    %v1395 = vadd.f32 %v1330, %v1394
    %1396 = vmatmul.f32.gmra.mxu0 %v157
    %v1397 = vpop.f32.mrf.mxu0
    %v1398 = vadd.f32 %v1333, %v1397
    %1399 = vdwg.mxu0
    %1400 = vmatpush.msra.mxu0 %v414
    %1401 = vmatpush.msra.mxu0 %v410
    %1402 = vmatpush.msra.mxu0 %v406
    %1403 = vmatpush.msra.mxu0 %v402
    %1404 = vmatpush.msra.mxu0 %v398
    %1405 = vmatpush.msra.mxu0 %v394
    %1406 = vmatpush.msra.mxu0 %v390
    %1407 = vmatpush.msra.mxu0 %v386
    %1408 = vmatpush.msra.mxu0 %v382
    %1409 = vmatpush.msra.mxu0 %v378
    %1410 = vmatpush.msra.mxu0 %v374
    %1411 = vmatpush.msra.mxu0 %v370
    %1412 = vmatpush.msra.mxu0 %v366
    %1413 = vmatpush.msra.mxu0 %v362
    %1414 = vmatpush.msra.mxu0 %v358
    %1415 = vmatpush.msra.mxu0 %v354
    %1416 = vmatmul.f32.gmra.mxu0 %v98
    %v1417 = vpop.f32.mrf.mxu0
    %v1418 = vadd.f32 %v1353, %v1417
    %1419 = vmatmul.f32.gmra.mxu0 %v102
    %v1420 = vpop.f32.mrf.mxu0
    %v1421 = vadd.f32 %v1356, %v1420
    %1422 = vmatmul.f32.gmra.mxu0 %v106
    %v1423 = vpop.f32.mrf.mxu0
    %v1424 = vadd.f32 %v1359, %v1423
    %1425 = vmatmul.f32.gmra.mxu0 %v110
    %v1426 = vpop.f32.mrf.mxu0
    %v1427 = vadd.f32 %v1362, %v1426
    %1428 = vmatmul.f32.gmra.mxu0 %v114
    %v1429 = vpop.f32.mrf.mxu0
    %v1430 = vadd.f32 %v1365, %v1429
    %1431 = vmatmul.f32.gmra.mxu0 %v118
    %v1432 = vpop.f32.mrf.mxu0
    %v1433 = vadd.f32 %v1368, %v1432
    %1434 = vmatmul.f32.gmra.mxu0 %v122
    %v1435 = vpop.f32.mrf.mxu0
    %v1436 = vadd.f32 %v1371, %v1435
    %1437 = vmatmul.f32.gmra.mxu0 %v126
    %v1438 = vpop.f32.mrf.mxu0
    %v1439 = vadd.f32 %v1374, %v1438
    %1440 = vmatmul.f32.gmra.mxu0 %v130
    %v1441 = vpop.f32.mrf.mxu0
    %v1442 = vadd.f32 %v1377, %v1441
    %1443 = vmatmul.f32.gmra.mxu0 %v134
    %v1444 = vpop.f32.mrf.mxu0
    %v1445 = vadd.f32 %v1380, %v1444
    %1446 = vmatmul.f32.gmra.mxu0 %v138
    %v1447 = vpop.f32.mrf.mxu0
    %v1448 = vadd.f32 %v1383, %v1447
    %1449 = vmatmul.f32.gmra.mxu0 %v142
    %v1450 = vpop.f32.mrf.mxu0
    %v1451 = vadd.f32 %v1386, %v1450
    %1452 = vmatmul.f32.gmra.mxu0 %v146
    %v1453 = vpop.f32.mrf.mxu0
    %v1454 = vadd.f32 %v1389, %v1453
    %1455 = vmatmul.f32.gmra.mxu0 %v150
    %v1456 = vpop.f32.mrf.mxu0
    %v1457 = vadd.f32 %v1392, %v1456
    %1458 = vmatmul.f32.gmra.mxu0 %v154
    %v1459 = vpop.f32.mrf.mxu0
    %v1460 = vadd.f32 %v1395, %v1459
    %1461 = vmatmul.f32.gmra.mxu0 %v158
    %v1462 = vpop.f32.mrf.mxu0
    %v1463 = vadd.f32 %v1398, %v1462
    %1464 = vdwg.mxu0
    %v1465 = vmax.f32 %v638, 0.0
    %v1466 = vmax.f32 %v898, 0.0
    %v1467 = vmax.f32 %v1158, 0.0
    %v1468 = vmax.f32 %v1418, 0.0
    %v1469 = vmax.f32 %v641, 0.0
    %v1470 = vmax.f32 %v901, 0.0
    %v1471 = vmax.f32 %v1161, 0.0
    %v1472 = vmax.f32 %v1421, 0.0
    %v1473 = vmax.f32 %v644, 0.0
    %v1474 = vmax.f32 %v904, 0.0
    %v1475 = vmax.f32 %v1164, 0.0
    %v1476 = vmax.f32 %v1424, 0.0
    %v1477 = vmax.f32 %v647, 0.0
    %v1478 = vmax.f32 %v907, 0.0
    %v1479 = vmax.f32 %v1167, 0.0
    %v1480 = vmax.f32 %v1427, 0.0
    %v1481 = vmax.f32 %v650, 0.0
    %v1482 = vmax.f32 %v910, 0.0
    %v1483 = vmax.f32 %v1170, 0.0
    %v1484 = vmax.f32 %v1430, 0.0
    %v1485 = vmax.f32 %v653, 0.0
    %v1486 = vmax.f32 %v913, 0.0
    %v1487 = vmax.f32 %v1173, 0.0
    %v1488 = vmax.f32 %v1433, 0.0
    %v1489 = vmax.f32 %v656, 0.0
    %v1490 = vmax.f32 %v916, 0.0
    %v1491 = vmax.f32 %v1176, 0.0
    %v1492 = vmax.f32 %v1436, 0.0
    %v1493 = vmax.f32 %v659, 0.0
    %v1494 = vmax.f32 %v919, 0.0
    %v1495 = vmax.f32 %v1179, 0.0
    %v1496 = vmax.f32 %v1439, 0.0
    %v1497 = vmax.f32 %v662, 0.0
    %v1498 = vmax.f32 %v922, 0.0
    %v1499 = vmax.f32 %v1182, 0.0
    %v1500 = vmax.f32 %v1442, 0.0
    %v1501 = vmax.f32 %v665, 0.0
    %v1502 = vmax.f32 %v925, 0.0
    %v1503 = vmax.f32 %v1185, 0.0
    %v1504 = vmax.f32 %v1445, 0.0
    %v1505 = vmax.f32 %v668, 0.0
    %v1506 = vmax.f32 %v928, 0.0
    %v1507 = vmax.f32 %v1188, 0.0
    %v1508 = vmax.f32 %v1448, 0.0
    %v1509 = vmax.f32 %v671, 0.0
    %v1510 = vmax.f32 %v931, 0.0
    %v1511 = vmax.f32 %v1191, 0.0
    %v1512 = vmax.f32 %v1451, 0.0
    %v1513 = vmax.f32 %v674, 0.0
    %v1514 = vmax.f32 %v934, 0.0
    %v1515 = vmax.f32 %v1194, 0.0
    %v1516 = vmax.f32 %v1454, 0.0
    %v1517 = vmax.f32 %v677, 0.0
    %v1518 = vmax.f32 %v937, 0.0
    %v1519 = vmax.f32 %v1197, 0.0
    %v1520 = vmax.f32 %v1457, 0.0
    %v1521 = vmax.f32 %v680, 0.0
    %v1522 = vmax.f32 %v940, 0.0
    %v1523 = vmax.f32 %v1200, 0.0
    %v1524 = vmax.f32 %v1460, 0.0
    %v1525 = vmax.f32 %v683, 0.0
    %v1526 = vmax.f32 %v943, 0.0
    %v1527 = vmax.f32 %v1203, 0.0
    %v1528 = vmax.f32 %v1463, 0.0
    %s1529 = scalar_lea.vmem [#allocation5], 2048
    %v1530 = vld [vmem:[%s1529] sm:$0xff]
    %v1531 = vld [vmem:[%s1529 + $0x8] sm:$0xff]
    %v1532 = vld [vmem:[%s1529 + $0x10] sm:$0xff]
    %v1533 = vld [vmem:[%s1529 + $0x18] sm:$0xff]
    %v1534 = vld [vmem:[%s1529 + $0x20] sm:$0xff]
    %v1535 = vld [vmem:[%s1529 + $0x28] sm:$0xff]
    %v1536 = vld [vmem:[%s1529 + $0x30] sm:$0xff]
    %v1537 = vld [vmem:[%s1529 + $0x38] sm:$0xff]
    %v1538 = vld [vmem:[%s1529 + $0x40] sm:$0xff]
    %v1539 = vld [vmem:[%s1529 + $0x48] sm:$0xff]
    %v1540 = vld [vmem:[%s1529 + $0x50] sm:$0xff]
    %v1541 = vld [vmem:[%s1529 + $0x58] sm:$0xff]
    %v1542 = vld [vmem:[%s1529 + $0x60] sm:$0xff]
    %v1543 = vld [vmem:[%s1529 + $0x68] sm:$0xff]
    %v1544 = vld [vmem:[%s1529 + $0x70] sm:$0xff]
    %v1545 = vld [vmem:[%s1529 + $0x78] sm:$0xff]
    %v1546 = vld [vmem:[%s1529 + $0x80] sm:$0xff]
    %v1547 = vld [vmem:[%s1529 + $0x88] sm:$0xff]
    %v1548 = vld [vmem:[%s1529 + $0x90] sm:$0xff]
    %v1549 = vld [vmem:[%s1529 + $0x98] sm:$0xff]
    %v1550 = vld [vmem:[%s1529 + $0xa0] sm:$0xff]
    %v1551 = vld [vmem:[%s1529 + $0xa8] sm:$0xff]
    %v1552 = vld [vmem:[%s1529 + $0xb0] sm:$0xff]
    %v1553 = vld [vmem:[%s1529 + $0xb8] sm:$0xff]
    %v1554 = vld [vmem:[%s1529 + $0xc0] sm:$0xff]
    %v1555 = vld [vmem:[%s1529 + $0xc8] sm:$0xff]
    %v1556 = vld [vmem:[%s1529 + $0xd0] sm:$0xff]
    %v1557 = vld [vmem:[%s1529 + $0xd8] sm:$0xff]
    %v1558 = vld [vmem:[%s1529 + $0xe0] sm:$0xff]
    %v1559 = vld [vmem:[%s1529 + $0xe8] sm:$0xff]
    %v1560 = vld [vmem:[%s1529 + $0xf0] sm:$0xff]
    %v1561 = vld [vmem:[%s1529 + $0xf8] sm:$0xff]
    %v1562 = vld [vmem:[%s1529 + $0x100] sm:$0xff]
    %v1563 = vld [vmem:[%s1529 + $0x108] sm:$0xff]
    %v1564 = vld [vmem:[%s1529 + $0x110] sm:$0xff]
    %v1565 = vld [vmem:[%s1529 + $0x118] sm:$0xff]
    %v1566 = vld [vmem:[%s1529 + $0x120] sm:$0xff]
    %v1567 = vld [vmem:[%s1529 + $0x128] sm:$0xff]
    %v1568 = vld [vmem:[%s1529 + $0x130] sm:$0xff]
    %v1569 = vld [vmem:[%s1529 + $0x138] sm:$0xff]
    %v1570 = vld [vmem:[%s1529 + $0x140] sm:$0xff]
    %v1571 = vld [vmem:[%s1529 + $0x148] sm:$0xff]
    %v1572 = vld [vmem:[%s1529 + $0x150] sm:$0xff]
    %v1573 = vld [vmem:[%s1529 + $0x158] sm:$0xff]
    %v1574 = vld [vmem:[%s1529 + $0x160] sm:$0xff]
    %v1575 = vld [vmem:[%s1529 + $0x168] sm:$0xff]
    %v1576 = vld [vmem:[%s1529 + $0x170] sm:$0xff]
    %v1577 = vld [vmem:[%s1529 + $0x178] sm:$0xff]
    %v1578 = vld [vmem:[%s1529 + $0x180] sm:$0xff]
    %v1579 = vld [vmem:[%s1529 + $0x188] sm:$0xff]
    %v1580 = vld [vmem:[%s1529 + $0x190] sm:$0xff]
    %v1581 = vld [vmem:[%s1529 + $0x198] sm:$0xff]
    %v1582 = vld [vmem:[%s1529 + $0x1a0] sm:$0xff]
    %v1583 = vld [vmem:[%s1529 + $0x1a8] sm:$0xff]
    %v1584 = vld [vmem:[%s1529 + $0x1b0] sm:$0xff]
    %v1585 = vld [vmem:[%s1529 + $0x1b8] sm:$0xff]
    %v1586 = vld [vmem:[%s1529 + $0x1c0] sm:$0xff]
    %v1587 = vld [vmem:[%s1529 + $0x1c8] sm:$0xff]
    %v1588 = vld [vmem:[%s1529 + $0x1d0] sm:$0xff]
    %v1589 = vld [vmem:[%s1529 + $0x1d8] sm:$0xff]
    %v1590 = vld [vmem:[%s1529 + $0x1e0] sm:$0xff]
    %v1591 = vld [vmem:[%s1529 + $0x1e8] sm:$0xff]
    %v1592 = vld [vmem:[%s1529 + $0x1f0] sm:$0xff]
    %v1593 = vld [vmem:[%s1529 + $0x1f8] sm:$0xff]
    %v1594 = vld [vmem:[%s1529 + $0x200] sm:$0xff]
    %v1595 = vld [vmem:[%s1529 + $0x208] sm:$0xff]
    %v1596 = vld [vmem:[%s1529 + $0x210] sm:$0xff]
    %v1597 = vld [vmem:[%s1529 + $0x218] sm:$0xff]
    %v1598 = vld [vmem:[%s1529 + $0x220] sm:$0xff]
    %v1599 = vld [vmem:[%s1529 + $0x228] sm:$0xff]
    %v1600 = vld [vmem:[%s1529 + $0x230] sm:$0xff]
    %v1601 = vld [vmem:[%s1529 + $0x238] sm:$0xff]
    %v1602 = vld [vmem:[%s1529 + $0x240] sm:$0xff]
    %v1603 = vld [vmem:[%s1529 + $0x248] sm:$0xff]
    %v1604 = vld [vmem:[%s1529 + $0x250] sm:$0xff]
    %v1605 = vld [vmem:[%s1529 + $0x258] sm:$0xff]
    %v1606 = vld [vmem:[%s1529 + $0x260] sm:$0xff]
    %v1607 = vld [vmem:[%s1529 + $0x268] sm:$0xff]
    %v1608 = vld [vmem:[%s1529 + $0x270] sm:$0xff]
    %v1609 = vld [vmem:[%s1529 + $0x278] sm:$0xff]
    %v1610 = vld [vmem:[%s1529 + $0x280] sm:$0xff]
    %v1611 = vld [vmem:[%s1529 + $0x288] sm:$0xff]
    %v1612 = vld [vmem:[%s1529 + $0x290] sm:$0xff]
    %v1613 = vld [vmem:[%s1529 + $0x298] sm:$0xff]
    %v1614 = vld [vmem:[%s1529 + $0x2a0] sm:$0xff]
    %v1615 = vld [vmem:[%s1529 + $0x2a8] sm:$0xff]
    %v1616 = vld [vmem:[%s1529 + $0x2b0] sm:$0xff]
    %v1617 = vld [vmem:[%s1529 + $0x2b8] sm:$0xff]
    %v1618 = vld [vmem:[%s1529 + $0x2c0] sm:$0xff]
    %v1619 = vld [vmem:[%s1529 + $0x2c8] sm:$0xff]
    %v1620 = vld [vmem:[%s1529 + $0x2d0] sm:$0xff]
    %v1621 = vld [vmem:[%s1529 + $0x2d8] sm:$0xff]
    %v1622 = vld [vmem:[%s1529 + $0x2e0] sm:$0xff]
    %v1623 = vld [vmem:[%s1529 + $0x2e8] sm:$0xff]
    %v1624 = vld [vmem:[%s1529 + $0x2f0] sm:$0xff]
    %v1625 = vld [vmem:[%s1529 + $0x2f8] sm:$0xff]
    %v1626 = vld [vmem:[%s1529 + $0x300] sm:$0xff]
    %v1627 = vld [vmem:[%s1529 + $0x308] sm:$0xff]
    %v1628 = vld [vmem:[%s1529 + $0x310] sm:$0xff]
    %v1629 = vld [vmem:[%s1529 + $0x318] sm:$0xff]
    %v1630 = vld [vmem:[%s1529 + $0x320] sm:$0xff]
    %v1631 = vld [vmem:[%s1529 + $0x328] sm:$0xff]
    %v1632 = vld [vmem:[%s1529 + $0x330] sm:$0xff]
    %v1633 = vld [vmem:[%s1529 + $0x338] sm:$0xff]
    %v1634 = vld [vmem:[%s1529 + $0x340] sm:$0xff]
    %v1635 = vld [vmem:[%s1529 + $0x348] sm:$0xff]
    %v1636 = vld [vmem:[%s1529 + $0x350] sm:$0xff]
    %v1637 = vld [vmem:[%s1529 + $0x358] sm:$0xff]
    %v1638 = vld [vmem:[%s1529 + $0x360] sm:$0xff]
    %v1639 = vld [vmem:[%s1529 + $0x368] sm:$0xff]
    %v1640 = vld [vmem:[%s1529 + $0x370] sm:$0xff]
    %v1641 = vld [vmem:[%s1529 + $0x378] sm:$0xff]
    %v1642 = vld [vmem:[%s1529 + $0x380] sm:$0xff]
    %v1643 = vld [vmem:[%s1529 + $0x388] sm:$0xff]
    %v1644 = vld [vmem:[%s1529 + $0x390] sm:$0xff]
    %v1645 = vld [vmem:[%s1529 + $0x398] sm:$0xff]
    %v1646 = vld [vmem:[%s1529 + $0x3a0] sm:$0xff]
    %v1647 = vld [vmem:[%s1529 + $0x3a8] sm:$0xff]
    %v1648 = vld [vmem:[%s1529 + $0x3b0] sm:$0xff]
    %v1649 = vld [vmem:[%s1529 + $0x3b8] sm:$0xff]
    %v1650 = vld [vmem:[%s1529 + $0x3c0] sm:$0xff]
    %v1651 = vld [vmem:[%s1529 + $0x3c8] sm:$0xff]
    %v1652 = vld [vmem:[%s1529 + $0x3d0] sm:$0xff]
    %v1653 = vld [vmem:[%s1529 + $0x3d8] sm:$0xff]
    %v1654 = vld [vmem:[%s1529 + $0x3e0] sm:$0xff]
    %v1655 = vld [vmem:[%s1529 + $0x3e8] sm:$0xff]
    %v1656 = vld [vmem:[%s1529 + $0x3f0] sm:$0xff]
    %v1657 = vld [vmem:[%s1529 + $0x3f8] sm:$0xff]
    %v1658 = vld [vmem:[%s1529 + $0x400] sm:$0xff]
    %v1659 = vld [vmem:[%s1529 + $0x408] sm:$0xff]
    %v1660 = vld [vmem:[%s1529 + $0x410] sm:$0xff]
    %v1661 = vld [vmem:[%s1529 + $0x418] sm:$0xff]
    %v1662 = vld [vmem:[%s1529 + $0x420] sm:$0xff]
    %v1663 = vld [vmem:[%s1529 + $0x428] sm:$0xff]
    %v1664 = vld [vmem:[%s1529 + $0x430] sm:$0xff]
    %v1665 = vld [vmem:[%s1529 + $0x438] sm:$0xff]
    %v1666 = vld [vmem:[%s1529 + $0x440] sm:$0xff]
    %v1667 = vld [vmem:[%s1529 + $0x448] sm:$0xff]
    %v1668 = vld [vmem:[%s1529 + $0x450] sm:$0xff]
    %v1669 = vld [vmem:[%s1529 + $0x458] sm:$0xff]
    %v1670 = vld [vmem:[%s1529 + $0x460] sm:$0xff]
    %v1671 = vld [vmem:[%s1529 + $0x468] sm:$0xff]
    %v1672 = vld [vmem:[%s1529 + $0x470] sm:$0xff]
    %v1673 = vld [vmem:[%s1529 + $0x478] sm:$0xff]
    %v1674 = vld [vmem:[%s1529 + $0x480] sm:$0xff]
    %v1675 = vld [vmem:[%s1529 + $0x488] sm:$0xff]
    %v1676 = vld [vmem:[%s1529 + $0x490] sm:$0xff]
    %v1677 = vld [vmem:[%s1529 + $0x498] sm:$0xff]
    %v1678 = vld [vmem:[%s1529 + $0x4a0] sm:$0xff]
    %v1679 = vld [vmem:[%s1529 + $0x4a8] sm:$0xff]
    %v1680 = vld [vmem:[%s1529 + $0x4b0] sm:$0xff]
    %v1681 = vld [vmem:[%s1529 + $0x4b8] sm:$0xff]
    %v1682 = vld [vmem:[%s1529 + $0x4c0] sm:$0xff]
    %v1683 = vld [vmem:[%s1529 + $0x4c8] sm:$0xff]
    %v1684 = vld [vmem:[%s1529 + $0x4d0] sm:$0xff]
    %v1685 = vld [vmem:[%s1529 + $0x4d8] sm:$0xff]
    %v1686 = vld [vmem:[%s1529 + $0x4e0] sm:$0xff]
    %v1687 = vld [vmem:[%s1529 + $0x4e8] sm:$0xff]
    %v1688 = vld [vmem:[%s1529 + $0x4f0] sm:$0xff]
    %v1689 = vld [vmem:[%s1529 + $0x4f8] sm:$0xff]
    %v1690 = vld [vmem:[%s1529 + $0x500] sm:$0xff]
    %v1691 = vld [vmem:[%s1529 + $0x508] sm:$0xff]
    %v1692 = vld [vmem:[%s1529 + $0x510] sm:$0xff]
    %v1693 = vld [vmem:[%s1529 + $0x518] sm:$0xff]
    %v1694 = vld [vmem:[%s1529 + $0x520] sm:$0xff]
    %v1695 = vld [vmem:[%s1529 + $0x528] sm:$0xff]
    %v1696 = vld [vmem:[%s1529 + $0x530] sm:$0xff]
    %v1697 = vld [vmem:[%s1529 + $0x538] sm:$0xff]
    %v1698 = vld [vmem:[%s1529 + $0x540] sm:$0xff]
    %v1699 = vld [vmem:[%s1529 + $0x548] sm:$0xff]
    %v1700 = vld [vmem:[%s1529 + $0x550] sm:$0xff]
    %v1701 = vld [vmem:[%s1529 + $0x558] sm:$0xff]
    %v1702 = vld [vmem:[%s1529 + $0x560] sm:$0xff]
    %v1703 = vld [vmem:[%s1529 + $0x568] sm:$0xff]
    %v1704 = vld [vmem:[%s1529 + $0x570] sm:$0xff]
    %v1705 = vld [vmem:[%s1529 + $0x578] sm:$0xff]
    %v1706 = vld [vmem:[%s1529 + $0x580] sm:$0xff]
    %v1707 = vld [vmem:[%s1529 + $0x588] sm:$0xff]
    %v1708 = vld [vmem:[%s1529 + $0x590] sm:$0xff]
    %v1709 = vld [vmem:[%s1529 + $0x598] sm:$0xff]
    %v1710 = vld [vmem:[%s1529 + $0x5a0] sm:$0xff]
    %v1711 = vld [vmem:[%s1529 + $0x5a8] sm:$0xff]
    %v1712 = vld [vmem:[%s1529 + $0x5b0] sm:$0xff]
    %v1713 = vld [vmem:[%s1529 + $0x5b8] sm:$0xff]
    %v1714 = vld [vmem:[%s1529 + $0x5c0] sm:$0xff]
    %v1715 = vld [vmem:[%s1529 + $0x5c8] sm:$0xff]
    %v1716 = vld [vmem:[%s1529 + $0x5d0] sm:$0xff]
    %v1717 = vld [vmem:[%s1529 + $0x5d8] sm:$0xff]
    %v1718 = vld [vmem:[%s1529 + $0x5e0] sm:$0xff]
    %v1719 = vld [vmem:[%s1529 + $0x5e8] sm:$0xff]
    %v1720 = vld [vmem:[%s1529 + $0x5f0] sm:$0xff]
    %v1721 = vld [vmem:[%s1529 + $0x5f8] sm:$0xff]
    %v1722 = vld [vmem:[%s1529 + $0x600] sm:$0xff]
    %v1723 = vld [vmem:[%s1529 + $0x608] sm:$0xff]
    %v1724 = vld [vmem:[%s1529 + $0x610] sm:$0xff]
    %v1725 = vld [vmem:[%s1529 + $0x618] sm:$0xff]
    %v1726 = vld [vmem:[%s1529 + $0x620] sm:$0xff]
    %v1727 = vld [vmem:[%s1529 + $0x628] sm:$0xff]
    %v1728 = vld [vmem:[%s1529 + $0x630] sm:$0xff]
    %v1729 = vld [vmem:[%s1529 + $0x638] sm:$0xff]
    %v1730 = vld [vmem:[%s1529 + $0x640] sm:$0xff]
    %v1731 = vld [vmem:[%s1529 + $0x648] sm:$0xff]
    %v1732 = vld [vmem:[%s1529 + $0x650] sm:$0xff]
    %v1733 = vld [vmem:[%s1529 + $0x658] sm:$0xff]
    %v1734 = vld [vmem:[%s1529 + $0x660] sm:$0xff]
    %v1735 = vld [vmem:[%s1529 + $0x668] sm:$0xff]
    %v1736 = vld [vmem:[%s1529 + $0x670] sm:$0xff]
    %v1737 = vld [vmem:[%s1529 + $0x678] sm:$0xff]
    %v1738 = vld [vmem:[%s1529 + $0x680] sm:$0xff]
    %v1739 = vld [vmem:[%s1529 + $0x688] sm:$0xff]
    %v1740 = vld [vmem:[%s1529 + $0x690] sm:$0xff]
    %v1741 = vld [vmem:[%s1529 + $0x698] sm:$0xff]
    %v1742 = vld [vmem:[%s1529 + $0x6a0] sm:$0xff]
    %v1743 = vld [vmem:[%s1529 + $0x6a8] sm:$0xff]
    %v1744 = vld [vmem:[%s1529 + $0x6b0] sm:$0xff]
    %v1745 = vld [vmem:[%s1529 + $0x6b8] sm:$0xff]
    %v1746 = vld [vmem:[%s1529 + $0x6c0] sm:$0xff]
    %v1747 = vld [vmem:[%s1529 + $0x6c8] sm:$0xff]
    %v1748 = vld [vmem:[%s1529 + $0x6d0] sm:$0xff]
    %v1749 = vld [vmem:[%s1529 + $0x6d8] sm:$0xff]
    %v1750 = vld [vmem:[%s1529 + $0x6e0] sm:$0xff]
    %v1751 = vld [vmem:[%s1529 + $0x6e8] sm:$0xff]
    %v1752 = vld [vmem:[%s1529 + $0x6f0] sm:$0xff]
    %v1753 = vld [vmem:[%s1529 + $0x6f8] sm:$0xff]
    %v1754 = vld [vmem:[%s1529 + $0x700] sm:$0xff]
    %v1755 = vld [vmem:[%s1529 + $0x708] sm:$0xff]
    %v1756 = vld [vmem:[%s1529 + $0x710] sm:$0xff]
    %v1757 = vld [vmem:[%s1529 + $0x718] sm:$0xff]
    %v1758 = vld [vmem:[%s1529 + $0x720] sm:$0xff]
    %v1759 = vld [vmem:[%s1529 + $0x728] sm:$0xff]
    %v1760 = vld [vmem:[%s1529 + $0x730] sm:$0xff]
    %v1761 = vld [vmem:[%s1529 + $0x738] sm:$0xff]
    %v1762 = vld [vmem:[%s1529 + $0x740] sm:$0xff]
    %v1763 = vld [vmem:[%s1529 + $0x748] sm:$0xff]
    %v1764 = vld [vmem:[%s1529 + $0x750] sm:$0xff]
    %v1765 = vld [vmem:[%s1529 + $0x758] sm:$0xff]
    %v1766 = vld [vmem:[%s1529 + $0x760] sm:$0xff]
    %v1767 = vld [vmem:[%s1529 + $0x768] sm:$0xff]
    %v1768 = vld [vmem:[%s1529 + $0x770] sm:$0xff]
    %v1769 = vld [vmem:[%s1529 + $0x778] sm:$0xff]
    %v1770 = vld [vmem:[%s1529 + $0x780] sm:$0xff]
    %v1771 = vld [vmem:[%s1529 + $0x788] sm:$0xff]
    %v1772 = vld [vmem:[%s1529 + $0x790] sm:$0xff]
    %v1773 = vld [vmem:[%s1529 + $0x798] sm:$0xff]
    %v1774 = vld [vmem:[%s1529 + $0x7a0] sm:$0xff]
    %v1775 = vld [vmem:[%s1529 + $0x7a8] sm:$0xff]
    %v1776 = vld [vmem:[%s1529 + $0x7b0] sm:$0xff]
    %v1777 = vld [vmem:[%s1529 + $0x7b8] sm:$0xff]
    %v1778 = vld [vmem:[%s1529 + $0x7c0] sm:$0xff]
    %v1779 = vld [vmem:[%s1529 + $0x7c8] sm:$0xff]
    %v1780 = vld [vmem:[%s1529 + $0x7d0] sm:$0xff]
    %v1781 = vld [vmem:[%s1529 + $0x7d8] sm:$0xff]
    %v1782 = vld [vmem:[%s1529 + $0x7e0] sm:$0xff]
    %v1783 = vld [vmem:[%s1529 + $0x7e8] sm:$0xff]
    %v1784 = vld [vmem:[%s1529 + $0x7f0] sm:$0xff]
    %v1785 = vld [vmem:[%s1529 + $0x7f8] sm:$0xff]
    %s1786 = scalar_lea.vmem [#allocation7], 1
    %v1787 = vld [vmem:[%s1786] ss:$8 sm:$0xf]
    %v1789 = vperm.slane %v1787, 0
    %v1790 = vperm.slane %v1787, 1
    %v1791 = vperm.slane %v1787, 2
    %v1792 = vperm.slane %v1787, 3
    %1797 = vmatpush.msra.mxu0 %v1590
    %1798 = vmatpush.msra.mxu0 %v1586
    %1799 = vmatpush.msra.mxu0 %v1582
    %1800 = vmatpush.msra.mxu0 %v1578
    %1801 = vmatpush.msra.mxu0 %v1574
    %1802 = vmatpush.msra.mxu0 %v1570
    %1803 = vmatpush.msra.mxu0 %v1566
    %1804 = vmatpush.msra.mxu0 %v1562
    %1805 = vmatpush.msra.mxu0 %v1558
    %1806 = vmatpush.msra.mxu0 %v1554
    %1807 = vmatpush.msra.mxu0 %v1550
    %1808 = vmatpush.msra.mxu0 %v1546
    %1809 = vmatpush.msra.mxu0 %v1542
    %1810 = vmatpush.msra.mxu0 %v1538
    %1811 = vmatpush.msra.mxu0 %v1534
    %1812 = vmatpush.msra.mxu0 %v1530
    %1813 = vmatmul.f32.gmra.mxu0 %v1465
    %v1814 = vpop.f32.mrf.mxu0
    %v1815 = vadd.f32 %v1789, %v1814
    %1816 = vmatmul.f32.gmra.mxu0 %v1469
    %v1817 = vpop.f32.mrf.mxu0
    %v1818 = vadd.f32 %v1789, %v1817
    %1819 = vmatmul.f32.gmra.mxu0 %v1473
    %v1820 = vpop.f32.mrf.mxu0
    %v1821 = vadd.f32 %v1789, %v1820
    %1822 = vmatmul.f32.gmra.mxu0 %v1477
    %v1823 = vpop.f32.mrf.mxu0
    %v1824 = vadd.f32 %v1789, %v1823
    %1825 = vmatmul.f32.gmra.mxu0 %v1481
    %v1826 = vpop.f32.mrf.mxu0
    %v1827 = vadd.f32 %v1789, %v1826
    %1828 = vmatmul.f32.gmra.mxu0 %v1485
    %v1829 = vpop.f32.mrf.mxu0
    %v1830 = vadd.f32 %v1789, %v1829
    %1831 = vmatmul.f32.gmra.mxu0 %v1489
    %v1832 = vpop.f32.mrf.mxu0
    %v1833 = vadd.f32 %v1789, %v1832
    %1834 = vmatmul.f32.gmra.mxu0 %v1493
    %v1835 = vpop.f32.mrf.mxu0
    %v1836 = vadd.f32 %v1789, %v1835
    %1837 = vmatmul.f32.gmra.mxu0 %v1497
    %v1838 = vpop.f32.mrf.mxu0
    %v1839 = vadd.f32 %v1789, %v1838
    %1840 = vmatmul.f32.gmra.mxu0 %v1501
    %v1841 = vpop.f32.mrf.mxu0
    %v1842 = vadd.f32 %v1789, %v1841
    %1843 = vmatmul.f32.gmra.mxu0 %v1505
    %v1844 = vpop.f32.mrf.mxu0
    %v1845 = vadd.f32 %v1789, %v1844
    %1846 = vmatmul.f32.gmra.mxu0 %v1509
    %v1847 = vpop.f32.mrf.mxu0
    %v1848 = vadd.f32 %v1789, %v1847
    %1849 = vmatmul.f32.gmra.mxu0 %v1513
    %v1850 = vpop.f32.mrf.mxu0
    %v1851 = vadd.f32 %v1789, %v1850
    %1852 = vmatmul.f32.gmra.mxu0 %v1517
    %v1853 = vpop.f32.mrf.mxu0
    %v1854 = vadd.f32 %v1789, %v1853
    %1855 = vmatmul.f32.gmra.mxu0 %v1521
    %v1856 = vpop.f32.mrf.mxu0
    %v1857 = vadd.f32 %v1789, %v1856
    %1858 = vmatmul.f32.gmra.mxu0 %v1525
    %v1859 = vpop.f32.mrf.mxu0
    %v1860 = vadd.f32 %v1789, %v1859
    %1861 = vdwg.mxu0
    %1862 = vmatpush.msra.mxu0 %v1654
    %1863 = vmatpush.msra.mxu0 %v1650
    %1864 = vmatpush.msra.mxu0 %v1646
    %1865 = vmatpush.msra.mxu0 %v1642
    %1866 = vmatpush.msra.mxu0 %v1638
    %1867 = vmatpush.msra.mxu0 %v1634
    %1868 = vmatpush.msra.mxu0 %v1630
    %1869 = vmatpush.msra.mxu0 %v1626
    %1870 = vmatpush.msra.mxu0 %v1622
    %1871 = vmatpush.msra.mxu0 %v1618
    %1872 = vmatpush.msra.mxu0 %v1614
    %1873 = vmatpush.msra.mxu0 %v1610
    %1874 = vmatpush.msra.mxu0 %v1606
    %1875 = vmatpush.msra.mxu0 %v1602
    %1876 = vmatpush.msra.mxu0 %v1598
    %1877 = vmatpush.msra.mxu0 %v1594
    %1878 = vmatmul.f32.gmra.mxu0 %v1466
    %v1879 = vpop.f32.mrf.mxu0
    %v1880 = vadd.f32 %v1815, %v1879
    %1881 = vmatmul.f32.gmra.mxu0 %v1470
    %v1882 = vpop.f32.mrf.mxu0
    %v1883 = vadd.f32 %v1818, %v1882
    %1884 = vmatmul.f32.gmra.mxu0 %v1474
    %v1885 = vpop.f32.mrf.mxu0
    %v1886 = vadd.f32 %v1821, %v1885
    %1887 = vmatmul.f32.gmra.mxu0 %v1478
    %v1888 = vpop.f32.mrf.mxu0
    %v1889 = vadd.f32 %v1824, %v1888
    %1890 = vmatmul.f32.gmra.mxu0 %v1482
    %v1891 = vpop.f32.mrf.mxu0
    %v1892 = vadd.f32 %v1827, %v1891
    %1893 = vmatmul.f32.gmra.mxu0 %v1486
    %v1894 = vpop.f32.mrf.mxu0
    %v1895 = vadd.f32 %v1830, %v1894
    %1896 = vmatmul.f32.gmra.mxu0 %v1490
    %v1897 = vpop.f32.mrf.mxu0
    %v1898 = vadd.f32 %v1833, %v1897
    %1899 = vmatmul.f32.gmra.mxu0 %v1494
    %v1900 = vpop.f32.mrf.mxu0
    %v1901 = vadd.f32 %v1836, %v1900
    %1902 = vmatmul.f32.gmra.mxu0 %v1498
    %v1903 = vpop.f32.mrf.mxu0
    %v1904 = vadd.f32 %v1839, %v1903
    %1905 = vmatmul.f32.gmra.mxu0 %v1502
    %v1906 = vpop.f32.mrf.mxu0
    %v1907 = vadd.f32 %v1842, %v1906
    %1908 = vmatmul.f32.gmra.mxu0 %v1506
    %v1909 = vpop.f32.mrf.mxu0
    %v1910 = vadd.f32 %v1845, %v1909
    %1911 = vmatmul.f32.gmra.mxu0 %v1510
    %v1912 = vpop.f32.mrf.mxu0
    %v1913 = vadd.f32 %v1848, %v1912
    %1914 = vmatmul.f32.gmra.mxu0 %v1514
    %v1915 = vpop.f32.mrf.mxu0
    %v1916 = vadd.f32 %v1851, %v1915
    %1917 = vmatmul.f32.gmra.mxu0 %v1518
    %v1918 = vpop.f32.mrf.mxu0
    %v1919 = vadd.f32 %v1854, %v1918
    %1920 = vmatmul.f32.gmra.mxu0 %v1522
    %v1921 = vpop.f32.mrf.mxu0
    %v1922 = vadd.f32 %v1857, %v1921
    %1923 = vmatmul.f32.gmra.mxu0 %v1526
    %v1924 = vpop.f32.mrf.mxu0
    %v1925 = vadd.f32 %v1860, %v1924
    %1926 = vdwg.mxu0
    %1927 = vmatpush.msra.mxu0 %v1718
    %1928 = vmatpush.msra.mxu0 %v1714
    %1929 = vmatpush.msra.mxu0 %v1710
    %1930 = vmatpush.msra.mxu0 %v1706
    %1931 = vmatpush.msra.mxu0 %v1702
    %1932 = vmatpush.msra.mxu0 %v1698
    %1933 = vmatpush.msra.mxu0 %v1694
    %1934 = vmatpush.msra.mxu0 %v1690
    %1935 = vmatpush.msra.mxu0 %v1686
    %1936 = vmatpush.msra.mxu0 %v1682
    %1937 = vmatpush.msra.mxu0 %v1678
    %1938 = vmatpush.msra.mxu0 %v1674
    %1939 = vmatpush.msra.mxu0 %v1670
    %1940 = vmatpush.msra.mxu0 %v1666
    %1941 = vmatpush.msra.mxu0 %v1662
    %1942 = vmatpush.msra.mxu0 %v1658
    %1943 = vmatmul.f32.gmra.mxu0 %v1467
    %v1944 = vpop.f32.mrf.mxu0
    %v1945 = vadd.f32 %v1880, %v1944
    %1946 = vmatmul.f32.gmra.mxu0 %v1471
    %v1947 = vpop.f32.mrf.mxu0
    %v1948 = vadd.f32 %v1883, %v1947
    %1949 = vmatmul.f32.gmra.mxu0 %v1475
    %v1950 = vpop.f32.mrf.mxu0
    %v1951 = vadd.f32 %v1886, %v1950
    %1952 = vmatmul.f32.gmra.mxu0 %v1479
    %v1953 = vpop.f32.mrf.mxu0
    %v1954 = vadd.f32 %v1889, %v1953
    %1955 = vmatmul.f32.gmra.mxu0 %v1483
    %v1956 = vpop.f32.mrf.mxu0
    %v1957 = vadd.f32 %v1892, %v1956
    %1958 = vmatmul.f32.gmra.mxu0 %v1487
    %v1959 = vpop.f32.mrf.mxu0
    %v1960 = vadd.f32 %v1895, %v1959
    %1961 = vmatmul.f32.gmra.mxu0 %v1491
    %v1962 = vpop.f32.mrf.mxu0
    %v1963 = vadd.f32 %v1898, %v1962
    %1964 = vmatmul.f32.gmra.mxu0 %v1495
    %v1965 = vpop.f32.mrf.mxu0
    %v1966 = vadd.f32 %v1901, %v1965
    %1967 = vmatmul.f32.gmra.mxu0 %v1499
    %v1968 = vpop.f32.mrf.mxu0
    %v1969 = vadd.f32 %v1904, %v1968
    %1970 = vmatmul.f32.gmra.mxu0 %v1503
    %v1971 = vpop.f32.mrf.mxu0
    %v1972 = vadd.f32 %v1907, %v1971
    %1973 = vmatmul.f32.gmra.mxu0 %v1507
    %v1974 = vpop.f32.mrf.mxu0
    %v1975 = vadd.f32 %v1910, %v1974
    %1976 = vmatmul.f32.gmra.mxu0 %v1511
    %v1977 = vpop.f32.mrf.mxu0
    %v1978 = vadd.f32 %v1913, %v1977
    %1979 = vmatmul.f32.gmra.mxu0 %v1515
    %v1980 = vpop.f32.mrf.mxu0
    %v1981 = vadd.f32 %v1916, %v1980
    %1982 = vmatmul.f32.gmra.mxu0 %v1519
    %v1983 = vpop.f32.mrf.mxu0
    %v1984 = vadd.f32 %v1919, %v1983
    %1985 = vmatmul.f32.gmra.mxu0 %v1523
    %v1986 = vpop.f32.mrf.mxu0
    %v1987 = vadd.f32 %v1922, %v1986
    %1988 = vmatmul.f32.gmra.mxu0 %v1527
    %v1989 = vpop.f32.mrf.mxu0
    %v1990 = vadd.f32 %v1925, %v1989
    %1991 = vdwg.mxu0
    %1992 = vmatpush.msra.mxu0 %v1782
    %1993 = vmatpush.msra.mxu0 %v1778
    %1994 = vmatpush.msra.mxu0 %v1774
    %1995 = vmatpush.msra.mxu0 %v1770
    %1996 = vmatpush.msra.mxu0 %v1766
    %1997 = vmatpush.msra.mxu0 %v1762
    %1998 = vmatpush.msra.mxu0 %v1758
    %1999 = vmatpush.msra.mxu0 %v1754
    %2000 = vmatpush.msra.mxu0 %v1750
    %2001 = vmatpush.msra.mxu0 %v1746
    %2002 = vmatpush.msra.mxu0 %v1742
    %2003 = vmatpush.msra.mxu0 %v1738
    %2004 = vmatpush.msra.mxu0 %v1734
    %2005 = vmatpush.msra.mxu0 %v1730
    %2006 = vmatpush.msra.mxu0 %v1726
    %2007 = vmatpush.msra.mxu0 %v1722
    %2008 = vmatmul.f32.gmra.mxu0 %v1468
    %v2009 = vpop.f32.mrf.mxu0
    %v2010 = vadd.f32 %v1945, %v2009
    %2011 = vmatmul.f32.gmra.mxu0 %v1472
    %v2012 = vpop.f32.mrf.mxu0
    %v2013 = vadd.f32 %v1948, %v2012
    %2014 = vmatmul.f32.gmra.mxu0 %v1476
    %v2015 = vpop.f32.mrf.mxu0
    %v2016 = vadd.f32 %v1951, %v2015
    %2017 = vmatmul.f32.gmra.mxu0 %v1480
    %v2018 = vpop.f32.mrf.mxu0
    %v2019 = vadd.f32 %v1954, %v2018
    %2020 = vmatmul.f32.gmra.mxu0 %v1484
    %v2021 = vpop.f32.mrf.mxu0
    %v2022 = vadd.f32 %v1957, %v2021
    %2023 = vmatmul.f32.gmra.mxu0 %v1488
    %v2024 = vpop.f32.mrf.mxu0
    %v2025 = vadd.f32 %v1960, %v2024
    %2026 = vmatmul.f32.gmra.mxu0 %v1492
    %v2027 = vpop.f32.mrf.mxu0
    %v2028 = vadd.f32 %v1963, %v2027
    %2029 = vmatmul.f32.gmra.mxu0 %v1496
    %v2030 = vpop.f32.mrf.mxu0
    %v2031 = vadd.f32 %v1966, %v2030
    %2032 = vmatmul.f32.gmra.mxu0 %v1500
    %v2033 = vpop.f32.mrf.mxu0
    %v2034 = vadd.f32 %v1969, %v2033
    %2035 = vmatmul.f32.gmra.mxu0 %v1504
    %v2036 = vpop.f32.mrf.mxu0
    %v2037 = vadd.f32 %v1972, %v2036
    %2038 = vmatmul.f32.gmra.mxu0 %v1508
    %v2039 = vpop.f32.mrf.mxu0
    %v2040 = vadd.f32 %v1975, %v2039
    %2041 = vmatmul.f32.gmra.mxu0 %v1512
    %v2042 = vpop.f32.mrf.mxu0
    %v2043 = vadd.f32 %v1978, %v2042
    %2044 = vmatmul.f32.gmra.mxu0 %v1516
    %v2045 = vpop.f32.mrf.mxu0
    %v2046 = vadd.f32 %v1981, %v2045
    %2047 = vmatmul.f32.gmra.mxu0 %v1520
    %v2048 = vpop.f32.mrf.mxu0
    %v2049 = vadd.f32 %v1984, %v2048
    %2050 = vmatmul.f32.gmra.mxu0 %v1524
    %v2051 = vpop.f32.mrf.mxu0
    %v2052 = vadd.f32 %v1987, %v2051
    %2053 = vmatmul.f32.gmra.mxu0 %v1528
    %v2054 = vpop.f32.mrf.mxu0
    %v2055 = vadd.f32 %v1990, %v2054
    %2056 = vdwg.mxu0
    %2057 = vmatpush.msra.mxu0 %v1591
    %2058 = vmatpush.msra.mxu0 %v1587
    %2059 = vmatpush.msra.mxu0 %v1583
    %2060 = vmatpush.msra.mxu0 %v1579
    %2061 = vmatpush.msra.mxu0 %v1575
    %2062 = vmatpush.msra.mxu0 %v1571
    %2063 = vmatpush.msra.mxu0 %v1567
    %2064 = vmatpush.msra.mxu0 %v1563
    %2065 = vmatpush.msra.mxu0 %v1559
    %2066 = vmatpush.msra.mxu0 %v1555
    %2067 = vmatpush.msra.mxu0 %v1551
    %2068 = vmatpush.msra.mxu0 %v1547
    %2069 = vmatpush.msra.mxu0 %v1543
    %2070 = vmatpush.msra.mxu0 %v1539
    %2071 = vmatpush.msra.mxu0 %v1535
    %2072 = vmatpush.msra.mxu0 %v1531
    %2073 = vmatmul.f32.gmra.mxu0 %v1465
    %v2074 = vpop.f32.mrf.mxu0
    %v2075 = vadd.f32 %v1790, %v2074
    %2076 = vmatmul.f32.gmra.mxu0 %v1469
    %v2077 = vpop.f32.mrf.mxu0
    %v2078 = vadd.f32 %v1790, %v2077
    %2079 = vmatmul.f32.gmra.mxu0 %v1473
    %v2080 = vpop.f32.mrf.mxu0
    %v2081 = vadd.f32 %v1790, %v2080
    %2082 = vmatmul.f32.gmra.mxu0 %v1477
    %v2083 = vpop.f32.mrf.mxu0
    %v2084 = vadd.f32 %v1790, %v2083
    %2085 = vmatmul.f32.gmra.mxu0 %v1481
    %v2086 = vpop.f32.mrf.mxu0
    %v2087 = vadd.f32 %v1790, %v2086
    %2088 = vmatmul.f32.gmra.mxu0 %v1485
    %v2089 = vpop.f32.mrf.mxu0
    %v2090 = vadd.f32 %v1790, %v2089
    %2091 = vmatmul.f32.gmra.mxu0 %v1489
    %v2092 = vpop.f32.mrf.mxu0
    %v2093 = vadd.f32 %v1790, %v2092
    %2094 = vmatmul.f32.gmra.mxu0 %v1493
    %v2095 = vpop.f32.mrf.mxu0
    %v2096 = vadd.f32 %v1790, %v2095
    %2097 = vmatmul.f32.gmra.mxu0 %v1497
    %v2098 = vpop.f32.mrf.mxu0
    %v2099 = vadd.f32 %v1790, %v2098
    %2100 = vmatmul.f32.gmra.mxu0 %v1501
    %v2101 = vpop.f32.mrf.mxu0
    %v2102 = vadd.f32 %v1790, %v2101
    %2103 = vmatmul.f32.gmra.mxu0 %v1505
    %v2104 = vpop.f32.mrf.mxu0
    %v2105 = vadd.f32 %v1790, %v2104
    %2106 = vmatmul.f32.gmra.mxu0 %v1509
    %v2107 = vpop.f32.mrf.mxu0
    %v2108 = vadd.f32 %v1790, %v2107
    %2109 = vmatmul.f32.gmra.mxu0 %v1513
    %v2110 = vpop.f32.mrf.mxu0
    %v2111 = vadd.f32 %v1790, %v2110
    %2112 = vmatmul.f32.gmra.mxu0 %v1517
    %v2113 = vpop.f32.mrf.mxu0
    %v2114 = vadd.f32 %v1790, %v2113
    %2115 = vmatmul.f32.gmra.mxu0 %v1521
    %v2116 = vpop.f32.mrf.mxu0
    %v2117 = vadd.f32 %v1790, %v2116
    %2118 = vmatmul.f32.gmra.mxu0 %v1525
    %v2119 = vpop.f32.mrf.mxu0
    %v2120 = vadd.f32 %v1790, %v2119
    %2121 = vdwg.mxu0
    %2122 = vmatpush.msra.mxu0 %v1655
    %2123 = vmatpush.msra.mxu0 %v1651
    %2124 = vmatpush.msra.mxu0 %v1647
    %2125 = vmatpush.msra.mxu0 %v1643
    %2126 = vmatpush.msra.mxu0 %v1639
    %2127 = vmatpush.msra.mxu0 %v1635
    %2128 = vmatpush.msra.mxu0 %v1631
    %2129 = vmatpush.msra.mxu0 %v1627
    %2130 = vmatpush.msra.mxu0 %v1623
    %2131 = vmatpush.msra.mxu0 %v1619
    %2132 = vmatpush.msra.mxu0 %v1615
    %2133 = vmatpush.msra.mxu0 %v1611
    %2134 = vmatpush.msra.mxu0 %v1607
    %2135 = vmatpush.msra.mxu0 %v1603
    %2136 = vmatpush.msra.mxu0 %v1599
    %2137 = vmatpush.msra.mxu0 %v1595
    %2138 = vmatmul.f32.gmra.mxu0 %v1466
    %v2139 = vpop.f32.mrf.mxu0
    %v2140 = vadd.f32 %v2075, %v2139
    %2141 = vmatmul.f32.gmra.mxu0 %v1470
    %v2142 = vpop.f32.mrf.mxu0
    %v2143 = vadd.f32 %v2078, %v2142
    %2144 = vmatmul.f32.gmra.mxu0 %v1474
    %v2145 = vpop.f32.mrf.mxu0
    %v2146 = vadd.f32 %v2081, %v2145
    %2147 = vmatmul.f32.gmra.mxu0 %v1478
    %v2148 = vpop.f32.mrf.mxu0
    %v2149 = vadd.f32 %v2084, %v2148
    %2150 = vmatmul.f32.gmra.mxu0 %v1482
    %v2151 = vpop.f32.mrf.mxu0
    %v2152 = vadd.f32 %v2087, %v2151
    %2153 = vmatmul.f32.gmra.mxu0 %v1486
    %v2154 = vpop.f32.mrf.mxu0
    %v2155 = vadd.f32 %v2090, %v2154
    %2156 = vmatmul.f32.gmra.mxu0 %v1490
    %v2157 = vpop.f32.mrf.mxu0
    %v2158 = vadd.f32 %v2093, %v2157
    %2159 = vmatmul.f32.gmra.mxu0 %v1494
    %v2160 = vpop.f32.mrf.mxu0
    %v2161 = vadd.f32 %v2096, %v2160
    %2162 = vmatmul.f32.gmra.mxu0 %v1498
    %v2163 = vpop.f32.mrf.mxu0
    %v2164 = vadd.f32 %v2099, %v2163
    %2165 = vmatmul.f32.gmra.mxu0 %v1502
    %v2166 = vpop.f32.mrf.mxu0
    %v2167 = vadd.f32 %v2102, %v2166
    %2168 = vmatmul.f32.gmra.mxu0 %v1506
    %v2169 = vpop.f32.mrf.mxu0
    %v2170 = vadd.f32 %v2105, %v2169
    %2171 = vmatmul.f32.gmra.mxu0 %v1510
    %v2172 = vpop.f32.mrf.mxu0
    %v2173 = vadd.f32 %v2108, %v2172
    %2174 = vmatmul.f32.gmra.mxu0 %v1514
    %v2175 = vpop.f32.mrf.mxu0
    %v2176 = vadd.f32 %v2111, %v2175
    %2177 = vmatmul.f32.gmra.mxu0 %v1518
    %v2178 = vpop.f32.mrf.mxu0
    %v2179 = vadd.f32 %v2114, %v2178
    %2180 = vmatmul.f32.gmra.mxu0 %v1522
    %v2181 = vpop.f32.mrf.mxu0
    %v2182 = vadd.f32 %v2117, %v2181
    %2183 = vmatmul.f32.gmra.mxu0 %v1526
    %v2184 = vpop.f32.mrf.mxu0
    %v2185 = vadd.f32 %v2120, %v2184
    %2186 = vdwg.mxu0
    %2187 = vmatpush.msra.mxu0 %v1719
    %2188 = vmatpush.msra.mxu0 %v1715
    %2189 = vmatpush.msra.mxu0 %v1711
    %2190 = vmatpush.msra.mxu0 %v1707
    %2191 = vmatpush.msra.mxu0 %v1703
    %2192 = vmatpush.msra.mxu0 %v1699
    %2193 = vmatpush.msra.mxu0 %v1695
    %2194 = vmatpush.msra.mxu0 %v1691
    %2195 = vmatpush.msra.mxu0 %v1687
    %2196 = vmatpush.msra.mxu0 %v1683
    %2197 = vmatpush.msra.mxu0 %v1679
    %2198 = vmatpush.msra.mxu0 %v1675
    %2199 = vmatpush.msra.mxu0 %v1671
    %2200 = vmatpush.msra.mxu0 %v1667
    %2201 = vmatpush.msra.mxu0 %v1663
    %2202 = vmatpush.msra.mxu0 %v1659
    %2203 = vmatmul.f32.gmra.mxu0 %v1467
    %v2204 = vpop.f32.mrf.mxu0
    %v2205 = vadd.f32 %v2140, %v2204
    %2206 = vmatmul.f32.gmra.mxu0 %v1471
    %v2207 = vpop.f32.mrf.mxu0
    %v2208 = vadd.f32 %v2143, %v2207
    %2209 = vmatmul.f32.gmra.mxu0 %v1475
    %v2210 = vpop.f32.mrf.mxu0
    %v2211 = vadd.f32 %v2146, %v2210
    %2212 = vmatmul.f32.gmra.mxu0 %v1479
    %v2213 = vpop.f32.mrf.mxu0
    %v2214 = vadd.f32 %v2149, %v2213
    %2215 = vmatmul.f32.gmra.mxu0 %v1483
    %v2216 = vpop.f32.mrf.mxu0
    %v2217 = vadd.f32 %v2152, %v2216
    %2218 = vmatmul.f32.gmra.mxu0 %v1487
    %v2219 = vpop.f32.mrf.mxu0
    %v2220 = vadd.f32 %v2155, %v2219
    %2221 = vmatmul.f32.gmra.mxu0 %v1491
    %v2222 = vpop.f32.mrf.mxu0
    %v2223 = vadd.f32 %v2158, %v2222
    %2224 = vmatmul.f32.gmra.mxu0 %v1495
    %v2225 = vpop.f32.mrf.mxu0
    %v2226 = vadd.f32 %v2161, %v2225
    %2227 = vmatmul.f32.gmra.mxu0 %v1499
    %v2228 = vpop.f32.mrf.mxu0
    %v2229 = vadd.f32 %v2164, %v2228
    %2230 = vmatmul.f32.gmra.mxu0 %v1503
    %v2231 = vpop.f32.mrf.mxu0
    %v2232 = vadd.f32 %v2167, %v2231
    %2233 = vmatmul.f32.gmra.mxu0 %v1507
    %v2234 = vpop.f32.mrf.mxu0
    %v2235 = vadd.f32 %v2170, %v2234
    %2236 = vmatmul.f32.gmra.mxu0 %v1511
    %v2237 = vpop.f32.mrf.mxu0
    %v2238 = vadd.f32 %v2173, %v2237
    %2239 = vmatmul.f32.gmra.mxu0 %v1515
    %v2240 = vpop.f32.mrf.mxu0
    %v2241 = vadd.f32 %v2176, %v2240
    %2242 = vmatmul.f32.gmra.mxu0 %v1519
    %v2243 = vpop.f32.mrf.mxu0
    %v2244 = vadd.f32 %v2179, %v2243
    %2245 = vmatmul.f32.gmra.mxu0 %v1523
    %v2246 = vpop.f32.mrf.mxu0
    %v2247 = vadd.f32 %v2182, %v2246
    %2248 = vmatmul.f32.gmra.mxu0 %v1527
    %v2249 = vpop.f32.mrf.mxu0
    %v2250 = vadd.f32 %v2185, %v2249
    %2251 = vdwg.mxu0
    %2252 = vmatpush.msra.mxu0 %v1783
    %2253 = vmatpush.msra.mxu0 %v1779
    %2254 = vmatpush.msra.mxu0 %v1775
    %2255 = vmatpush.msra.mxu0 %v1771
    %2256 = vmatpush.msra.mxu0 %v1767
    %2257 = vmatpush.msra.mxu0 %v1763
    %2258 = vmatpush.msra.mxu0 %v1759
    %2259 = vmatpush.msra.mxu0 %v1755
    %2260 = vmatpush.msra.mxu0 %v1751
    %2261 = vmatpush.msra.mxu0 %v1747
    %2262 = vmatpush.msra.mxu0 %v1743
    %2263 = vmatpush.msra.mxu0 %v1739
    %2264 = vmatpush.msra.mxu0 %v1735
    %2265 = vmatpush.msra.mxu0 %v1731
    %2266 = vmatpush.msra.mxu0 %v1727
    %2267 = vmatpush.msra.mxu0 %v1723
    %2268 = vmatmul.f32.gmra.mxu0 %v1468
    %v2269 = vpop.f32.mrf.mxu0
    %v2270 = vadd.f32 %v2205, %v2269
    %2271 = vmatmul.f32.gmra.mxu0 %v1472
    %v2272 = vpop.f32.mrf.mxu0
    %v2273 = vadd.f32 %v2208, %v2272
    %2274 = vmatmul.f32.gmra.mxu0 %v1476
    %v2275 = vpop.f32.mrf.mxu0
    %v2276 = vadd.f32 %v2211, %v2275
    %2277 = vmatmul.f32.gmra.mxu0 %v1480
    %v2278 = vpop.f32.mrf.mxu0
    %v2279 = vadd.f32 %v2214, %v2278
    %2280 = vmatmul.f32.gmra.mxu0 %v1484
    %v2281 = vpop.f32.mrf.mxu0
    %v2282 = vadd.f32 %v2217, %v2281
    %2283 = vmatmul.f32.gmra.mxu0 %v1488
    %v2284 = vpop.f32.mrf.mxu0
    %v2285 = vadd.f32 %v2220, %v2284
    %2286 = vmatmul.f32.gmra.mxu0 %v1492
    %v2287 = vpop.f32.mrf.mxu0
    %v2288 = vadd.f32 %v2223, %v2287
    %2289 = vmatmul.f32.gmra.mxu0 %v1496
    %v2290 = vpop.f32.mrf.mxu0
    %v2291 = vadd.f32 %v2226, %v2290
    %2292 = vmatmul.f32.gmra.mxu0 %v1500
    %v2293 = vpop.f32.mrf.mxu0
    %v2294 = vadd.f32 %v2229, %v2293
    %2295 = vmatmul.f32.gmra.mxu0 %v1504
    %v2296 = vpop.f32.mrf.mxu0
    %v2297 = vadd.f32 %v2232, %v2296
    %2298 = vmatmul.f32.gmra.mxu0 %v1508
    %v2299 = vpop.f32.mrf.mxu0
    %v2300 = vadd.f32 %v2235, %v2299
    %2301 = vmatmul.f32.gmra.mxu0 %v1512
    %v2302 = vpop.f32.mrf.mxu0
    %v2303 = vadd.f32 %v2238, %v2302
    %2304 = vmatmul.f32.gmra.mxu0 %v1516
    %v2305 = vpop.f32.mrf.mxu0
    %v2306 = vadd.f32 %v2241, %v2305
    %2307 = vmatmul.f32.gmra.mxu0 %v1520
    %v2308 = vpop.f32.mrf.mxu0
    %v2309 = vadd.f32 %v2244, %v2308
    %2310 = vmatmul.f32.gmra.mxu0 %v1524
    %v2311 = vpop.f32.mrf.mxu0
    %v2312 = vadd.f32 %v2247, %v2311
    %2313 = vmatmul.f32.gmra.mxu0 %v1528
    %v2314 = vpop.f32.mrf.mxu0
    %v2315 = vadd.f32 %v2250, %v2314
    %2316 = vdwg.mxu0
    %2317 = vmatpush.msra.mxu0 %v1592
    %2318 = vmatpush.msra.mxu0 %v1588
    %2319 = vmatpush.msra.mxu0 %v1584
    %2320 = vmatpush.msra.mxu0 %v1580
    %2321 = vmatpush.msra.mxu0 %v1576
    %2322 = vmatpush.msra.mxu0 %v1572
    %2323 = vmatpush.msra.mxu0 %v1568
    %2324 = vmatpush.msra.mxu0 %v1564
    %2325 = vmatpush.msra.mxu0 %v1560
    %2326 = vmatpush.msra.mxu0 %v1556
    %2327 = vmatpush.msra.mxu0 %v1552
    %2328 = vmatpush.msra.mxu0 %v1548
    %2329 = vmatpush.msra.mxu0 %v1544
    %2330 = vmatpush.msra.mxu0 %v1540
    %2331 = vmatpush.msra.mxu0 %v1536
    %2332 = vmatpush.msra.mxu0 %v1532
    %2333 = vmatmul.f32.gmra.mxu0 %v1465
    %v2334 = vpop.f32.mrf.mxu0
    %v2335 = vadd.f32 %v1791, %v2334
    %2336 = vmatmul.f32.gmra.mxu0 %v1469
    %v2337 = vpop.f32.mrf.mxu0
    %v2338 = vadd.f32 %v1791, %v2337
    %2339 = vmatmul.f32.gmra.mxu0 %v1473
    %v2340 = vpop.f32.mrf.mxu0
    %v2341 = vadd.f32 %v1791, %v2340
    %2342 = vmatmul.f32.gmra.mxu0 %v1477
    %v2343 = vpop.f32.mrf.mxu0
    %v2344 = vadd.f32 %v1791, %v2343
    %2345 = vmatmul.f32.gmra.mxu0 %v1481
    %v2346 = vpop.f32.mrf.mxu0
    %v2347 = vadd.f32 %v1791, %v2346
    %2348 = vmatmul.f32.gmra.mxu0 %v1485
    %v2349 = vpop.f32.mrf.mxu0
    %v2350 = vadd.f32 %v1791, %v2349
    %2351 = vmatmul.f32.gmra.mxu0 %v1489
    %v2352 = vpop.f32.mrf.mxu0
    %v2353 = vadd.f32 %v1791, %v2352
    %2354 = vmatmul.f32.gmra.mxu0 %v1493
    %v2355 = vpop.f32.mrf.mxu0
    %v2356 = vadd.f32 %v1791, %v2355
    %2357 = vmatmul.f32.gmra.mxu0 %v1497
    %v2358 = vpop.f32.mrf.mxu0
    %v2359 = vadd.f32 %v1791, %v2358
    %2360 = vmatmul.f32.gmra.mxu0 %v1501
    %v2361 = vpop.f32.mrf.mxu0
    %v2362 = vadd.f32 %v1791, %v2361
    %2363 = vmatmul.f32.gmra.mxu0 %v1505
    %v2364 = vpop.f32.mrf.mxu0
    %v2365 = vadd.f32 %v1791, %v2364
    %2366 = vmatmul.f32.gmra.mxu0 %v1509
    %v2367 = vpop.f32.mrf.mxu0
    %v2368 = vadd.f32 %v1791, %v2367
    %2369 = vmatmul.f32.gmra.mxu0 %v1513
    %v2370 = vpop.f32.mrf.mxu0
    %v2371 = vadd.f32 %v1791, %v2370
    %2372 = vmatmul.f32.gmra.mxu0 %v1517
    %v2373 = vpop.f32.mrf.mxu0
    %v2374 = vadd.f32 %v1791, %v2373
    %2375 = vmatmul.f32.gmra.mxu0 %v1521
    %v2376 = vpop.f32.mrf.mxu0
    %v2377 = vadd.f32 %v1791, %v2376
    %2378 = vmatmul.f32.gmra.mxu0 %v1525
    %v2379 = vpop.f32.mrf.mxu0
    %v2380 = vadd.f32 %v1791, %v2379
    %2381 = vdwg.mxu0
    %2382 = vmatpush.msra.mxu0 %v1656
    %2383 = vmatpush.msra.mxu0 %v1652
    %2384 = vmatpush.msra.mxu0 %v1648
    %2385 = vmatpush.msra.mxu0 %v1644
    %2386 = vmatpush.msra.mxu0 %v1640
    %2387 = vmatpush.msra.mxu0 %v1636
    %2388 = vmatpush.msra.mxu0 %v1632
    %2389 = vmatpush.msra.mxu0 %v1628
    %2390 = vmatpush.msra.mxu0 %v1624
    %2391 = vmatpush.msra.mxu0 %v1620
    %2392 = vmatpush.msra.mxu0 %v1616
    %2393 = vmatpush.msra.mxu0 %v1612
    %2394 = vmatpush.msra.mxu0 %v1608
    %2395 = vmatpush.msra.mxu0 %v1604
    %2396 = vmatpush.msra.mxu0 %v1600
    %2397 = vmatpush.msra.mxu0 %v1596
    %2398 = vmatmul.f32.gmra.mxu0 %v1466
    %v2399 = vpop.f32.mrf.mxu0
    %v2400 = vadd.f32 %v2335, %v2399
    %2401 = vmatmul.f32.gmra.mxu0 %v1470
    %v2402 = vpop.f32.mrf.mxu0
    %v2403 = vadd.f32 %v2338, %v2402
    %2404 = vmatmul.f32.gmra.mxu0 %v1474
    %v2405 = vpop.f32.mrf.mxu0
    %v2406 = vadd.f32 %v2341, %v2405
    %2407 = vmatmul.f32.gmra.mxu0 %v1478
    %v2408 = vpop.f32.mrf.mxu0
    %v2409 = vadd.f32 %v2344, %v2408
    %2410 = vmatmul.f32.gmra.mxu0 %v1482
    %v2411 = vpop.f32.mrf.mxu0
    %v2412 = vadd.f32 %v2347, %v2411
    %2413 = vmatmul.f32.gmra.mxu0 %v1486
    %v2414 = vpop.f32.mrf.mxu0
    %v2415 = vadd.f32 %v2350, %v2414
    %2416 = vmatmul.f32.gmra.mxu0 %v1490
    %v2417 = vpop.f32.mrf.mxu0
    %v2418 = vadd.f32 %v2353, %v2417
    %2419 = vmatmul.f32.gmra.mxu0 %v1494
    %v2420 = vpop.f32.mrf.mxu0
    %v2421 = vadd.f32 %v2356, %v2420
    %2422 = vmatmul.f32.gmra.mxu0 %v1498
    %v2423 = vpop.f32.mrf.mxu0
    %v2424 = vadd.f32 %v2359, %v2423
    %2425 = vmatmul.f32.gmra.mxu0 %v1502
    %v2426 = vpop.f32.mrf.mxu0
    %v2427 = vadd.f32 %v2362, %v2426
    %2428 = vmatmul.f32.gmra.mxu0 %v1506
    %v2429 = vpop.f32.mrf.mxu0
    %v2430 = vadd.f32 %v2365, %v2429
    %2431 = vmatmul.f32.gmra.mxu0 %v1510
    %v2432 = vpop.f32.mrf.mxu0
    %v2433 = vadd.f32 %v2368, %v2432
    %2434 = vmatmul.f32.gmra.mxu0 %v1514
    %v2435 = vpop.f32.mrf.mxu0
    %v2436 = vadd.f32 %v2371, %v2435
    %2437 = vmatmul.f32.gmra.mxu0 %v1518
    %v2438 = vpop.f32.mrf.mxu0
    %v2439 = vadd.f32 %v2374, %v2438
    %2440 = vmatmul.f32.gmra.mxu0 %v1522
    %v2441 = vpop.f32.mrf.mxu0
    %v2442 = vadd.f32 %v2377, %v2441
    %2443 = vmatmul.f32.gmra.mxu0 %v1526
    %v2444 = vpop.f32.mrf.mxu0
    %v2445 = vadd.f32 %v2380, %v2444
    %2446 = vdwg.mxu0
    %2447 = vmatpush.msra.mxu0 %v1720
    %2448 = vmatpush.msra.mxu0 %v1716
    %2449 = vmatpush.msra.mxu0 %v1712
    %2450 = vmatpush.msra.mxu0 %v1708
    %2451 = vmatpush.msra.mxu0 %v1704
    %2452 = vmatpush.msra.mxu0 %v1700
    %2453 = vmatpush.msra.mxu0 %v1696
    %2454 = vmatpush.msra.mxu0 %v1692
    %2455 = vmatpush.msra.mxu0 %v1688
    %2456 = vmatpush.msra.mxu0 %v1684
    %2457 = vmatpush.msra.mxu0 %v1680
    %2458 = vmatpush.msra.mxu0 %v1676
    %2459 = vmatpush.msra.mxu0 %v1672
    %2460 = vmatpush.msra.mxu0 %v1668
    %2461 = vmatpush.msra.mxu0 %v1664
    %2462 = vmatpush.msra.mxu0 %v1660
    %2463 = vmatmul.f32.gmra.mxu0 %v1467
    %v2464 = vpop.f32.mrf.mxu0
    %v2465 = vadd.f32 %v2400, %v2464
    %2466 = vmatmul.f32.gmra.mxu0 %v1471
    %v2467 = vpop.f32.mrf.mxu0
    %v2468 = vadd.f32 %v2403, %v2467
    %2469 = vmatmul.f32.gmra.mxu0 %v1475
    %v2470 = vpop.f32.mrf.mxu0
    %v2471 = vadd.f32 %v2406, %v2470
    %2472 = vmatmul.f32.gmra.mxu0 %v1479
    %v2473 = vpop.f32.mrf.mxu0
    %v2474 = vadd.f32 %v2409, %v2473
    %2475 = vmatmul.f32.gmra.mxu0 %v1483
    %v2476 = vpop.f32.mrf.mxu0
    %v2477 = vadd.f32 %v2412, %v2476
    %2478 = vmatmul.f32.gmra.mxu0 %v1487
    %v2479 = vpop.f32.mrf.mxu0
    %v2480 = vadd.f32 %v2415, %v2479
    %2481 = vmatmul.f32.gmra.mxu0 %v1491
    %v2482 = vpop.f32.mrf.mxu0
    %v2483 = vadd.f32 %v2418, %v2482
    %2484 = vmatmul.f32.gmra.mxu0 %v1495
    %v2485 = vpop.f32.mrf.mxu0
    %v2486 = vadd.f32 %v2421, %v2485
    %2487 = vmatmul.f32.gmra.mxu0 %v1499
    %v2488 = vpop.f32.mrf.mxu0
    %v2489 = vadd.f32 %v2424, %v2488
    %2490 = vmatmul.f32.gmra.mxu0 %v1503
    %v2491 = vpop.f32.mrf.mxu0
    %v2492 = vadd.f32 %v2427, %v2491
    %2493 = vmatmul.f32.gmra.mxu0 %v1507
    %v2494 = vpop.f32.mrf.mxu0
    %v2495 = vadd.f32 %v2430, %v2494
    %2496 = vmatmul.f32.gmra.mxu0 %v1511
    %v2497 = vpop.f32.mrf.mxu0
    %v2498 = vadd.f32 %v2433, %v2497
    %2499 = vmatmul.f32.gmra.mxu0 %v1515
    %v2500 = vpop.f32.mrf.mxu0
    %v2501 = vadd.f32 %v2436, %v2500
    %2502 = vmatmul.f32.gmra.mxu0 %v1519
    %v2503 = vpop.f32.mrf.mxu0
    %v2504 = vadd.f32 %v2439, %v2503
    %2505 = vmatmul.f32.gmra.mxu0 %v1523
    %v2506 = vpop.f32.mrf.mxu0
    %v2507 = vadd.f32 %v2442, %v2506
    %2508 = vmatmul.f32.gmra.mxu0 %v1527
    %v2509 = vpop.f32.mrf.mxu0
    %v2510 = vadd.f32 %v2445, %v2509
    %2511 = vdwg.mxu0
    %2512 = vmatpush.msra.mxu0 %v1784
    %2513 = vmatpush.msra.mxu0 %v1780
    %2514 = vmatpush.msra.mxu0 %v1776
    %2515 = vmatpush.msra.mxu0 %v1772
    %2516 = vmatpush.msra.mxu0 %v1768
    %2517 = vmatpush.msra.mxu0 %v1764
    %2518 = vmatpush.msra.mxu0 %v1760
    %2519 = vmatpush.msra.mxu0 %v1756
    %2520 = vmatpush.msra.mxu0 %v1752
    %2521 = vmatpush.msra.mxu0 %v1748
    %2522 = vmatpush.msra.mxu0 %v1744
    %2523 = vmatpush.msra.mxu0 %v1740
    %2524 = vmatpush.msra.mxu0 %v1736
    %2525 = vmatpush.msra.mxu0 %v1732
    %2526 = vmatpush.msra.mxu0 %v1728
    %2527 = vmatpush.msra.mxu0 %v1724
    %2528 = vmatmul.f32.gmra.mxu0 %v1468
    %v2529 = vpop.f32.mrf.mxu0
    %v2530 = vadd.f32 %v2465, %v2529
    %2531 = vmatmul.f32.gmra.mxu0 %v1472
    %v2532 = vpop.f32.mrf.mxu0
    %v2533 = vadd.f32 %v2468, %v2532
    %2534 = vmatmul.f32.gmra.mxu0 %v1476
    %v2535 = vpop.f32.mrf.mxu0
    %v2536 = vadd.f32 %v2471, %v2535
    %2537 = vmatmul.f32.gmra.mxu0 %v1480
    %v2538 = vpop.f32.mrf.mxu0
    %v2539 = vadd.f32 %v2474, %v2538
    %2540 = vmatmul.f32.gmra.mxu0 %v1484
    %v2541 = vpop.f32.mrf.mxu0
    %v2542 = vadd.f32 %v2477, %v2541
    %2543 = vmatmul.f32.gmra.mxu0 %v1488
    %v2544 = vpop.f32.mrf.mxu0
    %v2545 = vadd.f32 %v2480, %v2544
    %2546 = vmatmul.f32.gmra.mxu0 %v1492
    %v2547 = vpop.f32.mrf.mxu0
    %v2548 = vadd.f32 %v2483, %v2547
    %2549 = vmatmul.f32.gmra.mxu0 %v1496
    %v2550 = vpop.f32.mrf.mxu0
    %v2551 = vadd.f32 %v2486, %v2550
    %2552 = vmatmul.f32.gmra.mxu0 %v1500
    %v2553 = vpop.f32.mrf.mxu0
    %v2554 = vadd.f32 %v2489, %v2553
    %2555 = vmatmul.f32.gmra.mxu0 %v1504
    %v2556 = vpop.f32.mrf.mxu0
    %v2557 = vadd.f32 %v2492, %v2556
    %2558 = vmatmul.f32.gmra.mxu0 %v1508
    %v2559 = vpop.f32.mrf.mxu0
    %v2560 = vadd.f32 %v2495, %v2559
    %2561 = vmatmul.f32.gmra.mxu0 %v1512
    %v2562 = vpop.f32.mrf.mxu0
    %v2563 = vadd.f32 %v2498, %v2562
    %2564 = vmatmul.f32.gmra.mxu0 %v1516
    %v2565 = vpop.f32.mrf.mxu0
    %v2566 = vadd.f32 %v2501, %v2565
    %2567 = vmatmul.f32.gmra.mxu0 %v1520
    %v2568 = vpop.f32.mrf.mxu0
    %v2569 = vadd.f32 %v2504, %v2568
    %2570 = vmatmul.f32.gmra.mxu0 %v1524
    %v2571 = vpop.f32.mrf.mxu0
    %v2572 = vadd.f32 %v2507, %v2571
    %2573 = vmatmul.f32.gmra.mxu0 %v1528
    %v2574 = vpop.f32.mrf.mxu0
    %v2575 = vadd.f32 %v2510, %v2574
    %2576 = vdwg.mxu0
    %2577 = vmatpush.msra.mxu0 %v1593
    %2578 = vmatpush.msra.mxu0 %v1589
    %2579 = vmatpush.msra.mxu0 %v1585
    %2580 = vmatpush.msra.mxu0 %v1581
    %2581 = vmatpush.msra.mxu0 %v1577
    %2582 = vmatpush.msra.mxu0 %v1573
    %2583 = vmatpush.msra.mxu0 %v1569
    %2584 = vmatpush.msra.mxu0 %v1565
    %2585 = vmatpush.msra.mxu0 %v1561
    %2586 = vmatpush.msra.mxu0 %v1557
    %2587 = vmatpush.msra.mxu0 %v1553
    %2588 = vmatpush.msra.mxu0 %v1549
    %2589 = vmatpush.msra.mxu0 %v1545
    %2590 = vmatpush.msra.mxu0 %v1541
    %2591 = vmatpush.msra.mxu0 %v1537
    %2592 = vmatpush.msra.mxu0 %v1533
    %2593 = vmatmul.f32.gmra.mxu0 %v1465
    %v2594 = vpop.f32.mrf.mxu0
    %v2595 = vadd.f32 %v1792, %v2594
    %2596 = vmatmul.f32.gmra.mxu0 %v1469
    %v2597 = vpop.f32.mrf.mxu0
    %v2598 = vadd.f32 %v1792, %v2597
    %2599 = vmatmul.f32.gmra.mxu0 %v1473
    %v2600 = vpop.f32.mrf.mxu0
    %v2601 = vadd.f32 %v1792, %v2600
    %2602 = vmatmul.f32.gmra.mxu0 %v1477
    %v2603 = vpop.f32.mrf.mxu0
    %v2604 = vadd.f32 %v1792, %v2603
    %2605 = vmatmul.f32.gmra.mxu0 %v1481
    %v2606 = vpop.f32.mrf.mxu0
    %v2607 = vadd.f32 %v1792, %v2606
    %2608 = vmatmul.f32.gmra.mxu0 %v1485
    %v2609 = vpop.f32.mrf.mxu0
    %v2610 = vadd.f32 %v1792, %v2609
    %2611 = vmatmul.f32.gmra.mxu0 %v1489
    %v2612 = vpop.f32.mrf.mxu0
    %v2613 = vadd.f32 %v1792, %v2612
    %2614 = vmatmul.f32.gmra.mxu0 %v1493
    %v2615 = vpop.f32.mrf.mxu0
    %v2616 = vadd.f32 %v1792, %v2615
    %2617 = vmatmul.f32.gmra.mxu0 %v1497
    %v2618 = vpop.f32.mrf.mxu0
    %v2619 = vadd.f32 %v1792, %v2618
    %2620 = vmatmul.f32.gmra.mxu0 %v1501
    %v2621 = vpop.f32.mrf.mxu0
    %v2622 = vadd.f32 %v1792, %v2621
    %2623 = vmatmul.f32.gmra.mxu0 %v1505
    %v2624 = vpop.f32.mrf.mxu0
    %v2625 = vadd.f32 %v1792, %v2624
    %2626 = vmatmul.f32.gmra.mxu0 %v1509
    %v2627 = vpop.f32.mrf.mxu0
    %v2628 = vadd.f32 %v1792, %v2627
    %2629 = vmatmul.f32.gmra.mxu0 %v1513
    %v2630 = vpop.f32.mrf.mxu0
    %v2631 = vadd.f32 %v1792, %v2630
    %2632 = vmatmul.f32.gmra.mxu0 %v1517
    %v2633 = vpop.f32.mrf.mxu0
    %v2634 = vadd.f32 %v1792, %v2633
    %2635 = vmatmul.f32.gmra.mxu0 %v1521
    %v2636 = vpop.f32.mrf.mxu0
    %v2637 = vadd.f32 %v1792, %v2636
    %2638 = vmatmul.f32.gmra.mxu0 %v1525
    %v2639 = vpop.f32.mrf.mxu0
    %v2640 = vadd.f32 %v1792, %v2639
    %2641 = vdwg.mxu0
    %2642 = vmatpush.msra.mxu0 %v1657
    %2643 = vmatpush.msra.mxu0 %v1653
    %2644 = vmatpush.msra.mxu0 %v1649
    %2645 = vmatpush.msra.mxu0 %v1645
    %2646 = vmatpush.msra.mxu0 %v1641
    %2647 = vmatpush.msra.mxu0 %v1637
    %2648 = vmatpush.msra.mxu0 %v1633
    %2649 = vmatpush.msra.mxu0 %v1629
    %2650 = vmatpush.msra.mxu0 %v1625
    %2651 = vmatpush.msra.mxu0 %v1621
    %2652 = vmatpush.msra.mxu0 %v1617
    %2653 = vmatpush.msra.mxu0 %v1613
    %2654 = vmatpush.msra.mxu0 %v1609
    %2655 = vmatpush.msra.mxu0 %v1605
    %2656 = vmatpush.msra.mxu0 %v1601
    %2657 = vmatpush.msra.mxu0 %v1597
    %2658 = vmatmul.f32.gmra.mxu0 %v1466
    %v2659 = vpop.f32.mrf.mxu0
    %v2660 = vadd.f32 %v2595, %v2659
    %2661 = vmatmul.f32.gmra.mxu0 %v1470
    %v2662 = vpop.f32.mrf.mxu0
    %v2663 = vadd.f32 %v2598, %v2662
    %2664 = vmatmul.f32.gmra.mxu0 %v1474
    %v2665 = vpop.f32.mrf.mxu0
    %v2666 = vadd.f32 %v2601, %v2665
    %2667 = vmatmul.f32.gmra.mxu0 %v1478
    %v2668 = vpop.f32.mrf.mxu0
    %v2669 = vadd.f32 %v2604, %v2668
    %2670 = vmatmul.f32.gmra.mxu0 %v1482
    %v2671 = vpop.f32.mrf.mxu0
    %v2672 = vadd.f32 %v2607, %v2671
    %2673 = vmatmul.f32.gmra.mxu0 %v1486
    %v2674 = vpop.f32.mrf.mxu0
    %v2675 = vadd.f32 %v2610, %v2674
    %2676 = vmatmul.f32.gmra.mxu0 %v1490
    %v2677 = vpop.f32.mrf.mxu0
    %v2678 = vadd.f32 %v2613, %v2677
    %2679 = vmatmul.f32.gmra.mxu0 %v1494
    %v2680 = vpop.f32.mrf.mxu0
    %v2681 = vadd.f32 %v2616, %v2680
    %2682 = vmatmul.f32.gmra.mxu0 %v1498
    %v2683 = vpop.f32.mrf.mxu0
    %v2684 = vadd.f32 %v2619, %v2683
    %2685 = vmatmul.f32.gmra.mxu0 %v1502
    %v2686 = vpop.f32.mrf.mxu0
    %v2687 = vadd.f32 %v2622, %v2686
    %2688 = vmatmul.f32.gmra.mxu0 %v1506
    %v2689 = vpop.f32.mrf.mxu0
    %v2690 = vadd.f32 %v2625, %v2689
    %2691 = vmatmul.f32.gmra.mxu0 %v1510
    %v2692 = vpop.f32.mrf.mxu0
    %v2693 = vadd.f32 %v2628, %v2692
    %2694 = vmatmul.f32.gmra.mxu0 %v1514
    %v2695 = vpop.f32.mrf.mxu0
    %v2696 = vadd.f32 %v2631, %v2695
    %2697 = vmatmul.f32.gmra.mxu0 %v1518
    %v2698 = vpop.f32.mrf.mxu0
    %v2699 = vadd.f32 %v2634, %v2698
    %2700 = vmatmul.f32.gmra.mxu0 %v1522
    %v2701 = vpop.f32.mrf.mxu0
    %v2702 = vadd.f32 %v2637, %v2701
    %2703 = vmatmul.f32.gmra.mxu0 %v1526
    %v2704 = vpop.f32.mrf.mxu0
    %v2705 = vadd.f32 %v2640, %v2704
    %2706 = vdwg.mxu0
    %2707 = vmatpush.msra.mxu0 %v1721
    %2708 = vmatpush.msra.mxu0 %v1717
    %2709 = vmatpush.msra.mxu0 %v1713
    %2710 = vmatpush.msra.mxu0 %v1709
    %2711 = vmatpush.msra.mxu0 %v1705
    %2712 = vmatpush.msra.mxu0 %v1701
    %2713 = vmatpush.msra.mxu0 %v1697
    %2714 = vmatpush.msra.mxu0 %v1693
    %2715 = vmatpush.msra.mxu0 %v1689
    %2716 = vmatpush.msra.mxu0 %v1685
    %2717 = vmatpush.msra.mxu0 %v1681
    %2718 = vmatpush.msra.mxu0 %v1677
    %2719 = vmatpush.msra.mxu0 %v1673
    %2720 = vmatpush.msra.mxu0 %v1669
    %2721 = vmatpush.msra.mxu0 %v1665
    %2722 = vmatpush.msra.mxu0 %v1661
    %2723 = vmatmul.f32.gmra.mxu0 %v1467
    %v2724 = vpop.f32.mrf.mxu0
    %v2725 = vadd.f32 %v2660, %v2724
    %2726 = vmatmul.f32.gmra.mxu0 %v1471
    %v2727 = vpop.f32.mrf.mxu0
    %v2728 = vadd.f32 %v2663, %v2727
    %2729 = vmatmul.f32.gmra.mxu0 %v1475
    %v2730 = vpop.f32.mrf.mxu0
    %v2731 = vadd.f32 %v2666, %v2730
    %2732 = vmatmul.f32.gmra.mxu0 %v1479
    %v2733 = vpop.f32.mrf.mxu0
    %v2734 = vadd.f32 %v2669, %v2733
    %2735 = vmatmul.f32.gmra.mxu0 %v1483
    %v2736 = vpop.f32.mrf.mxu0
    %v2737 = vadd.f32 %v2672, %v2736
    %2738 = vmatmul.f32.gmra.mxu0 %v1487
    %v2739 = vpop.f32.mrf.mxu0
    %v2740 = vadd.f32 %v2675, %v2739
    %2741 = vmatmul.f32.gmra.mxu0 %v1491
    %v2742 = vpop.f32.mrf.mxu0
    %v2743 = vadd.f32 %v2678, %v2742
    %2744 = vmatmul.f32.gmra.mxu0 %v1495
    %v2745 = vpop.f32.mrf.mxu0
    %v2746 = vadd.f32 %v2681, %v2745
    %2747 = vmatmul.f32.gmra.mxu0 %v1499
    %v2748 = vpop.f32.mrf.mxu0
    %v2749 = vadd.f32 %v2684, %v2748
    %2750 = vmatmul.f32.gmra.mxu0 %v1503
    %v2751 = vpop.f32.mrf.mxu0
    %v2752 = vadd.f32 %v2687, %v2751
    %2753 = vmatmul.f32.gmra.mxu0 %v1507
    %v2754 = vpop.f32.mrf.mxu0
    %v2755 = vadd.f32 %v2690, %v2754
    %2756 = vmatmul.f32.gmra.mxu0 %v1511
    %v2757 = vpop.f32.mrf.mxu0
    %v2758 = vadd.f32 %v2693, %v2757
    %2759 = vmatmul.f32.gmra.mxu0 %v1515
    %v2760 = vpop.f32.mrf.mxu0
    %v2761 = vadd.f32 %v2696, %v2760
    %2762 = vmatmul.f32.gmra.mxu0 %v1519
    %v2763 = vpop.f32.mrf.mxu0
    %v2764 = vadd.f32 %v2699, %v2763
    %2765 = vmatmul.f32.gmra.mxu0 %v1523
    %v2766 = vpop.f32.mrf.mxu0
    %v2767 = vadd.f32 %v2702, %v2766
    %2768 = vmatmul.f32.gmra.mxu0 %v1527
    %v2769 = vpop.f32.mrf.mxu0
    %v2770 = vadd.f32 %v2705, %v2769
    %2771 = vdwg.mxu0
    %2772 = vmatpush.msra.mxu0 %v1785
    %2773 = vmatpush.msra.mxu0 %v1781
    %2774 = vmatpush.msra.mxu0 %v1777
    %2775 = vmatpush.msra.mxu0 %v1773
    %2776 = vmatpush.msra.mxu0 %v1769
    %2777 = vmatpush.msra.mxu0 %v1765
    %2778 = vmatpush.msra.mxu0 %v1761
    %2779 = vmatpush.msra.mxu0 %v1757
    %2780 = vmatpush.msra.mxu0 %v1753
    %2781 = vmatpush.msra.mxu0 %v1749
    %2782 = vmatpush.msra.mxu0 %v1745
    %2783 = vmatpush.msra.mxu0 %v1741
    %2784 = vmatpush.msra.mxu0 %v1737
    %2785 = vmatpush.msra.mxu0 %v1733
    %2786 = vmatpush.msra.mxu0 %v1729
    %2787 = vmatpush.msra.mxu0 %v1725
    %2788 = vmatmul.f32.gmra.mxu0 %v1468
    %v2789 = vpop.f32.mrf.mxu0
    %v2790 = vadd.f32 %v2725, %v2789
    %2791 = vmatmul.f32.gmra.mxu0 %v1472
    %v2792 = vpop.f32.mrf.mxu0
    %v2793 = vadd.f32 %v2728, %v2792
    %2794 = vmatmul.f32.gmra.mxu0 %v1476
    %v2795 = vpop.f32.mrf.mxu0
    %v2796 = vadd.f32 %v2731, %v2795
    %2797 = vmatmul.f32.gmra.mxu0 %v1480
    %v2798 = vpop.f32.mrf.mxu0
    %v2799 = vadd.f32 %v2734, %v2798
    %2800 = vmatmul.f32.gmra.mxu0 %v1484
    %v2801 = vpop.f32.mrf.mxu0
    %v2802 = vadd.f32 %v2737, %v2801
    %2803 = vmatmul.f32.gmra.mxu0 %v1488
    %v2804 = vpop.f32.mrf.mxu0
    %v2805 = vadd.f32 %v2740, %v2804
    %2806 = vmatmul.f32.gmra.mxu0 %v1492
    %v2807 = vpop.f32.mrf.mxu0
    %v2808 = vadd.f32 %v2743, %v2807
    %2809 = vmatmul.f32.gmra.mxu0 %v1496
    %v2810 = vpop.f32.mrf.mxu0
    %v2811 = vadd.f32 %v2746, %v2810
    %2812 = vmatmul.f32.gmra.mxu0 %v1500
    %v2813 = vpop.f32.mrf.mxu0
    %v2814 = vadd.f32 %v2749, %v2813
    %2815 = vmatmul.f32.gmra.mxu0 %v1504
    %v2816 = vpop.f32.mrf.mxu0
    %v2817 = vadd.f32 %v2752, %v2816
    %2818 = vmatmul.f32.gmra.mxu0 %v1508
    %v2819 = vpop.f32.mrf.mxu0
    %v2820 = vadd.f32 %v2755, %v2819
    %2821 = vmatmul.f32.gmra.mxu0 %v1512
    %v2822 = vpop.f32.mrf.mxu0
    %v2823 = vadd.f32 %v2758, %v2822
    %2824 = vmatmul.f32.gmra.mxu0 %v1516
    %v2825 = vpop.f32.mrf.mxu0
    %v2826 = vadd.f32 %v2761, %v2825
    %2827 = vmatmul.f32.gmra.mxu0 %v1520
    %v2828 = vpop.f32.mrf.mxu0
    %v2829 = vadd.f32 %v2764, %v2828
    %2830 = vmatmul.f32.gmra.mxu0 %v1524
    %v2831 = vpop.f32.mrf.mxu0
    %v2832 = vadd.f32 %v2767, %v2831
    %2833 = vmatmul.f32.gmra.mxu0 %v1528
    %v2834 = vpop.f32.mrf.mxu0
    %v2835 = vadd.f32 %v2770, %v2834
    %2836 = vdwg.mxu0
    %v2837 = vmax.f32 %v2010, 0.0
    %v2838 = vmax.f32 %v2270, 0.0
    %v2839 = vmax.f32 %v2530, 0.0
    %v2840 = vmax.f32 %v2790, 0.0
    %v2841 = vmax.f32 %v2013, 0.0
    %v2842 = vmax.f32 %v2273, 0.0
    %v2843 = vmax.f32 %v2533, 0.0
    %v2844 = vmax.f32 %v2793, 0.0
    %v2845 = vmax.f32 %v2016, 0.0
    %v2846 = vmax.f32 %v2276, 0.0
    %v2847 = vmax.f32 %v2536, 0.0
    %v2848 = vmax.f32 %v2796, 0.0
    %v2849 = vmax.f32 %v2019, 0.0
    %v2850 = vmax.f32 %v2279, 0.0
    %v2851 = vmax.f32 %v2539, 0.0
    %v2852 = vmax.f32 %v2799, 0.0
    %v2853 = vmax.f32 %v2022, 0.0
    %v2854 = vmax.f32 %v2282, 0.0
    %v2855 = vmax.f32 %v2542, 0.0
    %v2856 = vmax.f32 %v2802, 0.0
    %v2857 = vmax.f32 %v2025, 0.0
    %v2858 = vmax.f32 %v2285, 0.0
    %v2859 = vmax.f32 %v2545, 0.0
    %v2860 = vmax.f32 %v2805, 0.0
    %v2861 = vmax.f32 %v2028, 0.0
    %v2862 = vmax.f32 %v2288, 0.0
    %v2863 = vmax.f32 %v2548, 0.0
    %v2864 = vmax.f32 %v2808, 0.0
    %v2865 = vmax.f32 %v2031, 0.0
    %v2866 = vmax.f32 %v2291, 0.0
    %v2867 = vmax.f32 %v2551, 0.0
    %v2868 = vmax.f32 %v2811, 0.0
    %v2869 = vmax.f32 %v2034, 0.0
    %v2870 = vmax.f32 %v2294, 0.0
    %v2871 = vmax.f32 %v2554, 0.0
    %v2872 = vmax.f32 %v2814, 0.0
    %v2873 = vmax.f32 %v2037, 0.0
    %v2874 = vmax.f32 %v2297, 0.0
    %v2875 = vmax.f32 %v2557, 0.0
    %v2876 = vmax.f32 %v2817, 0.0
    %v2877 = vmax.f32 %v2040, 0.0
    %v2878 = vmax.f32 %v2300, 0.0
    %v2879 = vmax.f32 %v2560, 0.0
    %v2880 = vmax.f32 %v2820, 0.0
    %v2881 = vmax.f32 %v2043, 0.0
    %v2882 = vmax.f32 %v2303, 0.0
    %v2883 = vmax.f32 %v2563, 0.0
    %v2884 = vmax.f32 %v2823, 0.0
    %v2885 = vmax.f32 %v2046, 0.0
    %v2886 = vmax.f32 %v2306, 0.0
    %v2887 = vmax.f32 %v2566, 0.0
    %v2888 = vmax.f32 %v2826, 0.0
    %v2889 = vmax.f32 %v2049, 0.0
    %v2890 = vmax.f32 %v2309, 0.0
    %v2891 = vmax.f32 %v2569, 0.0
    %v2892 = vmax.f32 %v2829, 0.0
    %v2893 = vmax.f32 %v2052, 0.0
    %v2894 = vmax.f32 %v2312, 0.0
    %v2895 = vmax.f32 %v2572, 0.0
    %v2896 = vmax.f32 %v2832, 0.0
    %v2897 = vmax.f32 %v2055, 0.0
    %v2898 = vmax.f32 %v2315, 0.0
    %v2899 = vmax.f32 %v2575, 0.0
    %v2900 = vmax.f32 %v2835, 0.0
    %s2901 = scalar_lea.vmem [#allocation5], 4096
    %v2902 = vld [vmem:[%s2901] sm:$0xff]
    %v2903 = vld [vmem:[%s2901 + $0x8] sm:$0xff]
    %v2904 = vld [vmem:[%s2901 + $0x10] sm:$0xff]
    %v2905 = vld [vmem:[%s2901 + $0x18] sm:$0xff]
    %v2906 = vld [vmem:[%s2901 + $0x20] sm:$0xff]
    %v2907 = vld [vmem:[%s2901 + $0x28] sm:$0xff]
    %v2908 = vld [vmem:[%s2901 + $0x30] sm:$0xff]
    %v2909 = vld [vmem:[%s2901 + $0x38] sm:$0xff]
    %v2910 = vld [vmem:[%s2901 + $0x40] sm:$0xff]
    %v2911 = vld [vmem:[%s2901 + $0x48] sm:$0xff]
    %v2912 = vld [vmem:[%s2901 + $0x50] sm:$0xff]
    %v2913 = vld [vmem:[%s2901 + $0x58] sm:$0xff]
    %v2914 = vld [vmem:[%s2901 + $0x60] sm:$0xff]
    %v2915 = vld [vmem:[%s2901 + $0x68] sm:$0xff]
    %v2916 = vld [vmem:[%s2901 + $0x70] sm:$0xff]
    %v2917 = vld [vmem:[%s2901 + $0x78] sm:$0xff]
    %v2918 = vld [vmem:[%s2901 + $0x80] sm:$0xff]
    %v2919 = vld [vmem:[%s2901 + $0x88] sm:$0xff]
    %v2920 = vld [vmem:[%s2901 + $0x90] sm:$0xff]
    %v2921 = vld [vmem:[%s2901 + $0x98] sm:$0xff]
    %v2922 = vld [vmem:[%s2901 + $0xa0] sm:$0xff]
    %v2923 = vld [vmem:[%s2901 + $0xa8] sm:$0xff]
    %v2924 = vld [vmem:[%s2901 + $0xb0] sm:$0xff]
    %v2925 = vld [vmem:[%s2901 + $0xb8] sm:$0xff]
    %v2926 = vld [vmem:[%s2901 + $0xc0] sm:$0xff]
    %v2927 = vld [vmem:[%s2901 + $0xc8] sm:$0xff]
    %v2928 = vld [vmem:[%s2901 + $0xd0] sm:$0xff]
    %v2929 = vld [vmem:[%s2901 + $0xd8] sm:$0xff]
    %v2930 = vld [vmem:[%s2901 + $0xe0] sm:$0xff]
    %v2931 = vld [vmem:[%s2901 + $0xe8] sm:$0xff]
    %v2932 = vld [vmem:[%s2901 + $0xf0] sm:$0xff]
    %v2933 = vld [vmem:[%s2901 + $0xf8] sm:$0xff]
    %v2934 = vld [vmem:[%s2901 + $0x100] sm:$0xff]
    %v2935 = vld [vmem:[%s2901 + $0x108] sm:$0xff]
    %v2936 = vld [vmem:[%s2901 + $0x110] sm:$0xff]
    %v2937 = vld [vmem:[%s2901 + $0x118] sm:$0xff]
    %v2938 = vld [vmem:[%s2901 + $0x120] sm:$0xff]
    %v2939 = vld [vmem:[%s2901 + $0x128] sm:$0xff]
    %v2940 = vld [vmem:[%s2901 + $0x130] sm:$0xff]
    %v2941 = vld [vmem:[%s2901 + $0x138] sm:$0xff]
    %v2942 = vld [vmem:[%s2901 + $0x140] sm:$0xff]
    %v2943 = vld [vmem:[%s2901 + $0x148] sm:$0xff]
    %v2944 = vld [vmem:[%s2901 + $0x150] sm:$0xff]
    %v2945 = vld [vmem:[%s2901 + $0x158] sm:$0xff]
    %v2946 = vld [vmem:[%s2901 + $0x160] sm:$0xff]
    %v2947 = vld [vmem:[%s2901 + $0x168] sm:$0xff]
    %v2948 = vld [vmem:[%s2901 + $0x170] sm:$0xff]
    %v2949 = vld [vmem:[%s2901 + $0x178] sm:$0xff]
    %v2950 = vld [vmem:[%s2901 + $0x180] sm:$0xff]
    %v2951 = vld [vmem:[%s2901 + $0x188] sm:$0xff]
    %v2952 = vld [vmem:[%s2901 + $0x190] sm:$0xff]
    %v2953 = vld [vmem:[%s2901 + $0x198] sm:$0xff]
    %v2954 = vld [vmem:[%s2901 + $0x1a0] sm:$0xff]
    %v2955 = vld [vmem:[%s2901 + $0x1a8] sm:$0xff]
    %v2956 = vld [vmem:[%s2901 + $0x1b0] sm:$0xff]
    %v2957 = vld [vmem:[%s2901 + $0x1b8] sm:$0xff]
    %v2958 = vld [vmem:[%s2901 + $0x1c0] sm:$0xff]
    %v2959 = vld [vmem:[%s2901 + $0x1c8] sm:$0xff]
    %v2960 = vld [vmem:[%s2901 + $0x1d0] sm:$0xff]
    %v2961 = vld [vmem:[%s2901 + $0x1d8] sm:$0xff]
    %v2962 = vld [vmem:[%s2901 + $0x1e0] sm:$0xff]
    %v2963 = vld [vmem:[%s2901 + $0x1e8] sm:$0xff]
    %v2964 = vld [vmem:[%s2901 + $0x1f0] sm:$0xff]
    %v2965 = vld [vmem:[%s2901 + $0x1f8] sm:$0xff]
    %v2966 = vld [vmem:[%s2901 + $0x200] sm:$0xff]
    %v2967 = vld [vmem:[%s2901 + $0x208] sm:$0xff]
    %v2968 = vld [vmem:[%s2901 + $0x210] sm:$0xff]
    %v2969 = vld [vmem:[%s2901 + $0x218] sm:$0xff]
    %v2970 = vld [vmem:[%s2901 + $0x220] sm:$0xff]
    %v2971 = vld [vmem:[%s2901 + $0x228] sm:$0xff]
    %v2972 = vld [vmem:[%s2901 + $0x230] sm:$0xff]
    %v2973 = vld [vmem:[%s2901 + $0x238] sm:$0xff]
    %v2974 = vld [vmem:[%s2901 + $0x240] sm:$0xff]
    %v2975 = vld [vmem:[%s2901 + $0x248] sm:$0xff]
    %v2976 = vld [vmem:[%s2901 + $0x250] sm:$0xff]
    %v2977 = vld [vmem:[%s2901 + $0x258] sm:$0xff]
    %v2978 = vld [vmem:[%s2901 + $0x260] sm:$0xff]
    %v2979 = vld [vmem:[%s2901 + $0x268] sm:$0xff]
    %v2980 = vld [vmem:[%s2901 + $0x270] sm:$0xff]
    %v2981 = vld [vmem:[%s2901 + $0x278] sm:$0xff]
    %v2982 = vld [vmem:[%s2901 + $0x280] sm:$0xff]
    %v2983 = vld [vmem:[%s2901 + $0x288] sm:$0xff]
    %v2984 = vld [vmem:[%s2901 + $0x290] sm:$0xff]
    %v2985 = vld [vmem:[%s2901 + $0x298] sm:$0xff]
    %v2986 = vld [vmem:[%s2901 + $0x2a0] sm:$0xff]
    %v2987 = vld [vmem:[%s2901 + $0x2a8] sm:$0xff]
    %v2988 = vld [vmem:[%s2901 + $0x2b0] sm:$0xff]
    %v2989 = vld [vmem:[%s2901 + $0x2b8] sm:$0xff]
    %v2990 = vld [vmem:[%s2901 + $0x2c0] sm:$0xff]
    %v2991 = vld [vmem:[%s2901 + $0x2c8] sm:$0xff]
    %v2992 = vld [vmem:[%s2901 + $0x2d0] sm:$0xff]
    %v2993 = vld [vmem:[%s2901 + $0x2d8] sm:$0xff]
    %v2994 = vld [vmem:[%s2901 + $0x2e0] sm:$0xff]
    %v2995 = vld [vmem:[%s2901 + $0x2e8] sm:$0xff]
    %v2996 = vld [vmem:[%s2901 + $0x2f0] sm:$0xff]
    %v2997 = vld [vmem:[%s2901 + $0x2f8] sm:$0xff]
    %v2998 = vld [vmem:[%s2901 + $0x300] sm:$0xff]
    %v2999 = vld [vmem:[%s2901 + $0x308] sm:$0xff]
    %v3000 = vld [vmem:[%s2901 + $0x310] sm:$0xff]
    %v3001 = vld [vmem:[%s2901 + $0x318] sm:$0xff]
    %v3002 = vld [vmem:[%s2901 + $0x320] sm:$0xff]
    %v3003 = vld [vmem:[%s2901 + $0x328] sm:$0xff]
    %v3004 = vld [vmem:[%s2901 + $0x330] sm:$0xff]
    %v3005 = vld [vmem:[%s2901 + $0x338] sm:$0xff]
    %v3006 = vld [vmem:[%s2901 + $0x340] sm:$0xff]
    %v3007 = vld [vmem:[%s2901 + $0x348] sm:$0xff]
    %v3008 = vld [vmem:[%s2901 + $0x350] sm:$0xff]
    %v3009 = vld [vmem:[%s2901 + $0x358] sm:$0xff]
    %v3010 = vld [vmem:[%s2901 + $0x360] sm:$0xff]
    %v3011 = vld [vmem:[%s2901 + $0x368] sm:$0xff]
    %v3012 = vld [vmem:[%s2901 + $0x370] sm:$0xff]
    %v3013 = vld [vmem:[%s2901 + $0x378] sm:$0xff]
    %v3014 = vld [vmem:[%s2901 + $0x380] sm:$0xff]
    %v3015 = vld [vmem:[%s2901 + $0x388] sm:$0xff]
    %v3016 = vld [vmem:[%s2901 + $0x390] sm:$0xff]
    %v3017 = vld [vmem:[%s2901 + $0x398] sm:$0xff]
    %v3018 = vld [vmem:[%s2901 + $0x3a0] sm:$0xff]
    %v3019 = vld [vmem:[%s2901 + $0x3a8] sm:$0xff]
    %v3020 = vld [vmem:[%s2901 + $0x3b0] sm:$0xff]
    %v3021 = vld [vmem:[%s2901 + $0x3b8] sm:$0xff]
    %v3022 = vld [vmem:[%s2901 + $0x3c0] sm:$0xff]
    %v3023 = vld [vmem:[%s2901 + $0x3c8] sm:$0xff]
    %v3024 = vld [vmem:[%s2901 + $0x3d0] sm:$0xff]
    %v3025 = vld [vmem:[%s2901 + $0x3d8] sm:$0xff]
    %v3026 = vld [vmem:[%s2901 + $0x3e0] sm:$0xff]
    %v3027 = vld [vmem:[%s2901 + $0x3e8] sm:$0xff]
    %v3028 = vld [vmem:[%s2901 + $0x3f0] sm:$0xff]
    %v3029 = vld [vmem:[%s2901 + $0x3f8] sm:$0xff]
    %v3030 = vld [vmem:[%s2901 + $0x400] sm:$0xff]
    %v3031 = vld [vmem:[%s2901 + $0x408] sm:$0xff]
    %v3032 = vld [vmem:[%s2901 + $0x410] sm:$0xff]
    %v3033 = vld [vmem:[%s2901 + $0x418] sm:$0xff]
    %v3034 = vld [vmem:[%s2901 + $0x420] sm:$0xff]
    %v3035 = vld [vmem:[%s2901 + $0x428] sm:$0xff]
    %v3036 = vld [vmem:[%s2901 + $0x430] sm:$0xff]
    %v3037 = vld [vmem:[%s2901 + $0x438] sm:$0xff]
    %v3038 = vld [vmem:[%s2901 + $0x440] sm:$0xff]
    %v3039 = vld [vmem:[%s2901 + $0x448] sm:$0xff]
    %v3040 = vld [vmem:[%s2901 + $0x450] sm:$0xff]
    %v3041 = vld [vmem:[%s2901 + $0x458] sm:$0xff]
    %v3042 = vld [vmem:[%s2901 + $0x460] sm:$0xff]
    %v3043 = vld [vmem:[%s2901 + $0x468] sm:$0xff]
    %v3044 = vld [vmem:[%s2901 + $0x470] sm:$0xff]
    %v3045 = vld [vmem:[%s2901 + $0x478] sm:$0xff]
    %v3046 = vld [vmem:[%s2901 + $0x480] sm:$0xff]
    %v3047 = vld [vmem:[%s2901 + $0x488] sm:$0xff]
    %v3048 = vld [vmem:[%s2901 + $0x490] sm:$0xff]
    %v3049 = vld [vmem:[%s2901 + $0x498] sm:$0xff]
    %v3050 = vld [vmem:[%s2901 + $0x4a0] sm:$0xff]
    %v3051 = vld [vmem:[%s2901 + $0x4a8] sm:$0xff]
    %v3052 = vld [vmem:[%s2901 + $0x4b0] sm:$0xff]
    %v3053 = vld [vmem:[%s2901 + $0x4b8] sm:$0xff]
    %v3054 = vld [vmem:[%s2901 + $0x4c0] sm:$0xff]
    %v3055 = vld [vmem:[%s2901 + $0x4c8] sm:$0xff]
    %v3056 = vld [vmem:[%s2901 + $0x4d0] sm:$0xff]
    %v3057 = vld [vmem:[%s2901 + $0x4d8] sm:$0xff]
    %v3058 = vld [vmem:[%s2901 + $0x4e0] sm:$0xff]
    %v3059 = vld [vmem:[%s2901 + $0x4e8] sm:$0xff]
    %v3060 = vld [vmem:[%s2901 + $0x4f0] sm:$0xff]
    %v3061 = vld [vmem:[%s2901 + $0x4f8] sm:$0xff]
    %v3062 = vld [vmem:[%s2901 + $0x500] sm:$0xff]
    %v3063 = vld [vmem:[%s2901 + $0x508] sm:$0xff]
    %v3064 = vld [vmem:[%s2901 + $0x510] sm:$0xff]
    %v3065 = vld [vmem:[%s2901 + $0x518] sm:$0xff]
    %v3066 = vld [vmem:[%s2901 + $0x520] sm:$0xff]
    %v3067 = vld [vmem:[%s2901 + $0x528] sm:$0xff]
    %v3068 = vld [vmem:[%s2901 + $0x530] sm:$0xff]
    %v3069 = vld [vmem:[%s2901 + $0x538] sm:$0xff]
    %v3070 = vld [vmem:[%s2901 + $0x540] sm:$0xff]
    %v3071 = vld [vmem:[%s2901 + $0x548] sm:$0xff]
    %v3072 = vld [vmem:[%s2901 + $0x550] sm:$0xff]
    %v3073 = vld [vmem:[%s2901 + $0x558] sm:$0xff]
    %v3074 = vld [vmem:[%s2901 + $0x560] sm:$0xff]
    %v3075 = vld [vmem:[%s2901 + $0x568] sm:$0xff]
    %v3076 = vld [vmem:[%s2901 + $0x570] sm:$0xff]
    %v3077 = vld [vmem:[%s2901 + $0x578] sm:$0xff]
    %v3078 = vld [vmem:[%s2901 + $0x580] sm:$0xff]
    %v3079 = vld [vmem:[%s2901 + $0x588] sm:$0xff]
    %v3080 = vld [vmem:[%s2901 + $0x590] sm:$0xff]
    %v3081 = vld [vmem:[%s2901 + $0x598] sm:$0xff]
    %v3082 = vld [vmem:[%s2901 + $0x5a0] sm:$0xff]
    %v3083 = vld [vmem:[%s2901 + $0x5a8] sm:$0xff]
    %v3084 = vld [vmem:[%s2901 + $0x5b0] sm:$0xff]
    %v3085 = vld [vmem:[%s2901 + $0x5b8] sm:$0xff]
    %v3086 = vld [vmem:[%s2901 + $0x5c0] sm:$0xff]
    %v3087 = vld [vmem:[%s2901 + $0x5c8] sm:$0xff]
    %v3088 = vld [vmem:[%s2901 + $0x5d0] sm:$0xff]
    %v3089 = vld [vmem:[%s2901 + $0x5d8] sm:$0xff]
    %v3090 = vld [vmem:[%s2901 + $0x5e0] sm:$0xff]
    %v3091 = vld [vmem:[%s2901 + $0x5e8] sm:$0xff]
    %v3092 = vld [vmem:[%s2901 + $0x5f0] sm:$0xff]
    %v3093 = vld [vmem:[%s2901 + $0x5f8] sm:$0xff]
    %v3094 = vld [vmem:[%s2901 + $0x600] sm:$0xff]
    %v3095 = vld [vmem:[%s2901 + $0x608] sm:$0xff]
    %v3096 = vld [vmem:[%s2901 + $0x610] sm:$0xff]
    %v3097 = vld [vmem:[%s2901 + $0x618] sm:$0xff]
    %v3098 = vld [vmem:[%s2901 + $0x620] sm:$0xff]
    %v3099 = vld [vmem:[%s2901 + $0x628] sm:$0xff]
    %v3100 = vld [vmem:[%s2901 + $0x630] sm:$0xff]
    %v3101 = vld [vmem:[%s2901 + $0x638] sm:$0xff]
    %v3102 = vld [vmem:[%s2901 + $0x640] sm:$0xff]
    %v3103 = vld [vmem:[%s2901 + $0x648] sm:$0xff]
    %v3104 = vld [vmem:[%s2901 + $0x650] sm:$0xff]
    %v3105 = vld [vmem:[%s2901 + $0x658] sm:$0xff]
    %v3106 = vld [vmem:[%s2901 + $0x660] sm:$0xff]
    %v3107 = vld [vmem:[%s2901 + $0x668] sm:$0xff]
    %v3108 = vld [vmem:[%s2901 + $0x670] sm:$0xff]
    %v3109 = vld [vmem:[%s2901 + $0x678] sm:$0xff]
    %v3110 = vld [vmem:[%s2901 + $0x680] sm:$0xff]
    %v3111 = vld [vmem:[%s2901 + $0x688] sm:$0xff]
    %v3112 = vld [vmem:[%s2901 + $0x690] sm:$0xff]
    %v3113 = vld [vmem:[%s2901 + $0x698] sm:$0xff]
    %v3114 = vld [vmem:[%s2901 + $0x6a0] sm:$0xff]
    %v3115 = vld [vmem:[%s2901 + $0x6a8] sm:$0xff]
    %v3116 = vld [vmem:[%s2901 + $0x6b0] sm:$0xff]
    %v3117 = vld [vmem:[%s2901 + $0x6b8] sm:$0xff]
    %v3118 = vld [vmem:[%s2901 + $0x6c0] sm:$0xff]
    %v3119 = vld [vmem:[%s2901 + $0x6c8] sm:$0xff]
    %v3120 = vld [vmem:[%s2901 + $0x6d0] sm:$0xff]
    %v3121 = vld [vmem:[%s2901 + $0x6d8] sm:$0xff]
    %v3122 = vld [vmem:[%s2901 + $0x6e0] sm:$0xff]
    %v3123 = vld [vmem:[%s2901 + $0x6e8] sm:$0xff]
    %v3124 = vld [vmem:[%s2901 + $0x6f0] sm:$0xff]
    %v3125 = vld [vmem:[%s2901 + $0x6f8] sm:$0xff]
    %v3126 = vld [vmem:[%s2901 + $0x700] sm:$0xff]
    %v3127 = vld [vmem:[%s2901 + $0x708] sm:$0xff]
    %v3128 = vld [vmem:[%s2901 + $0x710] sm:$0xff]
    %v3129 = vld [vmem:[%s2901 + $0x718] sm:$0xff]
    %v3130 = vld [vmem:[%s2901 + $0x720] sm:$0xff]
    %v3131 = vld [vmem:[%s2901 + $0x728] sm:$0xff]
    %v3132 = vld [vmem:[%s2901 + $0x730] sm:$0xff]
    %v3133 = vld [vmem:[%s2901 + $0x738] sm:$0xff]
    %v3134 = vld [vmem:[%s2901 + $0x740] sm:$0xff]
    %v3135 = vld [vmem:[%s2901 + $0x748] sm:$0xff]
    %v3136 = vld [vmem:[%s2901 + $0x750] sm:$0xff]
    %v3137 = vld [vmem:[%s2901 + $0x758] sm:$0xff]
    %v3138 = vld [vmem:[%s2901 + $0x760] sm:$0xff]
    %v3139 = vld [vmem:[%s2901 + $0x768] sm:$0xff]
    %v3140 = vld [vmem:[%s2901 + $0x770] sm:$0xff]
    %v3141 = vld [vmem:[%s2901 + $0x778] sm:$0xff]
    %v3142 = vld [vmem:[%s2901 + $0x780] sm:$0xff]
    %v3143 = vld [vmem:[%s2901 + $0x788] sm:$0xff]
    %v3144 = vld [vmem:[%s2901 + $0x790] sm:$0xff]
    %v3145 = vld [vmem:[%s2901 + $0x798] sm:$0xff]
    %v3146 = vld [vmem:[%s2901 + $0x7a0] sm:$0xff]
    %v3147 = vld [vmem:[%s2901 + $0x7a8] sm:$0xff]
    %v3148 = vld [vmem:[%s2901 + $0x7b0] sm:$0xff]
    %v3149 = vld [vmem:[%s2901 + $0x7b8] sm:$0xff]
    %v3150 = vld [vmem:[%s2901 + $0x7c0] sm:$0xff]
    %v3151 = vld [vmem:[%s2901 + $0x7c8] sm:$0xff]
    %v3152 = vld [vmem:[%s2901 + $0x7d0] sm:$0xff]
    %v3153 = vld [vmem:[%s2901 + $0x7d8] sm:$0xff]
    %v3154 = vld [vmem:[%s2901 + $0x7e0] sm:$0xff]
    %v3155 = vld [vmem:[%s2901 + $0x7e8] sm:$0xff]
    %v3156 = vld [vmem:[%s2901 + $0x7f0] sm:$0xff]
    %v3157 = vld [vmem:[%s2901 + $0x7f8] sm:$0xff]
    %s3158 = scalar_lea.vmem [#allocation7], 2
    %v3159 = vld [vmem:[%s3158] ss:$8 sm:$0xf]
    %v3161 = vperm.slane %v3159, 0
    %v3162 = vperm.slane %v3159, 1
    %v3163 = vperm.slane %v3159, 2
    %v3164 = vperm.slane %v3159, 3
    %3169 = vmatpush.msra.mxu0 %v2962
    %3170 = vmatpush.msra.mxu0 %v2958
    %3171 = vmatpush.msra.mxu0 %v2954
    %3172 = vmatpush.msra.mxu0 %v2950
    %3173 = vmatpush.msra.mxu0 %v2946
    %3174 = vmatpush.msra.mxu0 %v2942
    %3175 = vmatpush.msra.mxu0 %v2938
    %3176 = vmatpush.msra.mxu0 %v2934
    %3177 = vmatpush.msra.mxu0 %v2930
    %3178 = vmatpush.msra.mxu0 %v2926
    %3179 = vmatpush.msra.mxu0 %v2922
    %3180 = vmatpush.msra.mxu0 %v2918
    %3181 = vmatpush.msra.mxu0 %v2914
    %3182 = vmatpush.msra.mxu0 %v2910
    %3183 = vmatpush.msra.mxu0 %v2906
    %3184 = vmatpush.msra.mxu0 %v2902
    %3185 = vmatmul.f32.gmra.mxu0 %v2837
    %v3186 = vpop.f32.mrf.mxu0
    %v3187 = vadd.f32 %v3161, %v3186
    %3188 = vmatmul.f32.gmra.mxu0 %v2841
    %v3189 = vpop.f32.mrf.mxu0
    %v3190 = vadd.f32 %v3161, %v3189
    %3191 = vmatmul.f32.gmra.mxu0 %v2845
    %v3192 = vpop.f32.mrf.mxu0
    %v3193 = vadd.f32 %v3161, %v3192
    %3194 = vmatmul.f32.gmra.mxu0 %v2849
    %v3195 = vpop.f32.mrf.mxu0
    %v3196 = vadd.f32 %v3161, %v3195
    %3197 = vmatmul.f32.gmra.mxu0 %v2853
    %v3198 = vpop.f32.mrf.mxu0
    %v3199 = vadd.f32 %v3161, %v3198
    %3200 = vmatmul.f32.gmra.mxu0 %v2857
    %v3201 = vpop.f32.mrf.mxu0
    %v3202 = vadd.f32 %v3161, %v3201
    %3203 = vmatmul.f32.gmra.mxu0 %v2861
    %v3204 = vpop.f32.mrf.mxu0
    %v3205 = vadd.f32 %v3161, %v3204
    %3206 = vmatmul.f32.gmra.mxu0 %v2865
    %v3207 = vpop.f32.mrf.mxu0
    %v3208 = vadd.f32 %v3161, %v3207
    %3209 = vmatmul.f32.gmra.mxu0 %v2869
    %v3210 = vpop.f32.mrf.mxu0
    %v3211 = vadd.f32 %v3161, %v3210
    %3212 = vmatmul.f32.gmra.mxu0 %v2873
    %v3213 = vpop.f32.mrf.mxu0
    %v3214 = vadd.f32 %v3161, %v3213
    %3215 = vmatmul.f32.gmra.mxu0 %v2877
    %v3216 = vpop.f32.mrf.mxu0
    %v3217 = vadd.f32 %v3161, %v3216
    %3218 = vmatmul.f32.gmra.mxu0 %v2881
    %v3219 = vpop.f32.mrf.mxu0
    %v3220 = vadd.f32 %v3161, %v3219
    %3221 = vmatmul.f32.gmra.mxu0 %v2885
    %v3222 = vpop.f32.mrf.mxu0
    %v3223 = vadd.f32 %v3161, %v3222
    %3224 = vmatmul.f32.gmra.mxu0 %v2889
    %v3225 = vpop.f32.mrf.mxu0
    %v3226 = vadd.f32 %v3161, %v3225
    %3227 = vmatmul.f32.gmra.mxu0 %v2893
    %v3228 = vpop.f32.mrf.mxu0
    %v3229 = vadd.f32 %v3161, %v3228
    %3230 = vmatmul.f32.gmra.mxu0 %v2897
    %v3231 = vpop.f32.mrf.mxu0
    %v3232 = vadd.f32 %v3161, %v3231
    %3233 = vdwg.mxu0
    %3234 = vmatpush.msra.mxu0 %v3026
    %3235 = vmatpush.msra.mxu0 %v3022
    %3236 = vmatpush.msra.mxu0 %v3018
    %3237 = vmatpush.msra.mxu0 %v3014
    %3238 = vmatpush.msra.mxu0 %v3010
    %3239 = vmatpush.msra.mxu0 %v3006
    %3240 = vmatpush.msra.mxu0 %v3002
    %3241 = vmatpush.msra.mxu0 %v2998
    %3242 = vmatpush.msra.mxu0 %v2994
    %3243 = vmatpush.msra.mxu0 %v2990
    %3244 = vmatpush.msra.mxu0 %v2986
    %3245 = vmatpush.msra.mxu0 %v2982
    %3246 = vmatpush.msra.mxu0 %v2978
    %3247 = vmatpush.msra.mxu0 %v2974
    %3248 = vmatpush.msra.mxu0 %v2970
    %3249 = vmatpush.msra.mxu0 %v2966
    %3250 = vmatmul.f32.gmra.mxu0 %v2838
    %v3251 = vpop.f32.mrf.mxu0
    %v3252 = vadd.f32 %v3187, %v3251
    %3253 = vmatmul.f32.gmra.mxu0 %v2842
    %v3254 = vpop.f32.mrf.mxu0
    %v3255 = vadd.f32 %v3190, %v3254
    %3256 = vmatmul.f32.gmra.mxu0 %v2846
    %v3257 = vpop.f32.mrf.mxu0
    %v3258 = vadd.f32 %v3193, %v3257
    %3259 = vmatmul.f32.gmra.mxu0 %v2850
    %v3260 = vpop.f32.mrf.mxu0
    %v3261 = vadd.f32 %v3196, %v3260
    %3262 = vmatmul.f32.gmra.mxu0 %v2854
    %v3263 = vpop.f32.mrf.mxu0
    %v3264 = vadd.f32 %v3199, %v3263
    %3265 = vmatmul.f32.gmra.mxu0 %v2858
    %v3266 = vpop.f32.mrf.mxu0
    %v3267 = vadd.f32 %v3202, %v3266
    %3268 = vmatmul.f32.gmra.mxu0 %v2862
    %v3269 = vpop.f32.mrf.mxu0
    %v3270 = vadd.f32 %v3205, %v3269
    %3271 = vmatmul.f32.gmra.mxu0 %v2866
    %v3272 = vpop.f32.mrf.mxu0
    %v3273 = vadd.f32 %v3208, %v3272
    %3274 = vmatmul.f32.gmra.mxu0 %v2870
    %v3275 = vpop.f32.mrf.mxu0
    %v3276 = vadd.f32 %v3211, %v3275
    %3277 = vmatmul.f32.gmra.mxu0 %v2874
    %v3278 = vpop.f32.mrf.mxu0
    %v3279 = vadd.f32 %v3214, %v3278
    %3280 = vmatmul.f32.gmra.mxu0 %v2878
    %v3281 = vpop.f32.mrf.mxu0
    %v3282 = vadd.f32 %v3217, %v3281
    %3283 = vmatmul.f32.gmra.mxu0 %v2882
    %v3284 = vpop.f32.mrf.mxu0
    %v3285 = vadd.f32 %v3220, %v3284
    %3286 = vmatmul.f32.gmra.mxu0 %v2886
    %v3287 = vpop.f32.mrf.mxu0
    %v3288 = vadd.f32 %v3223, %v3287
    %3289 = vmatmul.f32.gmra.mxu0 %v2890
    %v3290 = vpop.f32.mrf.mxu0
    %v3291 = vadd.f32 %v3226, %v3290
    %3292 = vmatmul.f32.gmra.mxu0 %v2894
    %v3293 = vpop.f32.mrf.mxu0
    %v3294 = vadd.f32 %v3229, %v3293
    %3295 = vmatmul.f32.gmra.mxu0 %v2898
    %v3296 = vpop.f32.mrf.mxu0
    %v3297 = vadd.f32 %v3232, %v3296
    %3298 = vdwg.mxu0
    %3299 = vmatpush.msra.mxu0 %v3090
    %3300 = vmatpush.msra.mxu0 %v3086
    %3301 = vmatpush.msra.mxu0 %v3082
    %3302 = vmatpush.msra.mxu0 %v3078
    %3303 = vmatpush.msra.mxu0 %v3074
    %3304 = vmatpush.msra.mxu0 %v3070
    %3305 = vmatpush.msra.mxu0 %v3066
    %3306 = vmatpush.msra.mxu0 %v3062
    %3307 = vmatpush.msra.mxu0 %v3058
    %3308 = vmatpush.msra.mxu0 %v3054
    %3309 = vmatpush.msra.mxu0 %v3050
    %3310 = vmatpush.msra.mxu0 %v3046
    %3311 = vmatpush.msra.mxu0 %v3042
    %3312 = vmatpush.msra.mxu0 %v3038
    %3313 = vmatpush.msra.mxu0 %v3034
    %3314 = vmatpush.msra.mxu0 %v3030
    %3315 = vmatmul.f32.gmra.mxu0 %v2839
    %v3316 = vpop.f32.mrf.mxu0
    %v3317 = vadd.f32 %v3252, %v3316
    %3318 = vmatmul.f32.gmra.mxu0 %v2843
    %v3319 = vpop.f32.mrf.mxu0
    %v3320 = vadd.f32 %v3255, %v3319
    %3321 = vmatmul.f32.gmra.mxu0 %v2847
    %v3322 = vpop.f32.mrf.mxu0
    %v3323 = vadd.f32 %v3258, %v3322
    %3324 = vmatmul.f32.gmra.mxu0 %v2851
    %v3325 = vpop.f32.mrf.mxu0
    %v3326 = vadd.f32 %v3261, %v3325
    %3327 = vmatmul.f32.gmra.mxu0 %v2855
    %v3328 = vpop.f32.mrf.mxu0
    %v3329 = vadd.f32 %v3264, %v3328
    %3330 = vmatmul.f32.gmra.mxu0 %v2859
    %v3331 = vpop.f32.mrf.mxu0
    %v3332 = vadd.f32 %v3267, %v3331
    %3333 = vmatmul.f32.gmra.mxu0 %v2863
    %v3334 = vpop.f32.mrf.mxu0
    %v3335 = vadd.f32 %v3270, %v3334
    %3336 = vmatmul.f32.gmra.mxu0 %v2867
    %v3337 = vpop.f32.mrf.mxu0
    %v3338 = vadd.f32 %v3273, %v3337
    %3339 = vmatmul.f32.gmra.mxu0 %v2871
    %v3340 = vpop.f32.mrf.mxu0
    %v3341 = vadd.f32 %v3276, %v3340
    %3342 = vmatmul.f32.gmra.mxu0 %v2875
    %v3343 = vpop.f32.mrf.mxu0
    %v3344 = vadd.f32 %v3279, %v3343
    %3345 = vmatmul.f32.gmra.mxu0 %v2879
    %v3346 = vpop.f32.mrf.mxu0
    %v3347 = vadd.f32 %v3282, %v3346
    %3348 = vmatmul.f32.gmra.mxu0 %v2883
    %v3349 = vpop.f32.mrf.mxu0
    %v3350 = vadd.f32 %v3285, %v3349
    %3351 = vmatmul.f32.gmra.mxu0 %v2887
    %v3352 = vpop.f32.mrf.mxu0
    %v3353 = vadd.f32 %v3288, %v3352
    %3354 = vmatmul.f32.gmra.mxu0 %v2891
    %v3355 = vpop.f32.mrf.mxu0
    %v3356 = vadd.f32 %v3291, %v3355
    %3357 = vmatmul.f32.gmra.mxu0 %v2895
    %v3358 = vpop.f32.mrf.mxu0
    %v3359 = vadd.f32 %v3294, %v3358
    %3360 = vmatmul.f32.gmra.mxu0 %v2899
    %v3361 = vpop.f32.mrf.mxu0
    %v3362 = vadd.f32 %v3297, %v3361
    %3363 = vdwg.mxu0
    %3364 = vmatpush.msra.mxu0 %v3154
    %3365 = vmatpush.msra.mxu0 %v3150
    %3366 = vmatpush.msra.mxu0 %v3146
    %3367 = vmatpush.msra.mxu0 %v3142
    %3368 = vmatpush.msra.mxu0 %v3138
    %3369 = vmatpush.msra.mxu0 %v3134
    %3370 = vmatpush.msra.mxu0 %v3130
    %3371 = vmatpush.msra.mxu0 %v3126
    %3372 = vmatpush.msra.mxu0 %v3122
    %3373 = vmatpush.msra.mxu0 %v3118
    %3374 = vmatpush.msra.mxu0 %v3114
    %3375 = vmatpush.msra.mxu0 %v3110
    %3376 = vmatpush.msra.mxu0 %v3106
    %3377 = vmatpush.msra.mxu0 %v3102
    %3378 = vmatpush.msra.mxu0 %v3098
    %3379 = vmatpush.msra.mxu0 %v3094
    %3380 = vmatmul.f32.gmra.mxu0 %v2840
    %v3381 = vpop.f32.mrf.mxu0
    %v3382 = vadd.f32 %v3317, %v3381
    %3383 = vmatmul.f32.gmra.mxu0 %v2844
    %v3384 = vpop.f32.mrf.mxu0
    %v3385 = vadd.f32 %v3320, %v3384
    %3386 = vmatmul.f32.gmra.mxu0 %v2848
    %v3387 = vpop.f32.mrf.mxu0
    %v3388 = vadd.f32 %v3323, %v3387
    %3389 = vmatmul.f32.gmra.mxu0 %v2852
    %v3390 = vpop.f32.mrf.mxu0
    %v3391 = vadd.f32 %v3326, %v3390
    %3392 = vmatmul.f32.gmra.mxu0 %v2856
    %v3393 = vpop.f32.mrf.mxu0
    %v3394 = vadd.f32 %v3329, %v3393
    %3395 = vmatmul.f32.gmra.mxu0 %v2860
    %v3396 = vpop.f32.mrf.mxu0
    %v3397 = vadd.f32 %v3332, %v3396
    %3398 = vmatmul.f32.gmra.mxu0 %v2864
    %v3399 = vpop.f32.mrf.mxu0
    %v3400 = vadd.f32 %v3335, %v3399
    %3401 = vmatmul.f32.gmra.mxu0 %v2868
    %v3402 = vpop.f32.mrf.mxu0
    %v3403 = vadd.f32 %v3338, %v3402
    %3404 = vmatmul.f32.gmra.mxu0 %v2872
    %v3405 = vpop.f32.mrf.mxu0
    %v3406 = vadd.f32 %v3341, %v3405
    %3407 = vmatmul.f32.gmra.mxu0 %v2876
    %v3408 = vpop.f32.mrf.mxu0
    %v3409 = vadd.f32 %v3344, %v3408
    %3410 = vmatmul.f32.gmra.mxu0 %v2880
    %v3411 = vpop.f32.mrf.mxu0
    %v3412 = vadd.f32 %v3347, %v3411
    %3413 = vmatmul.f32.gmra.mxu0 %v2884
    %v3414 = vpop.f32.mrf.mxu0
    %v3415 = vadd.f32 %v3350, %v3414
    %3416 = vmatmul.f32.gmra.mxu0 %v2888
    %v3417 = vpop.f32.mrf.mxu0
    %v3418 = vadd.f32 %v3353, %v3417
    %3419 = vmatmul.f32.gmra.mxu0 %v2892
    %v3420 = vpop.f32.mrf.mxu0
    %v3421 = vadd.f32 %v3356, %v3420
    %3422 = vmatmul.f32.gmra.mxu0 %v2896
    %v3423 = vpop.f32.mrf.mxu0
    %v3424 = vadd.f32 %v3359, %v3423
    %3425 = vmatmul.f32.gmra.mxu0 %v2900
    %v3426 = vpop.f32.mrf.mxu0
    %v3427 = vadd.f32 %v3362, %v3426
    %3428 = vdwg.mxu0
    %3429 = vmatpush.msra.mxu0 %v2963
    %3430 = vmatpush.msra.mxu0 %v2959
    %3431 = vmatpush.msra.mxu0 %v2955
    %3432 = vmatpush.msra.mxu0 %v2951
    %3433 = vmatpush.msra.mxu0 %v2947
    %3434 = vmatpush.msra.mxu0 %v2943
    %3435 = vmatpush.msra.mxu0 %v2939
    %3436 = vmatpush.msra.mxu0 %v2935
    %3437 = vmatpush.msra.mxu0 %v2931
    %3438 = vmatpush.msra.mxu0 %v2927
    %3439 = vmatpush.msra.mxu0 %v2923
    %3440 = vmatpush.msra.mxu0 %v2919
    %3441 = vmatpush.msra.mxu0 %v2915
    %3442 = vmatpush.msra.mxu0 %v2911
    %3443 = vmatpush.msra.mxu0 %v2907
    %3444 = vmatpush.msra.mxu0 %v2903
    %3445 = vmatmul.f32.gmra.mxu0 %v2837
    %v3446 = vpop.f32.mrf.mxu0
    %v3447 = vadd.f32 %v3162, %v3446
    %3448 = vmatmul.f32.gmra.mxu0 %v2841
    %v3449 = vpop.f32.mrf.mxu0
    %v3450 = vadd.f32 %v3162, %v3449
    %3451 = vmatmul.f32.gmra.mxu0 %v2845
    %v3452 = vpop.f32.mrf.mxu0
    %v3453 = vadd.f32 %v3162, %v3452
    %3454 = vmatmul.f32.gmra.mxu0 %v2849
    %v3455 = vpop.f32.mrf.mxu0
    %v3456 = vadd.f32 %v3162, %v3455
    %3457 = vmatmul.f32.gmra.mxu0 %v2853
    %v3458 = vpop.f32.mrf.mxu0
    %v3459 = vadd.f32 %v3162, %v3458
    %3460 = vmatmul.f32.gmra.mxu0 %v2857
    %v3461 = vpop.f32.mrf.mxu0
    %v3462 = vadd.f32 %v3162, %v3461
    %3463 = vmatmul.f32.gmra.mxu0 %v2861
    %v3464 = vpop.f32.mrf.mxu0
    %v3465 = vadd.f32 %v3162, %v3464
    %3466 = vmatmul.f32.gmra.mxu0 %v2865
    %v3467 = vpop.f32.mrf.mxu0
    %v3468 = vadd.f32 %v3162, %v3467
    %3469 = vmatmul.f32.gmra.mxu0 %v2869
    %v3470 = vpop.f32.mrf.mxu0
    %v3471 = vadd.f32 %v3162, %v3470
    %3472 = vmatmul.f32.gmra.mxu0 %v2873
    %v3473 = vpop.f32.mrf.mxu0
    %v3474 = vadd.f32 %v3162, %v3473
    %3475 = vmatmul.f32.gmra.mxu0 %v2877
    %v3476 = vpop.f32.mrf.mxu0
    %v3477 = vadd.f32 %v3162, %v3476
    %3478 = vmatmul.f32.gmra.mxu0 %v2881
    %v3479 = vpop.f32.mrf.mxu0
    %v3480 = vadd.f32 %v3162, %v3479
    %3481 = vmatmul.f32.gmra.mxu0 %v2885
    %v3482 = vpop.f32.mrf.mxu0
    %v3483 = vadd.f32 %v3162, %v3482
    %3484 = vmatmul.f32.gmra.mxu0 %v2889
    %v3485 = vpop.f32.mrf.mxu0
    %v3486 = vadd.f32 %v3162, %v3485
    %3487 = vmatmul.f32.gmra.mxu0 %v2893
    %v3488 = vpop.f32.mrf.mxu0
    %v3489 = vadd.f32 %v3162, %v3488
    %3490 = vmatmul.f32.gmra.mxu0 %v2897
    %v3491 = vpop.f32.mrf.mxu0
    %v3492 = vadd.f32 %v3162, %v3491
    %3493 = vdwg.mxu0
    %3494 = vmatpush.msra.mxu0 %v3027
    %3495 = vmatpush.msra.mxu0 %v3023
    %3496 = vmatpush.msra.mxu0 %v3019
    %3497 = vmatpush.msra.mxu0 %v3015
    %3498 = vmatpush.msra.mxu0 %v3011
    %3499 = vmatpush.msra.mxu0 %v3007
    %3500 = vmatpush.msra.mxu0 %v3003
    %3501 = vmatpush.msra.mxu0 %v2999
    %3502 = vmatpush.msra.mxu0 %v2995
    %3503 = vmatpush.msra.mxu0 %v2991
    %3504 = vmatpush.msra.mxu0 %v2987
    %3505 = vmatpush.msra.mxu0 %v2983
    %3506 = vmatpush.msra.mxu0 %v2979
    %3507 = vmatpush.msra.mxu0 %v2975
    %3508 = vmatpush.msra.mxu0 %v2971
    %3509 = vmatpush.msra.mxu0 %v2967
    %3510 = vmatmul.f32.gmra.mxu0 %v2838
    %v3511 = vpop.f32.mrf.mxu0
    %v3512 = vadd.f32 %v3447, %v3511
    %3513 = vmatmul.f32.gmra.mxu0 %v2842
    %v3514 = vpop.f32.mrf.mxu0
    %v3515 = vadd.f32 %v3450, %v3514
    %3516 = vmatmul.f32.gmra.mxu0 %v2846
    %v3517 = vpop.f32.mrf.mxu0
    %v3518 = vadd.f32 %v3453, %v3517
    %3519 = vmatmul.f32.gmra.mxu0 %v2850
    %v3520 = vpop.f32.mrf.mxu0
    %v3521 = vadd.f32 %v3456, %v3520
    %3522 = vmatmul.f32.gmra.mxu0 %v2854
    %v3523 = vpop.f32.mrf.mxu0
    %v3524 = vadd.f32 %v3459, %v3523
    %3525 = vmatmul.f32.gmra.mxu0 %v2858
    %v3526 = vpop.f32.mrf.mxu0
    %v3527 = vadd.f32 %v3462, %v3526
    %3528 = vmatmul.f32.gmra.mxu0 %v2862
    %v3529 = vpop.f32.mrf.mxu0
    %v3530 = vadd.f32 %v3465, %v3529
    %3531 = vmatmul.f32.gmra.mxu0 %v2866
    %v3532 = vpop.f32.mrf.mxu0
    %v3533 = vadd.f32 %v3468, %v3532
    %3534 = vmatmul.f32.gmra.mxu0 %v2870
    %v3535 = vpop.f32.mrf.mxu0
    %v3536 = vadd.f32 %v3471, %v3535
    %3537 = vmatmul.f32.gmra.mxu0 %v2874
    %v3538 = vpop.f32.mrf.mxu0
    %v3539 = vadd.f32 %v3474, %v3538
    %3540 = vmatmul.f32.gmra.mxu0 %v2878
    %v3541 = vpop.f32.mrf.mxu0
    %v3542 = vadd.f32 %v3477, %v3541
    %3543 = vmatmul.f32.gmra.mxu0 %v2882
    %v3544 = vpop.f32.mrf.mxu0
    %v3545 = vadd.f32 %v3480, %v3544
    %3546 = vmatmul.f32.gmra.mxu0 %v2886
    %v3547 = vpop.f32.mrf.mxu0
    %v3548 = vadd.f32 %v3483, %v3547
    %3549 = vmatmul.f32.gmra.mxu0 %v2890
    %v3550 = vpop.f32.mrf.mxu0
    %v3551 = vadd.f32 %v3486, %v3550
    %3552 = vmatmul.f32.gmra.mxu0 %v2894
    %v3553 = vpop.f32.mrf.mxu0
    %v3554 = vadd.f32 %v3489, %v3553
    %3555 = vmatmul.f32.gmra.mxu0 %v2898
    %v3556 = vpop.f32.mrf.mxu0
    %v3557 = vadd.f32 %v3492, %v3556
    %3558 = vdwg.mxu0
    %3559 = vmatpush.msra.mxu0 %v3091
    %3560 = vmatpush.msra.mxu0 %v3087
    %3561 = vmatpush.msra.mxu0 %v3083
    %3562 = vmatpush.msra.mxu0 %v3079
    %3563 = vmatpush.msra.mxu0 %v3075
    %3564 = vmatpush.msra.mxu0 %v3071
    %3565 = vmatpush.msra.mxu0 %v3067
    %3566 = vmatpush.msra.mxu0 %v3063
    %3567 = vmatpush.msra.mxu0 %v3059
    %3568 = vmatpush.msra.mxu0 %v3055
    %3569 = vmatpush.msra.mxu0 %v3051
    %3570 = vmatpush.msra.mxu0 %v3047
    %3571 = vmatpush.msra.mxu0 %v3043
    %3572 = vmatpush.msra.mxu0 %v3039
    %3573 = vmatpush.msra.mxu0 %v3035
    %3574 = vmatpush.msra.mxu0 %v3031
    %3575 = vmatmul.f32.gmra.mxu0 %v2839
    %v3576 = vpop.f32.mrf.mxu0
    %v3577 = vadd.f32 %v3512, %v3576
    %3578 = vmatmul.f32.gmra.mxu0 %v2843
    %v3579 = vpop.f32.mrf.mxu0
    %v3580 = vadd.f32 %v3515, %v3579
    %3581 = vmatmul.f32.gmra.mxu0 %v2847
    %v3582 = vpop.f32.mrf.mxu0
    %v3583 = vadd.f32 %v3518, %v3582
    %3584 = vmatmul.f32.gmra.mxu0 %v2851
    %v3585 = vpop.f32.mrf.mxu0
    %v3586 = vadd.f32 %v3521, %v3585
    %3587 = vmatmul.f32.gmra.mxu0 %v2855
    %v3588 = vpop.f32.mrf.mxu0
    %v3589 = vadd.f32 %v3524, %v3588
    %3590 = vmatmul.f32.gmra.mxu0 %v2859
    %v3591 = vpop.f32.mrf.mxu0
    %v3592 = vadd.f32 %v3527, %v3591
    %3593 = vmatmul.f32.gmra.mxu0 %v2863
    %v3594 = vpop.f32.mrf.mxu0
    %v3595 = vadd.f32 %v3530, %v3594
    %3596 = vmatmul.f32.gmra.mxu0 %v2867
    %v3597 = vpop.f32.mrf.mxu0
    %v3598 = vadd.f32 %v3533, %v3597
    %3599 = vmatmul.f32.gmra.mxu0 %v2871
    %v3600 = vpop.f32.mrf.mxu0
    %v3601 = vadd.f32 %v3536, %v3600
    %3602 = vmatmul.f32.gmra.mxu0 %v2875
    %v3603 = vpop.f32.mrf.mxu0
    %v3604 = vadd.f32 %v3539, %v3603
    %3605 = vmatmul.f32.gmra.mxu0 %v2879
    %v3606 = vpop.f32.mrf.mxu0
    %v3607 = vadd.f32 %v3542, %v3606
    %3608 = vmatmul.f32.gmra.mxu0 %v2883
    %v3609 = vpop.f32.mrf.mxu0
    %v3610 = vadd.f32 %v3545, %v3609
    %3611 = vmatmul.f32.gmra.mxu0 %v2887
    %v3612 = vpop.f32.mrf.mxu0
    %v3613 = vadd.f32 %v3548, %v3612
    %3614 = vmatmul.f32.gmra.mxu0 %v2891
    %v3615 = vpop.f32.mrf.mxu0
    %v3616 = vadd.f32 %v3551, %v3615
    %3617 = vmatmul.f32.gmra.mxu0 %v2895
    %v3618 = vpop.f32.mrf.mxu0
    %v3619 = vadd.f32 %v3554, %v3618
    %3620 = vmatmul.f32.gmra.mxu0 %v2899
    %v3621 = vpop.f32.mrf.mxu0
    %v3622 = vadd.f32 %v3557, %v3621
    %3623 = vdwg.mxu0
    %3624 = vmatpush.msra.mxu0 %v3155
    %3625 = vmatpush.msra.mxu0 %v3151
    %3626 = vmatpush.msra.mxu0 %v3147
    %3627 = vmatpush.msra.mxu0 %v3143
    %3628 = vmatpush.msra.mxu0 %v3139
    %3629 = vmatpush.msra.mxu0 %v3135
    %3630 = vmatpush.msra.mxu0 %v3131
    %3631 = vmatpush.msra.mxu0 %v3127
    %3632 = vmatpush.msra.mxu0 %v3123
    %3633 = vmatpush.msra.mxu0 %v3119
    %3634 = vmatpush.msra.mxu0 %v3115
    %3635 = vmatpush.msra.mxu0 %v3111
    %3636 = vmatpush.msra.mxu0 %v3107
    %3637 = vmatpush.msra.mxu0 %v3103
    %3638 = vmatpush.msra.mxu0 %v3099
    %3639 = vmatpush.msra.mxu0 %v3095
    %3640 = vmatmul.f32.gmra.mxu0 %v2840
    %v3641 = vpop.f32.mrf.mxu0
    %v3642 = vadd.f32 %v3577, %v3641
    %3643 = vmatmul.f32.gmra.mxu0 %v2844
    %v3644 = vpop.f32.mrf.mxu0
    %v3645 = vadd.f32 %v3580, %v3644
    %3646 = vmatmul.f32.gmra.mxu0 %v2848
    %v3647 = vpop.f32.mrf.mxu0
    %v3648 = vadd.f32 %v3583, %v3647
    %3649 = vmatmul.f32.gmra.mxu0 %v2852
    %v3650 = vpop.f32.mrf.mxu0
    %v3651 = vadd.f32 %v3586, %v3650
    %3652 = vmatmul.f32.gmra.mxu0 %v2856
    %v3653 = vpop.f32.mrf.mxu0
    %v3654 = vadd.f32 %v3589, %v3653
    %3655 = vmatmul.f32.gmra.mxu0 %v2860
    %v3656 = vpop.f32.mrf.mxu0
    %v3657 = vadd.f32 %v3592, %v3656
    %3658 = vmatmul.f32.gmra.mxu0 %v2864
    %v3659 = vpop.f32.mrf.mxu0
    %v3660 = vadd.f32 %v3595, %v3659
    %3661 = vmatmul.f32.gmra.mxu0 %v2868
    %v3662 = vpop.f32.mrf.mxu0
    %v3663 = vadd.f32 %v3598, %v3662
    %3664 = vmatmul.f32.gmra.mxu0 %v2872
    %v3665 = vpop.f32.mrf.mxu0
    %v3666 = vadd.f32 %v3601, %v3665
    %3667 = vmatmul.f32.gmra.mxu0 %v2876
    %v3668 = vpop.f32.mrf.mxu0
    %v3669 = vadd.f32 %v3604, %v3668
    %3670 = vmatmul.f32.gmra.mxu0 %v2880
    %v3671 = vpop.f32.mrf.mxu0
    %v3672 = vadd.f32 %v3607, %v3671
    %3673 = vmatmul.f32.gmra.mxu0 %v2884
    %v3674 = vpop.f32.mrf.mxu0
    %v3675 = vadd.f32 %v3610, %v3674
    %3676 = vmatmul.f32.gmra.mxu0 %v2888
    %v3677 = vpop.f32.mrf.mxu0
    %v3678 = vadd.f32 %v3613, %v3677
    %3679 = vmatmul.f32.gmra.mxu0 %v2892
    %v3680 = vpop.f32.mrf.mxu0
    %v3681 = vadd.f32 %v3616, %v3680
    %3682 = vmatmul.f32.gmra.mxu0 %v2896
    %v3683 = vpop.f32.mrf.mxu0
    %v3684 = vadd.f32 %v3619, %v3683
    %3685 = vmatmul.f32.gmra.mxu0 %v2900
    %v3686 = vpop.f32.mrf.mxu0
    %v3687 = vadd.f32 %v3622, %v3686
    %3688 = vdwg.mxu0
    %3689 = vmatpush.msra.mxu0 %v2964
    %3690 = vmatpush.msra.mxu0 %v2960
    %3691 = vmatpush.msra.mxu0 %v2956
    %3692 = vmatpush.msra.mxu0 %v2952
    %3693 = vmatpush.msra.mxu0 %v2948
    %3694 = vmatpush.msra.mxu0 %v2944
    %3695 = vmatpush.msra.mxu0 %v2940
    %3696 = vmatpush.msra.mxu0 %v2936
    %3697 = vmatpush.msra.mxu0 %v2932
    %3698 = vmatpush.msra.mxu0 %v2928
    %3699 = vmatpush.msra.mxu0 %v2924
    %3700 = vmatpush.msra.mxu0 %v2920
    %3701 = vmatpush.msra.mxu0 %v2916
    %3702 = vmatpush.msra.mxu0 %v2912
    %3703 = vmatpush.msra.mxu0 %v2908
    %3704 = vmatpush.msra.mxu0 %v2904
    %3705 = vmatmul.f32.gmra.mxu0 %v2837
    %v3706 = vpop.f32.mrf.mxu0
    %v3707 = vadd.f32 %v3163, %v3706
    %3708 = vmatmul.f32.gmra.mxu0 %v2841
    %v3709 = vpop.f32.mrf.mxu0
    %v3710 = vadd.f32 %v3163, %v3709
    %3711 = vmatmul.f32.gmra.mxu0 %v2845
    %v3712 = vpop.f32.mrf.mxu0
    %v3713 = vadd.f32 %v3163, %v3712
    %3714 = vmatmul.f32.gmra.mxu0 %v2849
    %v3715 = vpop.f32.mrf.mxu0
    %v3716 = vadd.f32 %v3163, %v3715
    %3717 = vmatmul.f32.gmra.mxu0 %v2853
    %v3718 = vpop.f32.mrf.mxu0
    %v3719 = vadd.f32 %v3163, %v3718
    %3720 = vmatmul.f32.gmra.mxu0 %v2857
    %v3721 = vpop.f32.mrf.mxu0
    %v3722 = vadd.f32 %v3163, %v3721
    %3723 = vmatmul.f32.gmra.mxu0 %v2861
    %v3724 = vpop.f32.mrf.mxu0
    %v3725 = vadd.f32 %v3163, %v3724
    %3726 = vmatmul.f32.gmra.mxu0 %v2865
    %v3727 = vpop.f32.mrf.mxu0
    %v3728 = vadd.f32 %v3163, %v3727
    %3729 = vmatmul.f32.gmra.mxu0 %v2869
    %v3730 = vpop.f32.mrf.mxu0
    %v3731 = vadd.f32 %v3163, %v3730
    %3732 = vmatmul.f32.gmra.mxu0 %v2873
    %v3733 = vpop.f32.mrf.mxu0
    %v3734 = vadd.f32 %v3163, %v3733
    %3735 = vmatmul.f32.gmra.mxu0 %v2877
    %v3736 = vpop.f32.mrf.mxu0
    %v3737 = vadd.f32 %v3163, %v3736
    %3738 = vmatmul.f32.gmra.mxu0 %v2881
    %v3739 = vpop.f32.mrf.mxu0
    %v3740 = vadd.f32 %v3163, %v3739
    %3741 = vmatmul.f32.gmra.mxu0 %v2885
    %v3742 = vpop.f32.mrf.mxu0
    %v3743 = vadd.f32 %v3163, %v3742
    %3744 = vmatmul.f32.gmra.mxu0 %v2889
    %v3745 = vpop.f32.mrf.mxu0
    %v3746 = vadd.f32 %v3163, %v3745
    %3747 = vmatmul.f32.gmra.mxu0 %v2893
    %v3748 = vpop.f32.mrf.mxu0
    %v3749 = vadd.f32 %v3163, %v3748
    %3750 = vmatmul.f32.gmra.mxu0 %v2897
    %v3751 = vpop.f32.mrf.mxu0
    %v3752 = vadd.f32 %v3163, %v3751
    %3753 = vdwg.mxu0
    %3754 = vmatpush.msra.mxu0 %v3028
    %3755 = vmatpush.msra.mxu0 %v3024
    %3756 = vmatpush.msra.mxu0 %v3020
    %3757 = vmatpush.msra.mxu0 %v3016
    %3758 = vmatpush.msra.mxu0 %v3012
    %3759 = vmatpush.msra.mxu0 %v3008
    %3760 = vmatpush.msra.mxu0 %v3004
    %3761 = vmatpush.msra.mxu0 %v3000
    %3762 = vmatpush.msra.mxu0 %v2996
    %3763 = vmatpush.msra.mxu0 %v2992
    %3764 = vmatpush.msra.mxu0 %v2988
    %3765 = vmatpush.msra.mxu0 %v2984
    %3766 = vmatpush.msra.mxu0 %v2980
    %3767 = vmatpush.msra.mxu0 %v2976
    %3768 = vmatpush.msra.mxu0 %v2972
    %3769 = vmatpush.msra.mxu0 %v2968
    %3770 = vmatmul.f32.gmra.mxu0 %v2838
    %v3771 = vpop.f32.mrf.mxu0
    %v3772 = vadd.f32 %v3707, %v3771
    %3773 = vmatmul.f32.gmra.mxu0 %v2842
    %v3774 = vpop.f32.mrf.mxu0
    %v3775 = vadd.f32 %v3710, %v3774
    %3776 = vmatmul.f32.gmra.mxu0 %v2846
    %v3777 = vpop.f32.mrf.mxu0
    %v3778 = vadd.f32 %v3713, %v3777
    %3779 = vmatmul.f32.gmra.mxu0 %v2850
    %v3780 = vpop.f32.mrf.mxu0
    %v3781 = vadd.f32 %v3716, %v3780
    %3782 = vmatmul.f32.gmra.mxu0 %v2854
    %v3783 = vpop.f32.mrf.mxu0
    %v3784 = vadd.f32 %v3719, %v3783
    %3785 = vmatmul.f32.gmra.mxu0 %v2858
    %v3786 = vpop.f32.mrf.mxu0
    %v3787 = vadd.f32 %v3722, %v3786
    %3788 = vmatmul.f32.gmra.mxu0 %v2862
    %v3789 = vpop.f32.mrf.mxu0
    %v3790 = vadd.f32 %v3725, %v3789
    %3791 = vmatmul.f32.gmra.mxu0 %v2866
    %v3792 = vpop.f32.mrf.mxu0
    %v3793 = vadd.f32 %v3728, %v3792
    %3794 = vmatmul.f32.gmra.mxu0 %v2870
    %v3795 = vpop.f32.mrf.mxu0
    %v3796 = vadd.f32 %v3731, %v3795
    %3797 = vmatmul.f32.gmra.mxu0 %v2874
    %v3798 = vpop.f32.mrf.mxu0
    %v3799 = vadd.f32 %v3734, %v3798
    %3800 = vmatmul.f32.gmra.mxu0 %v2878
    %v3801 = vpop.f32.mrf.mxu0
    %v3802 = vadd.f32 %v3737, %v3801
    %3803 = vmatmul.f32.gmra.mxu0 %v2882
    %v3804 = vpop.f32.mrf.mxu0
    %v3805 = vadd.f32 %v3740, %v3804
    %3806 = vmatmul.f32.gmra.mxu0 %v2886
    %v3807 = vpop.f32.mrf.mxu0
    %v3808 = vadd.f32 %v3743, %v3807
    %3809 = vmatmul.f32.gmra.mxu0 %v2890
    %v3810 = vpop.f32.mrf.mxu0
    %v3811 = vadd.f32 %v3746, %v3810
    %3812 = vmatmul.f32.gmra.mxu0 %v2894
    %v3813 = vpop.f32.mrf.mxu0
    %v3814 = vadd.f32 %v3749, %v3813
    %3815 = vmatmul.f32.gmra.mxu0 %v2898
    %v3816 = vpop.f32.mrf.mxu0
    %v3817 = vadd.f32 %v3752, %v3816
    %3818 = vdwg.mxu0
    %3819 = vmatpush.msra.mxu0 %v3092
    %3820 = vmatpush.msra.mxu0 %v3088
    %3821 = vmatpush.msra.mxu0 %v3084
    %3822 = vmatpush.msra.mxu0 %v3080
    %3823 = vmatpush.msra.mxu0 %v3076
    %3824 = vmatpush.msra.mxu0 %v3072
    %3825 = vmatpush.msra.mxu0 %v3068
    %3826 = vmatpush.msra.mxu0 %v3064
    %3827 = vmatpush.msra.mxu0 %v3060
    %3828 = vmatpush.msra.mxu0 %v3056
    %3829 = vmatpush.msra.mxu0 %v3052
    %3830 = vmatpush.msra.mxu0 %v3048
    %3831 = vmatpush.msra.mxu0 %v3044
    %3832 = vmatpush.msra.mxu0 %v3040
    %3833 = vmatpush.msra.mxu0 %v3036
    %3834 = vmatpush.msra.mxu0 %v3032
    %3835 = vmatmul.f32.gmra.mxu0 %v2839
    %v3836 = vpop.f32.mrf.mxu0
    %v3837 = vadd.f32 %v3772, %v3836
    %3838 = vmatmul.f32.gmra.mxu0 %v2843
    %v3839 = vpop.f32.mrf.mxu0
    %v3840 = vadd.f32 %v3775, %v3839
    %3841 = vmatmul.f32.gmra.mxu0 %v2847
    %v3842 = vpop.f32.mrf.mxu0
    %v3843 = vadd.f32 %v3778, %v3842
    %3844 = vmatmul.f32.gmra.mxu0 %v2851
    %v3845 = vpop.f32.mrf.mxu0
    %v3846 = vadd.f32 %v3781, %v3845
    %3847 = vmatmul.f32.gmra.mxu0 %v2855
    %v3848 = vpop.f32.mrf.mxu0
    %v3849 = vadd.f32 %v3784, %v3848
    %3850 = vmatmul.f32.gmra.mxu0 %v2859
    %v3851 = vpop.f32.mrf.mxu0
    %v3852 = vadd.f32 %v3787, %v3851
    %3853 = vmatmul.f32.gmra.mxu0 %v2863
    %v3854 = vpop.f32.mrf.mxu0
    %v3855 = vadd.f32 %v3790, %v3854
    %3856 = vmatmul.f32.gmra.mxu0 %v2867
    %v3857 = vpop.f32.mrf.mxu0
    %v3858 = vadd.f32 %v3793, %v3857
    %3859 = vmatmul.f32.gmra.mxu0 %v2871
    %v3860 = vpop.f32.mrf.mxu0
    %v3861 = vadd.f32 %v3796, %v3860
    %3862 = vmatmul.f32.gmra.mxu0 %v2875
    %v3863 = vpop.f32.mrf.mxu0
    %v3864 = vadd.f32 %v3799, %v3863
    %3865 = vmatmul.f32.gmra.mxu0 %v2879
    %v3866 = vpop.f32.mrf.mxu0
    %v3867 = vadd.f32 %v3802, %v3866
    %3868 = vmatmul.f32.gmra.mxu0 %v2883
    %v3869 = vpop.f32.mrf.mxu0
    %v3870 = vadd.f32 %v3805, %v3869
    %3871 = vmatmul.f32.gmra.mxu0 %v2887
    %v3872 = vpop.f32.mrf.mxu0
    %v3873 = vadd.f32 %v3808, %v3872
    %3874 = vmatmul.f32.gmra.mxu0 %v2891
    %v3875 = vpop.f32.mrf.mxu0
    %v3876 = vadd.f32 %v3811, %v3875
    %3877 = vmatmul.f32.gmra.mxu0 %v2895
    %v3878 = vpop.f32.mrf.mxu0
    %v3879 = vadd.f32 %v3814, %v3878
    %3880 = vmatmul.f32.gmra.mxu0 %v2899
    %v3881 = vpop.f32.mrf.mxu0
    %v3882 = vadd.f32 %v3817, %v3881
    %3883 = vdwg.mxu0
    %3884 = vmatpush.msra.mxu0 %v3156
    %3885 = vmatpush.msra.mxu0 %v3152
    %3886 = vmatpush.msra.mxu0 %v3148
    %3887 = vmatpush.msra.mxu0 %v3144
    %3888 = vmatpush.msra.mxu0 %v3140
    %3889 = vmatpush.msra.mxu0 %v3136
    %3890 = vmatpush.msra.mxu0 %v3132
    %3891 = vmatpush.msra.mxu0 %v3128
    %3892 = vmatpush.msra.mxu0 %v3124
    %3893 = vmatpush.msra.mxu0 %v3120
    %3894 = vmatpush.msra.mxu0 %v3116
    %3895 = vmatpush.msra.mxu0 %v3112
    %3896 = vmatpush.msra.mxu0 %v3108
    %3897 = vmatpush.msra.mxu0 %v3104
    %3898 = vmatpush.msra.mxu0 %v3100
    %3899 = vmatpush.msra.mxu0 %v3096
    %3900 = vmatmul.f32.gmra.mxu0 %v2840
    %v3901 = vpop.f32.mrf.mxu0
    %v3902 = vadd.f32 %v3837, %v3901
    %3903 = vmatmul.f32.gmra.mxu0 %v2844
    %v3904 = vpop.f32.mrf.mxu0
    %v3905 = vadd.f32 %v3840, %v3904
    %3906 = vmatmul.f32.gmra.mxu0 %v2848
    %v3907 = vpop.f32.mrf.mxu0
    %v3908 = vadd.f32 %v3843, %v3907
    %3909 = vmatmul.f32.gmra.mxu0 %v2852
    %v3910 = vpop.f32.mrf.mxu0
    %v3911 = vadd.f32 %v3846, %v3910
    %3912 = vmatmul.f32.gmra.mxu0 %v2856
    %v3913 = vpop.f32.mrf.mxu0
    %v3914 = vadd.f32 %v3849, %v3913
    %3915 = vmatmul.f32.gmra.mxu0 %v2860
    %v3916 = vpop.f32.mrf.mxu0
    %v3917 = vadd.f32 %v3852, %v3916
    %3918 = vmatmul.f32.gmra.mxu0 %v2864
    %v3919 = vpop.f32.mrf.mxu0
    %v3920 = vadd.f32 %v3855, %v3919
    %3921 = vmatmul.f32.gmra.mxu0 %v2868
    %v3922 = vpop.f32.mrf.mxu0
    %v3923 = vadd.f32 %v3858, %v3922
    %3924 = vmatmul.f32.gmra.mxu0 %v2872
    %v3925 = vpop.f32.mrf.mxu0
    %v3926 = vadd.f32 %v3861, %v3925
    %3927 = vmatmul.f32.gmra.mxu0 %v2876
    %v3928 = vpop.f32.mrf.mxu0
    %v3929 = vadd.f32 %v3864, %v3928
    %3930 = vmatmul.f32.gmra.mxu0 %v2880
    %v3931 = vpop.f32.mrf.mxu0
    %v3932 = vadd.f32 %v3867, %v3931
    %3933 = vmatmul.f32.gmra.mxu0 %v2884
    %v3934 = vpop.f32.mrf.mxu0
    %v3935 = vadd.f32 %v3870, %v3934
    %3936 = vmatmul.f32.gmra.mxu0 %v2888
    %v3937 = vpop.f32.mrf.mxu0
    %v3938 = vadd.f32 %v3873, %v3937
    %3939 = vmatmul.f32.gmra.mxu0 %v2892
    %v3940 = vpop.f32.mrf.mxu0
    %v3941 = vadd.f32 %v3876, %v3940
    %3942 = vmatmul.f32.gmra.mxu0 %v2896
    %v3943 = vpop.f32.mrf.mxu0
    %v3944 = vadd.f32 %v3879, %v3943
    %3945 = vmatmul.f32.gmra.mxu0 %v2900
    %v3946 = vpop.f32.mrf.mxu0
    %v3947 = vadd.f32 %v3882, %v3946
    %3948 = vdwg.mxu0
    %3949 = vmatpush.msra.mxu0 %v2965
    %3950 = vmatpush.msra.mxu0 %v2961
    %3951 = vmatpush.msra.mxu0 %v2957
    %3952 = vmatpush.msra.mxu0 %v2953
    %3953 = vmatpush.msra.mxu0 %v2949
    %3954 = vmatpush.msra.mxu0 %v2945
    %3955 = vmatpush.msra.mxu0 %v2941
    %3956 = vmatpush.msra.mxu0 %v2937
    %3957 = vmatpush.msra.mxu0 %v2933
    %3958 = vmatpush.msra.mxu0 %v2929
    %3959 = vmatpush.msra.mxu0 %v2925
    %3960 = vmatpush.msra.mxu0 %v2921
    %3961 = vmatpush.msra.mxu0 %v2917
    %3962 = vmatpush.msra.mxu0 %v2913
    %3963 = vmatpush.msra.mxu0 %v2909
    %3964 = vmatpush.msra.mxu0 %v2905
    %3965 = vmatmul.f32.gmra.mxu0 %v2837
    %v3966 = vpop.f32.mrf.mxu0
    %v3967 = vadd.f32 %v3164, %v3966
    %3968 = vmatmul.f32.gmra.mxu0 %v2841
    %v3969 = vpop.f32.mrf.mxu0
    %v3970 = vadd.f32 %v3164, %v3969
    %3971 = vmatmul.f32.gmra.mxu0 %v2845
    %v3972 = vpop.f32.mrf.mxu0
    %v3973 = vadd.f32 %v3164, %v3972
    %3974 = vmatmul.f32.gmra.mxu0 %v2849
    %v3975 = vpop.f32.mrf.mxu0
    %v3976 = vadd.f32 %v3164, %v3975
    %3977 = vmatmul.f32.gmra.mxu0 %v2853
    %v3978 = vpop.f32.mrf.mxu0
    %v3979 = vadd.f32 %v3164, %v3978
    %3980 = vmatmul.f32.gmra.mxu0 %v2857
    %v3981 = vpop.f32.mrf.mxu0
    %v3982 = vadd.f32 %v3164, %v3981
    %3983 = vmatmul.f32.gmra.mxu0 %v2861
    %v3984 = vpop.f32.mrf.mxu0
    %v3985 = vadd.f32 %v3164, %v3984
    %3986 = vmatmul.f32.gmra.mxu0 %v2865
    %v3987 = vpop.f32.mrf.mxu0
    %v3988 = vadd.f32 %v3164, %v3987
    %3989 = vmatmul.f32.gmra.mxu0 %v2869
    %v3990 = vpop.f32.mrf.mxu0
    %v3991 = vadd.f32 %v3164, %v3990
    %3992 = vmatmul.f32.gmra.mxu0 %v2873
    %v3993 = vpop.f32.mrf.mxu0
    %v3994 = vadd.f32 %v3164, %v3993
    %3995 = vmatmul.f32.gmra.mxu0 %v2877
    %v3996 = vpop.f32.mrf.mxu0
    %v3997 = vadd.f32 %v3164, %v3996
    %3998 = vmatmul.f32.gmra.mxu0 %v2881
    %v3999 = vpop.f32.mrf.mxu0
    %v4000 = vadd.f32 %v3164, %v3999
    %4001 = vmatmul.f32.gmra.mxu0 %v2885
    %v4002 = vpop.f32.mrf.mxu0
    %v4003 = vadd.f32 %v3164, %v4002
    %4004 = vmatmul.f32.gmra.mxu0 %v2889
    %v4005 = vpop.f32.mrf.mxu0
    %v4006 = vadd.f32 %v3164, %v4005
    %4007 = vmatmul.f32.gmra.mxu0 %v2893
    %v4008 = vpop.f32.mrf.mxu0
    %v4009 = vadd.f32 %v3164, %v4008
    %4010 = vmatmul.f32.gmra.mxu0 %v2897
    %v4011 = vpop.f32.mrf.mxu0
    %v4012 = vadd.f32 %v3164, %v4011
    %4013 = vdwg.mxu0
    %4014 = vmatpush.msra.mxu0 %v3029
    %4015 = vmatpush.msra.mxu0 %v3025
    %4016 = vmatpush.msra.mxu0 %v3021
    %4017 = vmatpush.msra.mxu0 %v3017
    %4018 = vmatpush.msra.mxu0 %v3013
    %4019 = vmatpush.msra.mxu0 %v3009
    %4020 = vmatpush.msra.mxu0 %v3005
    %4021 = vmatpush.msra.mxu0 %v3001
    %4022 = vmatpush.msra.mxu0 %v2997
    %4023 = vmatpush.msra.mxu0 %v2993
    %4024 = vmatpush.msra.mxu0 %v2989
    %4025 = vmatpush.msra.mxu0 %v2985
    %4026 = vmatpush.msra.mxu0 %v2981
    %4027 = vmatpush.msra.mxu0 %v2977
    %4028 = vmatpush.msra.mxu0 %v2973
    %4029 = vmatpush.msra.mxu0 %v2969
    %4030 = vmatmul.f32.gmra.mxu0 %v2838
    %v4031 = vpop.f32.mrf.mxu0
    %v4032 = vadd.f32 %v3967, %v4031
    %4033 = vmatmul.f32.gmra.mxu0 %v2842
    %v4034 = vpop.f32.mrf.mxu0
    %v4035 = vadd.f32 %v3970, %v4034
    %4036 = vmatmul.f32.gmra.mxu0 %v2846
    %v4037 = vpop.f32.mrf.mxu0
    %v4038 = vadd.f32 %v3973, %v4037
    %4039 = vmatmul.f32.gmra.mxu0 %v2850
    %v4040 = vpop.f32.mrf.mxu0
    %v4041 = vadd.f32 %v3976, %v4040
    %4042 = vmatmul.f32.gmra.mxu0 %v2854
    %v4043 = vpop.f32.mrf.mxu0
    %v4044 = vadd.f32 %v3979, %v4043
    %4045 = vmatmul.f32.gmra.mxu0 %v2858
    %v4046 = vpop.f32.mrf.mxu0
    %v4047 = vadd.f32 %v3982, %v4046
    %4048 = vmatmul.f32.gmra.mxu0 %v2862
    %v4049 = vpop.f32.mrf.mxu0
    %v4050 = vadd.f32 %v3985, %v4049
    %4051 = vmatmul.f32.gmra.mxu0 %v2866
    %v4052 = vpop.f32.mrf.mxu0
    %v4053 = vadd.f32 %v3988, %v4052
    %4054 = vmatmul.f32.gmra.mxu0 %v2870
    %v4055 = vpop.f32.mrf.mxu0
    %v4056 = vadd.f32 %v3991, %v4055
    %4057 = vmatmul.f32.gmra.mxu0 %v2874
    %v4058 = vpop.f32.mrf.mxu0
    %v4059 = vadd.f32 %v3994, %v4058
    %4060 = vmatmul.f32.gmra.mxu0 %v2878
    %v4061 = vpop.f32.mrf.mxu0
    %v4062 = vadd.f32 %v3997, %v4061
    %4063 = vmatmul.f32.gmra.mxu0 %v2882
    %v4064 = vpop.f32.mrf.mxu0
    %v4065 = vadd.f32 %v4000, %v4064
    %4066 = vmatmul.f32.gmra.mxu0 %v2886
    %v4067 = vpop.f32.mrf.mxu0
    %v4068 = vadd.f32 %v4003, %v4067
    %4069 = vmatmul.f32.gmra.mxu0 %v2890
    %v4070 = vpop.f32.mrf.mxu0
    %v4071 = vadd.f32 %v4006, %v4070
    %4072 = vmatmul.f32.gmra.mxu0 %v2894
    %v4073 = vpop.f32.mrf.mxu0
    %v4074 = vadd.f32 %v4009, %v4073
    %4075 = vmatmul.f32.gmra.mxu0 %v2898
    %v4076 = vpop.f32.mrf.mxu0
    %v4077 = vadd.f32 %v4012, %v4076
    %4078 = vdwg.mxu0
    %4079 = vmatpush.msra.mxu0 %v3093
    %4080 = vmatpush.msra.mxu0 %v3089
    %4081 = vmatpush.msra.mxu0 %v3085
    %4082 = vmatpush.msra.mxu0 %v3081
    %4083 = vmatpush.msra.mxu0 %v3077
    %4084 = vmatpush.msra.mxu0 %v3073
    %4085 = vmatpush.msra.mxu0 %v3069
    %4086 = vmatpush.msra.mxu0 %v3065
    %4087 = vmatpush.msra.mxu0 %v3061
    %4088 = vmatpush.msra.mxu0 %v3057
    %4089 = vmatpush.msra.mxu0 %v3053
    %4090 = vmatpush.msra.mxu0 %v3049
    %4091 = vmatpush.msra.mxu0 %v3045
    %4092 = vmatpush.msra.mxu0 %v3041
    %4093 = vmatpush.msra.mxu0 %v3037
    %4094 = vmatpush.msra.mxu0 %v3033
    %4095 = vmatmul.f32.gmra.mxu0 %v2839
    %v4096 = vpop.f32.mrf.mxu0
    %v4097 = vadd.f32 %v4032, %v4096
    %4098 = vmatmul.f32.gmra.mxu0 %v2843
    %v4099 = vpop.f32.mrf.mxu0
    %v4100 = vadd.f32 %v4035, %v4099
    %4101 = vmatmul.f32.gmra.mxu0 %v2847
    %v4102 = vpop.f32.mrf.mxu0
    %v4103 = vadd.f32 %v4038, %v4102
    %4104 = vmatmul.f32.gmra.mxu0 %v2851
    %v4105 = vpop.f32.mrf.mxu0
    %v4106 = vadd.f32 %v4041, %v4105
    %4107 = vmatmul.f32.gmra.mxu0 %v2855
    %v4108 = vpop.f32.mrf.mxu0
    %v4109 = vadd.f32 %v4044, %v4108
    %4110 = vmatmul.f32.gmra.mxu0 %v2859
    %v4111 = vpop.f32.mrf.mxu0
    %v4112 = vadd.f32 %v4047, %v4111
    %4113 = vmatmul.f32.gmra.mxu0 %v2863
    %v4114 = vpop.f32.mrf.mxu0
    %v4115 = vadd.f32 %v4050, %v4114
    %4116 = vmatmul.f32.gmra.mxu0 %v2867
    %v4117 = vpop.f32.mrf.mxu0
    %v4118 = vadd.f32 %v4053, %v4117
    %4119 = vmatmul.f32.gmra.mxu0 %v2871
    %v4120 = vpop.f32.mrf.mxu0
    %v4121 = vadd.f32 %v4056, %v4120
    %4122 = vmatmul.f32.gmra.mxu0 %v2875
    %v4123 = vpop.f32.mrf.mxu0
    %v4124 = vadd.f32 %v4059, %v4123
    %4125 = vmatmul.f32.gmra.mxu0 %v2879
    %v4126 = vpop.f32.mrf.mxu0
    %v4127 = vadd.f32 %v4062, %v4126
    %4128 = vmatmul.f32.gmra.mxu0 %v2883
    %v4129 = vpop.f32.mrf.mxu0
    %v4130 = vadd.f32 %v4065, %v4129
    %4131 = vmatmul.f32.gmra.mxu0 %v2887
    %v4132 = vpop.f32.mrf.mxu0
    %v4133 = vadd.f32 %v4068, %v4132
    %4134 = vmatmul.f32.gmra.mxu0 %v2891
    %v4135 = vpop.f32.mrf.mxu0
    %v4136 = vadd.f32 %v4071, %v4135
    %4137 = vmatmul.f32.gmra.mxu0 %v2895
    %v4138 = vpop.f32.mrf.mxu0
    %v4139 = vadd.f32 %v4074, %v4138
    %4140 = vmatmul.f32.gmra.mxu0 %v2899
    %v4141 = vpop.f32.mrf.mxu0
    %v4142 = vadd.f32 %v4077, %v4141
    %4143 = vdwg.mxu0
    %4144 = vmatpush.msra.mxu0 %v3157
    %4145 = vmatpush.msra.mxu0 %v3153
    %4146 = vmatpush.msra.mxu0 %v3149
    %4147 = vmatpush.msra.mxu0 %v3145
    %4148 = vmatpush.msra.mxu0 %v3141
    %4149 = vmatpush.msra.mxu0 %v3137
    %4150 = vmatpush.msra.mxu0 %v3133
    %4151 = vmatpush.msra.mxu0 %v3129
    %4152 = vmatpush.msra.mxu0 %v3125
    %4153 = vmatpush.msra.mxu0 %v3121
    %4154 = vmatpush.msra.mxu0 %v3117
    %4155 = vmatpush.msra.mxu0 %v3113
    %4156 = vmatpush.msra.mxu0 %v3109
    %4157 = vmatpush.msra.mxu0 %v3105
    %4158 = vmatpush.msra.mxu0 %v3101
    %4159 = vmatpush.msra.mxu0 %v3097
    %4160 = vmatmul.f32.gmra.mxu0 %v2840
    %v4161 = vpop.f32.mrf.mxu0
    %v4162 = vadd.f32 %v4097, %v4161
    %4163 = vmatmul.f32.gmra.mxu0 %v2844
    %v4164 = vpop.f32.mrf.mxu0
    %v4165 = vadd.f32 %v4100, %v4164
    %4166 = vmatmul.f32.gmra.mxu0 %v2848
    %v4167 = vpop.f32.mrf.mxu0
    %v4168 = vadd.f32 %v4103, %v4167
    %4169 = vmatmul.f32.gmra.mxu0 %v2852
    %v4170 = vpop.f32.mrf.mxu0
    %v4171 = vadd.f32 %v4106, %v4170
    %4172 = vmatmul.f32.gmra.mxu0 %v2856
    %v4173 = vpop.f32.mrf.mxu0
    %v4174 = vadd.f32 %v4109, %v4173
    %4175 = vmatmul.f32.gmra.mxu0 %v2860
    %v4176 = vpop.f32.mrf.mxu0
    %v4177 = vadd.f32 %v4112, %v4176
    %4178 = vmatmul.f32.gmra.mxu0 %v2864
    %v4179 = vpop.f32.mrf.mxu0
    %v4180 = vadd.f32 %v4115, %v4179
    %4181 = vmatmul.f32.gmra.mxu0 %v2868
    %v4182 = vpop.f32.mrf.mxu0
    %v4183 = vadd.f32 %v4118, %v4182
    %4184 = vmatmul.f32.gmra.mxu0 %v2872
    %v4185 = vpop.f32.mrf.mxu0
    %v4186 = vadd.f32 %v4121, %v4185
    %4187 = vmatmul.f32.gmra.mxu0 %v2876
    %v4188 = vpop.f32.mrf.mxu0
    %v4189 = vadd.f32 %v4124, %v4188
    %4190 = vmatmul.f32.gmra.mxu0 %v2880
    %v4191 = vpop.f32.mrf.mxu0
    %v4192 = vadd.f32 %v4127, %v4191
    %4193 = vmatmul.f32.gmra.mxu0 %v2884
    %v4194 = vpop.f32.mrf.mxu0
    %v4195 = vadd.f32 %v4130, %v4194
    %4196 = vmatmul.f32.gmra.mxu0 %v2888
    %v4197 = vpop.f32.mrf.mxu0
    %v4198 = vadd.f32 %v4133, %v4197
    %4199 = vmatmul.f32.gmra.mxu0 %v2892
    %v4200 = vpop.f32.mrf.mxu0
    %v4201 = vadd.f32 %v4136, %v4200
    %4202 = vmatmul.f32.gmra.mxu0 %v2896
    %v4203 = vpop.f32.mrf.mxu0
    %v4204 = vadd.f32 %v4139, %v4203
    %4205 = vmatmul.f32.gmra.mxu0 %v2900
    %v4206 = vpop.f32.mrf.mxu0
    %v4207 = vadd.f32 %v4142, %v4206
    %4208 = vdwg.mxu0
    %v4209 = vmax.f32 %v3382, 0.0
    %v4210 = vmax.f32 %v3642, 0.0
    %v4211 = vmax.f32 %v3902, 0.0
    %v4212 = vmax.f32 %v4162, 0.0
    %v4213 = vmax.f32 %v3385, 0.0
    %v4214 = vmax.f32 %v3645, 0.0
    %v4215 = vmax.f32 %v3905, 0.0
    %v4216 = vmax.f32 %v4165, 0.0
    %v4217 = vmax.f32 %v3388, 0.0
    %v4218 = vmax.f32 %v3648, 0.0
    %v4219 = vmax.f32 %v3908, 0.0
    %v4220 = vmax.f32 %v4168, 0.0
    %v4221 = vmax.f32 %v3391, 0.0
    %v4222 = vmax.f32 %v3651, 0.0
    %v4223 = vmax.f32 %v3911, 0.0
    %v4224 = vmax.f32 %v4171, 0.0
    %v4225 = vmax.f32 %v3394, 0.0
    %v4226 = vmax.f32 %v3654, 0.0
    %v4227 = vmax.f32 %v3914, 0.0
    %v4228 = vmax.f32 %v4174, 0.0
    %v4229 = vmax.f32 %v3397, 0.0
    %v4230 = vmax.f32 %v3657, 0.0
    %v4231 = vmax.f32 %v3917, 0.0
    %v4232 = vmax.f32 %v4177, 0.0
    %v4233 = vmax.f32 %v3400, 0.0
    %v4234 = vmax.f32 %v3660, 0.0
    %v4235 = vmax.f32 %v3920, 0.0
    %v4236 = vmax.f32 %v4180, 0.0
    %v4237 = vmax.f32 %v3403, 0.0
    %v4238 = vmax.f32 %v3663, 0.0
    %v4239 = vmax.f32 %v3923, 0.0
    %v4240 = vmax.f32 %v4183, 0.0
    %v4241 = vmax.f32 %v3406, 0.0
    %v4242 = vmax.f32 %v3666, 0.0
    %v4243 = vmax.f32 %v3926, 0.0
    %v4244 = vmax.f32 %v4186, 0.0
    %v4245 = vmax.f32 %v3409, 0.0
    %v4246 = vmax.f32 %v3669, 0.0
    %v4247 = vmax.f32 %v3929, 0.0
    %v4248 = vmax.f32 %v4189, 0.0
    %v4249 = vmax.f32 %v3412, 0.0
    %v4250 = vmax.f32 %v3672, 0.0
    %v4251 = vmax.f32 %v3932, 0.0
    %v4252 = vmax.f32 %v4192, 0.0
    %v4253 = vmax.f32 %v3415, 0.0
    %v4254 = vmax.f32 %v3675, 0.0
    %v4255 = vmax.f32 %v3935, 0.0
    %v4256 = vmax.f32 %v4195, 0.0
    %v4257 = vmax.f32 %v3418, 0.0
    %v4258 = vmax.f32 %v3678, 0.0
    %v4259 = vmax.f32 %v3938, 0.0
    %v4260 = vmax.f32 %v4198, 0.0
    %v4261 = vmax.f32 %v3421, 0.0
    %v4262 = vmax.f32 %v3681, 0.0
    %v4263 = vmax.f32 %v3941, 0.0
    %v4264 = vmax.f32 %v4201, 0.0
    %v4265 = vmax.f32 %v3424, 0.0
    %v4266 = vmax.f32 %v3684, 0.0
    %v4267 = vmax.f32 %v3944, 0.0
    %v4268 = vmax.f32 %v4204, 0.0
    %v4269 = vmax.f32 %v3427, 0.0
    %v4270 = vmax.f32 %v3687, 0.0
    %v4271 = vmax.f32 %v3947, 0.0
    %v4272 = vmax.f32 %v4207, 0.0
    %s4273 = scalar_lea.vmem [#allocation5], 6144
    %v4274 = vld [vmem:[%s4273] sm:$0xff]
    %v4275 = vld [vmem:[%s4273 + $0x8] sm:$0xff]
    %v4276 = vld [vmem:[%s4273 + $0x10] sm:$0xff]
    %v4277 = vld [vmem:[%s4273 + $0x18] sm:$0xff]
    %v4278 = vld [vmem:[%s4273 + $0x20] sm:$0xff]
    %v4279 = vld [vmem:[%s4273 + $0x28] sm:$0xff]
    %v4280 = vld [vmem:[%s4273 + $0x30] sm:$0xff]
    %v4281 = vld [vmem:[%s4273 + $0x38] sm:$0xff]
    %v4282 = vld [vmem:[%s4273 + $0x40] sm:$0xff]
    %v4283 = vld [vmem:[%s4273 + $0x48] sm:$0xff]
    %v4284 = vld [vmem:[%s4273 + $0x50] sm:$0xff]
    %v4285 = vld [vmem:[%s4273 + $0x58] sm:$0xff]
    %v4286 = vld [vmem:[%s4273 + $0x60] sm:$0xff]
    %v4287 = vld [vmem:[%s4273 + $0x68] sm:$0xff]
    %v4288 = vld [vmem:[%s4273 + $0x70] sm:$0xff]
    %v4289 = vld [vmem:[%s4273 + $0x78] sm:$0xff]
    %v4290 = vld [vmem:[%s4273 + $0x80] sm:$0xff]
    %v4291 = vld [vmem:[%s4273 + $0x88] sm:$0xff]
    %v4292 = vld [vmem:[%s4273 + $0x90] sm:$0xff]
    %v4293 = vld [vmem:[%s4273 + $0x98] sm:$0xff]
    %v4294 = vld [vmem:[%s4273 + $0xa0] sm:$0xff]
    %v4295 = vld [vmem:[%s4273 + $0xa8] sm:$0xff]
    %v4296 = vld [vmem:[%s4273 + $0xb0] sm:$0xff]
    %v4297 = vld [vmem:[%s4273 + $0xb8] sm:$0xff]
    %v4298 = vld [vmem:[%s4273 + $0xc0] sm:$0xff]
    %v4299 = vld [vmem:[%s4273 + $0xc8] sm:$0xff]
    %v4300 = vld [vmem:[%s4273 + $0xd0] sm:$0xff]
    %v4301 = vld [vmem:[%s4273 + $0xd8] sm:$0xff]
    %v4302 = vld [vmem:[%s4273 + $0xe0] sm:$0xff]
    %v4303 = vld [vmem:[%s4273 + $0xe8] sm:$0xff]
    %v4304 = vld [vmem:[%s4273 + $0xf0] sm:$0xff]
    %v4305 = vld [vmem:[%s4273 + $0xf8] sm:$0xff]
    %v4306 = vld [vmem:[%s4273 + $0x100] sm:$0xff]
    %v4307 = vld [vmem:[%s4273 + $0x108] sm:$0xff]
    %v4308 = vld [vmem:[%s4273 + $0x110] sm:$0xff]
    %v4309 = vld [vmem:[%s4273 + $0x118] sm:$0xff]
    %v4310 = vld [vmem:[%s4273 + $0x120] sm:$0xff]
    %v4311 = vld [vmem:[%s4273 + $0x128] sm:$0xff]
    %v4312 = vld [vmem:[%s4273 + $0x130] sm:$0xff]
    %v4313 = vld [vmem:[%s4273 + $0x138] sm:$0xff]
    %v4314 = vld [vmem:[%s4273 + $0x140] sm:$0xff]
    %v4315 = vld [vmem:[%s4273 + $0x148] sm:$0xff]
    %v4316 = vld [vmem:[%s4273 + $0x150] sm:$0xff]
    %v4317 = vld [vmem:[%s4273 + $0x158] sm:$0xff]
    %v4318 = vld [vmem:[%s4273 + $0x160] sm:$0xff]
    %v4319 = vld [vmem:[%s4273 + $0x168] sm:$0xff]
    %v4320 = vld [vmem:[%s4273 + $0x170] sm:$0xff]
    %v4321 = vld [vmem:[%s4273 + $0x178] sm:$0xff]
    %v4322 = vld [vmem:[%s4273 + $0x180] sm:$0xff]
    %v4323 = vld [vmem:[%s4273 + $0x188] sm:$0xff]
    %v4324 = vld [vmem:[%s4273 + $0x190] sm:$0xff]
    %v4325 = vld [vmem:[%s4273 + $0x198] sm:$0xff]
    %v4326 = vld [vmem:[%s4273 + $0x1a0] sm:$0xff]
    %v4327 = vld [vmem:[%s4273 + $0x1a8] sm:$0xff]
    %v4328 = vld [vmem:[%s4273 + $0x1b0] sm:$0xff]
    %v4329 = vld [vmem:[%s4273 + $0x1b8] sm:$0xff]
    %v4330 = vld [vmem:[%s4273 + $0x1c0] sm:$0xff]
    %v4331 = vld [vmem:[%s4273 + $0x1c8] sm:$0xff]
    %v4332 = vld [vmem:[%s4273 + $0x1d0] sm:$0xff]
    %v4333 = vld [vmem:[%s4273 + $0x1d8] sm:$0xff]
    %v4334 = vld [vmem:[%s4273 + $0x1e0] sm:$0xff]
    %v4335 = vld [vmem:[%s4273 + $0x1e8] sm:$0xff]
    %v4336 = vld [vmem:[%s4273 + $0x1f0] sm:$0xff]
    %v4337 = vld [vmem:[%s4273 + $0x1f8] sm:$0xff]
    %v4338 = vld [vmem:[%s4273 + $0x200] sm:$0xff]
    %v4339 = vld [vmem:[%s4273 + $0x208] sm:$0xff]
    %v4340 = vld [vmem:[%s4273 + $0x210] sm:$0xff]
    %v4341 = vld [vmem:[%s4273 + $0x218] sm:$0xff]
    %v4342 = vld [vmem:[%s4273 + $0x220] sm:$0xff]
    %v4343 = vld [vmem:[%s4273 + $0x228] sm:$0xff]
    %v4344 = vld [vmem:[%s4273 + $0x230] sm:$0xff]
    %v4345 = vld [vmem:[%s4273 + $0x238] sm:$0xff]
    %v4346 = vld [vmem:[%s4273 + $0x240] sm:$0xff]
    %v4347 = vld [vmem:[%s4273 + $0x248] sm:$0xff]
    %v4348 = vld [vmem:[%s4273 + $0x250] sm:$0xff]
    %v4349 = vld [vmem:[%s4273 + $0x258] sm:$0xff]
    %v4350 = vld [vmem:[%s4273 + $0x260] sm:$0xff]
    %v4351 = vld [vmem:[%s4273 + $0x268] sm:$0xff]
    %v4352 = vld [vmem:[%s4273 + $0x270] sm:$0xff]
    %v4353 = vld [vmem:[%s4273 + $0x278] sm:$0xff]
    %v4354 = vld [vmem:[%s4273 + $0x280] sm:$0xff]
    %v4355 = vld [vmem:[%s4273 + $0x288] sm:$0xff]
    %v4356 = vld [vmem:[%s4273 + $0x290] sm:$0xff]
    %v4357 = vld [vmem:[%s4273 + $0x298] sm:$0xff]
    %v4358 = vld [vmem:[%s4273 + $0x2a0] sm:$0xff]
    %v4359 = vld [vmem:[%s4273 + $0x2a8] sm:$0xff]
    %v4360 = vld [vmem:[%s4273 + $0x2b0] sm:$0xff]
    %v4361 = vld [vmem:[%s4273 + $0x2b8] sm:$0xff]
    %v4362 = vld [vmem:[%s4273 + $0x2c0] sm:$0xff]
    %v4363 = vld [vmem:[%s4273 + $0x2c8] sm:$0xff]
    %v4364 = vld [vmem:[%s4273 + $0x2d0] sm:$0xff]
    %v4365 = vld [vmem:[%s4273 + $0x2d8] sm:$0xff]
    %v4366 = vld [vmem:[%s4273 + $0x2e0] sm:$0xff]
    %v4367 = vld [vmem:[%s4273 + $0x2e8] sm:$0xff]
    %v4368 = vld [vmem:[%s4273 + $0x2f0] sm:$0xff]
    %v4369 = vld [vmem:[%s4273 + $0x2f8] sm:$0xff]
    %v4370 = vld [vmem:[%s4273 + $0x300] sm:$0xff]
    %v4371 = vld [vmem:[%s4273 + $0x308] sm:$0xff]
    %v4372 = vld [vmem:[%s4273 + $0x310] sm:$0xff]
    %v4373 = vld [vmem:[%s4273 + $0x318] sm:$0xff]
    %v4374 = vld [vmem:[%s4273 + $0x320] sm:$0xff]
    %v4375 = vld [vmem:[%s4273 + $0x328] sm:$0xff]
    %v4376 = vld [vmem:[%s4273 + $0x330] sm:$0xff]
    %v4377 = vld [vmem:[%s4273 + $0x338] sm:$0xff]
    %v4378 = vld [vmem:[%s4273 + $0x340] sm:$0xff]
    %v4379 = vld [vmem:[%s4273 + $0x348] sm:$0xff]
    %v4380 = vld [vmem:[%s4273 + $0x350] sm:$0xff]
    %v4381 = vld [vmem:[%s4273 + $0x358] sm:$0xff]
    %v4382 = vld [vmem:[%s4273 + $0x360] sm:$0xff]
    %v4383 = vld [vmem:[%s4273 + $0x368] sm:$0xff]
    %v4384 = vld [vmem:[%s4273 + $0x370] sm:$0xff]
    %v4385 = vld [vmem:[%s4273 + $0x378] sm:$0xff]
    %v4386 = vld [vmem:[%s4273 + $0x380] sm:$0xff]
    %v4387 = vld [vmem:[%s4273 + $0x388] sm:$0xff]
    %v4388 = vld [vmem:[%s4273 + $0x390] sm:$0xff]
    %v4389 = vld [vmem:[%s4273 + $0x398] sm:$0xff]
    %v4390 = vld [vmem:[%s4273 + $0x3a0] sm:$0xff]
    %v4391 = vld [vmem:[%s4273 + $0x3a8] sm:$0xff]
    %v4392 = vld [vmem:[%s4273 + $0x3b0] sm:$0xff]
    %v4393 = vld [vmem:[%s4273 + $0x3b8] sm:$0xff]
    %v4394 = vld [vmem:[%s4273 + $0x3c0] sm:$0xff]
    %v4395 = vld [vmem:[%s4273 + $0x3c8] sm:$0xff]
    %v4396 = vld [vmem:[%s4273 + $0x3d0] sm:$0xff]
    %v4397 = vld [vmem:[%s4273 + $0x3d8] sm:$0xff]
    %v4398 = vld [vmem:[%s4273 + $0x3e0] sm:$0xff]
    %v4399 = vld [vmem:[%s4273 + $0x3e8] sm:$0xff]
    %v4400 = vld [vmem:[%s4273 + $0x3f0] sm:$0xff]
    %v4401 = vld [vmem:[%s4273 + $0x3f8] sm:$0xff]
    %v4402 = vld [vmem:[%s4273 + $0x400] sm:$0xff]
    %v4403 = vld [vmem:[%s4273 + $0x408] sm:$0xff]
    %v4404 = vld [vmem:[%s4273 + $0x410] sm:$0xff]
    %v4405 = vld [vmem:[%s4273 + $0x418] sm:$0xff]
    %v4406 = vld [vmem:[%s4273 + $0x420] sm:$0xff]
    %v4407 = vld [vmem:[%s4273 + $0x428] sm:$0xff]
    %v4408 = vld [vmem:[%s4273 + $0x430] sm:$0xff]
    %v4409 = vld [vmem:[%s4273 + $0x438] sm:$0xff]
    %v4410 = vld [vmem:[%s4273 + $0x440] sm:$0xff]
    %v4411 = vld [vmem:[%s4273 + $0x448] sm:$0xff]
    %v4412 = vld [vmem:[%s4273 + $0x450] sm:$0xff]
    %v4413 = vld [vmem:[%s4273 + $0x458] sm:$0xff]
    %v4414 = vld [vmem:[%s4273 + $0x460] sm:$0xff]
    %v4415 = vld [vmem:[%s4273 + $0x468] sm:$0xff]
    %v4416 = vld [vmem:[%s4273 + $0x470] sm:$0xff]
    %v4417 = vld [vmem:[%s4273 + $0x478] sm:$0xff]
    %v4418 = vld [vmem:[%s4273 + $0x480] sm:$0xff]
    %v4419 = vld [vmem:[%s4273 + $0x488] sm:$0xff]
    %v4420 = vld [vmem:[%s4273 + $0x490] sm:$0xff]
    %v4421 = vld [vmem:[%s4273 + $0x498] sm:$0xff]
    %v4422 = vld [vmem:[%s4273 + $0x4a0] sm:$0xff]
    %v4423 = vld [vmem:[%s4273 + $0x4a8] sm:$0xff]
    %v4424 = vld [vmem:[%s4273 + $0x4b0] sm:$0xff]
    %v4425 = vld [vmem:[%s4273 + $0x4b8] sm:$0xff]
    %v4426 = vld [vmem:[%s4273 + $0x4c0] sm:$0xff]
    %v4427 = vld [vmem:[%s4273 + $0x4c8] sm:$0xff]
    %v4428 = vld [vmem:[%s4273 + $0x4d0] sm:$0xff]
    %v4429 = vld [vmem:[%s4273 + $0x4d8] sm:$0xff]
    %v4430 = vld [vmem:[%s4273 + $0x4e0] sm:$0xff]
    %v4431 = vld [vmem:[%s4273 + $0x4e8] sm:$0xff]
    %v4432 = vld [vmem:[%s4273 + $0x4f0] sm:$0xff]
    %v4433 = vld [vmem:[%s4273 + $0x4f8] sm:$0xff]
    %v4434 = vld [vmem:[%s4273 + $0x500] sm:$0xff]
    %v4435 = vld [vmem:[%s4273 + $0x508] sm:$0xff]
    %v4436 = vld [vmem:[%s4273 + $0x510] sm:$0xff]
    %v4437 = vld [vmem:[%s4273 + $0x518] sm:$0xff]
    %v4438 = vld [vmem:[%s4273 + $0x520] sm:$0xff]
    %v4439 = vld [vmem:[%s4273 + $0x528] sm:$0xff]
    %v4440 = vld [vmem:[%s4273 + $0x530] sm:$0xff]
    %v4441 = vld [vmem:[%s4273 + $0x538] sm:$0xff]
    %v4442 = vld [vmem:[%s4273 + $0x540] sm:$0xff]
    %v4443 = vld [vmem:[%s4273 + $0x548] sm:$0xff]
    %v4444 = vld [vmem:[%s4273 + $0x550] sm:$0xff]
    %v4445 = vld [vmem:[%s4273 + $0x558] sm:$0xff]
    %v4446 = vld [vmem:[%s4273 + $0x560] sm:$0xff]
    %v4447 = vld [vmem:[%s4273 + $0x568] sm:$0xff]
    %v4448 = vld [vmem:[%s4273 + $0x570] sm:$0xff]
    %v4449 = vld [vmem:[%s4273 + $0x578] sm:$0xff]
    %v4450 = vld [vmem:[%s4273 + $0x580] sm:$0xff]
    %v4451 = vld [vmem:[%s4273 + $0x588] sm:$0xff]
    %v4452 = vld [vmem:[%s4273 + $0x590] sm:$0xff]
    %v4453 = vld [vmem:[%s4273 + $0x598] sm:$0xff]
    %v4454 = vld [vmem:[%s4273 + $0x5a0] sm:$0xff]
    %v4455 = vld [vmem:[%s4273 + $0x5a8] sm:$0xff]
    %v4456 = vld [vmem:[%s4273 + $0x5b0] sm:$0xff]
    %v4457 = vld [vmem:[%s4273 + $0x5b8] sm:$0xff]
    %v4458 = vld [vmem:[%s4273 + $0x5c0] sm:$0xff]
    %v4459 = vld [vmem:[%s4273 + $0x5c8] sm:$0xff]
    %v4460 = vld [vmem:[%s4273 + $0x5d0] sm:$0xff]
    %v4461 = vld [vmem:[%s4273 + $0x5d8] sm:$0xff]
    %v4462 = vld [vmem:[%s4273 + $0x5e0] sm:$0xff]
    %v4463 = vld [vmem:[%s4273 + $0x5e8] sm:$0xff]
    %v4464 = vld [vmem:[%s4273 + $0x5f0] sm:$0xff]
    %v4465 = vld [vmem:[%s4273 + $0x5f8] sm:$0xff]
    %v4466 = vld [vmem:[%s4273 + $0x600] sm:$0xff]
    %v4467 = vld [vmem:[%s4273 + $0x608] sm:$0xff]
    %v4468 = vld [vmem:[%s4273 + $0x610] sm:$0xff]
    %v4469 = vld [vmem:[%s4273 + $0x618] sm:$0xff]
    %v4470 = vld [vmem:[%s4273 + $0x620] sm:$0xff]
    %v4471 = vld [vmem:[%s4273 + $0x628] sm:$0xff]
    %v4472 = vld [vmem:[%s4273 + $0x630] sm:$0xff]
    %v4473 = vld [vmem:[%s4273 + $0x638] sm:$0xff]
    %v4474 = vld [vmem:[%s4273 + $0x640] sm:$0xff]
    %v4475 = vld [vmem:[%s4273 + $0x648] sm:$0xff]
    %v4476 = vld [vmem:[%s4273 + $0x650] sm:$0xff]
    %v4477 = vld [vmem:[%s4273 + $0x658] sm:$0xff]
    %v4478 = vld [vmem:[%s4273 + $0x660] sm:$0xff]
    %v4479 = vld [vmem:[%s4273 + $0x668] sm:$0xff]
    %v4480 = vld [vmem:[%s4273 + $0x670] sm:$0xff]
    %v4481 = vld [vmem:[%s4273 + $0x678] sm:$0xff]
    %v4482 = vld [vmem:[%s4273 + $0x680] sm:$0xff]
    %v4483 = vld [vmem:[%s4273 + $0x688] sm:$0xff]
    %v4484 = vld [vmem:[%s4273 + $0x690] sm:$0xff]
    %v4485 = vld [vmem:[%s4273 + $0x698] sm:$0xff]
    %v4486 = vld [vmem:[%s4273 + $0x6a0] sm:$0xff]
    %v4487 = vld [vmem:[%s4273 + $0x6a8] sm:$0xff]
    %v4488 = vld [vmem:[%s4273 + $0x6b0] sm:$0xff]
    %v4489 = vld [vmem:[%s4273 + $0x6b8] sm:$0xff]
    %v4490 = vld [vmem:[%s4273 + $0x6c0] sm:$0xff]
    %v4491 = vld [vmem:[%s4273 + $0x6c8] sm:$0xff]
    %v4492 = vld [vmem:[%s4273 + $0x6d0] sm:$0xff]
    %v4493 = vld [vmem:[%s4273 + $0x6d8] sm:$0xff]
    %v4494 = vld [vmem:[%s4273 + $0x6e0] sm:$0xff]
    %v4495 = vld [vmem:[%s4273 + $0x6e8] sm:$0xff]
    %v4496 = vld [vmem:[%s4273 + $0x6f0] sm:$0xff]
    %v4497 = vld [vmem:[%s4273 + $0x6f8] sm:$0xff]
    %v4498 = vld [vmem:[%s4273 + $0x700] sm:$0xff]
    %v4499 = vld [vmem:[%s4273 + $0x708] sm:$0xff]
    %v4500 = vld [vmem:[%s4273 + $0x710] sm:$0xff]
    %v4501 = vld [vmem:[%s4273 + $0x718] sm:$0xff]
    %v4502 = vld [vmem:[%s4273 + $0x720] sm:$0xff]
    %v4503 = vld [vmem:[%s4273 + $0x728] sm:$0xff]
    %v4504 = vld [vmem:[%s4273 + $0x730] sm:$0xff]
    %v4505 = vld [vmem:[%s4273 + $0x738] sm:$0xff]
    %v4506 = vld [vmem:[%s4273 + $0x740] sm:$0xff]
    %v4507 = vld [vmem:[%s4273 + $0x748] sm:$0xff]
    %v4508 = vld [vmem:[%s4273 + $0x750] sm:$0xff]
    %v4509 = vld [vmem:[%s4273 + $0x758] sm:$0xff]
    %v4510 = vld [vmem:[%s4273 + $0x760] sm:$0xff]
    %v4511 = vld [vmem:[%s4273 + $0x768] sm:$0xff]
    %v4512 = vld [vmem:[%s4273 + $0x770] sm:$0xff]
    %v4513 = vld [vmem:[%s4273 + $0x778] sm:$0xff]
    %v4514 = vld [vmem:[%s4273 + $0x780] sm:$0xff]
    %v4515 = vld [vmem:[%s4273 + $0x788] sm:$0xff]
    %v4516 = vld [vmem:[%s4273 + $0x790] sm:$0xff]
    %v4517 = vld [vmem:[%s4273 + $0x798] sm:$0xff]
    %v4518 = vld [vmem:[%s4273 + $0x7a0] sm:$0xff]
    %v4519 = vld [vmem:[%s4273 + $0x7a8] sm:$0xff]
    %v4520 = vld [vmem:[%s4273 + $0x7b0] sm:$0xff]
    %v4521 = vld [vmem:[%s4273 + $0x7b8] sm:$0xff]
    %v4522 = vld [vmem:[%s4273 + $0x7c0] sm:$0xff]
    %v4523 = vld [vmem:[%s4273 + $0x7c8] sm:$0xff]
    %v4524 = vld [vmem:[%s4273 + $0x7d0] sm:$0xff]
    %v4525 = vld [vmem:[%s4273 + $0x7d8] sm:$0xff]
    %v4526 = vld [vmem:[%s4273 + $0x7e0] sm:$0xff]
    %v4527 = vld [vmem:[%s4273 + $0x7e8] sm:$0xff]
    %v4528 = vld [vmem:[%s4273 + $0x7f0] sm:$0xff]
    %v4529 = vld [vmem:[%s4273 + $0x7f8] sm:$0xff]
    %s4530 = scalar_lea.vmem [#allocation7], 3
    %v4531 = vld [vmem:[%s4530] ss:$8 sm:$0xf]
    %v4533 = vperm.slane %v4531, 0
    %v4534 = vperm.slane %v4531, 1
    %v4535 = vperm.slane %v4531, 2
    %v4536 = vperm.slane %v4531, 3
    %4541 = vmatpush.msra.mxu0 %v4334
    %4542 = vmatpush.msra.mxu0 %v4330
    %4543 = vmatpush.msra.mxu0 %v4326
    %4544 = vmatpush.msra.mxu0 %v4322
    %4545 = vmatpush.msra.mxu0 %v4318
    %4546 = vmatpush.msra.mxu0 %v4314
    %4547 = vmatpush.msra.mxu0 %v4310
    %4548 = vmatpush.msra.mxu0 %v4306
    %4549 = vmatpush.msra.mxu0 %v4302
    %4550 = vmatpush.msra.mxu0 %v4298
    %4551 = vmatpush.msra.mxu0 %v4294
    %4552 = vmatpush.msra.mxu0 %v4290
    %4553 = vmatpush.msra.mxu0 %v4286
    %4554 = vmatpush.msra.mxu0 %v4282
    %4555 = vmatpush.msra.mxu0 %v4278
    %4556 = vmatpush.msra.mxu0 %v4274
    %4557 = vmatmul.f32.gmra.mxu0 %v4209
    %v4558 = vpop.f32.mrf.mxu0
    %v4559 = vadd.f32 %v4533, %v4558
    %4560 = vmatmul.f32.gmra.mxu0 %v4213
    %v4561 = vpop.f32.mrf.mxu0
    %v4562 = vadd.f32 %v4533, %v4561
    %4563 = vmatmul.f32.gmra.mxu0 %v4217
    %v4564 = vpop.f32.mrf.mxu0
    %v4565 = vadd.f32 %v4533, %v4564
    %4566 = vmatmul.f32.gmra.mxu0 %v4221
    %v4567 = vpop.f32.mrf.mxu0
    %v4568 = vadd.f32 %v4533, %v4567
    %4569 = vmatmul.f32.gmra.mxu0 %v4225
    %v4570 = vpop.f32.mrf.mxu0
    %v4571 = vadd.f32 %v4533, %v4570
    %4572 = vmatmul.f32.gmra.mxu0 %v4229
    %v4573 = vpop.f32.mrf.mxu0
    %v4574 = vadd.f32 %v4533, %v4573
    %4575 = vmatmul.f32.gmra.mxu0 %v4233
    %v4576 = vpop.f32.mrf.mxu0
    %v4577 = vadd.f32 %v4533, %v4576
    %4578 = vmatmul.f32.gmra.mxu0 %v4237
    %v4579 = vpop.f32.mrf.mxu0
    %v4580 = vadd.f32 %v4533, %v4579
    %4581 = vmatmul.f32.gmra.mxu0 %v4241
    %v4582 = vpop.f32.mrf.mxu0
    %v4583 = vadd.f32 %v4533, %v4582
    %4584 = vmatmul.f32.gmra.mxu0 %v4245
    %v4585 = vpop.f32.mrf.mxu0
    %v4586 = vadd.f32 %v4533, %v4585
    %4587 = vmatmul.f32.gmra.mxu0 %v4249
    %v4588 = vpop.f32.mrf.mxu0
    %v4589 = vadd.f32 %v4533, %v4588
    %4590 = vmatmul.f32.gmra.mxu0 %v4253
    %v4591 = vpop.f32.mrf.mxu0
    %v4592 = vadd.f32 %v4533, %v4591
    %4593 = vmatmul.f32.gmra.mxu0 %v4257
    %v4594 = vpop.f32.mrf.mxu0
    %v4595 = vadd.f32 %v4533, %v4594
    %4596 = vmatmul.f32.gmra.mxu0 %v4261
    %v4597 = vpop.f32.mrf.mxu0
    %v4598 = vadd.f32 %v4533, %v4597
    %4599 = vmatmul.f32.gmra.mxu0 %v4265
    %v4600 = vpop.f32.mrf.mxu0
    %v4601 = vadd.f32 %v4533, %v4600
    %4602 = vmatmul.f32.gmra.mxu0 %v4269
    %v4603 = vpop.f32.mrf.mxu0
    %v4604 = vadd.f32 %v4533, %v4603
    %4605 = vdwg.mxu0
    %4606 = vmatpush.msra.mxu0 %v4398
    %4607 = vmatpush.msra.mxu0 %v4394
    %4608 = vmatpush.msra.mxu0 %v4390
    %4609 = vmatpush.msra.mxu0 %v4386
    %4610 = vmatpush.msra.mxu0 %v4382
    %4611 = vmatpush.msra.mxu0 %v4378
    %4612 = vmatpush.msra.mxu0 %v4374
    %4613 = vmatpush.msra.mxu0 %v4370
    %4614 = vmatpush.msra.mxu0 %v4366
    %4615 = vmatpush.msra.mxu0 %v4362
    %4616 = vmatpush.msra.mxu0 %v4358
    %4617 = vmatpush.msra.mxu0 %v4354
    %4618 = vmatpush.msra.mxu0 %v4350
    %4619 = vmatpush.msra.mxu0 %v4346
    %4620 = vmatpush.msra.mxu0 %v4342
    %4621 = vmatpush.msra.mxu0 %v4338
    %4622 = vmatmul.f32.gmra.mxu0 %v4210
    %v4623 = vpop.f32.mrf.mxu0
    %v4624 = vadd.f32 %v4559, %v4623
    %4625 = vmatmul.f32.gmra.mxu0 %v4214
    %v4626 = vpop.f32.mrf.mxu0
    %v4627 = vadd.f32 %v4562, %v4626
    %4628 = vmatmul.f32.gmra.mxu0 %v4218
    %v4629 = vpop.f32.mrf.mxu0
    %v4630 = vadd.f32 %v4565, %v4629
    %4631 = vmatmul.f32.gmra.mxu0 %v4222
    %v4632 = vpop.f32.mrf.mxu0
    %v4633 = vadd.f32 %v4568, %v4632
    %4634 = vmatmul.f32.gmra.mxu0 %v4226
    %v4635 = vpop.f32.mrf.mxu0
    %v4636 = vadd.f32 %v4571, %v4635
    %4637 = vmatmul.f32.gmra.mxu0 %v4230
    %v4638 = vpop.f32.mrf.mxu0
    %v4639 = vadd.f32 %v4574, %v4638
    %4640 = vmatmul.f32.gmra.mxu0 %v4234
    %v4641 = vpop.f32.mrf.mxu0
    %v4642 = vadd.f32 %v4577, %v4641
    %4643 = vmatmul.f32.gmra.mxu0 %v4238
    %v4644 = vpop.f32.mrf.mxu0
    %v4645 = vadd.f32 %v4580, %v4644
    %4646 = vmatmul.f32.gmra.mxu0 %v4242
    %v4647 = vpop.f32.mrf.mxu0
    %v4648 = vadd.f32 %v4583, %v4647
    %4649 = vmatmul.f32.gmra.mxu0 %v4246
    %v4650 = vpop.f32.mrf.mxu0
    %v4651 = vadd.f32 %v4586, %v4650
    %4652 = vmatmul.f32.gmra.mxu0 %v4250
    %v4653 = vpop.f32.mrf.mxu0
    %v4654 = vadd.f32 %v4589, %v4653
    %4655 = vmatmul.f32.gmra.mxu0 %v4254
    %v4656 = vpop.f32.mrf.mxu0
    %v4657 = vadd.f32 %v4592, %v4656
    %4658 = vmatmul.f32.gmra.mxu0 %v4258
    %v4659 = vpop.f32.mrf.mxu0
    %v4660 = vadd.f32 %v4595, %v4659
    %4661 = vmatmul.f32.gmra.mxu0 %v4262
    %v4662 = vpop.f32.mrf.mxu0
    %v4663 = vadd.f32 %v4598, %v4662
    %4664 = vmatmul.f32.gmra.mxu0 %v4266
    %v4665 = vpop.f32.mrf.mxu0
    %v4666 = vadd.f32 %v4601, %v4665
    %4667 = vmatmul.f32.gmra.mxu0 %v4270
    %v4668 = vpop.f32.mrf.mxu0
    %v4669 = vadd.f32 %v4604, %v4668
    %4670 = vdwg.mxu0
    %4671 = vmatpush.msra.mxu0 %v4462
    %4672 = vmatpush.msra.mxu0 %v4458
    %4673 = vmatpush.msra.mxu0 %v4454
    %4674 = vmatpush.msra.mxu0 %v4450
    %4675 = vmatpush.msra.mxu0 %v4446
    %4676 = vmatpush.msra.mxu0 %v4442
    %4677 = vmatpush.msra.mxu0 %v4438
    %4678 = vmatpush.msra.mxu0 %v4434
    %4679 = vmatpush.msra.mxu0 %v4430
    %4680 = vmatpush.msra.mxu0 %v4426
    %4681 = vmatpush.msra.mxu0 %v4422
    %4682 = vmatpush.msra.mxu0 %v4418
    %4683 = vmatpush.msra.mxu0 %v4414
    %4684 = vmatpush.msra.mxu0 %v4410
    %4685 = vmatpush.msra.mxu0 %v4406
    %4686 = vmatpush.msra.mxu0 %v4402
    %4687 = vmatmul.f32.gmra.mxu0 %v4211
    %v4688 = vpop.f32.mrf.mxu0
    %v4689 = vadd.f32 %v4624, %v4688
    %4690 = vmatmul.f32.gmra.mxu0 %v4215
    %v4691 = vpop.f32.mrf.mxu0
    %v4692 = vadd.f32 %v4627, %v4691
    %4693 = vmatmul.f32.gmra.mxu0 %v4219
    %v4694 = vpop.f32.mrf.mxu0
    %v4695 = vadd.f32 %v4630, %v4694
    %4696 = vmatmul.f32.gmra.mxu0 %v4223
    %v4697 = vpop.f32.mrf.mxu0
    %v4698 = vadd.f32 %v4633, %v4697
    %4699 = vmatmul.f32.gmra.mxu0 %v4227
    %v4700 = vpop.f32.mrf.mxu0
    %v4701 = vadd.f32 %v4636, %v4700
    %4702 = vmatmul.f32.gmra.mxu0 %v4231
    %v4703 = vpop.f32.mrf.mxu0
    %v4704 = vadd.f32 %v4639, %v4703
    %4705 = vmatmul.f32.gmra.mxu0 %v4235
    %v4706 = vpop.f32.mrf.mxu0
    %v4707 = vadd.f32 %v4642, %v4706
    %4708 = vmatmul.f32.gmra.mxu0 %v4239
    %v4709 = vpop.f32.mrf.mxu0
    %v4710 = vadd.f32 %v4645, %v4709
    %4711 = vmatmul.f32.gmra.mxu0 %v4243
    %v4712 = vpop.f32.mrf.mxu0
    %v4713 = vadd.f32 %v4648, %v4712
    %4714 = vmatmul.f32.gmra.mxu0 %v4247
    %v4715 = vpop.f32.mrf.mxu0
    %v4716 = vadd.f32 %v4651, %v4715
    %4717 = vmatmul.f32.gmra.mxu0 %v4251
    %v4718 = vpop.f32.mrf.mxu0
    %v4719 = vadd.f32 %v4654, %v4718
    %4720 = vmatmul.f32.gmra.mxu0 %v4255
    %v4721 = vpop.f32.mrf.mxu0
    %v4722 = vadd.f32 %v4657, %v4721
    %4723 = vmatmul.f32.gmra.mxu0 %v4259
    %v4724 = vpop.f32.mrf.mxu0
    %v4725 = vadd.f32 %v4660, %v4724
    %4726 = vmatmul.f32.gmra.mxu0 %v4263
    %v4727 = vpop.f32.mrf.mxu0
    %v4728 = vadd.f32 %v4663, %v4727
    %4729 = vmatmul.f32.gmra.mxu0 %v4267
    %v4730 = vpop.f32.mrf.mxu0
    %v4731 = vadd.f32 %v4666, %v4730
    %4732 = vmatmul.f32.gmra.mxu0 %v4271
    %v4733 = vpop.f32.mrf.mxu0
    %v4734 = vadd.f32 %v4669, %v4733
    %4735 = vdwg.mxu0
    %4736 = vmatpush.msra.mxu0 %v4526
    %4737 = vmatpush.msra.mxu0 %v4522
    %4738 = vmatpush.msra.mxu0 %v4518
    %4739 = vmatpush.msra.mxu0 %v4514
    %4740 = vmatpush.msra.mxu0 %v4510
    %4741 = vmatpush.msra.mxu0 %v4506
    %4742 = vmatpush.msra.mxu0 %v4502
    %4743 = vmatpush.msra.mxu0 %v4498
    %4744 = vmatpush.msra.mxu0 %v4494
    %4745 = vmatpush.msra.mxu0 %v4490
    %4746 = vmatpush.msra.mxu0 %v4486
    %4747 = vmatpush.msra.mxu0 %v4482
    %4748 = vmatpush.msra.mxu0 %v4478
    %4749 = vmatpush.msra.mxu0 %v4474
    %4750 = vmatpush.msra.mxu0 %v4470
    %4751 = vmatpush.msra.mxu0 %v4466
    %4752 = vmatmul.f32.gmra.mxu0 %v4212
    %v4753 = vpop.f32.mrf.mxu0
    %v4754 = vadd.f32 %v4689, %v4753
    %4755 = vmatmul.f32.gmra.mxu0 %v4216
    %v4756 = vpop.f32.mrf.mxu0
    %v4757 = vadd.f32 %v4692, %v4756
    %4758 = vmatmul.f32.gmra.mxu0 %v4220
    %v4759 = vpop.f32.mrf.mxu0
    %v4760 = vadd.f32 %v4695, %v4759
    %4761 = vmatmul.f32.gmra.mxu0 %v4224
    %v4762 = vpop.f32.mrf.mxu0
    %v4763 = vadd.f32 %v4698, %v4762
    %4764 = vmatmul.f32.gmra.mxu0 %v4228
    %v4765 = vpop.f32.mrf.mxu0
    %v4766 = vadd.f32 %v4701, %v4765
    %4767 = vmatmul.f32.gmra.mxu0 %v4232
    %v4768 = vpop.f32.mrf.mxu0
    %v4769 = vadd.f32 %v4704, %v4768
    %4770 = vmatmul.f32.gmra.mxu0 %v4236
    %v4771 = vpop.f32.mrf.mxu0
    %v4772 = vadd.f32 %v4707, %v4771
    %4773 = vmatmul.f32.gmra.mxu0 %v4240
    %v4774 = vpop.f32.mrf.mxu0
    %v4775 = vadd.f32 %v4710, %v4774
    %4776 = vmatmul.f32.gmra.mxu0 %v4244
    %v4777 = vpop.f32.mrf.mxu0
    %v4778 = vadd.f32 %v4713, %v4777
    %4779 = vmatmul.f32.gmra.mxu0 %v4248
    %v4780 = vpop.f32.mrf.mxu0
    %v4781 = vadd.f32 %v4716, %v4780
    %4782 = vmatmul.f32.gmra.mxu0 %v4252
    %v4783 = vpop.f32.mrf.mxu0
    %v4784 = vadd.f32 %v4719, %v4783
    %4785 = vmatmul.f32.gmra.mxu0 %v4256
    %v4786 = vpop.f32.mrf.mxu0
    %v4787 = vadd.f32 %v4722, %v4786
    %4788 = vmatmul.f32.gmra.mxu0 %v4260
    %v4789 = vpop.f32.mrf.mxu0
    %v4790 = vadd.f32 %v4725, %v4789
    %4791 = vmatmul.f32.gmra.mxu0 %v4264
    %v4792 = vpop.f32.mrf.mxu0
    %v4793 = vadd.f32 %v4728, %v4792
    %4794 = vmatmul.f32.gmra.mxu0 %v4268
    %v4795 = vpop.f32.mrf.mxu0
    %v4796 = vadd.f32 %v4731, %v4795
    %4797 = vmatmul.f32.gmra.mxu0 %v4272
    %v4798 = vpop.f32.mrf.mxu0
    %v4799 = vadd.f32 %v4734, %v4798
    %4800 = vdwg.mxu0
    %4801 = vmatpush.msra.mxu0 %v4335
    %4802 = vmatpush.msra.mxu0 %v4331
    %4803 = vmatpush.msra.mxu0 %v4327
    %4804 = vmatpush.msra.mxu0 %v4323
    %4805 = vmatpush.msra.mxu0 %v4319
    %4806 = vmatpush.msra.mxu0 %v4315
    %4807 = vmatpush.msra.mxu0 %v4311
    %4808 = vmatpush.msra.mxu0 %v4307
    %4809 = vmatpush.msra.mxu0 %v4303
    %4810 = vmatpush.msra.mxu0 %v4299
    %4811 = vmatpush.msra.mxu0 %v4295
    %4812 = vmatpush.msra.mxu0 %v4291
    %4813 = vmatpush.msra.mxu0 %v4287
    %4814 = vmatpush.msra.mxu0 %v4283
    %4815 = vmatpush.msra.mxu0 %v4279
    %4816 = vmatpush.msra.mxu0 %v4275
    %4817 = vmatmul.f32.gmra.mxu0 %v4209
    %v4818 = vpop.f32.mrf.mxu0
    %v4819 = vadd.f32 %v4534, %v4818
    %4820 = vmatmul.f32.gmra.mxu0 %v4213
    %v4821 = vpop.f32.mrf.mxu0
    %v4822 = vadd.f32 %v4534, %v4821
    %4823 = vmatmul.f32.gmra.mxu0 %v4217
    %v4824 = vpop.f32.mrf.mxu0
    %v4825 = vadd.f32 %v4534, %v4824
    %4826 = vmatmul.f32.gmra.mxu0 %v4221
    %v4827 = vpop.f32.mrf.mxu0
    %v4828 = vadd.f32 %v4534, %v4827
    %4829 = vmatmul.f32.gmra.mxu0 %v4225
    %v4830 = vpop.f32.mrf.mxu0
    %v4831 = vadd.f32 %v4534, %v4830
    %4832 = vmatmul.f32.gmra.mxu0 %v4229
    %v4833 = vpop.f32.mrf.mxu0
    %v4834 = vadd.f32 %v4534, %v4833
    %4835 = vmatmul.f32.gmra.mxu0 %v4233
    %v4836 = vpop.f32.mrf.mxu0
    %v4837 = vadd.f32 %v4534, %v4836
    %4838 = vmatmul.f32.gmra.mxu0 %v4237
    %v4839 = vpop.f32.mrf.mxu0
    %v4840 = vadd.f32 %v4534, %v4839
    %4841 = vmatmul.f32.gmra.mxu0 %v4241
    %v4842 = vpop.f32.mrf.mxu0
    %v4843 = vadd.f32 %v4534, %v4842
    %4844 = vmatmul.f32.gmra.mxu0 %v4245
    %v4845 = vpop.f32.mrf.mxu0
    %v4846 = vadd.f32 %v4534, %v4845
    %4847 = vmatmul.f32.gmra.mxu0 %v4249
    %v4848 = vpop.f32.mrf.mxu0
    %v4849 = vadd.f32 %v4534, %v4848
    %4850 = vmatmul.f32.gmra.mxu0 %v4253
    %v4851 = vpop.f32.mrf.mxu0
    %v4852 = vadd.f32 %v4534, %v4851
    %4853 = vmatmul.f32.gmra.mxu0 %v4257
    %v4854 = vpop.f32.mrf.mxu0
    %v4855 = vadd.f32 %v4534, %v4854
    %4856 = vmatmul.f32.gmra.mxu0 %v4261
    %v4857 = vpop.f32.mrf.mxu0
    %v4858 = vadd.f32 %v4534, %v4857
    %4859 = vmatmul.f32.gmra.mxu0 %v4265
    %v4860 = vpop.f32.mrf.mxu0
    %v4861 = vadd.f32 %v4534, %v4860
    %4862 = vmatmul.f32.gmra.mxu0 %v4269
    %v4863 = vpop.f32.mrf.mxu0
    %v4864 = vadd.f32 %v4534, %v4863
    %4865 = vdwg.mxu0
    %4866 = vmatpush.msra.mxu0 %v4399
    %4867 = vmatpush.msra.mxu0 %v4395
    %4868 = vmatpush.msra.mxu0 %v4391
    %4869 = vmatpush.msra.mxu0 %v4387
    %4870 = vmatpush.msra.mxu0 %v4383
    %4871 = vmatpush.msra.mxu0 %v4379
    %4872 = vmatpush.msra.mxu0 %v4375
    %4873 = vmatpush.msra.mxu0 %v4371
    %4874 = vmatpush.msra.mxu0 %v4367
    %4875 = vmatpush.msra.mxu0 %v4363
    %4876 = vmatpush.msra.mxu0 %v4359
    %4877 = vmatpush.msra.mxu0 %v4355
    %4878 = vmatpush.msra.mxu0 %v4351
    %4879 = vmatpush.msra.mxu0 %v4347
    %4880 = vmatpush.msra.mxu0 %v4343
    %4881 = vmatpush.msra.mxu0 %v4339
    %4882 = vmatmul.f32.gmra.mxu0 %v4210
    %v4883 = vpop.f32.mrf.mxu0
    %v4884 = vadd.f32 %v4819, %v4883
    %4885 = vmatmul.f32.gmra.mxu0 %v4214
    %v4886 = vpop.f32.mrf.mxu0
    %v4887 = vadd.f32 %v4822, %v4886
    %4888 = vmatmul.f32.gmra.mxu0 %v4218
    %v4889 = vpop.f32.mrf.mxu0
    %v4890 = vadd.f32 %v4825, %v4889
    %4891 = vmatmul.f32.gmra.mxu0 %v4222
    %v4892 = vpop.f32.mrf.mxu0
    %v4893 = vadd.f32 %v4828, %v4892
    %4894 = vmatmul.f32.gmra.mxu0 %v4226
    %v4895 = vpop.f32.mrf.mxu0
    %v4896 = vadd.f32 %v4831, %v4895
    %4897 = vmatmul.f32.gmra.mxu0 %v4230
    %v4898 = vpop.f32.mrf.mxu0
    %v4899 = vadd.f32 %v4834, %v4898
    %4900 = vmatmul.f32.gmra.mxu0 %v4234
    %v4901 = vpop.f32.mrf.mxu0
    %v4902 = vadd.f32 %v4837, %v4901
    %4903 = vmatmul.f32.gmra.mxu0 %v4238
    %v4904 = vpop.f32.mrf.mxu0
    %v4905 = vadd.f32 %v4840, %v4904
    %4906 = vmatmul.f32.gmra.mxu0 %v4242
    %v4907 = vpop.f32.mrf.mxu0
    %v4908 = vadd.f32 %v4843, %v4907
    %4909 = vmatmul.f32.gmra.mxu0 %v4246
    %v4910 = vpop.f32.mrf.mxu0
    %v4911 = vadd.f32 %v4846, %v4910
    %4912 = vmatmul.f32.gmra.mxu0 %v4250
    %v4913 = vpop.f32.mrf.mxu0
    %v4914 = vadd.f32 %v4849, %v4913
    %4915 = vmatmul.f32.gmra.mxu0 %v4254
    %v4916 = vpop.f32.mrf.mxu0
    %v4917 = vadd.f32 %v4852, %v4916
    %4918 = vmatmul.f32.gmra.mxu0 %v4258
    %v4919 = vpop.f32.mrf.mxu0
    %v4920 = vadd.f32 %v4855, %v4919
    %4921 = vmatmul.f32.gmra.mxu0 %v4262
    %v4922 = vpop.f32.mrf.mxu0
    %v4923 = vadd.f32 %v4858, %v4922
    %4924 = vmatmul.f32.gmra.mxu0 %v4266
    %v4925 = vpop.f32.mrf.mxu0
    %v4926 = vadd.f32 %v4861, %v4925
    %4927 = vmatmul.f32.gmra.mxu0 %v4270
    %v4928 = vpop.f32.mrf.mxu0
    %v4929 = vadd.f32 %v4864, %v4928
    %4930 = vdwg.mxu0
    %4931 = vmatpush.msra.mxu0 %v4463
    %4932 = vmatpush.msra.mxu0 %v4459
    %4933 = vmatpush.msra.mxu0 %v4455
    %4934 = vmatpush.msra.mxu0 %v4451
    %4935 = vmatpush.msra.mxu0 %v4447
    %4936 = vmatpush.msra.mxu0 %v4443
    %4937 = vmatpush.msra.mxu0 %v4439
    %4938 = vmatpush.msra.mxu0 %v4435
    %4939 = vmatpush.msra.mxu0 %v4431
    %4940 = vmatpush.msra.mxu0 %v4427
    %4941 = vmatpush.msra.mxu0 %v4423
    %4942 = vmatpush.msra.mxu0 %v4419
    %4943 = vmatpush.msra.mxu0 %v4415
    %4944 = vmatpush.msra.mxu0 %v4411
    %4945 = vmatpush.msra.mxu0 %v4407
    %4946 = vmatpush.msra.mxu0 %v4403
    %4947 = vmatmul.f32.gmra.mxu0 %v4211
    %v4948 = vpop.f32.mrf.mxu0
    %v4949 = vadd.f32 %v4884, %v4948
    %4950 = vmatmul.f32.gmra.mxu0 %v4215
    %v4951 = vpop.f32.mrf.mxu0
    %v4952 = vadd.f32 %v4887, %v4951
    %4953 = vmatmul.f32.gmra.mxu0 %v4219
    %v4954 = vpop.f32.mrf.mxu0
    %v4955 = vadd.f32 %v4890, %v4954
    %4956 = vmatmul.f32.gmra.mxu0 %v4223
    %v4957 = vpop.f32.mrf.mxu0
    %v4958 = vadd.f32 %v4893, %v4957
    %4959 = vmatmul.f32.gmra.mxu0 %v4227
    %v4960 = vpop.f32.mrf.mxu0
    %v4961 = vadd.f32 %v4896, %v4960
    %4962 = vmatmul.f32.gmra.mxu0 %v4231
    %v4963 = vpop.f32.mrf.mxu0
    %v4964 = vadd.f32 %v4899, %v4963
    %4965 = vmatmul.f32.gmra.mxu0 %v4235
    %v4966 = vpop.f32.mrf.mxu0
    %v4967 = vadd.f32 %v4902, %v4966
    %4968 = vmatmul.f32.gmra.mxu0 %v4239
    %v4969 = vpop.f32.mrf.mxu0
    %v4970 = vadd.f32 %v4905, %v4969
    %4971 = vmatmul.f32.gmra.mxu0 %v4243
    %v4972 = vpop.f32.mrf.mxu0
    %v4973 = vadd.f32 %v4908, %v4972
    %4974 = vmatmul.f32.gmra.mxu0 %v4247
    %v4975 = vpop.f32.mrf.mxu0
    %v4976 = vadd.f32 %v4911, %v4975
    %4977 = vmatmul.f32.gmra.mxu0 %v4251
    %v4978 = vpop.f32.mrf.mxu0
    %v4979 = vadd.f32 %v4914, %v4978
    %4980 = vmatmul.f32.gmra.mxu0 %v4255
    %v4981 = vpop.f32.mrf.mxu0
    %v4982 = vadd.f32 %v4917, %v4981
    %4983 = vmatmul.f32.gmra.mxu0 %v4259
    %v4984 = vpop.f32.mrf.mxu0
    %v4985 = vadd.f32 %v4920, %v4984
    %4986 = vmatmul.f32.gmra.mxu0 %v4263
    %v4987 = vpop.f32.mrf.mxu0
    %v4988 = vadd.f32 %v4923, %v4987
    %4989 = vmatmul.f32.gmra.mxu0 %v4267
    %v4990 = vpop.f32.mrf.mxu0
    %v4991 = vadd.f32 %v4926, %v4990
    %4992 = vmatmul.f32.gmra.mxu0 %v4271
    %v4993 = vpop.f32.mrf.mxu0
    %v4994 = vadd.f32 %v4929, %v4993
    %4995 = vdwg.mxu0
    %4996 = vmatpush.msra.mxu0 %v4527
    %4997 = vmatpush.msra.mxu0 %v4523
    %4998 = vmatpush.msra.mxu0 %v4519
    %4999 = vmatpush.msra.mxu0 %v4515
    %5000 = vmatpush.msra.mxu0 %v4511
    %5001 = vmatpush.msra.mxu0 %v4507
    %5002 = vmatpush.msra.mxu0 %v4503
    %5003 = vmatpush.msra.mxu0 %v4499
    %5004 = vmatpush.msra.mxu0 %v4495
    %5005 = vmatpush.msra.mxu0 %v4491
    %5006 = vmatpush.msra.mxu0 %v4487
    %5007 = vmatpush.msra.mxu0 %v4483
    %5008 = vmatpush.msra.mxu0 %v4479
    %5009 = vmatpush.msra.mxu0 %v4475
    %5010 = vmatpush.msra.mxu0 %v4471
    %5011 = vmatpush.msra.mxu0 %v4467
    %5012 = vmatmul.f32.gmra.mxu0 %v4212
    %v5013 = vpop.f32.mrf.mxu0
    %v5014 = vadd.f32 %v4949, %v5013
    %5015 = vmatmul.f32.gmra.mxu0 %v4216
    %v5016 = vpop.f32.mrf.mxu0
    %v5017 = vadd.f32 %v4952, %v5016
    %5018 = vmatmul.f32.gmra.mxu0 %v4220
    %v5019 = vpop.f32.mrf.mxu0
    %v5020 = vadd.f32 %v4955, %v5019
    %5021 = vmatmul.f32.gmra.mxu0 %v4224
    %v5022 = vpop.f32.mrf.mxu0
    %v5023 = vadd.f32 %v4958, %v5022
    %5024 = vmatmul.f32.gmra.mxu0 %v4228
    %v5025 = vpop.f32.mrf.mxu0
    %v5026 = vadd.f32 %v4961, %v5025
    %5027 = vmatmul.f32.gmra.mxu0 %v4232
    %v5028 = vpop.f32.mrf.mxu0
    %v5029 = vadd.f32 %v4964, %v5028
    %5030 = vmatmul.f32.gmra.mxu0 %v4236
    %v5031 = vpop.f32.mrf.mxu0
    %v5032 = vadd.f32 %v4967, %v5031
    %5033 = vmatmul.f32.gmra.mxu0 %v4240
    %v5034 = vpop.f32.mrf.mxu0
    %v5035 = vadd.f32 %v4970, %v5034
    %5036 = vmatmul.f32.gmra.mxu0 %v4244
    %v5037 = vpop.f32.mrf.mxu0
    %v5038 = vadd.f32 %v4973, %v5037
    %5039 = vmatmul.f32.gmra.mxu0 %v4248
    %v5040 = vpop.f32.mrf.mxu0
    %v5041 = vadd.f32 %v4976, %v5040
    %5042 = vmatmul.f32.gmra.mxu0 %v4252
    %v5043 = vpop.f32.mrf.mxu0
    %v5044 = vadd.f32 %v4979, %v5043
    %5045 = vmatmul.f32.gmra.mxu0 %v4256
    %v5046 = vpop.f32.mrf.mxu0
    %v5047 = vadd.f32 %v4982, %v5046
    %5048 = vmatmul.f32.gmra.mxu0 %v4260
    %v5049 = vpop.f32.mrf.mxu0
    %v5050 = vadd.f32 %v4985, %v5049
    %5051 = vmatmul.f32.gmra.mxu0 %v4264
    %v5052 = vpop.f32.mrf.mxu0
    %v5053 = vadd.f32 %v4988, %v5052
    %5054 = vmatmul.f32.gmra.mxu0 %v4268
    %v5055 = vpop.f32.mrf.mxu0
    %v5056 = vadd.f32 %v4991, %v5055
    %5057 = vmatmul.f32.gmra.mxu0 %v4272
    %v5058 = vpop.f32.mrf.mxu0
    %v5059 = vadd.f32 %v4994, %v5058
    %5060 = vdwg.mxu0
    %5061 = vmatpush.msra.mxu0 %v4336
    %5062 = vmatpush.msra.mxu0 %v4332
    %5063 = vmatpush.msra.mxu0 %v4328
    %5064 = vmatpush.msra.mxu0 %v4324
    %5065 = vmatpush.msra.mxu0 %v4320
    %5066 = vmatpush.msra.mxu0 %v4316
    %5067 = vmatpush.msra.mxu0 %v4312
    %5068 = vmatpush.msra.mxu0 %v4308
    %5069 = vmatpush.msra.mxu0 %v4304
    %5070 = vmatpush.msra.mxu0 %v4300
    %5071 = vmatpush.msra.mxu0 %v4296
    %5072 = vmatpush.msra.mxu0 %v4292
    %5073 = vmatpush.msra.mxu0 %v4288
    %5074 = vmatpush.msra.mxu0 %v4284
    %5075 = vmatpush.msra.mxu0 %v4280
    %5076 = vmatpush.msra.mxu0 %v4276
    %5077 = vmatmul.f32.gmra.mxu0 %v4209
    %v5078 = vpop.f32.mrf.mxu0
    %v5079 = vadd.f32 %v4535, %v5078
    %5080 = vmatmul.f32.gmra.mxu0 %v4213
    %v5081 = vpop.f32.mrf.mxu0
    %v5082 = vadd.f32 %v4535, %v5081
    %5083 = vmatmul.f32.gmra.mxu0 %v4217
    %v5084 = vpop.f32.mrf.mxu0
    %v5085 = vadd.f32 %v4535, %v5084
    %5086 = vmatmul.f32.gmra.mxu0 %v4221
    %v5087 = vpop.f32.mrf.mxu0
    %v5088 = vadd.f32 %v4535, %v5087
    %5089 = vmatmul.f32.gmra.mxu0 %v4225
    %v5090 = vpop.f32.mrf.mxu0
    %v5091 = vadd.f32 %v4535, %v5090
    %5092 = vmatmul.f32.gmra.mxu0 %v4229
    %v5093 = vpop.f32.mrf.mxu0
    %v5094 = vadd.f32 %v4535, %v5093
    %5095 = vmatmul.f32.gmra.mxu0 %v4233
    %v5096 = vpop.f32.mrf.mxu0
    %v5097 = vadd.f32 %v4535, %v5096
    %5098 = vmatmul.f32.gmra.mxu0 %v4237
    %v5099 = vpop.f32.mrf.mxu0
    %v5100 = vadd.f32 %v4535, %v5099
    %5101 = vmatmul.f32.gmra.mxu0 %v4241
    %v5102 = vpop.f32.mrf.mxu0
    %v5103 = vadd.f32 %v4535, %v5102
    %5104 = vmatmul.f32.gmra.mxu0 %v4245
    %v5105 = vpop.f32.mrf.mxu0
    %v5106 = vadd.f32 %v4535, %v5105
    %5107 = vmatmul.f32.gmra.mxu0 %v4249
    %v5108 = vpop.f32.mrf.mxu0
    %v5109 = vadd.f32 %v4535, %v5108
    %5110 = vmatmul.f32.gmra.mxu0 %v4253
    %v5111 = vpop.f32.mrf.mxu0
    %v5112 = vadd.f32 %v4535, %v5111
    %5113 = vmatmul.f32.gmra.mxu0 %v4257
    %v5114 = vpop.f32.mrf.mxu0
    %v5115 = vadd.f32 %v4535, %v5114
    %5116 = vmatmul.f32.gmra.mxu0 %v4261
    %v5117 = vpop.f32.mrf.mxu0
    %v5118 = vadd.f32 %v4535, %v5117
    %5119 = vmatmul.f32.gmra.mxu0 %v4265
    %v5120 = vpop.f32.mrf.mxu0
    %v5121 = vadd.f32 %v4535, %v5120
    %5122 = vmatmul.f32.gmra.mxu0 %v4269
    %v5123 = vpop.f32.mrf.mxu0
    %v5124 = vadd.f32 %v4535, %v5123
    %5125 = vdwg.mxu0
    %5126 = vmatpush.msra.mxu0 %v4400
    %5127 = vmatpush.msra.mxu0 %v4396
    %5128 = vmatpush.msra.mxu0 %v4392
    %5129 = vmatpush.msra.mxu0 %v4388
    %5130 = vmatpush.msra.mxu0 %v4384
    %5131 = vmatpush.msra.mxu0 %v4380
    %5132 = vmatpush.msra.mxu0 %v4376
    %5133 = vmatpush.msra.mxu0 %v4372
    %5134 = vmatpush.msra.mxu0 %v4368
    %5135 = vmatpush.msra.mxu0 %v4364
    %5136 = vmatpush.msra.mxu0 %v4360
    %5137 = vmatpush.msra.mxu0 %v4356
    %5138 = vmatpush.msra.mxu0 %v4352
    %5139 = vmatpush.msra.mxu0 %v4348
    %5140 = vmatpush.msra.mxu0 %v4344
    %5141 = vmatpush.msra.mxu0 %v4340
    %5142 = vmatmul.f32.gmra.mxu0 %v4210
    %v5143 = vpop.f32.mrf.mxu0
    %v5144 = vadd.f32 %v5079, %v5143
    %5145 = vmatmul.f32.gmra.mxu0 %v4214
    %v5146 = vpop.f32.mrf.mxu0
    %v5147 = vadd.f32 %v5082, %v5146
    %5148 = vmatmul.f32.gmra.mxu0 %v4218
    %v5149 = vpop.f32.mrf.mxu0
    %v5150 = vadd.f32 %v5085, %v5149
    %5151 = vmatmul.f32.gmra.mxu0 %v4222
    %v5152 = vpop.f32.mrf.mxu0
    %v5153 = vadd.f32 %v5088, %v5152
    %5154 = vmatmul.f32.gmra.mxu0 %v4226
    %v5155 = vpop.f32.mrf.mxu0
    %v5156 = vadd.f32 %v5091, %v5155
    %5157 = vmatmul.f32.gmra.mxu0 %v4230
    %v5158 = vpop.f32.mrf.mxu0
    %v5159 = vadd.f32 %v5094, %v5158
    %5160 = vmatmul.f32.gmra.mxu0 %v4234
    %v5161 = vpop.f32.mrf.mxu0
    %v5162 = vadd.f32 %v5097, %v5161
    %5163 = vmatmul.f32.gmra.mxu0 %v4238
    %v5164 = vpop.f32.mrf.mxu0
    %v5165 = vadd.f32 %v5100, %v5164
    %5166 = vmatmul.f32.gmra.mxu0 %v4242
    %v5167 = vpop.f32.mrf.mxu0
    %v5168 = vadd.f32 %v5103, %v5167
    %5169 = vmatmul.f32.gmra.mxu0 %v4246
    %v5170 = vpop.f32.mrf.mxu0
    %v5171 = vadd.f32 %v5106, %v5170
    %5172 = vmatmul.f32.gmra.mxu0 %v4250
    %v5173 = vpop.f32.mrf.mxu0
    %v5174 = vadd.f32 %v5109, %v5173
    %5175 = vmatmul.f32.gmra.mxu0 %v4254
    %v5176 = vpop.f32.mrf.mxu0
    %v5177 = vadd.f32 %v5112, %v5176
    %5178 = vmatmul.f32.gmra.mxu0 %v4258
    %v5179 = vpop.f32.mrf.mxu0
    %v5180 = vadd.f32 %v5115, %v5179
    %5181 = vmatmul.f32.gmra.mxu0 %v4262
    %v5182 = vpop.f32.mrf.mxu0
    %v5183 = vadd.f32 %v5118, %v5182
    %5184 = vmatmul.f32.gmra.mxu0 %v4266
    %v5185 = vpop.f32.mrf.mxu0
    %v5186 = vadd.f32 %v5121, %v5185
    %5187 = vmatmul.f32.gmra.mxu0 %v4270
    %v5188 = vpop.f32.mrf.mxu0
    %v5189 = vadd.f32 %v5124, %v5188
    %5190 = vdwg.mxu0
    %5191 = vmatpush.msra.mxu0 %v4464
    %5192 = vmatpush.msra.mxu0 %v4460
    %5193 = vmatpush.msra.mxu0 %v4456
    %5194 = vmatpush.msra.mxu0 %v4452
    %5195 = vmatpush.msra.mxu0 %v4448
    %5196 = vmatpush.msra.mxu0 %v4444
    %5197 = vmatpush.msra.mxu0 %v4440
    %5198 = vmatpush.msra.mxu0 %v4436
    %5199 = vmatpush.msra.mxu0 %v4432
    %5200 = vmatpush.msra.mxu0 %v4428
    %5201 = vmatpush.msra.mxu0 %v4424
    %5202 = vmatpush.msra.mxu0 %v4420
    %5203 = vmatpush.msra.mxu0 %v4416
    %5204 = vmatpush.msra.mxu0 %v4412
    %5205 = vmatpush.msra.mxu0 %v4408
    %5206 = vmatpush.msra.mxu0 %v4404
    %5207 = vmatmul.f32.gmra.mxu0 %v4211
    %v5208 = vpop.f32.mrf.mxu0
    %v5209 = vadd.f32 %v5144, %v5208
    %5210 = vmatmul.f32.gmra.mxu0 %v4215
    %v5211 = vpop.f32.mrf.mxu0
    %v5212 = vadd.f32 %v5147, %v5211
    %5213 = vmatmul.f32.gmra.mxu0 %v4219
    %v5214 = vpop.f32.mrf.mxu0
    %v5215 = vadd.f32 %v5150, %v5214
    %5216 = vmatmul.f32.gmra.mxu0 %v4223
    %v5217 = vpop.f32.mrf.mxu0
    %v5218 = vadd.f32 %v5153, %v5217
    %5219 = vmatmul.f32.gmra.mxu0 %v4227
    %v5220 = vpop.f32.mrf.mxu0
    %v5221 = vadd.f32 %v5156, %v5220
    %5222 = vmatmul.f32.gmra.mxu0 %v4231
    %v5223 = vpop.f32.mrf.mxu0
    %v5224 = vadd.f32 %v5159, %v5223
    %5225 = vmatmul.f32.gmra.mxu0 %v4235
    %v5226 = vpop.f32.mrf.mxu0
    %v5227 = vadd.f32 %v5162, %v5226
    %5228 = vmatmul.f32.gmra.mxu0 %v4239
    %v5229 = vpop.f32.mrf.mxu0
    %v5230 = vadd.f32 %v5165, %v5229
    %5231 = vmatmul.f32.gmra.mxu0 %v4243
    %v5232 = vpop.f32.mrf.mxu0
    %v5233 = vadd.f32 %v5168, %v5232
    %5234 = vmatmul.f32.gmra.mxu0 %v4247
    %v5235 = vpop.f32.mrf.mxu0
    %v5236 = vadd.f32 %v5171, %v5235
    %5237 = vmatmul.f32.gmra.mxu0 %v4251
    %v5238 = vpop.f32.mrf.mxu0
    %v5239 = vadd.f32 %v5174, %v5238
    %5240 = vmatmul.f32.gmra.mxu0 %v4255
    %v5241 = vpop.f32.mrf.mxu0
    %v5242 = vadd.f32 %v5177, %v5241
    %5243 = vmatmul.f32.gmra.mxu0 %v4259
    %v5244 = vpop.f32.mrf.mxu0
    %v5245 = vadd.f32 %v5180, %v5244
    %5246 = vmatmul.f32.gmra.mxu0 %v4263
    %v5247 = vpop.f32.mrf.mxu0
    %v5248 = vadd.f32 %v5183, %v5247
    %5249 = vmatmul.f32.gmra.mxu0 %v4267
    %v5250 = vpop.f32.mrf.mxu0
    %v5251 = vadd.f32 %v5186, %v5250
    %5252 = vmatmul.f32.gmra.mxu0 %v4271
    %v5253 = vpop.f32.mrf.mxu0
    %v5254 = vadd.f32 %v5189, %v5253
    %5255 = vdwg.mxu0
    %5256 = vmatpush.msra.mxu0 %v4528
    %5257 = vmatpush.msra.mxu0 %v4524
    %5258 = vmatpush.msra.mxu0 %v4520
    %5259 = vmatpush.msra.mxu0 %v4516
    %5260 = vmatpush.msra.mxu0 %v4512
    %5261 = vmatpush.msra.mxu0 %v4508
    %5262 = vmatpush.msra.mxu0 %v4504
    %5263 = vmatpush.msra.mxu0 %v4500
    %5264 = vmatpush.msra.mxu0 %v4496
    %5265 = vmatpush.msra.mxu0 %v4492
    %5266 = vmatpush.msra.mxu0 %v4488
    %5267 = vmatpush.msra.mxu0 %v4484
    %5268 = vmatpush.msra.mxu0 %v4480
    %5269 = vmatpush.msra.mxu0 %v4476
    %5270 = vmatpush.msra.mxu0 %v4472
    %5271 = vmatpush.msra.mxu0 %v4468
    %5272 = vmatmul.f32.gmra.mxu0 %v4212
    %v5273 = vpop.f32.mrf.mxu0
    %v5274 = vadd.f32 %v5209, %v5273
    %5275 = vmatmul.f32.gmra.mxu0 %v4216
    %v5276 = vpop.f32.mrf.mxu0
    %v5277 = vadd.f32 %v5212, %v5276
    %5278 = vmatmul.f32.gmra.mxu0 %v4220
    %v5279 = vpop.f32.mrf.mxu0
    %v5280 = vadd.f32 %v5215, %v5279
    %5281 = vmatmul.f32.gmra.mxu0 %v4224
    %v5282 = vpop.f32.mrf.mxu0
    %v5283 = vadd.f32 %v5218, %v5282
    %5284 = vmatmul.f32.gmra.mxu0 %v4228
    %v5285 = vpop.f32.mrf.mxu0
    %v5286 = vadd.f32 %v5221, %v5285
    %5287 = vmatmul.f32.gmra.mxu0 %v4232
    %v5288 = vpop.f32.mrf.mxu0
    %v5289 = vadd.f32 %v5224, %v5288
    %5290 = vmatmul.f32.gmra.mxu0 %v4236
    %v5291 = vpop.f32.mrf.mxu0
    %v5292 = vadd.f32 %v5227, %v5291
    %5293 = vmatmul.f32.gmra.mxu0 %v4240
    %v5294 = vpop.f32.mrf.mxu0
    %v5295 = vadd.f32 %v5230, %v5294
    %5296 = vmatmul.f32.gmra.mxu0 %v4244
    %v5297 = vpop.f32.mrf.mxu0
    %v5298 = vadd.f32 %v5233, %v5297
    %5299 = vmatmul.f32.gmra.mxu0 %v4248
    %v5300 = vpop.f32.mrf.mxu0
    %v5301 = vadd.f32 %v5236, %v5300
    %5302 = vmatmul.f32.gmra.mxu0 %v4252
    %v5303 = vpop.f32.mrf.mxu0
    %v5304 = vadd.f32 %v5239, %v5303
    %5305 = vmatmul.f32.gmra.mxu0 %v4256
    %v5306 = vpop.f32.mrf.mxu0
    %v5307 = vadd.f32 %v5242, %v5306
    %5308 = vmatmul.f32.gmra.mxu0 %v4260
    %v5309 = vpop.f32.mrf.mxu0
    %v5310 = vadd.f32 %v5245, %v5309
    %5311 = vmatmul.f32.gmra.mxu0 %v4264
    %v5312 = vpop.f32.mrf.mxu0
    %v5313 = vadd.f32 %v5248, %v5312
    %5314 = vmatmul.f32.gmra.mxu0 %v4268
    %v5315 = vpop.f32.mrf.mxu0
    %v5316 = vadd.f32 %v5251, %v5315
    %5317 = vmatmul.f32.gmra.mxu0 %v4272
    %v5318 = vpop.f32.mrf.mxu0
    %v5319 = vadd.f32 %v5254, %v5318
    %5320 = vdwg.mxu0
    %5321 = vmatpush.msra.mxu0 %v4337
    %5322 = vmatpush.msra.mxu0 %v4333
    %5323 = vmatpush.msra.mxu0 %v4329
    %5324 = vmatpush.msra.mxu0 %v4325
    %5325 = vmatpush.msra.mxu0 %v4321
    %5326 = vmatpush.msra.mxu0 %v4317
    %5327 = vmatpush.msra.mxu0 %v4313
    %5328 = vmatpush.msra.mxu0 %v4309
    %5329 = vmatpush.msra.mxu0 %v4305
    %5330 = vmatpush.msra.mxu0 %v4301
    %5331 = vmatpush.msra.mxu0 %v4297
    %5332 = vmatpush.msra.mxu0 %v4293
    %5333 = vmatpush.msra.mxu0 %v4289
    %5334 = vmatpush.msra.mxu0 %v4285
    %5335 = vmatpush.msra.mxu0 %v4281
    %5336 = vmatpush.msra.mxu0 %v4277
    %5337 = vmatmul.f32.gmra.mxu0 %v4209
    %v5338 = vpop.f32.mrf.mxu0
    %v5339 = vadd.f32 %v4536, %v5338
    %5340 = vmatmul.f32.gmra.mxu0 %v4213
    %v5341 = vpop.f32.mrf.mxu0
    %v5342 = vadd.f32 %v4536, %v5341
    %5343 = vmatmul.f32.gmra.mxu0 %v4217
    %v5344 = vpop.f32.mrf.mxu0
    %v5345 = vadd.f32 %v4536, %v5344
    %5346 = vmatmul.f32.gmra.mxu0 %v4221
    %v5347 = vpop.f32.mrf.mxu0
    %v5348 = vadd.f32 %v4536, %v5347
    %5349 = vmatmul.f32.gmra.mxu0 %v4225
    %v5350 = vpop.f32.mrf.mxu0
    %v5351 = vadd.f32 %v4536, %v5350
    %5352 = vmatmul.f32.gmra.mxu0 %v4229
    %v5353 = vpop.f32.mrf.mxu0
    %v5354 = vadd.f32 %v4536, %v5353
    %5355 = vmatmul.f32.gmra.mxu0 %v4233
    %v5356 = vpop.f32.mrf.mxu0
    %v5357 = vadd.f32 %v4536, %v5356
    %5358 = vmatmul.f32.gmra.mxu0 %v4237
    %v5359 = vpop.f32.mrf.mxu0
    %v5360 = vadd.f32 %v4536, %v5359
    %5361 = vmatmul.f32.gmra.mxu0 %v4241
    %v5362 = vpop.f32.mrf.mxu0
    %v5363 = vadd.f32 %v4536, %v5362
    %5364 = vmatmul.f32.gmra.mxu0 %v4245
    %v5365 = vpop.f32.mrf.mxu0
    %v5366 = vadd.f32 %v4536, %v5365
    %5367 = vmatmul.f32.gmra.mxu0 %v4249
    %v5368 = vpop.f32.mrf.mxu0
    %v5369 = vadd.f32 %v4536, %v5368
    %5370 = vmatmul.f32.gmra.mxu0 %v4253
    %v5371 = vpop.f32.mrf.mxu0
    %v5372 = vadd.f32 %v4536, %v5371
    %5373 = vmatmul.f32.gmra.mxu0 %v4257
    %v5374 = vpop.f32.mrf.mxu0
    %v5375 = vadd.f32 %v4536, %v5374
    %5376 = vmatmul.f32.gmra.mxu0 %v4261
    %v5377 = vpop.f32.mrf.mxu0
    %v5378 = vadd.f32 %v4536, %v5377
    %5379 = vmatmul.f32.gmra.mxu0 %v4265
    %v5380 = vpop.f32.mrf.mxu0
    %v5381 = vadd.f32 %v4536, %v5380
    %5382 = vmatmul.f32.gmra.mxu0 %v4269
    %v5383 = vpop.f32.mrf.mxu0
    %v5384 = vadd.f32 %v4536, %v5383
    %5385 = vdwg.mxu0
    %5386 = vmatpush.msra.mxu0 %v4401
    %5387 = vmatpush.msra.mxu0 %v4397
    %5388 = vmatpush.msra.mxu0 %v4393
    %5389 = vmatpush.msra.mxu0 %v4389
    %5390 = vmatpush.msra.mxu0 %v4385
    %5391 = vmatpush.msra.mxu0 %v4381
    %5392 = vmatpush.msra.mxu0 %v4377
    %5393 = vmatpush.msra.mxu0 %v4373
    %5394 = vmatpush.msra.mxu0 %v4369
    %5395 = vmatpush.msra.mxu0 %v4365
    %5396 = vmatpush.msra.mxu0 %v4361
    %5397 = vmatpush.msra.mxu0 %v4357
    %5398 = vmatpush.msra.mxu0 %v4353
    %5399 = vmatpush.msra.mxu0 %v4349
    %5400 = vmatpush.msra.mxu0 %v4345
    %5401 = vmatpush.msra.mxu0 %v4341
    %5402 = vmatmul.f32.gmra.mxu0 %v4210
    %v5403 = vpop.f32.mrf.mxu0
    %v5404 = vadd.f32 %v5339, %v5403
    %5405 = vmatmul.f32.gmra.mxu0 %v4214
    %v5406 = vpop.f32.mrf.mxu0
    %v5407 = vadd.f32 %v5342, %v5406
    %5408 = vmatmul.f32.gmra.mxu0 %v4218
    %v5409 = vpop.f32.mrf.mxu0
    %v5410 = vadd.f32 %v5345, %v5409
    %5411 = vmatmul.f32.gmra.mxu0 %v4222
    %v5412 = vpop.f32.mrf.mxu0
    %v5413 = vadd.f32 %v5348, %v5412
    %5414 = vmatmul.f32.gmra.mxu0 %v4226
    %v5415 = vpop.f32.mrf.mxu0
    %v5416 = vadd.f32 %v5351, %v5415
    %5417 = vmatmul.f32.gmra.mxu0 %v4230
    %v5418 = vpop.f32.mrf.mxu0
    %v5419 = vadd.f32 %v5354, %v5418
    %5420 = vmatmul.f32.gmra.mxu0 %v4234
    %v5421 = vpop.f32.mrf.mxu0
    %v5422 = vadd.f32 %v5357, %v5421
    %5423 = vmatmul.f32.gmra.mxu0 %v4238
    %v5424 = vpop.f32.mrf.mxu0
    %v5425 = vadd.f32 %v5360, %v5424
    %5426 = vmatmul.f32.gmra.mxu0 %v4242
    %v5427 = vpop.f32.mrf.mxu0
    %v5428 = vadd.f32 %v5363, %v5427
    %5429 = vmatmul.f32.gmra.mxu0 %v4246
    %v5430 = vpop.f32.mrf.mxu0
    %v5431 = vadd.f32 %v5366, %v5430
    %5432 = vmatmul.f32.gmra.mxu0 %v4250
    %v5433 = vpop.f32.mrf.mxu0
    %v5434 = vadd.f32 %v5369, %v5433
    %5435 = vmatmul.f32.gmra.mxu0 %v4254
    %v5436 = vpop.f32.mrf.mxu0
    %v5437 = vadd.f32 %v5372, %v5436
    %5438 = vmatmul.f32.gmra.mxu0 %v4258
    %v5439 = vpop.f32.mrf.mxu0
    %v5440 = vadd.f32 %v5375, %v5439
    %5441 = vmatmul.f32.gmra.mxu0 %v4262
    %v5442 = vpop.f32.mrf.mxu0
    %v5443 = vadd.f32 %v5378, %v5442
    %5444 = vmatmul.f32.gmra.mxu0 %v4266
    %v5445 = vpop.f32.mrf.mxu0
    %v5446 = vadd.f32 %v5381, %v5445
    %5447 = vmatmul.f32.gmra.mxu0 %v4270
    %v5448 = vpop.f32.mrf.mxu0
    %v5449 = vadd.f32 %v5384, %v5448
    %5450 = vdwg.mxu0
    %5451 = vmatpush.msra.mxu0 %v4465
    %5452 = vmatpush.msra.mxu0 %v4461
    %5453 = vmatpush.msra.mxu0 %v4457
    %5454 = vmatpush.msra.mxu0 %v4453
    %5455 = vmatpush.msra.mxu0 %v4449
    %5456 = vmatpush.msra.mxu0 %v4445
    %5457 = vmatpush.msra.mxu0 %v4441
    %5458 = vmatpush.msra.mxu0 %v4437
    %5459 = vmatpush.msra.mxu0 %v4433
    %5460 = vmatpush.msra.mxu0 %v4429
    %5461 = vmatpush.msra.mxu0 %v4425
    %5462 = vmatpush.msra.mxu0 %v4421
    %5463 = vmatpush.msra.mxu0 %v4417
    %5464 = vmatpush.msra.mxu0 %v4413
    %5465 = vmatpush.msra.mxu0 %v4409
    %5466 = vmatpush.msra.mxu0 %v4405
    %5467 = vmatmul.f32.gmra.mxu0 %v4211
    %v5468 = vpop.f32.mrf.mxu0
    %v5469 = vadd.f32 %v5404, %v5468
    %5470 = vmatmul.f32.gmra.mxu0 %v4215
    %v5471 = vpop.f32.mrf.mxu0
    %v5472 = vadd.f32 %v5407, %v5471
    %5473 = vmatmul.f32.gmra.mxu0 %v4219
    %v5474 = vpop.f32.mrf.mxu0
    %v5475 = vadd.f32 %v5410, %v5474
    %5476 = vmatmul.f32.gmra.mxu0 %v4223
    %v5477 = vpop.f32.mrf.mxu0
    %v5478 = vadd.f32 %v5413, %v5477
    %5479 = vmatmul.f32.gmra.mxu0 %v4227
    %v5480 = vpop.f32.mrf.mxu0
    %v5481 = vadd.f32 %v5416, %v5480
    %5482 = vmatmul.f32.gmra.mxu0 %v4231
    %v5483 = vpop.f32.mrf.mxu0
    %v5484 = vadd.f32 %v5419, %v5483
    %5485 = vmatmul.f32.gmra.mxu0 %v4235
    %v5486 = vpop.f32.mrf.mxu0
    %v5487 = vadd.f32 %v5422, %v5486
    %5488 = vmatmul.f32.gmra.mxu0 %v4239
    %v5489 = vpop.f32.mrf.mxu0
    %v5490 = vadd.f32 %v5425, %v5489
    %5491 = vmatmul.f32.gmra.mxu0 %v4243
    %v5492 = vpop.f32.mrf.mxu0
    %v5493 = vadd.f32 %v5428, %v5492
    %5494 = vmatmul.f32.gmra.mxu0 %v4247
    %v5495 = vpop.f32.mrf.mxu0
    %v5496 = vadd.f32 %v5431, %v5495
    %5497 = vmatmul.f32.gmra.mxu0 %v4251
    %v5498 = vpop.f32.mrf.mxu0
    %v5499 = vadd.f32 %v5434, %v5498
    %5500 = vmatmul.f32.gmra.mxu0 %v4255
    %v5501 = vpop.f32.mrf.mxu0
    %v5502 = vadd.f32 %v5437, %v5501
    %5503 = vmatmul.f32.gmra.mxu0 %v4259
    %v5504 = vpop.f32.mrf.mxu0
    %v5505 = vadd.f32 %v5440, %v5504
    %5506 = vmatmul.f32.gmra.mxu0 %v4263
    %v5507 = vpop.f32.mrf.mxu0
    %v5508 = vadd.f32 %v5443, %v5507
    %5509 = vmatmul.f32.gmra.mxu0 %v4267
    %v5510 = vpop.f32.mrf.mxu0
    %v5511 = vadd.f32 %v5446, %v5510
    %5512 = vmatmul.f32.gmra.mxu0 %v4271
    %v5513 = vpop.f32.mrf.mxu0
    %v5514 = vadd.f32 %v5449, %v5513
    %5515 = vdwg.mxu0
    %5516 = vmatpush.msra.mxu0 %v4529
    %5517 = vmatpush.msra.mxu0 %v4525
    %5518 = vmatpush.msra.mxu0 %v4521
    %5519 = vmatpush.msra.mxu0 %v4517
    %5520 = vmatpush.msra.mxu0 %v4513
    %5521 = vmatpush.msra.mxu0 %v4509
    %5522 = vmatpush.msra.mxu0 %v4505
    %5523 = vmatpush.msra.mxu0 %v4501
    %5524 = vmatpush.msra.mxu0 %v4497
    %5525 = vmatpush.msra.mxu0 %v4493
    %5526 = vmatpush.msra.mxu0 %v4489
    %5527 = vmatpush.msra.mxu0 %v4485
    %5528 = vmatpush.msra.mxu0 %v4481
    %5529 = vmatpush.msra.mxu0 %v4477
    %5530 = vmatpush.msra.mxu0 %v4473
    %5531 = vmatpush.msra.mxu0 %v4469
    %5532 = vmatmul.f32.gmra.mxu0 %v4212
    %v5533 = vpop.f32.mrf.mxu0
    %v5534 = vadd.f32 %v5469, %v5533
    %5535 = vmatmul.f32.gmra.mxu0 %v4216
    %v5536 = vpop.f32.mrf.mxu0
    %v5537 = vadd.f32 %v5472, %v5536
    %5538 = vmatmul.f32.gmra.mxu0 %v4220
    %v5539 = vpop.f32.mrf.mxu0
    %v5540 = vadd.f32 %v5475, %v5539
    %5541 = vmatmul.f32.gmra.mxu0 %v4224
    %v5542 = vpop.f32.mrf.mxu0
    %v5543 = vadd.f32 %v5478, %v5542
    %5544 = vmatmul.f32.gmra.mxu0 %v4228
    %v5545 = vpop.f32.mrf.mxu0
    %v5546 = vadd.f32 %v5481, %v5545
    %5547 = vmatmul.f32.gmra.mxu0 %v4232
    %v5548 = vpop.f32.mrf.mxu0
    %v5549 = vadd.f32 %v5484, %v5548
    %5550 = vmatmul.f32.gmra.mxu0 %v4236
    %v5551 = vpop.f32.mrf.mxu0
    %v5552 = vadd.f32 %v5487, %v5551
    %5553 = vmatmul.f32.gmra.mxu0 %v4240
    %v5554 = vpop.f32.mrf.mxu0
    %v5555 = vadd.f32 %v5490, %v5554
    %5556 = vmatmul.f32.gmra.mxu0 %v4244
    %v5557 = vpop.f32.mrf.mxu0
    %v5558 = vadd.f32 %v5493, %v5557
    %5559 = vmatmul.f32.gmra.mxu0 %v4248
    %v5560 = vpop.f32.mrf.mxu0
    %v5561 = vadd.f32 %v5496, %v5560
    %5562 = vmatmul.f32.gmra.mxu0 %v4252
    %v5563 = vpop.f32.mrf.mxu0
    %v5564 = vadd.f32 %v5499, %v5563
    %5565 = vmatmul.f32.gmra.mxu0 %v4256
    %v5566 = vpop.f32.mrf.mxu0
    %v5567 = vadd.f32 %v5502, %v5566
    %5568 = vmatmul.f32.gmra.mxu0 %v4260
    %v5569 = vpop.f32.mrf.mxu0
    %v5570 = vadd.f32 %v5505, %v5569
    %5571 = vmatmul.f32.gmra.mxu0 %v4264
    %v5572 = vpop.f32.mrf.mxu0
    %v5573 = vadd.f32 %v5508, %v5572
    %5574 = vmatmul.f32.gmra.mxu0 %v4268
    %v5575 = vpop.f32.mrf.mxu0
    %v5576 = vadd.f32 %v5511, %v5575
    %5577 = vmatmul.f32.gmra.mxu0 %v4272
    %v5578 = vpop.f32.mrf.mxu0
    %v5579 = vadd.f32 %v5514, %v5578
    %5580 = vdwg.mxu0
    %v5581 = vmax.f32 %v4754, 0.0
    %v5582 = vmax.f32 %v5014, 0.0
    %v5583 = vmax.f32 %v5274, 0.0
    %v5584 = vmax.f32 %v5534, 0.0
    %v5585 = vmax.f32 %v4757, 0.0
    %v5586 = vmax.f32 %v5017, 0.0
    %v5587 = vmax.f32 %v5277, 0.0
    %v5588 = vmax.f32 %v5537, 0.0
    %v5589 = vmax.f32 %v4760, 0.0
    %v5590 = vmax.f32 %v5020, 0.0
    %v5591 = vmax.f32 %v5280, 0.0
    %v5592 = vmax.f32 %v5540, 0.0
    %v5593 = vmax.f32 %v4763, 0.0
    %v5594 = vmax.f32 %v5023, 0.0
    %v5595 = vmax.f32 %v5283, 0.0
    %v5596 = vmax.f32 %v5543, 0.0
    %v5597 = vmax.f32 %v4766, 0.0
    %v5598 = vmax.f32 %v5026, 0.0
    %v5599 = vmax.f32 %v5286, 0.0
    %v5600 = vmax.f32 %v5546, 0.0
    %v5601 = vmax.f32 %v4769, 0.0
    %v5602 = vmax.f32 %v5029, 0.0
    %v5603 = vmax.f32 %v5289, 0.0
    %v5604 = vmax.f32 %v5549, 0.0
    %v5605 = vmax.f32 %v4772, 0.0
    %v5606 = vmax.f32 %v5032, 0.0
    %v5607 = vmax.f32 %v5292, 0.0
    %v5608 = vmax.f32 %v5552, 0.0
    %v5609 = vmax.f32 %v4775, 0.0
    %v5610 = vmax.f32 %v5035, 0.0
    %v5611 = vmax.f32 %v5295, 0.0
    %v5612 = vmax.f32 %v5555, 0.0
    %v5613 = vmax.f32 %v4778, 0.0
    %v5614 = vmax.f32 %v5038, 0.0
    %v5615 = vmax.f32 %v5298, 0.0
    %v5616 = vmax.f32 %v5558, 0.0
    %v5617 = vmax.f32 %v4781, 0.0
    %v5618 = vmax.f32 %v5041, 0.0
    %v5619 = vmax.f32 %v5301, 0.0
    %v5620 = vmax.f32 %v5561, 0.0
    %v5621 = vmax.f32 %v4784, 0.0
    %v5622 = vmax.f32 %v5044, 0.0
    %v5623 = vmax.f32 %v5304, 0.0
    %v5624 = vmax.f32 %v5564, 0.0
    %v5625 = vmax.f32 %v4787, 0.0
    %v5626 = vmax.f32 %v5047, 0.0
    %v5627 = vmax.f32 %v5307, 0.0
    %v5628 = vmax.f32 %v5567, 0.0
    %v5629 = vmax.f32 %v4790, 0.0
    %v5630 = vmax.f32 %v5050, 0.0
    %v5631 = vmax.f32 %v5310, 0.0
    %v5632 = vmax.f32 %v5570, 0.0
    %v5633 = vmax.f32 %v4793, 0.0
    %v5634 = vmax.f32 %v5053, 0.0
    %v5635 = vmax.f32 %v5313, 0.0
    %v5636 = vmax.f32 %v5573, 0.0
    %v5637 = vmax.f32 %v4796, 0.0
    %v5638 = vmax.f32 %v5056, 0.0
    %v5639 = vmax.f32 %v5316, 0.0
    %v5640 = vmax.f32 %v5576, 0.0
    %v5641 = vmax.f32 %v4799, 0.0
    %v5642 = vmax.f32 %v5059, 0.0
    %v5643 = vmax.f32 %v5319, 0.0
    %v5644 = vmax.f32 %v5579, 0.0
    %s5645 = scalar_lea.vmem [#allocation5], 8192
    %v5646 = vld [vmem:[%s5645] sm:$0xff]
    %v5647 = vld [vmem:[%s5645 + $0x8] sm:$0xff]
    %v5648 = vld [vmem:[%s5645 + $0x10] sm:$0xff]
    %v5649 = vld [vmem:[%s5645 + $0x18] sm:$0xff]
    %v5650 = vld [vmem:[%s5645 + $0x20] sm:$0xff]
    %v5651 = vld [vmem:[%s5645 + $0x28] sm:$0xff]
    %v5652 = vld [vmem:[%s5645 + $0x30] sm:$0xff]
    %v5653 = vld [vmem:[%s5645 + $0x38] sm:$0xff]
    %v5654 = vld [vmem:[%s5645 + $0x40] sm:$0xff]
    %v5655 = vld [vmem:[%s5645 + $0x48] sm:$0xff]
    %v5656 = vld [vmem:[%s5645 + $0x50] sm:$0xff]
    %v5657 = vld [vmem:[%s5645 + $0x58] sm:$0xff]
    %v5658 = vld [vmem:[%s5645 + $0x60] sm:$0xff]
    %v5659 = vld [vmem:[%s5645 + $0x68] sm:$0xff]
    %v5660 = vld [vmem:[%s5645 + $0x70] sm:$0xff]
    %v5661 = vld [vmem:[%s5645 + $0x78] sm:$0xff]
    %v5662 = vld [vmem:[%s5645 + $0x80] sm:$0xff]
    %v5663 = vld [vmem:[%s5645 + $0x88] sm:$0xff]
    %v5664 = vld [vmem:[%s5645 + $0x90] sm:$0xff]
    %v5665 = vld [vmem:[%s5645 + $0x98] sm:$0xff]
    %v5666 = vld [vmem:[%s5645 + $0xa0] sm:$0xff]
    %v5667 = vld [vmem:[%s5645 + $0xa8] sm:$0xff]
    %v5668 = vld [vmem:[%s5645 + $0xb0] sm:$0xff]
    %v5669 = vld [vmem:[%s5645 + $0xb8] sm:$0xff]
    %v5670 = vld [vmem:[%s5645 + $0xc0] sm:$0xff]
    %v5671 = vld [vmem:[%s5645 + $0xc8] sm:$0xff]
    %v5672 = vld [vmem:[%s5645 + $0xd0] sm:$0xff]
    %v5673 = vld [vmem:[%s5645 + $0xd8] sm:$0xff]
    %v5674 = vld [vmem:[%s5645 + $0xe0] sm:$0xff]
    %v5675 = vld [vmem:[%s5645 + $0xe8] sm:$0xff]
    %v5676 = vld [vmem:[%s5645 + $0xf0] sm:$0xff]
    %v5677 = vld [vmem:[%s5645 + $0xf8] sm:$0xff]
    %v5678 = vld [vmem:[%s5645 + $0x100] sm:$0xff]
    %v5679 = vld [vmem:[%s5645 + $0x108] sm:$0xff]
    %v5680 = vld [vmem:[%s5645 + $0x110] sm:$0xff]
    %v5681 = vld [vmem:[%s5645 + $0x118] sm:$0xff]
    %v5682 = vld [vmem:[%s5645 + $0x120] sm:$0xff]
    %v5683 = vld [vmem:[%s5645 + $0x128] sm:$0xff]
    %v5684 = vld [vmem:[%s5645 + $0x130] sm:$0xff]
    %v5685 = vld [vmem:[%s5645 + $0x138] sm:$0xff]
    %v5686 = vld [vmem:[%s5645 + $0x140] sm:$0xff]
    %v5687 = vld [vmem:[%s5645 + $0x148] sm:$0xff]
    %v5688 = vld [vmem:[%s5645 + $0x150] sm:$0xff]
    %v5689 = vld [vmem:[%s5645 + $0x158] sm:$0xff]
    %v5690 = vld [vmem:[%s5645 + $0x160] sm:$0xff]
    %v5691 = vld [vmem:[%s5645 + $0x168] sm:$0xff]
    %v5692 = vld [vmem:[%s5645 + $0x170] sm:$0xff]
    %v5693 = vld [vmem:[%s5645 + $0x178] sm:$0xff]
    %v5694 = vld [vmem:[%s5645 + $0x180] sm:$0xff]
    %v5695 = vld [vmem:[%s5645 + $0x188] sm:$0xff]
    %v5696 = vld [vmem:[%s5645 + $0x190] sm:$0xff]
    %v5697 = vld [vmem:[%s5645 + $0x198] sm:$0xff]
    %v5698 = vld [vmem:[%s5645 + $0x1a0] sm:$0xff]
    %v5699 = vld [vmem:[%s5645 + $0x1a8] sm:$0xff]
    %v5700 = vld [vmem:[%s5645 + $0x1b0] sm:$0xff]
    %v5701 = vld [vmem:[%s5645 + $0x1b8] sm:$0xff]
    %v5702 = vld [vmem:[%s5645 + $0x1c0] sm:$0xff]
    %v5703 = vld [vmem:[%s5645 + $0x1c8] sm:$0xff]
    %v5704 = vld [vmem:[%s5645 + $0x1d0] sm:$0xff]
    %v5705 = vld [vmem:[%s5645 + $0x1d8] sm:$0xff]
    %v5706 = vld [vmem:[%s5645 + $0x1e0] sm:$0xff]
    %v5707 = vld [vmem:[%s5645 + $0x1e8] sm:$0xff]
    %v5708 = vld [vmem:[%s5645 + $0x1f0] sm:$0xff]
    %v5709 = vld [vmem:[%s5645 + $0x1f8] sm:$0xff]
    %v5710 = vld [vmem:[%s5645 + $0x200] sm:$0xff]
    %v5711 = vld [vmem:[%s5645 + $0x208] sm:$0xff]
    %v5712 = vld [vmem:[%s5645 + $0x210] sm:$0xff]
    %v5713 = vld [vmem:[%s5645 + $0x218] sm:$0xff]
    %v5714 = vld [vmem:[%s5645 + $0x220] sm:$0xff]
    %v5715 = vld [vmem:[%s5645 + $0x228] sm:$0xff]
    %v5716 = vld [vmem:[%s5645 + $0x230] sm:$0xff]
    %v5717 = vld [vmem:[%s5645 + $0x238] sm:$0xff]
    %v5718 = vld [vmem:[%s5645 + $0x240] sm:$0xff]
    %v5719 = vld [vmem:[%s5645 + $0x248] sm:$0xff]
    %v5720 = vld [vmem:[%s5645 + $0x250] sm:$0xff]
    %v5721 = vld [vmem:[%s5645 + $0x258] sm:$0xff]
    %v5722 = vld [vmem:[%s5645 + $0x260] sm:$0xff]
    %v5723 = vld [vmem:[%s5645 + $0x268] sm:$0xff]
    %v5724 = vld [vmem:[%s5645 + $0x270] sm:$0xff]
    %v5725 = vld [vmem:[%s5645 + $0x278] sm:$0xff]
    %v5726 = vld [vmem:[%s5645 + $0x280] sm:$0xff]
    %v5727 = vld [vmem:[%s5645 + $0x288] sm:$0xff]
    %v5728 = vld [vmem:[%s5645 + $0x290] sm:$0xff]
    %v5729 = vld [vmem:[%s5645 + $0x298] sm:$0xff]
    %v5730 = vld [vmem:[%s5645 + $0x2a0] sm:$0xff]
    %v5731 = vld [vmem:[%s5645 + $0x2a8] sm:$0xff]
    %v5732 = vld [vmem:[%s5645 + $0x2b0] sm:$0xff]
    %v5733 = vld [vmem:[%s5645 + $0x2b8] sm:$0xff]
    %v5734 = vld [vmem:[%s5645 + $0x2c0] sm:$0xff]
    %v5735 = vld [vmem:[%s5645 + $0x2c8] sm:$0xff]
    %v5736 = vld [vmem:[%s5645 + $0x2d0] sm:$0xff]
    %v5737 = vld [vmem:[%s5645 + $0x2d8] sm:$0xff]
    %v5738 = vld [vmem:[%s5645 + $0x2e0] sm:$0xff]
    %v5739 = vld [vmem:[%s5645 + $0x2e8] sm:$0xff]
    %v5740 = vld [vmem:[%s5645 + $0x2f0] sm:$0xff]
    %v5741 = vld [vmem:[%s5645 + $0x2f8] sm:$0xff]
    %v5742 = vld [vmem:[%s5645 + $0x300] sm:$0xff]
    %v5743 = vld [vmem:[%s5645 + $0x308] sm:$0xff]
    %v5744 = vld [vmem:[%s5645 + $0x310] sm:$0xff]
    %v5745 = vld [vmem:[%s5645 + $0x318] sm:$0xff]
    %v5746 = vld [vmem:[%s5645 + $0x320] sm:$0xff]
    %v5747 = vld [vmem:[%s5645 + $0x328] sm:$0xff]
    %v5748 = vld [vmem:[%s5645 + $0x330] sm:$0xff]
    %v5749 = vld [vmem:[%s5645 + $0x338] sm:$0xff]
    %v5750 = vld [vmem:[%s5645 + $0x340] sm:$0xff]
    %v5751 = vld [vmem:[%s5645 + $0x348] sm:$0xff]
    %v5752 = vld [vmem:[%s5645 + $0x350] sm:$0xff]
    %v5753 = vld [vmem:[%s5645 + $0x358] sm:$0xff]
    %v5754 = vld [vmem:[%s5645 + $0x360] sm:$0xff]
    %v5755 = vld [vmem:[%s5645 + $0x368] sm:$0xff]
    %v5756 = vld [vmem:[%s5645 + $0x370] sm:$0xff]
    %v5757 = vld [vmem:[%s5645 + $0x378] sm:$0xff]
    %v5758 = vld [vmem:[%s5645 + $0x380] sm:$0xff]
    %v5759 = vld [vmem:[%s5645 + $0x388] sm:$0xff]
    %v5760 = vld [vmem:[%s5645 + $0x390] sm:$0xff]
    %v5761 = vld [vmem:[%s5645 + $0x398] sm:$0xff]
    %v5762 = vld [vmem:[%s5645 + $0x3a0] sm:$0xff]
    %v5763 = vld [vmem:[%s5645 + $0x3a8] sm:$0xff]
    %v5764 = vld [vmem:[%s5645 + $0x3b0] sm:$0xff]
    %v5765 = vld [vmem:[%s5645 + $0x3b8] sm:$0xff]
    %v5766 = vld [vmem:[%s5645 + $0x3c0] sm:$0xff]
    %v5767 = vld [vmem:[%s5645 + $0x3c8] sm:$0xff]
    %v5768 = vld [vmem:[%s5645 + $0x3d0] sm:$0xff]
    %v5769 = vld [vmem:[%s5645 + $0x3d8] sm:$0xff]
    %v5770 = vld [vmem:[%s5645 + $0x3e0] sm:$0xff]
    %v5771 = vld [vmem:[%s5645 + $0x3e8] sm:$0xff]
    %v5772 = vld [vmem:[%s5645 + $0x3f0] sm:$0xff]
    %v5773 = vld [vmem:[%s5645 + $0x3f8] sm:$0xff]
    %v5774 = vld [vmem:[%s5645 + $0x400] sm:$0xff]
    %v5775 = vld [vmem:[%s5645 + $0x408] sm:$0xff]
    %v5776 = vld [vmem:[%s5645 + $0x410] sm:$0xff]
    %v5777 = vld [vmem:[%s5645 + $0x418] sm:$0xff]
    %v5778 = vld [vmem:[%s5645 + $0x420] sm:$0xff]
    %v5779 = vld [vmem:[%s5645 + $0x428] sm:$0xff]
    %v5780 = vld [vmem:[%s5645 + $0x430] sm:$0xff]
    %v5781 = vld [vmem:[%s5645 + $0x438] sm:$0xff]
    %v5782 = vld [vmem:[%s5645 + $0x440] sm:$0xff]
    %v5783 = vld [vmem:[%s5645 + $0x448] sm:$0xff]
    %v5784 = vld [vmem:[%s5645 + $0x450] sm:$0xff]
    %v5785 = vld [vmem:[%s5645 + $0x458] sm:$0xff]
    %v5786 = vld [vmem:[%s5645 + $0x460] sm:$0xff]
    %v5787 = vld [vmem:[%s5645 + $0x468] sm:$0xff]
    %v5788 = vld [vmem:[%s5645 + $0x470] sm:$0xff]
    %v5789 = vld [vmem:[%s5645 + $0x478] sm:$0xff]
    %v5790 = vld [vmem:[%s5645 + $0x480] sm:$0xff]
    %v5791 = vld [vmem:[%s5645 + $0x488] sm:$0xff]
    %v5792 = vld [vmem:[%s5645 + $0x490] sm:$0xff]
    %v5793 = vld [vmem:[%s5645 + $0x498] sm:$0xff]
    %v5794 = vld [vmem:[%s5645 + $0x4a0] sm:$0xff]
    %v5795 = vld [vmem:[%s5645 + $0x4a8] sm:$0xff]
    %v5796 = vld [vmem:[%s5645 + $0x4b0] sm:$0xff]
    %v5797 = vld [vmem:[%s5645 + $0x4b8] sm:$0xff]
    %v5798 = vld [vmem:[%s5645 + $0x4c0] sm:$0xff]
    %v5799 = vld [vmem:[%s5645 + $0x4c8] sm:$0xff]
    %v5800 = vld [vmem:[%s5645 + $0x4d0] sm:$0xff]
    %v5801 = vld [vmem:[%s5645 + $0x4d8] sm:$0xff]
    %v5802 = vld [vmem:[%s5645 + $0x4e0] sm:$0xff]
    %v5803 = vld [vmem:[%s5645 + $0x4e8] sm:$0xff]
    %v5804 = vld [vmem:[%s5645 + $0x4f0] sm:$0xff]
    %v5805 = vld [vmem:[%s5645 + $0x4f8] sm:$0xff]
    %v5806 = vld [vmem:[%s5645 + $0x500] sm:$0xff]
    %v5807 = vld [vmem:[%s5645 + $0x508] sm:$0xff]
    %v5808 = vld [vmem:[%s5645 + $0x510] sm:$0xff]
    %v5809 = vld [vmem:[%s5645 + $0x518] sm:$0xff]
    %v5810 = vld [vmem:[%s5645 + $0x520] sm:$0xff]
    %v5811 = vld [vmem:[%s5645 + $0x528] sm:$0xff]
    %v5812 = vld [vmem:[%s5645 + $0x530] sm:$0xff]
    %v5813 = vld [vmem:[%s5645 + $0x538] sm:$0xff]
    %v5814 = vld [vmem:[%s5645 + $0x540] sm:$0xff]
    %v5815 = vld [vmem:[%s5645 + $0x548] sm:$0xff]
    %v5816 = vld [vmem:[%s5645 + $0x550] sm:$0xff]
    %v5817 = vld [vmem:[%s5645 + $0x558] sm:$0xff]
    %v5818 = vld [vmem:[%s5645 + $0x560] sm:$0xff]
    %v5819 = vld [vmem:[%s5645 + $0x568] sm:$0xff]
    %v5820 = vld [vmem:[%s5645 + $0x570] sm:$0xff]
    %v5821 = vld [vmem:[%s5645 + $0x578] sm:$0xff]
    %v5822 = vld [vmem:[%s5645 + $0x580] sm:$0xff]
    %v5823 = vld [vmem:[%s5645 + $0x588] sm:$0xff]
    %v5824 = vld [vmem:[%s5645 + $0x590] sm:$0xff]
    %v5825 = vld [vmem:[%s5645 + $0x598] sm:$0xff]
    %v5826 = vld [vmem:[%s5645 + $0x5a0] sm:$0xff]
    %v5827 = vld [vmem:[%s5645 + $0x5a8] sm:$0xff]
    %v5828 = vld [vmem:[%s5645 + $0x5b0] sm:$0xff]
    %v5829 = vld [vmem:[%s5645 + $0x5b8] sm:$0xff]
    %v5830 = vld [vmem:[%s5645 + $0x5c0] sm:$0xff]
    %v5831 = vld [vmem:[%s5645 + $0x5c8] sm:$0xff]
    %v5832 = vld [vmem:[%s5645 + $0x5d0] sm:$0xff]
    %v5833 = vld [vmem:[%s5645 + $0x5d8] sm:$0xff]
    %v5834 = vld [vmem:[%s5645 + $0x5e0] sm:$0xff]
    %v5835 = vld [vmem:[%s5645 + $0x5e8] sm:$0xff]
    %v5836 = vld [vmem:[%s5645 + $0x5f0] sm:$0xff]
    %v5837 = vld [vmem:[%s5645 + $0x5f8] sm:$0xff]
    %v5838 = vld [vmem:[%s5645 + $0x600] sm:$0xff]
    %v5839 = vld [vmem:[%s5645 + $0x608] sm:$0xff]
    %v5840 = vld [vmem:[%s5645 + $0x610] sm:$0xff]
    %v5841 = vld [vmem:[%s5645 + $0x618] sm:$0xff]
    %v5842 = vld [vmem:[%s5645 + $0x620] sm:$0xff]
    %v5843 = vld [vmem:[%s5645 + $0x628] sm:$0xff]
    %v5844 = vld [vmem:[%s5645 + $0x630] sm:$0xff]
    %v5845 = vld [vmem:[%s5645 + $0x638] sm:$0xff]
    %v5846 = vld [vmem:[%s5645 + $0x640] sm:$0xff]
    %v5847 = vld [vmem:[%s5645 + $0x648] sm:$0xff]
    %v5848 = vld [vmem:[%s5645 + $0x650] sm:$0xff]
    %v5849 = vld [vmem:[%s5645 + $0x658] sm:$0xff]
    %v5850 = vld [vmem:[%s5645 + $0x660] sm:$0xff]
    %v5851 = vld [vmem:[%s5645 + $0x668] sm:$0xff]
    %v5852 = vld [vmem:[%s5645 + $0x670] sm:$0xff]
    %v5853 = vld [vmem:[%s5645 + $0x678] sm:$0xff]
    %v5854 = vld [vmem:[%s5645 + $0x680] sm:$0xff]
    %v5855 = vld [vmem:[%s5645 + $0x688] sm:$0xff]
    %v5856 = vld [vmem:[%s5645 + $0x690] sm:$0xff]
    %v5857 = vld [vmem:[%s5645 + $0x698] sm:$0xff]
    %v5858 = vld [vmem:[%s5645 + $0x6a0] sm:$0xff]
    %v5859 = vld [vmem:[%s5645 + $0x6a8] sm:$0xff]
    %v5860 = vld [vmem:[%s5645 + $0x6b0] sm:$0xff]
    %v5861 = vld [vmem:[%s5645 + $0x6b8] sm:$0xff]
    %v5862 = vld [vmem:[%s5645 + $0x6c0] sm:$0xff]
    %v5863 = vld [vmem:[%s5645 + $0x6c8] sm:$0xff]
    %v5864 = vld [vmem:[%s5645 + $0x6d0] sm:$0xff]
    %v5865 = vld [vmem:[%s5645 + $0x6d8] sm:$0xff]
    %v5866 = vld [vmem:[%s5645 + $0x6e0] sm:$0xff]
    %v5867 = vld [vmem:[%s5645 + $0x6e8] sm:$0xff]
    %v5868 = vld [vmem:[%s5645 + $0x6f0] sm:$0xff]
    %v5869 = vld [vmem:[%s5645 + $0x6f8] sm:$0xff]
    %v5870 = vld [vmem:[%s5645 + $0x700] sm:$0xff]
    %v5871 = vld [vmem:[%s5645 + $0x708] sm:$0xff]
    %v5872 = vld [vmem:[%s5645 + $0x710] sm:$0xff]
    %v5873 = vld [vmem:[%s5645 + $0x718] sm:$0xff]
    %v5874 = vld [vmem:[%s5645 + $0x720] sm:$0xff]
    %v5875 = vld [vmem:[%s5645 + $0x728] sm:$0xff]
    %v5876 = vld [vmem:[%s5645 + $0x730] sm:$0xff]
    %v5877 = vld [vmem:[%s5645 + $0x738] sm:$0xff]
    %v5878 = vld [vmem:[%s5645 + $0x740] sm:$0xff]
    %v5879 = vld [vmem:[%s5645 + $0x748] sm:$0xff]
    %v5880 = vld [vmem:[%s5645 + $0x750] sm:$0xff]
    %v5881 = vld [vmem:[%s5645 + $0x758] sm:$0xff]
    %v5882 = vld [vmem:[%s5645 + $0x760] sm:$0xff]
    %v5883 = vld [vmem:[%s5645 + $0x768] sm:$0xff]
    %v5884 = vld [vmem:[%s5645 + $0x770] sm:$0xff]
    %v5885 = vld [vmem:[%s5645 + $0x778] sm:$0xff]
    %v5886 = vld [vmem:[%s5645 + $0x780] sm:$0xff]
    %v5887 = vld [vmem:[%s5645 + $0x788] sm:$0xff]
    %v5888 = vld [vmem:[%s5645 + $0x790] sm:$0xff]
    %v5889 = vld [vmem:[%s5645 + $0x798] sm:$0xff]
    %v5890 = vld [vmem:[%s5645 + $0x7a0] sm:$0xff]
    %v5891 = vld [vmem:[%s5645 + $0x7a8] sm:$0xff]
    %v5892 = vld [vmem:[%s5645 + $0x7b0] sm:$0xff]
    %v5893 = vld [vmem:[%s5645 + $0x7b8] sm:$0xff]
    %v5894 = vld [vmem:[%s5645 + $0x7c0] sm:$0xff]
    %v5895 = vld [vmem:[%s5645 + $0x7c8] sm:$0xff]
    %v5896 = vld [vmem:[%s5645 + $0x7d0] sm:$0xff]
    %v5897 = vld [vmem:[%s5645 + $0x7d8] sm:$0xff]
    %v5898 = vld [vmem:[%s5645 + $0x7e0] sm:$0xff]
    %v5899 = vld [vmem:[%s5645 + $0x7e8] sm:$0xff]
    %v5900 = vld [vmem:[%s5645 + $0x7f0] sm:$0xff]
    %v5901 = vld [vmem:[%s5645 + $0x7f8] sm:$0xff]
    %s5902 = scalar_lea.vmem [#allocation7], 4
    %v5903 = vld [vmem:[%s5902] ss:$8 sm:$0xf]
    %v5905 = vperm.slane %v5903, 0
    %v5906 = vperm.slane %v5903, 1
    %v5907 = vperm.slane %v5903, 2
    %v5908 = vperm.slane %v5903, 3
    %5913 = vmatpush.msra.mxu0 %v5706
    %5914 = vmatpush.msra.mxu0 %v5702
    %5915 = vmatpush.msra.mxu0 %v5698
    %5916 = vmatpush.msra.mxu0 %v5694
    %5917 = vmatpush.msra.mxu0 %v5690
    %5918 = vmatpush.msra.mxu0 %v5686
    %5919 = vmatpush.msra.mxu0 %v5682
    %5920 = vmatpush.msra.mxu0 %v5678
    %5921 = vmatpush.msra.mxu0 %v5674
    %5922 = vmatpush.msra.mxu0 %v5670
    %5923 = vmatpush.msra.mxu0 %v5666
    %5924 = vmatpush.msra.mxu0 %v5662
    %5925 = vmatpush.msra.mxu0 %v5658
    %5926 = vmatpush.msra.mxu0 %v5654
    %5927 = vmatpush.msra.mxu0 %v5650
    %5928 = vmatpush.msra.mxu0 %v5646
    %5929 = vmatmul.f32.gmra.mxu0 %v5581
    %v5930 = vpop.f32.mrf.mxu0
    %v5931 = vadd.f32 %v5905, %v5930
    %5932 = vmatmul.f32.gmra.mxu0 %v5585
    %v5933 = vpop.f32.mrf.mxu0
    %v5934 = vadd.f32 %v5905, %v5933
    %5935 = vmatmul.f32.gmra.mxu0 %v5589
    %v5936 = vpop.f32.mrf.mxu0
    %v5937 = vadd.f32 %v5905, %v5936
    %5938 = vmatmul.f32.gmra.mxu0 %v5593
    %v5939 = vpop.f32.mrf.mxu0
    %v5940 = vadd.f32 %v5905, %v5939
    %5941 = vmatmul.f32.gmra.mxu0 %v5597
    %v5942 = vpop.f32.mrf.mxu0
    %v5943 = vadd.f32 %v5905, %v5942
    %5944 = vmatmul.f32.gmra.mxu0 %v5601
    %v5945 = vpop.f32.mrf.mxu0
    %v5946 = vadd.f32 %v5905, %v5945
    %5947 = vmatmul.f32.gmra.mxu0 %v5605
    %v5948 = vpop.f32.mrf.mxu0
    %v5949 = vadd.f32 %v5905, %v5948
    %5950 = vmatmul.f32.gmra.mxu0 %v5609
    %v5951 = vpop.f32.mrf.mxu0
    %v5952 = vadd.f32 %v5905, %v5951
    %5953 = vmatmul.f32.gmra.mxu0 %v5613
    %v5954 = vpop.f32.mrf.mxu0
    %v5955 = vadd.f32 %v5905, %v5954
    %5956 = vmatmul.f32.gmra.mxu0 %v5617
    %v5957 = vpop.f32.mrf.mxu0
    %v5958 = vadd.f32 %v5905, %v5957
    %5959 = vmatmul.f32.gmra.mxu0 %v5621
    %v5960 = vpop.f32.mrf.mxu0
    %v5961 = vadd.f32 %v5905, %v5960
    %5962 = vmatmul.f32.gmra.mxu0 %v5625
    %v5963 = vpop.f32.mrf.mxu0
    %v5964 = vadd.f32 %v5905, %v5963
    %5965 = vmatmul.f32.gmra.mxu0 %v5629
    %v5966 = vpop.f32.mrf.mxu0
    %v5967 = vadd.f32 %v5905, %v5966
    %5968 = vmatmul.f32.gmra.mxu0 %v5633
    %v5969 = vpop.f32.mrf.mxu0
    %v5970 = vadd.f32 %v5905, %v5969
    %5971 = vmatmul.f32.gmra.mxu0 %v5637
    %v5972 = vpop.f32.mrf.mxu0
    %v5973 = vadd.f32 %v5905, %v5972
    %5974 = vmatmul.f32.gmra.mxu0 %v5641
    %v5975 = vpop.f32.mrf.mxu0
    %v5976 = vadd.f32 %v5905, %v5975
    %5977 = vdwg.mxu0
    %5978 = vmatpush.msra.mxu0 %v5770
    %5979 = vmatpush.msra.mxu0 %v5766
    %5980 = vmatpush.msra.mxu0 %v5762
    %5981 = vmatpush.msra.mxu0 %v5758
    %5982 = vmatpush.msra.mxu0 %v5754
    %5983 = vmatpush.msra.mxu0 %v5750
    %5984 = vmatpush.msra.mxu0 %v5746
    %5985 = vmatpush.msra.mxu0 %v5742
    %5986 = vmatpush.msra.mxu0 %v5738
    %5987 = vmatpush.msra.mxu0 %v5734
    %5988 = vmatpush.msra.mxu0 %v5730
    %5989 = vmatpush.msra.mxu0 %v5726
    %5990 = vmatpush.msra.mxu0 %v5722
    %5991 = vmatpush.msra.mxu0 %v5718
    %5992 = vmatpush.msra.mxu0 %v5714
    %5993 = vmatpush.msra.mxu0 %v5710
    %5994 = vmatmul.f32.gmra.mxu0 %v5582
    %v5995 = vpop.f32.mrf.mxu0
    %v5996 = vadd.f32 %v5931, %v5995
    %5997 = vmatmul.f32.gmra.mxu0 %v5586
    %v5998 = vpop.f32.mrf.mxu0
    %v5999 = vadd.f32 %v5934, %v5998
    %6000 = vmatmul.f32.gmra.mxu0 %v5590
    %v6001 = vpop.f32.mrf.mxu0
    %v6002 = vadd.f32 %v5937, %v6001
    %6003 = vmatmul.f32.gmra.mxu0 %v5594
    %v6004 = vpop.f32.mrf.mxu0
    %v6005 = vadd.f32 %v5940, %v6004
    %6006 = vmatmul.f32.gmra.mxu0 %v5598
    %v6007 = vpop.f32.mrf.mxu0
    %v6008 = vadd.f32 %v5943, %v6007
    %6009 = vmatmul.f32.gmra.mxu0 %v5602
    %v6010 = vpop.f32.mrf.mxu0
    %v6011 = vadd.f32 %v5946, %v6010
    %6012 = vmatmul.f32.gmra.mxu0 %v5606
    %v6013 = vpop.f32.mrf.mxu0
    %v6014 = vadd.f32 %v5949, %v6013
    %6015 = vmatmul.f32.gmra.mxu0 %v5610
    %v6016 = vpop.f32.mrf.mxu0
    %v6017 = vadd.f32 %v5952, %v6016
    %6018 = vmatmul.f32.gmra.mxu0 %v5614
    %v6019 = vpop.f32.mrf.mxu0
    %v6020 = vadd.f32 %v5955, %v6019
    %6021 = vmatmul.f32.gmra.mxu0 %v5618
    %v6022 = vpop.f32.mrf.mxu0
    %v6023 = vadd.f32 %v5958, %v6022
    %6024 = vmatmul.f32.gmra.mxu0 %v5622
    %v6025 = vpop.f32.mrf.mxu0
    %v6026 = vadd.f32 %v5961, %v6025
    %6027 = vmatmul.f32.gmra.mxu0 %v5626
    %v6028 = vpop.f32.mrf.mxu0
    %v6029 = vadd.f32 %v5964, %v6028
    %6030 = vmatmul.f32.gmra.mxu0 %v5630
    %v6031 = vpop.f32.mrf.mxu0
    %v6032 = vadd.f32 %v5967, %v6031
    %6033 = vmatmul.f32.gmra.mxu0 %v5634
    %v6034 = vpop.f32.mrf.mxu0
    %v6035 = vadd.f32 %v5970, %v6034
    %6036 = vmatmul.f32.gmra.mxu0 %v5638
    %v6037 = vpop.f32.mrf.mxu0
    %v6038 = vadd.f32 %v5973, %v6037
    %6039 = vmatmul.f32.gmra.mxu0 %v5642
    %v6040 = vpop.f32.mrf.mxu0
    %v6041 = vadd.f32 %v5976, %v6040
    %6042 = vdwg.mxu0
    %6043 = vmatpush.msra.mxu0 %v5834
    %6044 = vmatpush.msra.mxu0 %v5830
    %6045 = vmatpush.msra.mxu0 %v5826
    %6046 = vmatpush.msra.mxu0 %v5822
    %6047 = vmatpush.msra.mxu0 %v5818
    %6048 = vmatpush.msra.mxu0 %v5814
    %6049 = vmatpush.msra.mxu0 %v5810
    %6050 = vmatpush.msra.mxu0 %v5806
    %6051 = vmatpush.msra.mxu0 %v5802
    %6052 = vmatpush.msra.mxu0 %v5798
    %6053 = vmatpush.msra.mxu0 %v5794
    %6054 = vmatpush.msra.mxu0 %v5790
    %6055 = vmatpush.msra.mxu0 %v5786
    %6056 = vmatpush.msra.mxu0 %v5782
    %6057 = vmatpush.msra.mxu0 %v5778
    %6058 = vmatpush.msra.mxu0 %v5774
    %6059 = vmatmul.f32.gmra.mxu0 %v5583
    %v6060 = vpop.f32.mrf.mxu0
    %v6061 = vadd.f32 %v5996, %v6060
    %6062 = vmatmul.f32.gmra.mxu0 %v5587
    %v6063 = vpop.f32.mrf.mxu0
    %v6064 = vadd.f32 %v5999, %v6063
    %6065 = vmatmul.f32.gmra.mxu0 %v5591
    %v6066 = vpop.f32.mrf.mxu0
    %v6067 = vadd.f32 %v6002, %v6066
    %6068 = vmatmul.f32.gmra.mxu0 %v5595
    %v6069 = vpop.f32.mrf.mxu0
    %v6070 = vadd.f32 %v6005, %v6069
    %6071 = vmatmul.f32.gmra.mxu0 %v5599
    %v6072 = vpop.f32.mrf.mxu0
    %v6073 = vadd.f32 %v6008, %v6072
    %6074 = vmatmul.f32.gmra.mxu0 %v5603
    %v6075 = vpop.f32.mrf.mxu0
    %v6076 = vadd.f32 %v6011, %v6075
    %6077 = vmatmul.f32.gmra.mxu0 %v5607
    %v6078 = vpop.f32.mrf.mxu0
    %v6079 = vadd.f32 %v6014, %v6078
    %6080 = vmatmul.f32.gmra.mxu0 %v5611
    %v6081 = vpop.f32.mrf.mxu0
    %v6082 = vadd.f32 %v6017, %v6081
    %6083 = vmatmul.f32.gmra.mxu0 %v5615
    %v6084 = vpop.f32.mrf.mxu0
    %v6085 = vadd.f32 %v6020, %v6084
    %6086 = vmatmul.f32.gmra.mxu0 %v5619
    %v6087 = vpop.f32.mrf.mxu0
    %v6088 = vadd.f32 %v6023, %v6087
    %6089 = vmatmul.f32.gmra.mxu0 %v5623
    %v6090 = vpop.f32.mrf.mxu0
    %v6091 = vadd.f32 %v6026, %v6090
    %6092 = vmatmul.f32.gmra.mxu0 %v5627
    %v6093 = vpop.f32.mrf.mxu0
    %v6094 = vadd.f32 %v6029, %v6093
    %6095 = vmatmul.f32.gmra.mxu0 %v5631
    %v6096 = vpop.f32.mrf.mxu0
    %v6097 = vadd.f32 %v6032, %v6096
    %6098 = vmatmul.f32.gmra.mxu0 %v5635
    %v6099 = vpop.f32.mrf.mxu0
    %v6100 = vadd.f32 %v6035, %v6099
    %6101 = vmatmul.f32.gmra.mxu0 %v5639
    %v6102 = vpop.f32.mrf.mxu0
    %v6103 = vadd.f32 %v6038, %v6102
    %6104 = vmatmul.f32.gmra.mxu0 %v5643
    %v6105 = vpop.f32.mrf.mxu0
    %v6106 = vadd.f32 %v6041, %v6105
    %6107 = vdwg.mxu0
    %6108 = vmatpush.msra.mxu0 %v5898
    %6109 = vmatpush.msra.mxu0 %v5894
    %6110 = vmatpush.msra.mxu0 %v5890
    %6111 = vmatpush.msra.mxu0 %v5886
    %6112 = vmatpush.msra.mxu0 %v5882
    %6113 = vmatpush.msra.mxu0 %v5878
    %6114 = vmatpush.msra.mxu0 %v5874
    %6115 = vmatpush.msra.mxu0 %v5870
    %6116 = vmatpush.msra.mxu0 %v5866
    %6117 = vmatpush.msra.mxu0 %v5862
    %6118 = vmatpush.msra.mxu0 %v5858
    %6119 = vmatpush.msra.mxu0 %v5854
    %6120 = vmatpush.msra.mxu0 %v5850
    %6121 = vmatpush.msra.mxu0 %v5846
    %6122 = vmatpush.msra.mxu0 %v5842
    %6123 = vmatpush.msra.mxu0 %v5838
    %6124 = vmatmul.f32.gmra.mxu0 %v5584
    %v6125 = vpop.f32.mrf.mxu0
    %v6126 = vadd.f32 %v6061, %v6125
    %6127 = vmatmul.f32.gmra.mxu0 %v5588
    %v6128 = vpop.f32.mrf.mxu0
    %v6129 = vadd.f32 %v6064, %v6128
    %6130 = vmatmul.f32.gmra.mxu0 %v5592
    %v6131 = vpop.f32.mrf.mxu0
    %v6132 = vadd.f32 %v6067, %v6131
    %6133 = vmatmul.f32.gmra.mxu0 %v5596
    %v6134 = vpop.f32.mrf.mxu0
    %v6135 = vadd.f32 %v6070, %v6134
    %6136 = vmatmul.f32.gmra.mxu0 %v5600
    %v6137 = vpop.f32.mrf.mxu0
    %v6138 = vadd.f32 %v6073, %v6137
    %6139 = vmatmul.f32.gmra.mxu0 %v5604
    %v6140 = vpop.f32.mrf.mxu0
    %v6141 = vadd.f32 %v6076, %v6140
    %6142 = vmatmul.f32.gmra.mxu0 %v5608
    %v6143 = vpop.f32.mrf.mxu0
    %v6144 = vadd.f32 %v6079, %v6143
    %6145 = vmatmul.f32.gmra.mxu0 %v5612
    %v6146 = vpop.f32.mrf.mxu0
    %v6147 = vadd.f32 %v6082, %v6146
    %6148 = vmatmul.f32.gmra.mxu0 %v5616
    %v6149 = vpop.f32.mrf.mxu0
    %v6150 = vadd.f32 %v6085, %v6149
    %6151 = vmatmul.f32.gmra.mxu0 %v5620
    %v6152 = vpop.f32.mrf.mxu0
    %v6153 = vadd.f32 %v6088, %v6152
    %6154 = vmatmul.f32.gmra.mxu0 %v5624
    %v6155 = vpop.f32.mrf.mxu0
    %v6156 = vadd.f32 %v6091, %v6155
    %6157 = vmatmul.f32.gmra.mxu0 %v5628
    %v6158 = vpop.f32.mrf.mxu0
    %v6159 = vadd.f32 %v6094, %v6158
    %6160 = vmatmul.f32.gmra.mxu0 %v5632
    %v6161 = vpop.f32.mrf.mxu0
    %v6162 = vadd.f32 %v6097, %v6161
    %6163 = vmatmul.f32.gmra.mxu0 %v5636
    %v6164 = vpop.f32.mrf.mxu0
    %v6165 = vadd.f32 %v6100, %v6164
    %6166 = vmatmul.f32.gmra.mxu0 %v5640
    %v6167 = vpop.f32.mrf.mxu0
    %v6168 = vadd.f32 %v6103, %v6167
    %6169 = vmatmul.f32.gmra.mxu0 %v5644
    %v6170 = vpop.f32.mrf.mxu0
    %v6171 = vadd.f32 %v6106, %v6170
    %6172 = vdwg.mxu0
    %6173 = vmatpush.msra.mxu0 %v5707
    %6174 = vmatpush.msra.mxu0 %v5703
    %6175 = vmatpush.msra.mxu0 %v5699
    %6176 = vmatpush.msra.mxu0 %v5695
    %6177 = vmatpush.msra.mxu0 %v5691
    %6178 = vmatpush.msra.mxu0 %v5687
    %6179 = vmatpush.msra.mxu0 %v5683
    %6180 = vmatpush.msra.mxu0 %v5679
    %6181 = vmatpush.msra.mxu0 %v5675
    %6182 = vmatpush.msra.mxu0 %v5671
    %6183 = vmatpush.msra.mxu0 %v5667
    %6184 = vmatpush.msra.mxu0 %v5663
    %6185 = vmatpush.msra.mxu0 %v5659
    %6186 = vmatpush.msra.mxu0 %v5655
    %6187 = vmatpush.msra.mxu0 %v5651
    %6188 = vmatpush.msra.mxu0 %v5647
    %6189 = vmatmul.f32.gmra.mxu0 %v5581
    %v6190 = vpop.f32.mrf.mxu0
    %v6191 = vadd.f32 %v5906, %v6190
    %6192 = vmatmul.f32.gmra.mxu0 %v5585
    %v6193 = vpop.f32.mrf.mxu0
    %v6194 = vadd.f32 %v5906, %v6193
    %6195 = vmatmul.f32.gmra.mxu0 %v5589
    %v6196 = vpop.f32.mrf.mxu0
    %v6197 = vadd.f32 %v5906, %v6196
    %6198 = vmatmul.f32.gmra.mxu0 %v5593
    %v6199 = vpop.f32.mrf.mxu0
    %v6200 = vadd.f32 %v5906, %v6199
    %6201 = vmatmul.f32.gmra.mxu0 %v5597
    %v6202 = vpop.f32.mrf.mxu0
    %v6203 = vadd.f32 %v5906, %v6202
    %6204 = vmatmul.f32.gmra.mxu0 %v5601
    %v6205 = vpop.f32.mrf.mxu0
    %v6206 = vadd.f32 %v5906, %v6205
    %6207 = vmatmul.f32.gmra.mxu0 %v5605
    %v6208 = vpop.f32.mrf.mxu0
    %v6209 = vadd.f32 %v5906, %v6208
    %6210 = vmatmul.f32.gmra.mxu0 %v5609
    %v6211 = vpop.f32.mrf.mxu0
    %v6212 = vadd.f32 %v5906, %v6211
    %6213 = vmatmul.f32.gmra.mxu0 %v5613
    %v6214 = vpop.f32.mrf.mxu0
    %v6215 = vadd.f32 %v5906, %v6214
    %6216 = vmatmul.f32.gmra.mxu0 %v5617
    %v6217 = vpop.f32.mrf.mxu0
    %v6218 = vadd.f32 %v5906, %v6217
    %6219 = vmatmul.f32.gmra.mxu0 %v5621
    %v6220 = vpop.f32.mrf.mxu0
    %v6221 = vadd.f32 %v5906, %v6220
    %6222 = vmatmul.f32.gmra.mxu0 %v5625
    %v6223 = vpop.f32.mrf.mxu0
    %v6224 = vadd.f32 %v5906, %v6223
    %6225 = vmatmul.f32.gmra.mxu0 %v5629
    %v6226 = vpop.f32.mrf.mxu0
    %v6227 = vadd.f32 %v5906, %v6226
    %6228 = vmatmul.f32.gmra.mxu0 %v5633
    %v6229 = vpop.f32.mrf.mxu0
    %v6230 = vadd.f32 %v5906, %v6229
    %6231 = vmatmul.f32.gmra.mxu0 %v5637
    %v6232 = vpop.f32.mrf.mxu0
    %v6233 = vadd.f32 %v5906, %v6232
    %6234 = vmatmul.f32.gmra.mxu0 %v5641
    %v6235 = vpop.f32.mrf.mxu0
    %v6236 = vadd.f32 %v5906, %v6235
    %6237 = vdwg.mxu0
    %6238 = vmatpush.msra.mxu0 %v5771
    %6239 = vmatpush.msra.mxu0 %v5767
    %6240 = vmatpush.msra.mxu0 %v5763
    %6241 = vmatpush.msra.mxu0 %v5759
    %6242 = vmatpush.msra.mxu0 %v5755
    %6243 = vmatpush.msra.mxu0 %v5751
    %6244 = vmatpush.msra.mxu0 %v5747
    %6245 = vmatpush.msra.mxu0 %v5743
    %6246 = vmatpush.msra.mxu0 %v5739
    %6247 = vmatpush.msra.mxu0 %v5735
    %6248 = vmatpush.msra.mxu0 %v5731
    %6249 = vmatpush.msra.mxu0 %v5727
    %6250 = vmatpush.msra.mxu0 %v5723
    %6251 = vmatpush.msra.mxu0 %v5719
    %6252 = vmatpush.msra.mxu0 %v5715
    %6253 = vmatpush.msra.mxu0 %v5711
    %6254 = vmatmul.f32.gmra.mxu0 %v5582
    %v6255 = vpop.f32.mrf.mxu0
    %v6256 = vadd.f32 %v6191, %v6255
    %6257 = vmatmul.f32.gmra.mxu0 %v5586
    %v6258 = vpop.f32.mrf.mxu0
    %v6259 = vadd.f32 %v6194, %v6258
    %6260 = vmatmul.f32.gmra.mxu0 %v5590
    %v6261 = vpop.f32.mrf.mxu0
    %v6262 = vadd.f32 %v6197, %v6261
    %6263 = vmatmul.f32.gmra.mxu0 %v5594
    %v6264 = vpop.f32.mrf.mxu0
    %v6265 = vadd.f32 %v6200, %v6264
    %6266 = vmatmul.f32.gmra.mxu0 %v5598
    %v6267 = vpop.f32.mrf.mxu0
    %v6268 = vadd.f32 %v6203, %v6267
    %6269 = vmatmul.f32.gmra.mxu0 %v5602
    %v6270 = vpop.f32.mrf.mxu0
    %v6271 = vadd.f32 %v6206, %v6270
    %6272 = vmatmul.f32.gmra.mxu0 %v5606
    %v6273 = vpop.f32.mrf.mxu0
    %v6274 = vadd.f32 %v6209, %v6273
    %6275 = vmatmul.f32.gmra.mxu0 %v5610
    %v6276 = vpop.f32.mrf.mxu0
    %v6277 = vadd.f32 %v6212, %v6276
    %6278 = vmatmul.f32.gmra.mxu0 %v5614
    %v6279 = vpop.f32.mrf.mxu0
    %v6280 = vadd.f32 %v6215, %v6279
    %6281 = vmatmul.f32.gmra.mxu0 %v5618
    %v6282 = vpop.f32.mrf.mxu0
    %v6283 = vadd.f32 %v6218, %v6282
    %6284 = vmatmul.f32.gmra.mxu0 %v5622
    %v6285 = vpop.f32.mrf.mxu0
    %v6286 = vadd.f32 %v6221, %v6285
    %6287 = vmatmul.f32.gmra.mxu0 %v5626
    %v6288 = vpop.f32.mrf.mxu0
    %v6289 = vadd.f32 %v6224, %v6288
    %6290 = vmatmul.f32.gmra.mxu0 %v5630
    %v6291 = vpop.f32.mrf.mxu0
    %v6292 = vadd.f32 %v6227, %v6291
    %6293 = vmatmul.f32.gmra.mxu0 %v5634
    %v6294 = vpop.f32.mrf.mxu0
    %v6295 = vadd.f32 %v6230, %v6294
    %6296 = vmatmul.f32.gmra.mxu0 %v5638
    %v6297 = vpop.f32.mrf.mxu0
    %v6298 = vadd.f32 %v6233, %v6297
    %6299 = vmatmul.f32.gmra.mxu0 %v5642
    %v6300 = vpop.f32.mrf.mxu0
    %v6301 = vadd.f32 %v6236, %v6300
    %6302 = vdwg.mxu0
    %6303 = vmatpush.msra.mxu0 %v5835
    %6304 = vmatpush.msra.mxu0 %v5831
    %6305 = vmatpush.msra.mxu0 %v5827
    %6306 = vmatpush.msra.mxu0 %v5823
    %6307 = vmatpush.msra.mxu0 %v5819
    %6308 = vmatpush.msra.mxu0 %v5815
    %6309 = vmatpush.msra.mxu0 %v5811
    %6310 = vmatpush.msra.mxu0 %v5807
    %6311 = vmatpush.msra.mxu0 %v5803
    %6312 = vmatpush.msra.mxu0 %v5799
    %6313 = vmatpush.msra.mxu0 %v5795
    %6314 = vmatpush.msra.mxu0 %v5791
    %6315 = vmatpush.msra.mxu0 %v5787
    %6316 = vmatpush.msra.mxu0 %v5783
    %6317 = vmatpush.msra.mxu0 %v5779
    %6318 = vmatpush.msra.mxu0 %v5775
    %6319 = vmatmul.f32.gmra.mxu0 %v5583
    %v6320 = vpop.f32.mrf.mxu0
    %v6321 = vadd.f32 %v6256, %v6320
    %6322 = vmatmul.f32.gmra.mxu0 %v5587
    %v6323 = vpop.f32.mrf.mxu0
    %v6324 = vadd.f32 %v6259, %v6323
    %6325 = vmatmul.f32.gmra.mxu0 %v5591
    %v6326 = vpop.f32.mrf.mxu0
    %v6327 = vadd.f32 %v6262, %v6326
    %6328 = vmatmul.f32.gmra.mxu0 %v5595
    %v6329 = vpop.f32.mrf.mxu0
    %v6330 = vadd.f32 %v6265, %v6329
    %6331 = vmatmul.f32.gmra.mxu0 %v5599
    %v6332 = vpop.f32.mrf.mxu0
    %v6333 = vadd.f32 %v6268, %v6332
    %6334 = vmatmul.f32.gmra.mxu0 %v5603
    %v6335 = vpop.f32.mrf.mxu0
    %v6336 = vadd.f32 %v6271, %v6335
    %6337 = vmatmul.f32.gmra.mxu0 %v5607
    %v6338 = vpop.f32.mrf.mxu0
    %v6339 = vadd.f32 %v6274, %v6338
    %6340 = vmatmul.f32.gmra.mxu0 %v5611
    %v6341 = vpop.f32.mrf.mxu0
    %v6342 = vadd.f32 %v6277, %v6341
    %6343 = vmatmul.f32.gmra.mxu0 %v5615
    %v6344 = vpop.f32.mrf.mxu0
    %v6345 = vadd.f32 %v6280, %v6344
    %6346 = vmatmul.f32.gmra.mxu0 %v5619
    %v6347 = vpop.f32.mrf.mxu0
    %v6348 = vadd.f32 %v6283, %v6347
    %6349 = vmatmul.f32.gmra.mxu0 %v5623
    %v6350 = vpop.f32.mrf.mxu0
    %v6351 = vadd.f32 %v6286, %v6350
    %6352 = vmatmul.f32.gmra.mxu0 %v5627
    %v6353 = vpop.f32.mrf.mxu0
    %v6354 = vadd.f32 %v6289, %v6353
    %6355 = vmatmul.f32.gmra.mxu0 %v5631
    %v6356 = vpop.f32.mrf.mxu0
    %v6357 = vadd.f32 %v6292, %v6356
    %6358 = vmatmul.f32.gmra.mxu0 %v5635
    %v6359 = vpop.f32.mrf.mxu0
    %v6360 = vadd.f32 %v6295, %v6359
    %6361 = vmatmul.f32.gmra.mxu0 %v5639
    %v6362 = vpop.f32.mrf.mxu0
    %v6363 = vadd.f32 %v6298, %v6362
    %6364 = vmatmul.f32.gmra.mxu0 %v5643
    %v6365 = vpop.f32.mrf.mxu0
    %v6366 = vadd.f32 %v6301, %v6365
    %6367 = vdwg.mxu0
    %6368 = vmatpush.msra.mxu0 %v5899
    %6369 = vmatpush.msra.mxu0 %v5895
    %6370 = vmatpush.msra.mxu0 %v5891
    %6371 = vmatpush.msra.mxu0 %v5887
    %6372 = vmatpush.msra.mxu0 %v5883
    %6373 = vmatpush.msra.mxu0 %v5879
    %6374 = vmatpush.msra.mxu0 %v5875
    %6375 = vmatpush.msra.mxu0 %v5871
    %6376 = vmatpush.msra.mxu0 %v5867
    %6377 = vmatpush.msra.mxu0 %v5863
    %6378 = vmatpush.msra.mxu0 %v5859
    %6379 = vmatpush.msra.mxu0 %v5855
    %6380 = vmatpush.msra.mxu0 %v5851
    %6381 = vmatpush.msra.mxu0 %v5847
    %6382 = vmatpush.msra.mxu0 %v5843
    %6383 = vmatpush.msra.mxu0 %v5839
    %6384 = vmatmul.f32.gmra.mxu0 %v5584
    %v6385 = vpop.f32.mrf.mxu0
    %v6386 = vadd.f32 %v6321, %v6385
    %6387 = vmatmul.f32.gmra.mxu0 %v5588
    %v6388 = vpop.f32.mrf.mxu0
    %v6389 = vadd.f32 %v6324, %v6388
    %6390 = vmatmul.f32.gmra.mxu0 %v5592
    %v6391 = vpop.f32.mrf.mxu0
    %v6392 = vadd.f32 %v6327, %v6391
    %6393 = vmatmul.f32.gmra.mxu0 %v5596
    %v6394 = vpop.f32.mrf.mxu0
    %v6395 = vadd.f32 %v6330, %v6394
    %6396 = vmatmul.f32.gmra.mxu0 %v5600
    %v6397 = vpop.f32.mrf.mxu0
    %v6398 = vadd.f32 %v6333, %v6397
    %6399 = vmatmul.f32.gmra.mxu0 %v5604
    %v6400 = vpop.f32.mrf.mxu0
    %v6401 = vadd.f32 %v6336, %v6400
    %6402 = vmatmul.f32.gmra.mxu0 %v5608
    %v6403 = vpop.f32.mrf.mxu0
    %v6404 = vadd.f32 %v6339, %v6403
    %6405 = vmatmul.f32.gmra.mxu0 %v5612
    %v6406 = vpop.f32.mrf.mxu0
    %v6407 = vadd.f32 %v6342, %v6406
    %6408 = vmatmul.f32.gmra.mxu0 %v5616
    %v6409 = vpop.f32.mrf.mxu0
    %v6410 = vadd.f32 %v6345, %v6409
    %6411 = vmatmul.f32.gmra.mxu0 %v5620
    %v6412 = vpop.f32.mrf.mxu0
    %v6413 = vadd.f32 %v6348, %v6412
    %6414 = vmatmul.f32.gmra.mxu0 %v5624
    %v6415 = vpop.f32.mrf.mxu0
    %v6416 = vadd.f32 %v6351, %v6415
    %6417 = vmatmul.f32.gmra.mxu0 %v5628
    %v6418 = vpop.f32.mrf.mxu0
    %v6419 = vadd.f32 %v6354, %v6418
    %6420 = vmatmul.f32.gmra.mxu0 %v5632
    %v6421 = vpop.f32.mrf.mxu0
    %v6422 = vadd.f32 %v6357, %v6421
    %6423 = vmatmul.f32.gmra.mxu0 %v5636
    %v6424 = vpop.f32.mrf.mxu0
    %v6425 = vadd.f32 %v6360, %v6424
    %6426 = vmatmul.f32.gmra.mxu0 %v5640
    %v6427 = vpop.f32.mrf.mxu0
    %v6428 = vadd.f32 %v6363, %v6427
    %6429 = vmatmul.f32.gmra.mxu0 %v5644
    %v6430 = vpop.f32.mrf.mxu0
    %v6431 = vadd.f32 %v6366, %v6430
    %6432 = vdwg.mxu0
    %6433 = vmatpush.msra.mxu0 %v5708
    %6434 = vmatpush.msra.mxu0 %v5704
    %6435 = vmatpush.msra.mxu0 %v5700
    %6436 = vmatpush.msra.mxu0 %v5696
    %6437 = vmatpush.msra.mxu0 %v5692
    %6438 = vmatpush.msra.mxu0 %v5688
    %6439 = vmatpush.msra.mxu0 %v5684
    %6440 = vmatpush.msra.mxu0 %v5680
    %6441 = vmatpush.msra.mxu0 %v5676
    %6442 = vmatpush.msra.mxu0 %v5672
    %6443 = vmatpush.msra.mxu0 %v5668
    %6444 = vmatpush.msra.mxu0 %v5664
    %6445 = vmatpush.msra.mxu0 %v5660
    %6446 = vmatpush.msra.mxu0 %v5656
    %6447 = vmatpush.msra.mxu0 %v5652
    %6448 = vmatpush.msra.mxu0 %v5648
    %6449 = vmatmul.f32.gmra.mxu0 %v5581
    %v6450 = vpop.f32.mrf.mxu0
    %v6451 = vadd.f32 %v5907, %v6450
    %6452 = vmatmul.f32.gmra.mxu0 %v5585
    %v6453 = vpop.f32.mrf.mxu0
    %v6454 = vadd.f32 %v5907, %v6453
    %6455 = vmatmul.f32.gmra.mxu0 %v5589
    %v6456 = vpop.f32.mrf.mxu0
    %v6457 = vadd.f32 %v5907, %v6456
    %6458 = vmatmul.f32.gmra.mxu0 %v5593
    %v6459 = vpop.f32.mrf.mxu0
    %v6460 = vadd.f32 %v5907, %v6459
    %6461 = vmatmul.f32.gmra.mxu0 %v5597
    %v6462 = vpop.f32.mrf.mxu0
    %v6463 = vadd.f32 %v5907, %v6462
    %6464 = vmatmul.f32.gmra.mxu0 %v5601
    %v6465 = vpop.f32.mrf.mxu0
    %v6466 = vadd.f32 %v5907, %v6465
    %6467 = vmatmul.f32.gmra.mxu0 %v5605
    %v6468 = vpop.f32.mrf.mxu0
    %v6469 = vadd.f32 %v5907, %v6468
    %6470 = vmatmul.f32.gmra.mxu0 %v5609
    %v6471 = vpop.f32.mrf.mxu0
    %v6472 = vadd.f32 %v5907, %v6471
    %6473 = vmatmul.f32.gmra.mxu0 %v5613
    %v6474 = vpop.f32.mrf.mxu0
    %v6475 = vadd.f32 %v5907, %v6474
    %6476 = vmatmul.f32.gmra.mxu0 %v5617
    %v6477 = vpop.f32.mrf.mxu0
    %v6478 = vadd.f32 %v5907, %v6477
    %6479 = vmatmul.f32.gmra.mxu0 %v5621
    %v6480 = vpop.f32.mrf.mxu0
    %v6481 = vadd.f32 %v5907, %v6480
    %6482 = vmatmul.f32.gmra.mxu0 %v5625
    %v6483 = vpop.f32.mrf.mxu0
    %v6484 = vadd.f32 %v5907, %v6483
    %6485 = vmatmul.f32.gmra.mxu0 %v5629
    %v6486 = vpop.f32.mrf.mxu0
    %v6487 = vadd.f32 %v5907, %v6486
    %6488 = vmatmul.f32.gmra.mxu0 %v5633
    %v6489 = vpop.f32.mrf.mxu0
    %v6490 = vadd.f32 %v5907, %v6489
    %6491 = vmatmul.f32.gmra.mxu0 %v5637
    %v6492 = vpop.f32.mrf.mxu0
    %v6493 = vadd.f32 %v5907, %v6492
    %6494 = vmatmul.f32.gmra.mxu0 %v5641
    %v6495 = vpop.f32.mrf.mxu0
    %v6496 = vadd.f32 %v5907, %v6495
    %6497 = vdwg.mxu0
    %6498 = vmatpush.msra.mxu0 %v5772
    %6499 = vmatpush.msra.mxu0 %v5768
    %6500 = vmatpush.msra.mxu0 %v5764
    %6501 = vmatpush.msra.mxu0 %v5760
    %6502 = vmatpush.msra.mxu0 %v5756
    %6503 = vmatpush.msra.mxu0 %v5752
    %6504 = vmatpush.msra.mxu0 %v5748
    %6505 = vmatpush.msra.mxu0 %v5744
    %6506 = vmatpush.msra.mxu0 %v5740
    %6507 = vmatpush.msra.mxu0 %v5736
    %6508 = vmatpush.msra.mxu0 %v5732
    %6509 = vmatpush.msra.mxu0 %v5728
    %6510 = vmatpush.msra.mxu0 %v5724
    %6511 = vmatpush.msra.mxu0 %v5720
    %6512 = vmatpush.msra.mxu0 %v5716
    %6513 = vmatpush.msra.mxu0 %v5712
    %6514 = vmatmul.f32.gmra.mxu0 %v5582
    %v6515 = vpop.f32.mrf.mxu0
    %v6516 = vadd.f32 %v6451, %v6515
    %6517 = vmatmul.f32.gmra.mxu0 %v5586
    %v6518 = vpop.f32.mrf.mxu0
    %v6519 = vadd.f32 %v6454, %v6518
    %6520 = vmatmul.f32.gmra.mxu0 %v5590
    %v6521 = vpop.f32.mrf.mxu0
    %v6522 = vadd.f32 %v6457, %v6521
    %6523 = vmatmul.f32.gmra.mxu0 %v5594
    %v6524 = vpop.f32.mrf.mxu0
    %v6525 = vadd.f32 %v6460, %v6524
    %6526 = vmatmul.f32.gmra.mxu0 %v5598
    %v6527 = vpop.f32.mrf.mxu0
    %v6528 = vadd.f32 %v6463, %v6527
    %6529 = vmatmul.f32.gmra.mxu0 %v5602
    %v6530 = vpop.f32.mrf.mxu0
    %v6531 = vadd.f32 %v6466, %v6530
    %6532 = vmatmul.f32.gmra.mxu0 %v5606
    %v6533 = vpop.f32.mrf.mxu0
    %v6534 = vadd.f32 %v6469, %v6533
    %6535 = vmatmul.f32.gmra.mxu0 %v5610
    %v6536 = vpop.f32.mrf.mxu0
    %v6537 = vadd.f32 %v6472, %v6536
    %6538 = vmatmul.f32.gmra.mxu0 %v5614
    %v6539 = vpop.f32.mrf.mxu0
    %v6540 = vadd.f32 %v6475, %v6539
    %6541 = vmatmul.f32.gmra.mxu0 %v5618
    %v6542 = vpop.f32.mrf.mxu0
    %v6543 = vadd.f32 %v6478, %v6542
    %6544 = vmatmul.f32.gmra.mxu0 %v5622
    %v6545 = vpop.f32.mrf.mxu0
    %v6546 = vadd.f32 %v6481, %v6545
    %6547 = vmatmul.f32.gmra.mxu0 %v5626
    %v6548 = vpop.f32.mrf.mxu0
    %v6549 = vadd.f32 %v6484, %v6548
    %6550 = vmatmul.f32.gmra.mxu0 %v5630
    %v6551 = vpop.f32.mrf.mxu0
    %v6552 = vadd.f32 %v6487, %v6551
    %6553 = vmatmul.f32.gmra.mxu0 %v5634
    %v6554 = vpop.f32.mrf.mxu0
    %v6555 = vadd.f32 %v6490, %v6554
    %6556 = vmatmul.f32.gmra.mxu0 %v5638
    %v6557 = vpop.f32.mrf.mxu0
    %v6558 = vadd.f32 %v6493, %v6557
    %6559 = vmatmul.f32.gmra.mxu0 %v5642
    %v6560 = vpop.f32.mrf.mxu0
    %v6561 = vadd.f32 %v6496, %v6560
    %6562 = vdwg.mxu0
    %6563 = vmatpush.msra.mxu0 %v5836
    %6564 = vmatpush.msra.mxu0 %v5832
    %6565 = vmatpush.msra.mxu0 %v5828
    %6566 = vmatpush.msra.mxu0 %v5824
    %6567 = vmatpush.msra.mxu0 %v5820
    %6568 = vmatpush.msra.mxu0 %v5816
    %6569 = vmatpush.msra.mxu0 %v5812
    %6570 = vmatpush.msra.mxu0 %v5808
    %6571 = vmatpush.msra.mxu0 %v5804
    %6572 = vmatpush.msra.mxu0 %v5800
    %6573 = vmatpush.msra.mxu0 %v5796
    %6574 = vmatpush.msra.mxu0 %v5792
    %6575 = vmatpush.msra.mxu0 %v5788
    %6576 = vmatpush.msra.mxu0 %v5784
    %6577 = vmatpush.msra.mxu0 %v5780
    %6578 = vmatpush.msra.mxu0 %v5776
    %6579 = vmatmul.f32.gmra.mxu0 %v5583
    %v6580 = vpop.f32.mrf.mxu0
    %v6581 = vadd.f32 %v6516, %v6580
    %6582 = vmatmul.f32.gmra.mxu0 %v5587
    %v6583 = vpop.f32.mrf.mxu0
    %v6584 = vadd.f32 %v6519, %v6583
    %6585 = vmatmul.f32.gmra.mxu0 %v5591
    %v6586 = vpop.f32.mrf.mxu0
    %v6587 = vadd.f32 %v6522, %v6586
    %6588 = vmatmul.f32.gmra.mxu0 %v5595
    %v6589 = vpop.f32.mrf.mxu0
    %v6590 = vadd.f32 %v6525, %v6589
    %6591 = vmatmul.f32.gmra.mxu0 %v5599
    %v6592 = vpop.f32.mrf.mxu0
    %v6593 = vadd.f32 %v6528, %v6592
    %6594 = vmatmul.f32.gmra.mxu0 %v5603
    %v6595 = vpop.f32.mrf.mxu0
    %v6596 = vadd.f32 %v6531, %v6595
    %6597 = vmatmul.f32.gmra.mxu0 %v5607
    %v6598 = vpop.f32.mrf.mxu0
    %v6599 = vadd.f32 %v6534, %v6598
    %6600 = vmatmul.f32.gmra.mxu0 %v5611
    %v6601 = vpop.f32.mrf.mxu0
    %v6602 = vadd.f32 %v6537, %v6601
    %6603 = vmatmul.f32.gmra.mxu0 %v5615
    %v6604 = vpop.f32.mrf.mxu0
    %v6605 = vadd.f32 %v6540, %v6604
    %6606 = vmatmul.f32.gmra.mxu0 %v5619
    %v6607 = vpop.f32.mrf.mxu0
    %v6608 = vadd.f32 %v6543, %v6607
    %6609 = vmatmul.f32.gmra.mxu0 %v5623
    %v6610 = vpop.f32.mrf.mxu0
    %v6611 = vadd.f32 %v6546, %v6610
    %6612 = vmatmul.f32.gmra.mxu0 %v5627
    %v6613 = vpop.f32.mrf.mxu0
    %v6614 = vadd.f32 %v6549, %v6613
    %6615 = vmatmul.f32.gmra.mxu0 %v5631
    %v6616 = vpop.f32.mrf.mxu0
    %v6617 = vadd.f32 %v6552, %v6616
    %6618 = vmatmul.f32.gmra.mxu0 %v5635
    %v6619 = vpop.f32.mrf.mxu0
    %v6620 = vadd.f32 %v6555, %v6619
    %6621 = vmatmul.f32.gmra.mxu0 %v5639
    %v6622 = vpop.f32.mrf.mxu0
    %v6623 = vadd.f32 %v6558, %v6622
    %6624 = vmatmul.f32.gmra.mxu0 %v5643
    %v6625 = vpop.f32.mrf.mxu0
    %v6626 = vadd.f32 %v6561, %v6625
    %6627 = vdwg.mxu0
    %6628 = vmatpush.msra.mxu0 %v5900
    %6629 = vmatpush.msra.mxu0 %v5896
    %6630 = vmatpush.msra.mxu0 %v5892
    %6631 = vmatpush.msra.mxu0 %v5888
    %6632 = vmatpush.msra.mxu0 %v5884
    %6633 = vmatpush.msra.mxu0 %v5880
    %6634 = vmatpush.msra.mxu0 %v5876
    %6635 = vmatpush.msra.mxu0 %v5872
    %6636 = vmatpush.msra.mxu0 %v5868
    %6637 = vmatpush.msra.mxu0 %v5864
    %6638 = vmatpush.msra.mxu0 %v5860
    %6639 = vmatpush.msra.mxu0 %v5856
    %6640 = vmatpush.msra.mxu0 %v5852
    %6641 = vmatpush.msra.mxu0 %v5848
    %6642 = vmatpush.msra.mxu0 %v5844
    %6643 = vmatpush.msra.mxu0 %v5840
    %6644 = vmatmul.f32.gmra.mxu0 %v5584
    %v6645 = vpop.f32.mrf.mxu0
    %v6646 = vadd.f32 %v6581, %v6645
    %6647 = vmatmul.f32.gmra.mxu0 %v5588
    %v6648 = vpop.f32.mrf.mxu0
    %v6649 = vadd.f32 %v6584, %v6648
    %6650 = vmatmul.f32.gmra.mxu0 %v5592
    %v6651 = vpop.f32.mrf.mxu0
    %v6652 = vadd.f32 %v6587, %v6651
    %6653 = vmatmul.f32.gmra.mxu0 %v5596
    %v6654 = vpop.f32.mrf.mxu0
    %v6655 = vadd.f32 %v6590, %v6654
    %6656 = vmatmul.f32.gmra.mxu0 %v5600
    %v6657 = vpop.f32.mrf.mxu0
    %v6658 = vadd.f32 %v6593, %v6657
    %6659 = vmatmul.f32.gmra.mxu0 %v5604
    %v6660 = vpop.f32.mrf.mxu0
    %v6661 = vadd.f32 %v6596, %v6660
    %6662 = vmatmul.f32.gmra.mxu0 %v5608
    %v6663 = vpop.f32.mrf.mxu0
    %v6664 = vadd.f32 %v6599, %v6663
    %6665 = vmatmul.f32.gmra.mxu0 %v5612
    %v6666 = vpop.f32.mrf.mxu0
    %v6667 = vadd.f32 %v6602, %v6666
    %6668 = vmatmul.f32.gmra.mxu0 %v5616
    %v6669 = vpop.f32.mrf.mxu0
    %v6670 = vadd.f32 %v6605, %v6669
    %6671 = vmatmul.f32.gmra.mxu0 %v5620
    %v6672 = vpop.f32.mrf.mxu0
    %v6673 = vadd.f32 %v6608, %v6672
    %6674 = vmatmul.f32.gmra.mxu0 %v5624
    %v6675 = vpop.f32.mrf.mxu0
    %v6676 = vadd.f32 %v6611, %v6675
    %6677 = vmatmul.f32.gmra.mxu0 %v5628
    %v6678 = vpop.f32.mrf.mxu0
    %v6679 = vadd.f32 %v6614, %v6678
    %6680 = vmatmul.f32.gmra.mxu0 %v5632
    %v6681 = vpop.f32.mrf.mxu0
    %v6682 = vadd.f32 %v6617, %v6681
    %6683 = vmatmul.f32.gmra.mxu0 %v5636
    %v6684 = vpop.f32.mrf.mxu0
    %v6685 = vadd.f32 %v6620, %v6684
    %6686 = vmatmul.f32.gmra.mxu0 %v5640
    %v6687 = vpop.f32.mrf.mxu0
    %v6688 = vadd.f32 %v6623, %v6687
    %6689 = vmatmul.f32.gmra.mxu0 %v5644
    %v6690 = vpop.f32.mrf.mxu0
    %v6691 = vadd.f32 %v6626, %v6690
    %6692 = vdwg.mxu0
    %6693 = vmatpush.msra.mxu0 %v5709
    %6694 = vmatpush.msra.mxu0 %v5705
    %6695 = vmatpush.msra.mxu0 %v5701
    %6696 = vmatpush.msra.mxu0 %v5697
    %6697 = vmatpush.msra.mxu0 %v5693
    %6698 = vmatpush.msra.mxu0 %v5689
    %6699 = vmatpush.msra.mxu0 %v5685
    %6700 = vmatpush.msra.mxu0 %v5681
    %6701 = vmatpush.msra.mxu0 %v5677
    %6702 = vmatpush.msra.mxu0 %v5673
    %6703 = vmatpush.msra.mxu0 %v5669
    %6704 = vmatpush.msra.mxu0 %v5665
    %6705 = vmatpush.msra.mxu0 %v5661
    %6706 = vmatpush.msra.mxu0 %v5657
    %6707 = vmatpush.msra.mxu0 %v5653
    %6708 = vmatpush.msra.mxu0 %v5649
    %6709 = vmatmul.f32.gmra.mxu0 %v5581
    %v6710 = vpop.f32.mrf.mxu0
    %v6711 = vadd.f32 %v5908, %v6710
    %6712 = vmatmul.f32.gmra.mxu0 %v5585
    %v6713 = vpop.f32.mrf.mxu0
    %v6714 = vadd.f32 %v5908, %v6713
    %6715 = vmatmul.f32.gmra.mxu0 %v5589
    %v6716 = vpop.f32.mrf.mxu0
    %v6717 = vadd.f32 %v5908, %v6716
    %6718 = vmatmul.f32.gmra.mxu0 %v5593
    %v6719 = vpop.f32.mrf.mxu0
    %v6720 = vadd.f32 %v5908, %v6719
    %6721 = vmatmul.f32.gmra.mxu0 %v5597
    %v6722 = vpop.f32.mrf.mxu0
    %v6723 = vadd.f32 %v5908, %v6722
    %6724 = vmatmul.f32.gmra.mxu0 %v5601
    %v6725 = vpop.f32.mrf.mxu0
    %v6726 = vadd.f32 %v5908, %v6725
    %6727 = vmatmul.f32.gmra.mxu0 %v5605
    %v6728 = vpop.f32.mrf.mxu0
    %v6729 = vadd.f32 %v5908, %v6728
    %6730 = vmatmul.f32.gmra.mxu0 %v5609
    %v6731 = vpop.f32.mrf.mxu0
    %v6732 = vadd.f32 %v5908, %v6731
    %6733 = vmatmul.f32.gmra.mxu0 %v5613
    %v6734 = vpop.f32.mrf.mxu0
    %v6735 = vadd.f32 %v5908, %v6734
    %6736 = vmatmul.f32.gmra.mxu0 %v5617
    %v6737 = vpop.f32.mrf.mxu0
    %v6738 = vadd.f32 %v5908, %v6737
    %6739 = vmatmul.f32.gmra.mxu0 %v5621
    %v6740 = vpop.f32.mrf.mxu0
    %v6741 = vadd.f32 %v5908, %v6740
    %6742 = vmatmul.f32.gmra.mxu0 %v5625
    %v6743 = vpop.f32.mrf.mxu0
    %v6744 = vadd.f32 %v5908, %v6743
    %6745 = vmatmul.f32.gmra.mxu0 %v5629
    %v6746 = vpop.f32.mrf.mxu0
    %v6747 = vadd.f32 %v5908, %v6746
    %6748 = vmatmul.f32.gmra.mxu0 %v5633
    %v6749 = vpop.f32.mrf.mxu0
    %v6750 = vadd.f32 %v5908, %v6749
    %6751 = vmatmul.f32.gmra.mxu0 %v5637
    %v6752 = vpop.f32.mrf.mxu0
    %v6753 = vadd.f32 %v5908, %v6752
    %6754 = vmatmul.f32.gmra.mxu0 %v5641
    %v6755 = vpop.f32.mrf.mxu0
    %v6756 = vadd.f32 %v5908, %v6755
    %6757 = vdwg.mxu0
    %6758 = vmatpush.msra.mxu0 %v5773
    %6759 = vmatpush.msra.mxu0 %v5769
    %6760 = vmatpush.msra.mxu0 %v5765
    %6761 = vmatpush.msra.mxu0 %v5761
    %6762 = vmatpush.msra.mxu0 %v5757
    %6763 = vmatpush.msra.mxu0 %v5753
    %6764 = vmatpush.msra.mxu0 %v5749
    %6765 = vmatpush.msra.mxu0 %v5745
    %6766 = vmatpush.msra.mxu0 %v5741
    %6767 = vmatpush.msra.mxu0 %v5737
    %6768 = vmatpush.msra.mxu0 %v5733
    %6769 = vmatpush.msra.mxu0 %v5729
    %6770 = vmatpush.msra.mxu0 %v5725
    %6771 = vmatpush.msra.mxu0 %v5721
    %6772 = vmatpush.msra.mxu0 %v5717
    %6773 = vmatpush.msra.mxu0 %v5713
    %6774 = vmatmul.f32.gmra.mxu0 %v5582
    %v6775 = vpop.f32.mrf.mxu0
    %v6776 = vadd.f32 %v6711, %v6775
    %6777 = vmatmul.f32.gmra.mxu0 %v5586
    %v6778 = vpop.f32.mrf.mxu0
    %v6779 = vadd.f32 %v6714, %v6778
    %6780 = vmatmul.f32.gmra.mxu0 %v5590
    %v6781 = vpop.f32.mrf.mxu0
    %v6782 = vadd.f32 %v6717, %v6781
    %6783 = vmatmul.f32.gmra.mxu0 %v5594
    %v6784 = vpop.f32.mrf.mxu0
    %v6785 = vadd.f32 %v6720, %v6784
    %6786 = vmatmul.f32.gmra.mxu0 %v5598
    %v6787 = vpop.f32.mrf.mxu0
    %v6788 = vadd.f32 %v6723, %v6787
    %6789 = vmatmul.f32.gmra.mxu0 %v5602
    %v6790 = vpop.f32.mrf.mxu0
    %v6791 = vadd.f32 %v6726, %v6790
    %6792 = vmatmul.f32.gmra.mxu0 %v5606
    %v6793 = vpop.f32.mrf.mxu0
    %v6794 = vadd.f32 %v6729, %v6793
    %6795 = vmatmul.f32.gmra.mxu0 %v5610
    %v6796 = vpop.f32.mrf.mxu0
    %v6797 = vadd.f32 %v6732, %v6796
    %6798 = vmatmul.f32.gmra.mxu0 %v5614
    %v6799 = vpop.f32.mrf.mxu0
    %v6800 = vadd.f32 %v6735, %v6799
    %6801 = vmatmul.f32.gmra.mxu0 %v5618
    %v6802 = vpop.f32.mrf.mxu0
    %v6803 = vadd.f32 %v6738, %v6802
    %6804 = vmatmul.f32.gmra.mxu0 %v5622
    %v6805 = vpop.f32.mrf.mxu0
    %v6806 = vadd.f32 %v6741, %v6805
    %6807 = vmatmul.f32.gmra.mxu0 %v5626
    %v6808 = vpop.f32.mrf.mxu0
    %v6809 = vadd.f32 %v6744, %v6808
    %6810 = vmatmul.f32.gmra.mxu0 %v5630
    %v6811 = vpop.f32.mrf.mxu0
    %v6812 = vadd.f32 %v6747, %v6811
    %6813 = vmatmul.f32.gmra.mxu0 %v5634
    %v6814 = vpop.f32.mrf.mxu0
    %v6815 = vadd.f32 %v6750, %v6814
    %6816 = vmatmul.f32.gmra.mxu0 %v5638
    %v6817 = vpop.f32.mrf.mxu0
    %v6818 = vadd.f32 %v6753, %v6817
    %6819 = vmatmul.f32.gmra.mxu0 %v5642
    %v6820 = vpop.f32.mrf.mxu0
    %v6821 = vadd.f32 %v6756, %v6820
    %6822 = vdwg.mxu0
    %6823 = vmatpush.msra.mxu0 %v5837
    %6824 = vmatpush.msra.mxu0 %v5833
    %6825 = vmatpush.msra.mxu0 %v5829
    %6826 = vmatpush.msra.mxu0 %v5825
    %6827 = vmatpush.msra.mxu0 %v5821
    %6828 = vmatpush.msra.mxu0 %v5817
    %6829 = vmatpush.msra.mxu0 %v5813
    %6830 = vmatpush.msra.mxu0 %v5809
    %6831 = vmatpush.msra.mxu0 %v5805
    %6832 = vmatpush.msra.mxu0 %v5801
    %6833 = vmatpush.msra.mxu0 %v5797
    %6834 = vmatpush.msra.mxu0 %v5793
    %6835 = vmatpush.msra.mxu0 %v5789
    %6836 = vmatpush.msra.mxu0 %v5785
    %6837 = vmatpush.msra.mxu0 %v5781
    %6838 = vmatpush.msra.mxu0 %v5777
    %6839 = vmatmul.f32.gmra.mxu0 %v5583
    %v6840 = vpop.f32.mrf.mxu0
    %v6841 = vadd.f32 %v6776, %v6840
    %6842 = vmatmul.f32.gmra.mxu0 %v5587
    %v6843 = vpop.f32.mrf.mxu0
    %v6844 = vadd.f32 %v6779, %v6843
    %6845 = vmatmul.f32.gmra.mxu0 %v5591
    %v6846 = vpop.f32.mrf.mxu0
    %v6847 = vadd.f32 %v6782, %v6846
    %6848 = vmatmul.f32.gmra.mxu0 %v5595
    %v6849 = vpop.f32.mrf.mxu0
    %v6850 = vadd.f32 %v6785, %v6849
    %6851 = vmatmul.f32.gmra.mxu0 %v5599
    %v6852 = vpop.f32.mrf.mxu0
    %v6853 = vadd.f32 %v6788, %v6852
    %6854 = vmatmul.f32.gmra.mxu0 %v5603
    %v6855 = vpop.f32.mrf.mxu0
    %v6856 = vadd.f32 %v6791, %v6855
    %6857 = vmatmul.f32.gmra.mxu0 %v5607
    %v6858 = vpop.f32.mrf.mxu0
    %v6859 = vadd.f32 %v6794, %v6858
    %6860 = vmatmul.f32.gmra.mxu0 %v5611
    %v6861 = vpop.f32.mrf.mxu0
    %v6862 = vadd.f32 %v6797, %v6861
    %6863 = vmatmul.f32.gmra.mxu0 %v5615
    %v6864 = vpop.f32.mrf.mxu0
    %v6865 = vadd.f32 %v6800, %v6864
    %6866 = vmatmul.f32.gmra.mxu0 %v5619
    %v6867 = vpop.f32.mrf.mxu0
    %v6868 = vadd.f32 %v6803, %v6867
    %6869 = vmatmul.f32.gmra.mxu0 %v5623
    %v6870 = vpop.f32.mrf.mxu0
    %v6871 = vadd.f32 %v6806, %v6870
    %6872 = vmatmul.f32.gmra.mxu0 %v5627
    %v6873 = vpop.f32.mrf.mxu0
    %v6874 = vadd.f32 %v6809, %v6873
    %6875 = vmatmul.f32.gmra.mxu0 %v5631
    %v6876 = vpop.f32.mrf.mxu0
    %v6877 = vadd.f32 %v6812, %v6876
    %6878 = vmatmul.f32.gmra.mxu0 %v5635
    %v6879 = vpop.f32.mrf.mxu0
    %v6880 = vadd.f32 %v6815, %v6879
    %6881 = vmatmul.f32.gmra.mxu0 %v5639
    %v6882 = vpop.f32.mrf.mxu0
    %v6883 = vadd.f32 %v6818, %v6882
    %6884 = vmatmul.f32.gmra.mxu0 %v5643
    %v6885 = vpop.f32.mrf.mxu0
    %v6886 = vadd.f32 %v6821, %v6885
    %6887 = vdwg.mxu0
    %6888 = vmatpush.msra.mxu0 %v5901
    %6889 = vmatpush.msra.mxu0 %v5897
    %6890 = vmatpush.msra.mxu0 %v5893
    %6891 = vmatpush.msra.mxu0 %v5889
    %6892 = vmatpush.msra.mxu0 %v5885
    %6893 = vmatpush.msra.mxu0 %v5881
    %6894 = vmatpush.msra.mxu0 %v5877
    %6895 = vmatpush.msra.mxu0 %v5873
    %6896 = vmatpush.msra.mxu0 %v5869
    %6897 = vmatpush.msra.mxu0 %v5865
    %6898 = vmatpush.msra.mxu0 %v5861
    %6899 = vmatpush.msra.mxu0 %v5857
    %6900 = vmatpush.msra.mxu0 %v5853
    %6901 = vmatpush.msra.mxu0 %v5849
    %6902 = vmatpush.msra.mxu0 %v5845
    %6903 = vmatpush.msra.mxu0 %v5841
    %6904 = vmatmul.f32.gmra.mxu0 %v5584
    %v6905 = vpop.f32.mrf.mxu0
    %v6906 = vadd.f32 %v6841, %v6905
    %6907 = vmatmul.f32.gmra.mxu0 %v5588
    %v6908 = vpop.f32.mrf.mxu0
    %v6909 = vadd.f32 %v6844, %v6908
    %6910 = vmatmul.f32.gmra.mxu0 %v5592
    %v6911 = vpop.f32.mrf.mxu0
    %v6912 = vadd.f32 %v6847, %v6911
    %6913 = vmatmul.f32.gmra.mxu0 %v5596
    %v6914 = vpop.f32.mrf.mxu0
    %v6915 = vadd.f32 %v6850, %v6914
    %6916 = vmatmul.f32.gmra.mxu0 %v5600
    %v6917 = vpop.f32.mrf.mxu0
    %v6918 = vadd.f32 %v6853, %v6917
    %6919 = vmatmul.f32.gmra.mxu0 %v5604
    %v6920 = vpop.f32.mrf.mxu0
    %v6921 = vadd.f32 %v6856, %v6920
    %6922 = vmatmul.f32.gmra.mxu0 %v5608
    %v6923 = vpop.f32.mrf.mxu0
    %v6924 = vadd.f32 %v6859, %v6923
    %6925 = vmatmul.f32.gmra.mxu0 %v5612
    %v6926 = vpop.f32.mrf.mxu0
    %v6927 = vadd.f32 %v6862, %v6926
    %6928 = vmatmul.f32.gmra.mxu0 %v5616
    %v6929 = vpop.f32.mrf.mxu0
    %v6930 = vadd.f32 %v6865, %v6929
    %6931 = vmatmul.f32.gmra.mxu0 %v5620
    %v6932 = vpop.f32.mrf.mxu0
    %v6933 = vadd.f32 %v6868, %v6932
    %6934 = vmatmul.f32.gmra.mxu0 %v5624
    %v6935 = vpop.f32.mrf.mxu0
    %v6936 = vadd.f32 %v6871, %v6935
    %6937 = vmatmul.f32.gmra.mxu0 %v5628
    %v6938 = vpop.f32.mrf.mxu0
    %v6939 = vadd.f32 %v6874, %v6938
    %6940 = vmatmul.f32.gmra.mxu0 %v5632
    %v6941 = vpop.f32.mrf.mxu0
    %v6942 = vadd.f32 %v6877, %v6941
    %6943 = vmatmul.f32.gmra.mxu0 %v5636
    %v6944 = vpop.f32.mrf.mxu0
    %v6945 = vadd.f32 %v6880, %v6944
    %6946 = vmatmul.f32.gmra.mxu0 %v5640
    %v6947 = vpop.f32.mrf.mxu0
    %v6948 = vadd.f32 %v6883, %v6947
    %6949 = vmatmul.f32.gmra.mxu0 %v5644
    %v6950 = vpop.f32.mrf.mxu0
    %v6951 = vadd.f32 %v6886, %v6950
    %6952 = vdwg.mxu0
    %v6953 = vmax.f32 %v6126, 0.0
    %v6954 = vmax.f32 %v6386, 0.0
    %v6955 = vmax.f32 %v6646, 0.0
    %v6956 = vmax.f32 %v6906, 0.0
    %v6957 = vmax.f32 %v6129, 0.0
    %v6958 = vmax.f32 %v6389, 0.0
    %v6959 = vmax.f32 %v6649, 0.0
    %v6960 = vmax.f32 %v6909, 0.0
    %v6961 = vmax.f32 %v6132, 0.0
    %v6962 = vmax.f32 %v6392, 0.0
    %v6963 = vmax.f32 %v6652, 0.0
    %v6964 = vmax.f32 %v6912, 0.0
    %v6965 = vmax.f32 %v6135, 0.0
    %v6966 = vmax.f32 %v6395, 0.0
    %v6967 = vmax.f32 %v6655, 0.0
    %v6968 = vmax.f32 %v6915, 0.0
    %v6969 = vmax.f32 %v6138, 0.0
    %v6970 = vmax.f32 %v6398, 0.0
    %v6971 = vmax.f32 %v6658, 0.0
    %v6972 = vmax.f32 %v6918, 0.0
    %v6973 = vmax.f32 %v6141, 0.0
    %v6974 = vmax.f32 %v6401, 0.0
    %v6975 = vmax.f32 %v6661, 0.0
    %v6976 = vmax.f32 %v6921, 0.0
    %v6977 = vmax.f32 %v6144, 0.0
    %v6978 = vmax.f32 %v6404, 0.0
    %v6979 = vmax.f32 %v6664, 0.0
    %v6980 = vmax.f32 %v6924, 0.0
    %v6981 = vmax.f32 %v6147, 0.0
    %v6982 = vmax.f32 %v6407, 0.0
    %v6983 = vmax.f32 %v6667, 0.0
    %v6984 = vmax.f32 %v6927, 0.0
    %v6985 = vmax.f32 %v6150, 0.0
    %v6986 = vmax.f32 %v6410, 0.0
    %v6987 = vmax.f32 %v6670, 0.0
    %v6988 = vmax.f32 %v6930, 0.0
    %v6989 = vmax.f32 %v6153, 0.0
    %v6990 = vmax.f32 %v6413, 0.0
    %v6991 = vmax.f32 %v6673, 0.0
    %v6992 = vmax.f32 %v6933, 0.0
    %v6993 = vmax.f32 %v6156, 0.0
    %v6994 = vmax.f32 %v6416, 0.0
    %v6995 = vmax.f32 %v6676, 0.0
    %v6996 = vmax.f32 %v6936, 0.0
    %v6997 = vmax.f32 %v6159, 0.0
    %v6998 = vmax.f32 %v6419, 0.0
    %v6999 = vmax.f32 %v6679, 0.0
    %v7000 = vmax.f32 %v6939, 0.0
    %v7001 = vmax.f32 %v6162, 0.0
    %v7002 = vmax.f32 %v6422, 0.0
    %v7003 = vmax.f32 %v6682, 0.0
    %v7004 = vmax.f32 %v6942, 0.0
    %v7005 = vmax.f32 %v6165, 0.0
    %v7006 = vmax.f32 %v6425, 0.0
    %v7007 = vmax.f32 %v6685, 0.0
    %v7008 = vmax.f32 %v6945, 0.0
    %v7009 = vmax.f32 %v6168, 0.0
    %v7010 = vmax.f32 %v6428, 0.0
    %v7011 = vmax.f32 %v6688, 0.0
    %v7012 = vmax.f32 %v6948, 0.0
    %v7013 = vmax.f32 %v6171, 0.0
    %v7014 = vmax.f32 %v6431, 0.0
    %v7015 = vmax.f32 %v6691, 0.0
    %v7016 = vmax.f32 %v6951, 0.0
    %s7017 = scalar_lea.vmem [#allocation5], 10240
    %v7018 = vld [vmem:[%s7017] sm:$0xff]
    %v7019 = vld [vmem:[%s7017 + $0x8] sm:$0xff]
    %v7020 = vld [vmem:[%s7017 + $0x10] sm:$0xff]
    %v7021 = vld [vmem:[%s7017 + $0x18] sm:$0xff]
    %v7022 = vld [vmem:[%s7017 + $0x20] sm:$0xff]
    %v7023 = vld [vmem:[%s7017 + $0x28] sm:$0xff]
    %v7024 = vld [vmem:[%s7017 + $0x30] sm:$0xff]
    %v7025 = vld [vmem:[%s7017 + $0x38] sm:$0xff]
    %v7026 = vld [vmem:[%s7017 + $0x40] sm:$0xff]
    %v7027 = vld [vmem:[%s7017 + $0x48] sm:$0xff]
    %v7028 = vld [vmem:[%s7017 + $0x50] sm:$0xff]
    %v7029 = vld [vmem:[%s7017 + $0x58] sm:$0xff]
    %v7030 = vld [vmem:[%s7017 + $0x60] sm:$0xff]
    %v7031 = vld [vmem:[%s7017 + $0x68] sm:$0xff]
    %v7032 = vld [vmem:[%s7017 + $0x70] sm:$0xff]
    %v7033 = vld [vmem:[%s7017 + $0x78] sm:$0xff]
    %v7034 = vld [vmem:[%s7017 + $0x80] sm:$0xff]
    %v7035 = vld [vmem:[%s7017 + $0x88] sm:$0xff]
    %v7036 = vld [vmem:[%s7017 + $0x90] sm:$0xff]
    %v7037 = vld [vmem:[%s7017 + $0x98] sm:$0xff]
    %v7038 = vld [vmem:[%s7017 + $0xa0] sm:$0xff]
    %v7039 = vld [vmem:[%s7017 + $0xa8] sm:$0xff]
    %v7040 = vld [vmem:[%s7017 + $0xb0] sm:$0xff]
    %v7041 = vld [vmem:[%s7017 + $0xb8] sm:$0xff]
    %v7042 = vld [vmem:[%s7017 + $0xc0] sm:$0xff]
    %v7043 = vld [vmem:[%s7017 + $0xc8] sm:$0xff]
    %v7044 = vld [vmem:[%s7017 + $0xd0] sm:$0xff]
    %v7045 = vld [vmem:[%s7017 + $0xd8] sm:$0xff]
    %v7046 = vld [vmem:[%s7017 + $0xe0] sm:$0xff]
    %v7047 = vld [vmem:[%s7017 + $0xe8] sm:$0xff]
    %v7048 = vld [vmem:[%s7017 + $0xf0] sm:$0xff]
    %v7049 = vld [vmem:[%s7017 + $0xf8] sm:$0xff]
    %v7050 = vld [vmem:[%s7017 + $0x100] sm:$0xff]
    %v7051 = vld [vmem:[%s7017 + $0x108] sm:$0xff]
    %v7052 = vld [vmem:[%s7017 + $0x110] sm:$0xff]
    %v7053 = vld [vmem:[%s7017 + $0x118] sm:$0xff]
    %v7054 = vld [vmem:[%s7017 + $0x120] sm:$0xff]
    %v7055 = vld [vmem:[%s7017 + $0x128] sm:$0xff]
    %v7056 = vld [vmem:[%s7017 + $0x130] sm:$0xff]
    %v7057 = vld [vmem:[%s7017 + $0x138] sm:$0xff]
    %v7058 = vld [vmem:[%s7017 + $0x140] sm:$0xff]
    %v7059 = vld [vmem:[%s7017 + $0x148] sm:$0xff]
    %v7060 = vld [vmem:[%s7017 + $0x150] sm:$0xff]
    %v7061 = vld [vmem:[%s7017 + $0x158] sm:$0xff]
    %v7062 = vld [vmem:[%s7017 + $0x160] sm:$0xff]
    %v7063 = vld [vmem:[%s7017 + $0x168] sm:$0xff]
    %v7064 = vld [vmem:[%s7017 + $0x170] sm:$0xff]
    %v7065 = vld [vmem:[%s7017 + $0x178] sm:$0xff]
    %v7066 = vld [vmem:[%s7017 + $0x180] sm:$0xff]
    %v7067 = vld [vmem:[%s7017 + $0x188] sm:$0xff]
    %v7068 = vld [vmem:[%s7017 + $0x190] sm:$0xff]
    %v7069 = vld [vmem:[%s7017 + $0x198] sm:$0xff]
    %v7070 = vld [vmem:[%s7017 + $0x1a0] sm:$0xff]
    %v7071 = vld [vmem:[%s7017 + $0x1a8] sm:$0xff]
    %v7072 = vld [vmem:[%s7017 + $0x1b0] sm:$0xff]
    %v7073 = vld [vmem:[%s7017 + $0x1b8] sm:$0xff]
    %v7074 = vld [vmem:[%s7017 + $0x1c0] sm:$0xff]
    %v7075 = vld [vmem:[%s7017 + $0x1c8] sm:$0xff]
    %v7076 = vld [vmem:[%s7017 + $0x1d0] sm:$0xff]
    %v7077 = vld [vmem:[%s7017 + $0x1d8] sm:$0xff]
    %v7078 = vld [vmem:[%s7017 + $0x1e0] sm:$0xff]
    %v7079 = vld [vmem:[%s7017 + $0x1e8] sm:$0xff]
    %v7080 = vld [vmem:[%s7017 + $0x1f0] sm:$0xff]
    %v7081 = vld [vmem:[%s7017 + $0x1f8] sm:$0xff]
    %v7082 = vld [vmem:[%s7017 + $0x200] sm:$0xff]
    %v7083 = vld [vmem:[%s7017 + $0x208] sm:$0xff]
    %v7084 = vld [vmem:[%s7017 + $0x210] sm:$0xff]
    %v7085 = vld [vmem:[%s7017 + $0x218] sm:$0xff]
    %v7086 = vld [vmem:[%s7017 + $0x220] sm:$0xff]
    %v7087 = vld [vmem:[%s7017 + $0x228] sm:$0xff]
    %v7088 = vld [vmem:[%s7017 + $0x230] sm:$0xff]
    %v7089 = vld [vmem:[%s7017 + $0x238] sm:$0xff]
    %v7090 = vld [vmem:[%s7017 + $0x240] sm:$0xff]
    %v7091 = vld [vmem:[%s7017 + $0x248] sm:$0xff]
    %v7092 = vld [vmem:[%s7017 + $0x250] sm:$0xff]
    %v7093 = vld [vmem:[%s7017 + $0x258] sm:$0xff]
    %v7094 = vld [vmem:[%s7017 + $0x260] sm:$0xff]
    %v7095 = vld [vmem:[%s7017 + $0x268] sm:$0xff]
    %v7096 = vld [vmem:[%s7017 + $0x270] sm:$0xff]
    %v7097 = vld [vmem:[%s7017 + $0x278] sm:$0xff]
    %v7098 = vld [vmem:[%s7017 + $0x280] sm:$0xff]
    %v7099 = vld [vmem:[%s7017 + $0x288] sm:$0xff]
    %v7100 = vld [vmem:[%s7017 + $0x290] sm:$0xff]
    %v7101 = vld [vmem:[%s7017 + $0x298] sm:$0xff]
    %v7102 = vld [vmem:[%s7017 + $0x2a0] sm:$0xff]
    %v7103 = vld [vmem:[%s7017 + $0x2a8] sm:$0xff]
    %v7104 = vld [vmem:[%s7017 + $0x2b0] sm:$0xff]
    %v7105 = vld [vmem:[%s7017 + $0x2b8] sm:$0xff]
    %v7106 = vld [vmem:[%s7017 + $0x2c0] sm:$0xff]
    %v7107 = vld [vmem:[%s7017 + $0x2c8] sm:$0xff]
    %v7108 = vld [vmem:[%s7017 + $0x2d0] sm:$0xff]
    %v7109 = vld [vmem:[%s7017 + $0x2d8] sm:$0xff]
    %v7110 = vld [vmem:[%s7017 + $0x2e0] sm:$0xff]
    %v7111 = vld [vmem:[%s7017 + $0x2e8] sm:$0xff]
    %v7112 = vld [vmem:[%s7017 + $0x2f0] sm:$0xff]
    %v7113 = vld [vmem:[%s7017 + $0x2f8] sm:$0xff]
    %v7114 = vld [vmem:[%s7017 + $0x300] sm:$0xff]
    %v7115 = vld [vmem:[%s7017 + $0x308] sm:$0xff]
    %v7116 = vld [vmem:[%s7017 + $0x310] sm:$0xff]
    %v7117 = vld [vmem:[%s7017 + $0x318] sm:$0xff]
    %v7118 = vld [vmem:[%s7017 + $0x320] sm:$0xff]
    %v7119 = vld [vmem:[%s7017 + $0x328] sm:$0xff]
    %v7120 = vld [vmem:[%s7017 + $0x330] sm:$0xff]
    %v7121 = vld [vmem:[%s7017 + $0x338] sm:$0xff]
    %v7122 = vld [vmem:[%s7017 + $0x340] sm:$0xff]
    %v7123 = vld [vmem:[%s7017 + $0x348] sm:$0xff]
    %v7124 = vld [vmem:[%s7017 + $0x350] sm:$0xff]
    %v7125 = vld [vmem:[%s7017 + $0x358] sm:$0xff]
    %v7126 = vld [vmem:[%s7017 + $0x360] sm:$0xff]
    %v7127 = vld [vmem:[%s7017 + $0x368] sm:$0xff]
    %v7128 = vld [vmem:[%s7017 + $0x370] sm:$0xff]
    %v7129 = vld [vmem:[%s7017 + $0x378] sm:$0xff]
    %v7130 = vld [vmem:[%s7017 + $0x380] sm:$0xff]
    %v7131 = vld [vmem:[%s7017 + $0x388] sm:$0xff]
    %v7132 = vld [vmem:[%s7017 + $0x390] sm:$0xff]
    %v7133 = vld [vmem:[%s7017 + $0x398] sm:$0xff]
    %v7134 = vld [vmem:[%s7017 + $0x3a0] sm:$0xff]
    %v7135 = vld [vmem:[%s7017 + $0x3a8] sm:$0xff]
    %v7136 = vld [vmem:[%s7017 + $0x3b0] sm:$0xff]
    %v7137 = vld [vmem:[%s7017 + $0x3b8] sm:$0xff]
    %v7138 = vld [vmem:[%s7017 + $0x3c0] sm:$0xff]
    %v7139 = vld [vmem:[%s7017 + $0x3c8] sm:$0xff]
    %v7140 = vld [vmem:[%s7017 + $0x3d0] sm:$0xff]
    %v7141 = vld [vmem:[%s7017 + $0x3d8] sm:$0xff]
    %v7142 = vld [vmem:[%s7017 + $0x3e0] sm:$0xff]
    %v7143 = vld [vmem:[%s7017 + $0x3e8] sm:$0xff]
    %v7144 = vld [vmem:[%s7017 + $0x3f0] sm:$0xff]
    %v7145 = vld [vmem:[%s7017 + $0x3f8] sm:$0xff]
    %v7146 = vld [vmem:[%s7017 + $0x400] sm:$0xff]
    %v7147 = vld [vmem:[%s7017 + $0x408] sm:$0xff]
    %v7148 = vld [vmem:[%s7017 + $0x410] sm:$0xff]
    %v7149 = vld [vmem:[%s7017 + $0x418] sm:$0xff]
    %v7150 = vld [vmem:[%s7017 + $0x420] sm:$0xff]
    %v7151 = vld [vmem:[%s7017 + $0x428] sm:$0xff]
    %v7152 = vld [vmem:[%s7017 + $0x430] sm:$0xff]
    %v7153 = vld [vmem:[%s7017 + $0x438] sm:$0xff]
    %v7154 = vld [vmem:[%s7017 + $0x440] sm:$0xff]
    %v7155 = vld [vmem:[%s7017 + $0x448] sm:$0xff]
    %v7156 = vld [vmem:[%s7017 + $0x450] sm:$0xff]
    %v7157 = vld [vmem:[%s7017 + $0x458] sm:$0xff]
    %v7158 = vld [vmem:[%s7017 + $0x460] sm:$0xff]
    %v7159 = vld [vmem:[%s7017 + $0x468] sm:$0xff]
    %v7160 = vld [vmem:[%s7017 + $0x470] sm:$0xff]
    %v7161 = vld [vmem:[%s7017 + $0x478] sm:$0xff]
    %v7162 = vld [vmem:[%s7017 + $0x480] sm:$0xff]
    %v7163 = vld [vmem:[%s7017 + $0x488] sm:$0xff]
    %v7164 = vld [vmem:[%s7017 + $0x490] sm:$0xff]
    %v7165 = vld [vmem:[%s7017 + $0x498] sm:$0xff]
    %v7166 = vld [vmem:[%s7017 + $0x4a0] sm:$0xff]
    %v7167 = vld [vmem:[%s7017 + $0x4a8] sm:$0xff]
    %v7168 = vld [vmem:[%s7017 + $0x4b0] sm:$0xff]
    %v7169 = vld [vmem:[%s7017 + $0x4b8] sm:$0xff]
    %v7170 = vld [vmem:[%s7017 + $0x4c0] sm:$0xff]
    %v7171 = vld [vmem:[%s7017 + $0x4c8] sm:$0xff]
    %v7172 = vld [vmem:[%s7017 + $0x4d0] sm:$0xff]
    %v7173 = vld [vmem:[%s7017 + $0x4d8] sm:$0xff]
    %v7174 = vld [vmem:[%s7017 + $0x4e0] sm:$0xff]
    %v7175 = vld [vmem:[%s7017 + $0x4e8] sm:$0xff]
    %v7176 = vld [vmem:[%s7017 + $0x4f0] sm:$0xff]
    %v7177 = vld [vmem:[%s7017 + $0x4f8] sm:$0xff]
    %v7178 = vld [vmem:[%s7017 + $0x500] sm:$0xff]
    %v7179 = vld [vmem:[%s7017 + $0x508] sm:$0xff]
    %v7180 = vld [vmem:[%s7017 + $0x510] sm:$0xff]
    %v7181 = vld [vmem:[%s7017 + $0x518] sm:$0xff]
    %v7182 = vld [vmem:[%s7017 + $0x520] sm:$0xff]
    %v7183 = vld [vmem:[%s7017 + $0x528] sm:$0xff]
    %v7184 = vld [vmem:[%s7017 + $0x530] sm:$0xff]
    %v7185 = vld [vmem:[%s7017 + $0x538] sm:$0xff]
    %v7186 = vld [vmem:[%s7017 + $0x540] sm:$0xff]
    %v7187 = vld [vmem:[%s7017 + $0x548] sm:$0xff]
    %v7188 = vld [vmem:[%s7017 + $0x550] sm:$0xff]
    %v7189 = vld [vmem:[%s7017 + $0x558] sm:$0xff]
    %v7190 = vld [vmem:[%s7017 + $0x560] sm:$0xff]
    %v7191 = vld [vmem:[%s7017 + $0x568] sm:$0xff]
    %v7192 = vld [vmem:[%s7017 + $0x570] sm:$0xff]
    %v7193 = vld [vmem:[%s7017 + $0x578] sm:$0xff]
    %v7194 = vld [vmem:[%s7017 + $0x580] sm:$0xff]
    %v7195 = vld [vmem:[%s7017 + $0x588] sm:$0xff]
    %v7196 = vld [vmem:[%s7017 + $0x590] sm:$0xff]
    %v7197 = vld [vmem:[%s7017 + $0x598] sm:$0xff]
    %v7198 = vld [vmem:[%s7017 + $0x5a0] sm:$0xff]
    %v7199 = vld [vmem:[%s7017 + $0x5a8] sm:$0xff]
    %v7200 = vld [vmem:[%s7017 + $0x5b0] sm:$0xff]
    %v7201 = vld [vmem:[%s7017 + $0x5b8] sm:$0xff]
    %v7202 = vld [vmem:[%s7017 + $0x5c0] sm:$0xff]
    %v7203 = vld [vmem:[%s7017 + $0x5c8] sm:$0xff]
    %v7204 = vld [vmem:[%s7017 + $0x5d0] sm:$0xff]
    %v7205 = vld [vmem:[%s7017 + $0x5d8] sm:$0xff]
    %v7206 = vld [vmem:[%s7017 + $0x5e0] sm:$0xff]
    %v7207 = vld [vmem:[%s7017 + $0x5e8] sm:$0xff]
    %v7208 = vld [vmem:[%s7017 + $0x5f0] sm:$0xff]
    %v7209 = vld [vmem:[%s7017 + $0x5f8] sm:$0xff]
    %v7210 = vld [vmem:[%s7017 + $0x600] sm:$0xff]
    %v7211 = vld [vmem:[%s7017 + $0x608] sm:$0xff]
    %v7212 = vld [vmem:[%s7017 + $0x610] sm:$0xff]
    %v7213 = vld [vmem:[%s7017 + $0x618] sm:$0xff]
    %v7214 = vld [vmem:[%s7017 + $0x620] sm:$0xff]
    %v7215 = vld [vmem:[%s7017 + $0x628] sm:$0xff]
    %v7216 = vld [vmem:[%s7017 + $0x630] sm:$0xff]
    %v7217 = vld [vmem:[%s7017 + $0x638] sm:$0xff]
    %v7218 = vld [vmem:[%s7017 + $0x640] sm:$0xff]
    %v7219 = vld [vmem:[%s7017 + $0x648] sm:$0xff]
    %v7220 = vld [vmem:[%s7017 + $0x650] sm:$0xff]
    %v7221 = vld [vmem:[%s7017 + $0x658] sm:$0xff]
    %v7222 = vld [vmem:[%s7017 + $0x660] sm:$0xff]
    %v7223 = vld [vmem:[%s7017 + $0x668] sm:$0xff]
    %v7224 = vld [vmem:[%s7017 + $0x670] sm:$0xff]
    %v7225 = vld [vmem:[%s7017 + $0x678] sm:$0xff]
    %v7226 = vld [vmem:[%s7017 + $0x680] sm:$0xff]
    %v7227 = vld [vmem:[%s7017 + $0x688] sm:$0xff]
    %v7228 = vld [vmem:[%s7017 + $0x690] sm:$0xff]
    %v7229 = vld [vmem:[%s7017 + $0x698] sm:$0xff]
    %v7230 = vld [vmem:[%s7017 + $0x6a0] sm:$0xff]
    %v7231 = vld [vmem:[%s7017 + $0x6a8] sm:$0xff]
    %v7232 = vld [vmem:[%s7017 + $0x6b0] sm:$0xff]
    %v7233 = vld [vmem:[%s7017 + $0x6b8] sm:$0xff]
    %v7234 = vld [vmem:[%s7017 + $0x6c0] sm:$0xff]
    %v7235 = vld [vmem:[%s7017 + $0x6c8] sm:$0xff]
    %v7236 = vld [vmem:[%s7017 + $0x6d0] sm:$0xff]
    %v7237 = vld [vmem:[%s7017 + $0x6d8] sm:$0xff]
    %v7238 = vld [vmem:[%s7017 + $0x6e0] sm:$0xff]
    %v7239 = vld [vmem:[%s7017 + $0x6e8] sm:$0xff]
    %v7240 = vld [vmem:[%s7017 + $0x6f0] sm:$0xff]
    %v7241 = vld [vmem:[%s7017 + $0x6f8] sm:$0xff]
    %v7242 = vld [vmem:[%s7017 + $0x700] sm:$0xff]
    %v7243 = vld [vmem:[%s7017 + $0x708] sm:$0xff]
    %v7244 = vld [vmem:[%s7017 + $0x710] sm:$0xff]
    %v7245 = vld [vmem:[%s7017 + $0x718] sm:$0xff]
    %v7246 = vld [vmem:[%s7017 + $0x720] sm:$0xff]
    %v7247 = vld [vmem:[%s7017 + $0x728] sm:$0xff]
    %v7248 = vld [vmem:[%s7017 + $0x730] sm:$0xff]
    %v7249 = vld [vmem:[%s7017 + $0x738] sm:$0xff]
    %v7250 = vld [vmem:[%s7017 + $0x740] sm:$0xff]
    %v7251 = vld [vmem:[%s7017 + $0x748] sm:$0xff]
    %v7252 = vld [vmem:[%s7017 + $0x750] sm:$0xff]
    %v7253 = vld [vmem:[%s7017 + $0x758] sm:$0xff]
    %v7254 = vld [vmem:[%s7017 + $0x760] sm:$0xff]
    %v7255 = vld [vmem:[%s7017 + $0x768] sm:$0xff]
    %v7256 = vld [vmem:[%s7017 + $0x770] sm:$0xff]
    %v7257 = vld [vmem:[%s7017 + $0x778] sm:$0xff]
    %v7258 = vld [vmem:[%s7017 + $0x780] sm:$0xff]
    %v7259 = vld [vmem:[%s7017 + $0x788] sm:$0xff]
    %v7260 = vld [vmem:[%s7017 + $0x790] sm:$0xff]
    %v7261 = vld [vmem:[%s7017 + $0x798] sm:$0xff]
    %v7262 = vld [vmem:[%s7017 + $0x7a0] sm:$0xff]
    %v7263 = vld [vmem:[%s7017 + $0x7a8] sm:$0xff]
    %v7264 = vld [vmem:[%s7017 + $0x7b0] sm:$0xff]
    %v7265 = vld [vmem:[%s7017 + $0x7b8] sm:$0xff]
    %v7266 = vld [vmem:[%s7017 + $0x7c0] sm:$0xff]
    %v7267 = vld [vmem:[%s7017 + $0x7c8] sm:$0xff]
    %v7268 = vld [vmem:[%s7017 + $0x7d0] sm:$0xff]
    %v7269 = vld [vmem:[%s7017 + $0x7d8] sm:$0xff]
    %v7270 = vld [vmem:[%s7017 + $0x7e0] sm:$0xff]
    %v7271 = vld [vmem:[%s7017 + $0x7e8] sm:$0xff]
    %v7272 = vld [vmem:[%s7017 + $0x7f0] sm:$0xff]
    %v7273 = vld [vmem:[%s7017 + $0x7f8] sm:$0xff]
    %s7274 = scalar_lea.vmem [#allocation7], 5
    %v7275 = vld [vmem:[%s7274] ss:$8 sm:$0xf]
    %v7277 = vperm.slane %v7275, 0
    %v7278 = vperm.slane %v7275, 1
    %v7279 = vperm.slane %v7275, 2
    %v7280 = vperm.slane %v7275, 3
    %7285 = vmatpush.msra.mxu0 %v7078
    %7286 = vmatpush.msra.mxu0 %v7074
    %7287 = vmatpush.msra.mxu0 %v7070
    %7288 = vmatpush.msra.mxu0 %v7066
    %7289 = vmatpush.msra.mxu0 %v7062
    %7290 = vmatpush.msra.mxu0 %v7058
    %7291 = vmatpush.msra.mxu0 %v7054
    %7292 = vmatpush.msra.mxu0 %v7050
    %7293 = vmatpush.msra.mxu0 %v7046
    %7294 = vmatpush.msra.mxu0 %v7042
    %7295 = vmatpush.msra.mxu0 %v7038
    %7296 = vmatpush.msra.mxu0 %v7034
    %7297 = vmatpush.msra.mxu0 %v7030
    %7298 = vmatpush.msra.mxu0 %v7026
    %7299 = vmatpush.msra.mxu0 %v7022
    %7300 = vmatpush.msra.mxu0 %v7018
    %7301 = vmatmul.f32.gmra.mxu0 %v6953
    %v7302 = vpop.f32.mrf.mxu0
    %v7303 = vadd.f32 %v7277, %v7302
    %7304 = vmatmul.f32.gmra.mxu0 %v6957
    %v7305 = vpop.f32.mrf.mxu0
    %v7306 = vadd.f32 %v7277, %v7305
    %7307 = vmatmul.f32.gmra.mxu0 %v6961
    %v7308 = vpop.f32.mrf.mxu0
    %v7309 = vadd.f32 %v7277, %v7308
    %7310 = vmatmul.f32.gmra.mxu0 %v6965
    %v7311 = vpop.f32.mrf.mxu0
    %v7312 = vadd.f32 %v7277, %v7311
    %7313 = vmatmul.f32.gmra.mxu0 %v6969
    %v7314 = vpop.f32.mrf.mxu0
    %v7315 = vadd.f32 %v7277, %v7314
    %7316 = vmatmul.f32.gmra.mxu0 %v6973
    %v7317 = vpop.f32.mrf.mxu0
    %v7318 = vadd.f32 %v7277, %v7317
    %7319 = vmatmul.f32.gmra.mxu0 %v6977
    %v7320 = vpop.f32.mrf.mxu0
    %v7321 = vadd.f32 %v7277, %v7320
    %7322 = vmatmul.f32.gmra.mxu0 %v6981
    %v7323 = vpop.f32.mrf.mxu0
    %v7324 = vadd.f32 %v7277, %v7323
    %7325 = vmatmul.f32.gmra.mxu0 %v6985
    %v7326 = vpop.f32.mrf.mxu0
    %v7327 = vadd.f32 %v7277, %v7326
    %7328 = vmatmul.f32.gmra.mxu0 %v6989
    %v7329 = vpop.f32.mrf.mxu0
    %v7330 = vadd.f32 %v7277, %v7329
    %7331 = vmatmul.f32.gmra.mxu0 %v6993
    %v7332 = vpop.f32.mrf.mxu0
    %v7333 = vadd.f32 %v7277, %v7332
    %7334 = vmatmul.f32.gmra.mxu0 %v6997
    %v7335 = vpop.f32.mrf.mxu0
    %v7336 = vadd.f32 %v7277, %v7335
    %7337 = vmatmul.f32.gmra.mxu0 %v7001
    %v7338 = vpop.f32.mrf.mxu0
    %v7339 = vadd.f32 %v7277, %v7338
    %7340 = vmatmul.f32.gmra.mxu0 %v7005
    %v7341 = vpop.f32.mrf.mxu0
    %v7342 = vadd.f32 %v7277, %v7341
    %7343 = vmatmul.f32.gmra.mxu0 %v7009
    %v7344 = vpop.f32.mrf.mxu0
    %v7345 = vadd.f32 %v7277, %v7344
    %7346 = vmatmul.f32.gmra.mxu0 %v7013
    %v7347 = vpop.f32.mrf.mxu0
    %v7348 = vadd.f32 %v7277, %v7347
    %7349 = vdwg.mxu0
    %7350 = vmatpush.msra.mxu0 %v7142
    %7351 = vmatpush.msra.mxu0 %v7138
    %7352 = vmatpush.msra.mxu0 %v7134
    %7353 = vmatpush.msra.mxu0 %v7130
    %7354 = vmatpush.msra.mxu0 %v7126
    %7355 = vmatpush.msra.mxu0 %v7122
    %7356 = vmatpush.msra.mxu0 %v7118
    %7357 = vmatpush.msra.mxu0 %v7114
    %7358 = vmatpush.msra.mxu0 %v7110
    %7359 = vmatpush.msra.mxu0 %v7106
    %7360 = vmatpush.msra.mxu0 %v7102
    %7361 = vmatpush.msra.mxu0 %v7098
    %7362 = vmatpush.msra.mxu0 %v7094
    %7363 = vmatpush.msra.mxu0 %v7090
    %7364 = vmatpush.msra.mxu0 %v7086
    %7365 = vmatpush.msra.mxu0 %v7082
    %7366 = vmatmul.f32.gmra.mxu0 %v6954
    %v7367 = vpop.f32.mrf.mxu0
    %v7368 = vadd.f32 %v7303, %v7367
    %7369 = vmatmul.f32.gmra.mxu0 %v6958
    %v7370 = vpop.f32.mrf.mxu0
    %v7371 = vadd.f32 %v7306, %v7370
    %7372 = vmatmul.f32.gmra.mxu0 %v6962
    %v7373 = vpop.f32.mrf.mxu0
    %v7374 = vadd.f32 %v7309, %v7373
    %7375 = vmatmul.f32.gmra.mxu0 %v6966
    %v7376 = vpop.f32.mrf.mxu0
    %v7377 = vadd.f32 %v7312, %v7376
    %7378 = vmatmul.f32.gmra.mxu0 %v6970
    %v7379 = vpop.f32.mrf.mxu0
    %v7380 = vadd.f32 %v7315, %v7379
    %7381 = vmatmul.f32.gmra.mxu0 %v6974
    %v7382 = vpop.f32.mrf.mxu0
    %v7383 = vadd.f32 %v7318, %v7382
    %7384 = vmatmul.f32.gmra.mxu0 %v6978
    %v7385 = vpop.f32.mrf.mxu0
    %v7386 = vadd.f32 %v7321, %v7385
    %7387 = vmatmul.f32.gmra.mxu0 %v6982
    %v7388 = vpop.f32.mrf.mxu0
    %v7389 = vadd.f32 %v7324, %v7388
    %7390 = vmatmul.f32.gmra.mxu0 %v6986
    %v7391 = vpop.f32.mrf.mxu0
    %v7392 = vadd.f32 %v7327, %v7391
    %7393 = vmatmul.f32.gmra.mxu0 %v6990
    %v7394 = vpop.f32.mrf.mxu0
    %v7395 = vadd.f32 %v7330, %v7394
    %7396 = vmatmul.f32.gmra.mxu0 %v6994
    %v7397 = vpop.f32.mrf.mxu0
    %v7398 = vadd.f32 %v7333, %v7397
    %7399 = vmatmul.f32.gmra.mxu0 %v6998
    %v7400 = vpop.f32.mrf.mxu0
    %v7401 = vadd.f32 %v7336, %v7400
    %7402 = vmatmul.f32.gmra.mxu0 %v7002
    %v7403 = vpop.f32.mrf.mxu0
    %v7404 = vadd.f32 %v7339, %v7403
    %7405 = vmatmul.f32.gmra.mxu0 %v7006
    %v7406 = vpop.f32.mrf.mxu0
    %v7407 = vadd.f32 %v7342, %v7406
    %7408 = vmatmul.f32.gmra.mxu0 %v7010
    %v7409 = vpop.f32.mrf.mxu0
    %v7410 = vadd.f32 %v7345, %v7409
    %7411 = vmatmul.f32.gmra.mxu0 %v7014
    %v7412 = vpop.f32.mrf.mxu0
    %v7413 = vadd.f32 %v7348, %v7412
    %7414 = vdwg.mxu0
    %7415 = vmatpush.msra.mxu0 %v7206
    %7416 = vmatpush.msra.mxu0 %v7202
    %7417 = vmatpush.msra.mxu0 %v7198
    %7418 = vmatpush.msra.mxu0 %v7194
    %7419 = vmatpush.msra.mxu0 %v7190
    %7420 = vmatpush.msra.mxu0 %v7186
    %7421 = vmatpush.msra.mxu0 %v7182
    %7422 = vmatpush.msra.mxu0 %v7178
    %7423 = vmatpush.msra.mxu0 %v7174
    %7424 = vmatpush.msra.mxu0 %v7170
    %7425 = vmatpush.msra.mxu0 %v7166
    %7426 = vmatpush.msra.mxu0 %v7162
    %7427 = vmatpush.msra.mxu0 %v7158
    %7428 = vmatpush.msra.mxu0 %v7154
    %7429 = vmatpush.msra.mxu0 %v7150
    %7430 = vmatpush.msra.mxu0 %v7146
    %7431 = vmatmul.f32.gmra.mxu0 %v6955
    %v7432 = vpop.f32.mrf.mxu0
    %v7433 = vadd.f32 %v7368, %v7432
    %7434 = vmatmul.f32.gmra.mxu0 %v6959
    %v7435 = vpop.f32.mrf.mxu0
    %v7436 = vadd.f32 %v7371, %v7435
    %7437 = vmatmul.f32.gmra.mxu0 %v6963
    %v7438 = vpop.f32.mrf.mxu0
    %v7439 = vadd.f32 %v7374, %v7438
    %7440 = vmatmul.f32.gmra.mxu0 %v6967
    %v7441 = vpop.f32.mrf.mxu0
    %v7442 = vadd.f32 %v7377, %v7441
    %7443 = vmatmul.f32.gmra.mxu0 %v6971
    %v7444 = vpop.f32.mrf.mxu0
    %v7445 = vadd.f32 %v7380, %v7444
    %7446 = vmatmul.f32.gmra.mxu0 %v6975
    %v7447 = vpop.f32.mrf.mxu0
    %v7448 = vadd.f32 %v7383, %v7447
    %7449 = vmatmul.f32.gmra.mxu0 %v6979
    %v7450 = vpop.f32.mrf.mxu0
    %v7451 = vadd.f32 %v7386, %v7450
    %7452 = vmatmul.f32.gmra.mxu0 %v6983
    %v7453 = vpop.f32.mrf.mxu0
    %v7454 = vadd.f32 %v7389, %v7453
    %7455 = vmatmul.f32.gmra.mxu0 %v6987
    %v7456 = vpop.f32.mrf.mxu0
    %v7457 = vadd.f32 %v7392, %v7456
    %7458 = vmatmul.f32.gmra.mxu0 %v6991
    %v7459 = vpop.f32.mrf.mxu0
    %v7460 = vadd.f32 %v7395, %v7459
    %7461 = vmatmul.f32.gmra.mxu0 %v6995
    %v7462 = vpop.f32.mrf.mxu0
    %v7463 = vadd.f32 %v7398, %v7462
    %7464 = vmatmul.f32.gmra.mxu0 %v6999
    %v7465 = vpop.f32.mrf.mxu0
    %v7466 = vadd.f32 %v7401, %v7465
    %7467 = vmatmul.f32.gmra.mxu0 %v7003
    %v7468 = vpop.f32.mrf.mxu0
    %v7469 = vadd.f32 %v7404, %v7468
    %7470 = vmatmul.f32.gmra.mxu0 %v7007
    %v7471 = vpop.f32.mrf.mxu0
    %v7472 = vadd.f32 %v7407, %v7471
    %7473 = vmatmul.f32.gmra.mxu0 %v7011
    %v7474 = vpop.f32.mrf.mxu0
    %v7475 = vadd.f32 %v7410, %v7474
    %7476 = vmatmul.f32.gmra.mxu0 %v7015
    %v7477 = vpop.f32.mrf.mxu0
    %v7478 = vadd.f32 %v7413, %v7477
    %7479 = vdwg.mxu0
    %7480 = vmatpush.msra.mxu0 %v7270
    %7481 = vmatpush.msra.mxu0 %v7266
    %7482 = vmatpush.msra.mxu0 %v7262
    %7483 = vmatpush.msra.mxu0 %v7258
    %7484 = vmatpush.msra.mxu0 %v7254
    %7485 = vmatpush.msra.mxu0 %v7250
    %7486 = vmatpush.msra.mxu0 %v7246
    %7487 = vmatpush.msra.mxu0 %v7242
    %7488 = vmatpush.msra.mxu0 %v7238
    %7489 = vmatpush.msra.mxu0 %v7234
    %7490 = vmatpush.msra.mxu0 %v7230
    %7491 = vmatpush.msra.mxu0 %v7226
    %7492 = vmatpush.msra.mxu0 %v7222
    %7493 = vmatpush.msra.mxu0 %v7218
    %7494 = vmatpush.msra.mxu0 %v7214
    %7495 = vmatpush.msra.mxu0 %v7210
    %7496 = vmatmul.f32.gmra.mxu0 %v6956
    %v7497 = vpop.f32.mrf.mxu0
    %v7498 = vadd.f32 %v7433, %v7497
    %7499 = vmatmul.f32.gmra.mxu0 %v6960
    %v7500 = vpop.f32.mrf.mxu0
    %v7501 = vadd.f32 %v7436, %v7500
    %7502 = vmatmul.f32.gmra.mxu0 %v6964
    %v7503 = vpop.f32.mrf.mxu0
    %v7504 = vadd.f32 %v7439, %v7503
    %7505 = vmatmul.f32.gmra.mxu0 %v6968
    %v7506 = vpop.f32.mrf.mxu0
    %v7507 = vadd.f32 %v7442, %v7506
    %7508 = vmatmul.f32.gmra.mxu0 %v6972
    %v7509 = vpop.f32.mrf.mxu0
    %v7510 = vadd.f32 %v7445, %v7509
    %7511 = vmatmul.f32.gmra.mxu0 %v6976
    %v7512 = vpop.f32.mrf.mxu0
    %v7513 = vadd.f32 %v7448, %v7512
    %7514 = vmatmul.f32.gmra.mxu0 %v6980
    %v7515 = vpop.f32.mrf.mxu0
    %v7516 = vadd.f32 %v7451, %v7515
    %7517 = vmatmul.f32.gmra.mxu0 %v6984
    %v7518 = vpop.f32.mrf.mxu0
    %v7519 = vadd.f32 %v7454, %v7518
    %7520 = vmatmul.f32.gmra.mxu0 %v6988
    %v7521 = vpop.f32.mrf.mxu0
    %v7522 = vadd.f32 %v7457, %v7521
    %7523 = vmatmul.f32.gmra.mxu0 %v6992
    %v7524 = vpop.f32.mrf.mxu0
    %v7525 = vadd.f32 %v7460, %v7524
    %7526 = vmatmul.f32.gmra.mxu0 %v6996
    %v7527 = vpop.f32.mrf.mxu0
    %v7528 = vadd.f32 %v7463, %v7527
    %7529 = vmatmul.f32.gmra.mxu0 %v7000
    %v7530 = vpop.f32.mrf.mxu0
    %v7531 = vadd.f32 %v7466, %v7530
    %7532 = vmatmul.f32.gmra.mxu0 %v7004
    %v7533 = vpop.f32.mrf.mxu0
    %v7534 = vadd.f32 %v7469, %v7533
    %7535 = vmatmul.f32.gmra.mxu0 %v7008
    %v7536 = vpop.f32.mrf.mxu0
    %v7537 = vadd.f32 %v7472, %v7536
    %7538 = vmatmul.f32.gmra.mxu0 %v7012
    %v7539 = vpop.f32.mrf.mxu0
    %v7540 = vadd.f32 %v7475, %v7539
    %7541 = vmatmul.f32.gmra.mxu0 %v7016
    %v7542 = vpop.f32.mrf.mxu0
    %v7543 = vadd.f32 %v7478, %v7542
    %7544 = vdwg.mxu0
    %7545 = vmatpush.msra.mxu0 %v7079
    %7546 = vmatpush.msra.mxu0 %v7075
    %7547 = vmatpush.msra.mxu0 %v7071
    %7548 = vmatpush.msra.mxu0 %v7067
    %7549 = vmatpush.msra.mxu0 %v7063
    %7550 = vmatpush.msra.mxu0 %v7059
    %7551 = vmatpush.msra.mxu0 %v7055
    %7552 = vmatpush.msra.mxu0 %v7051
    %7553 = vmatpush.msra.mxu0 %v7047
    %7554 = vmatpush.msra.mxu0 %v7043
    %7555 = vmatpush.msra.mxu0 %v7039
    %7556 = vmatpush.msra.mxu0 %v7035
    %7557 = vmatpush.msra.mxu0 %v7031
    %7558 = vmatpush.msra.mxu0 %v7027
    %7559 = vmatpush.msra.mxu0 %v7023
    %7560 = vmatpush.msra.mxu0 %v7019
    %7561 = vmatmul.f32.gmra.mxu0 %v6953
    %v7562 = vpop.f32.mrf.mxu0
    %v7563 = vadd.f32 %v7278, %v7562
    %7564 = vmatmul.f32.gmra.mxu0 %v6957
    %v7565 = vpop.f32.mrf.mxu0
    %v7566 = vadd.f32 %v7278, %v7565
    %7567 = vmatmul.f32.gmra.mxu0 %v6961
    %v7568 = vpop.f32.mrf.mxu0
    %v7569 = vadd.f32 %v7278, %v7568
    %7570 = vmatmul.f32.gmra.mxu0 %v6965
    %v7571 = vpop.f32.mrf.mxu0
    %v7572 = vadd.f32 %v7278, %v7571
    %7573 = vmatmul.f32.gmra.mxu0 %v6969
    %v7574 = vpop.f32.mrf.mxu0
    %v7575 = vadd.f32 %v7278, %v7574
    %7576 = vmatmul.f32.gmra.mxu0 %v6973
    %v7577 = vpop.f32.mrf.mxu0
    %v7578 = vadd.f32 %v7278, %v7577
    %7579 = vmatmul.f32.gmra.mxu0 %v6977
    %v7580 = vpop.f32.mrf.mxu0
    %v7581 = vadd.f32 %v7278, %v7580
    %7582 = vmatmul.f32.gmra.mxu0 %v6981
    %v7583 = vpop.f32.mrf.mxu0
    %v7584 = vadd.f32 %v7278, %v7583
    %7585 = vmatmul.f32.gmra.mxu0 %v6985
    %v7586 = vpop.f32.mrf.mxu0
    %v7587 = vadd.f32 %v7278, %v7586
    %7588 = vmatmul.f32.gmra.mxu0 %v6989
    %v7589 = vpop.f32.mrf.mxu0
    %v7590 = vadd.f32 %v7278, %v7589
    %7591 = vmatmul.f32.gmra.mxu0 %v6993
    %v7592 = vpop.f32.mrf.mxu0
    %v7593 = vadd.f32 %v7278, %v7592
    %7594 = vmatmul.f32.gmra.mxu0 %v6997
    %v7595 = vpop.f32.mrf.mxu0
    %v7596 = vadd.f32 %v7278, %v7595
    %7597 = vmatmul.f32.gmra.mxu0 %v7001
    %v7598 = vpop.f32.mrf.mxu0
    %v7599 = vadd.f32 %v7278, %v7598
    %7600 = vmatmul.f32.gmra.mxu0 %v7005
    %v7601 = vpop.f32.mrf.mxu0
    %v7602 = vadd.f32 %v7278, %v7601
    %7603 = vmatmul.f32.gmra.mxu0 %v7009
    %v7604 = vpop.f32.mrf.mxu0
    %v7605 = vadd.f32 %v7278, %v7604
    %7606 = vmatmul.f32.gmra.mxu0 %v7013
    %v7607 = vpop.f32.mrf.mxu0
    %v7608 = vadd.f32 %v7278, %v7607
    %7609 = vdwg.mxu0
    %7610 = vmatpush.msra.mxu0 %v7143
    %7611 = vmatpush.msra.mxu0 %v7139
    %7612 = vmatpush.msra.mxu0 %v7135
    %7613 = vmatpush.msra.mxu0 %v7131
    %7614 = vmatpush.msra.mxu0 %v7127
    %7615 = vmatpush.msra.mxu0 %v7123
    %7616 = vmatpush.msra.mxu0 %v7119
    %7617 = vmatpush.msra.mxu0 %v7115
    %7618 = vmatpush.msra.mxu0 %v7111
    %7619 = vmatpush.msra.mxu0 %v7107
    %7620 = vmatpush.msra.mxu0 %v7103
    %7621 = vmatpush.msra.mxu0 %v7099
    %7622 = vmatpush.msra.mxu0 %v7095
    %7623 = vmatpush.msra.mxu0 %v7091
    %7624 = vmatpush.msra.mxu0 %v7087
    %7625 = vmatpush.msra.mxu0 %v7083
    %7626 = vmatmul.f32.gmra.mxu0 %v6954
    %v7627 = vpop.f32.mrf.mxu0
    %v7628 = vadd.f32 %v7563, %v7627
    %7629 = vmatmul.f32.gmra.mxu0 %v6958
    %v7630 = vpop.f32.mrf.mxu0
    %v7631 = vadd.f32 %v7566, %v7630
    %7632 = vmatmul.f32.gmra.mxu0 %v6962
    %v7633 = vpop.f32.mrf.mxu0
    %v7634 = vadd.f32 %v7569, %v7633
    %7635 = vmatmul.f32.gmra.mxu0 %v6966
    %v7636 = vpop.f32.mrf.mxu0
    %v7637 = vadd.f32 %v7572, %v7636
    %7638 = vmatmul.f32.gmra.mxu0 %v6970
    %v7639 = vpop.f32.mrf.mxu0
    %v7640 = vadd.f32 %v7575, %v7639
    %7641 = vmatmul.f32.gmra.mxu0 %v6974
    %v7642 = vpop.f32.mrf.mxu0
    %v7643 = vadd.f32 %v7578, %v7642
    %7644 = vmatmul.f32.gmra.mxu0 %v6978
    %v7645 = vpop.f32.mrf.mxu0
    %v7646 = vadd.f32 %v7581, %v7645
    %7647 = vmatmul.f32.gmra.mxu0 %v6982
    %v7648 = vpop.f32.mrf.mxu0
    %v7649 = vadd.f32 %v7584, %v7648
    %7650 = vmatmul.f32.gmra.mxu0 %v6986
    %v7651 = vpop.f32.mrf.mxu0
    %v7652 = vadd.f32 %v7587, %v7651
    %7653 = vmatmul.f32.gmra.mxu0 %v6990
    %v7654 = vpop.f32.mrf.mxu0
    %v7655 = vadd.f32 %v7590, %v7654
    %7656 = vmatmul.f32.gmra.mxu0 %v6994
    %v7657 = vpop.f32.mrf.mxu0
    %v7658 = vadd.f32 %v7593, %v7657
    %7659 = vmatmul.f32.gmra.mxu0 %v6998
    %v7660 = vpop.f32.mrf.mxu0
    %v7661 = vadd.f32 %v7596, %v7660
    %7662 = vmatmul.f32.gmra.mxu0 %v7002
    %v7663 = vpop.f32.mrf.mxu0
    %v7664 = vadd.f32 %v7599, %v7663
    %7665 = vmatmul.f32.gmra.mxu0 %v7006
    %v7666 = vpop.f32.mrf.mxu0
    %v7667 = vadd.f32 %v7602, %v7666
    %7668 = vmatmul.f32.gmra.mxu0 %v7010
    %v7669 = vpop.f32.mrf.mxu0
    %v7670 = vadd.f32 %v7605, %v7669
    %7671 = vmatmul.f32.gmra.mxu0 %v7014
    %v7672 = vpop.f32.mrf.mxu0
    %v7673 = vadd.f32 %v7608, %v7672
    %7674 = vdwg.mxu0
    %7675 = vmatpush.msra.mxu0 %v7207
    %7676 = vmatpush.msra.mxu0 %v7203
    %7677 = vmatpush.msra.mxu0 %v7199
    %7678 = vmatpush.msra.mxu0 %v7195
    %7679 = vmatpush.msra.mxu0 %v7191
    %7680 = vmatpush.msra.mxu0 %v7187
    %7681 = vmatpush.msra.mxu0 %v7183
    %7682 = vmatpush.msra.mxu0 %v7179
    %7683 = vmatpush.msra.mxu0 %v7175
    %7684 = vmatpush.msra.mxu0 %v7171
    %7685 = vmatpush.msra.mxu0 %v7167
    %7686 = vmatpush.msra.mxu0 %v7163
    %7687 = vmatpush.msra.mxu0 %v7159
    %7688 = vmatpush.msra.mxu0 %v7155
    %7689 = vmatpush.msra.mxu0 %v7151
    %7690 = vmatpush.msra.mxu0 %v7147
    %7691 = vmatmul.f32.gmra.mxu0 %v6955
    %v7692 = vpop.f32.mrf.mxu0
    %v7693 = vadd.f32 %v7628, %v7692
    %7694 = vmatmul.f32.gmra.mxu0 %v6959
    %v7695 = vpop.f32.mrf.mxu0
    %v7696 = vadd.f32 %v7631, %v7695
    %7697 = vmatmul.f32.gmra.mxu0 %v6963
    %v7698 = vpop.f32.mrf.mxu0
    %v7699 = vadd.f32 %v7634, %v7698
    %7700 = vmatmul.f32.gmra.mxu0 %v6967
    %v7701 = vpop.f32.mrf.mxu0
    %v7702 = vadd.f32 %v7637, %v7701
    %7703 = vmatmul.f32.gmra.mxu0 %v6971
    %v7704 = vpop.f32.mrf.mxu0
    %v7705 = vadd.f32 %v7640, %v7704
    %7706 = vmatmul.f32.gmra.mxu0 %v6975
    %v7707 = vpop.f32.mrf.mxu0
    %v7708 = vadd.f32 %v7643, %v7707
    %7709 = vmatmul.f32.gmra.mxu0 %v6979
    %v7710 = vpop.f32.mrf.mxu0
    %v7711 = vadd.f32 %v7646, %v7710
    %7712 = vmatmul.f32.gmra.mxu0 %v6983
    %v7713 = vpop.f32.mrf.mxu0
    %v7714 = vadd.f32 %v7649, %v7713
    %7715 = vmatmul.f32.gmra.mxu0 %v6987
    %v7716 = vpop.f32.mrf.mxu0
    %v7717 = vadd.f32 %v7652, %v7716
    %7718 = vmatmul.f32.gmra.mxu0 %v6991
    %v7719 = vpop.f32.mrf.mxu0
    %v7720 = vadd.f32 %v7655, %v7719
    %7721 = vmatmul.f32.gmra.mxu0 %v6995
    %v7722 = vpop.f32.mrf.mxu0
    %v7723 = vadd.f32 %v7658, %v7722
    %7724 = vmatmul.f32.gmra.mxu0 %v6999
    %v7725 = vpop.f32.mrf.mxu0
    %v7726 = vadd.f32 %v7661, %v7725
    %7727 = vmatmul.f32.gmra.mxu0 %v7003
    %v7728 = vpop.f32.mrf.mxu0
    %v7729 = vadd.f32 %v7664, %v7728
    %7730 = vmatmul.f32.gmra.mxu0 %v7007
    %v7731 = vpop.f32.mrf.mxu0
    %v7732 = vadd.f32 %v7667, %v7731
    %7733 = vmatmul.f32.gmra.mxu0 %v7011
    %v7734 = vpop.f32.mrf.mxu0
    %v7735 = vadd.f32 %v7670, %v7734
    %7736 = vmatmul.f32.gmra.mxu0 %v7015
    %v7737 = vpop.f32.mrf.mxu0
    %v7738 = vadd.f32 %v7673, %v7737
    %7739 = vdwg.mxu0
    %7740 = vmatpush.msra.mxu0 %v7271
    %7741 = vmatpush.msra.mxu0 %v7267
    %7742 = vmatpush.msra.mxu0 %v7263
    %7743 = vmatpush.msra.mxu0 %v7259
    %7744 = vmatpush.msra.mxu0 %v7255
    %7745 = vmatpush.msra.mxu0 %v7251
    %7746 = vmatpush.msra.mxu0 %v7247
    %7747 = vmatpush.msra.mxu0 %v7243
    %7748 = vmatpush.msra.mxu0 %v7239
    %7749 = vmatpush.msra.mxu0 %v7235
    %7750 = vmatpush.msra.mxu0 %v7231
    %7751 = vmatpush.msra.mxu0 %v7227
    %7752 = vmatpush.msra.mxu0 %v7223
    %7753 = vmatpush.msra.mxu0 %v7219
    %7754 = vmatpush.msra.mxu0 %v7215
    %7755 = vmatpush.msra.mxu0 %v7211
    %7756 = vmatmul.f32.gmra.mxu0 %v6956
    %v7757 = vpop.f32.mrf.mxu0
    %v7758 = vadd.f32 %v7693, %v7757
    %7759 = vmatmul.f32.gmra.mxu0 %v6960
    %v7760 = vpop.f32.mrf.mxu0
    %v7761 = vadd.f32 %v7696, %v7760
    %7762 = vmatmul.f32.gmra.mxu0 %v6964
    %v7763 = vpop.f32.mrf.mxu0
    %v7764 = vadd.f32 %v7699, %v7763
    %7765 = vmatmul.f32.gmra.mxu0 %v6968
    %v7766 = vpop.f32.mrf.mxu0
    %v7767 = vadd.f32 %v7702, %v7766
    %7768 = vmatmul.f32.gmra.mxu0 %v6972
    %v7769 = vpop.f32.mrf.mxu0
    %v7770 = vadd.f32 %v7705, %v7769
    %7771 = vmatmul.f32.gmra.mxu0 %v6976
    %v7772 = vpop.f32.mrf.mxu0
    %v7773 = vadd.f32 %v7708, %v7772
    %7774 = vmatmul.f32.gmra.mxu0 %v6980
    %v7775 = vpop.f32.mrf.mxu0
    %v7776 = vadd.f32 %v7711, %v7775
    %7777 = vmatmul.f32.gmra.mxu0 %v6984
    %v7778 = vpop.f32.mrf.mxu0
    %v7779 = vadd.f32 %v7714, %v7778
    %7780 = vmatmul.f32.gmra.mxu0 %v6988
    %v7781 = vpop.f32.mrf.mxu0
    %v7782 = vadd.f32 %v7717, %v7781
    %7783 = vmatmul.f32.gmra.mxu0 %v6992
    %v7784 = vpop.f32.mrf.mxu0
    %v7785 = vadd.f32 %v7720, %v7784
    %7786 = vmatmul.f32.gmra.mxu0 %v6996
    %v7787 = vpop.f32.mrf.mxu0
    %v7788 = vadd.f32 %v7723, %v7787
    %7789 = vmatmul.f32.gmra.mxu0 %v7000
    %v7790 = vpop.f32.mrf.mxu0
    %v7791 = vadd.f32 %v7726, %v7790
    %7792 = vmatmul.f32.gmra.mxu0 %v7004
    %v7793 = vpop.f32.mrf.mxu0
    %v7794 = vadd.f32 %v7729, %v7793
    %7795 = vmatmul.f32.gmra.mxu0 %v7008
    %v7796 = vpop.f32.mrf.mxu0
    %v7797 = vadd.f32 %v7732, %v7796
    %7798 = vmatmul.f32.gmra.mxu0 %v7012
    %v7799 = vpop.f32.mrf.mxu0
    %v7800 = vadd.f32 %v7735, %v7799
    %7801 = vmatmul.f32.gmra.mxu0 %v7016
    %v7802 = vpop.f32.mrf.mxu0
    %v7803 = vadd.f32 %v7738, %v7802
    %7804 = vdwg.mxu0
    %7805 = vmatpush.msra.mxu0 %v7080
    %7806 = vmatpush.msra.mxu0 %v7076
    %7807 = vmatpush.msra.mxu0 %v7072
    %7808 = vmatpush.msra.mxu0 %v7068
    %7809 = vmatpush.msra.mxu0 %v7064
    %7810 = vmatpush.msra.mxu0 %v7060
    %7811 = vmatpush.msra.mxu0 %v7056
    %7812 = vmatpush.msra.mxu0 %v7052
    %7813 = vmatpush.msra.mxu0 %v7048
    %7814 = vmatpush.msra.mxu0 %v7044
    %7815 = vmatpush.msra.mxu0 %v7040
    %7816 = vmatpush.msra.mxu0 %v7036
    %7817 = vmatpush.msra.mxu0 %v7032
    %7818 = vmatpush.msra.mxu0 %v7028
    %7819 = vmatpush.msra.mxu0 %v7024
    %7820 = vmatpush.msra.mxu0 %v7020
    %7821 = vmatmul.f32.gmra.mxu0 %v6953
    %v7822 = vpop.f32.mrf.mxu0
    %v7823 = vadd.f32 %v7279, %v7822
    %7824 = vmatmul.f32.gmra.mxu0 %v6957
    %v7825 = vpop.f32.mrf.mxu0
    %v7826 = vadd.f32 %v7279, %v7825
    %7827 = vmatmul.f32.gmra.mxu0 %v6961
    %v7828 = vpop.f32.mrf.mxu0
    %v7829 = vadd.f32 %v7279, %v7828
    %7830 = vmatmul.f32.gmra.mxu0 %v6965
    %v7831 = vpop.f32.mrf.mxu0
    %v7832 = vadd.f32 %v7279, %v7831
    %7833 = vmatmul.f32.gmra.mxu0 %v6969
    %v7834 = vpop.f32.mrf.mxu0
    %v7835 = vadd.f32 %v7279, %v7834
    %7836 = vmatmul.f32.gmra.mxu0 %v6973
    %v7837 = vpop.f32.mrf.mxu0
    %v7838 = vadd.f32 %v7279, %v7837
    %7839 = vmatmul.f32.gmra.mxu0 %v6977
    %v7840 = vpop.f32.mrf.mxu0
    %v7841 = vadd.f32 %v7279, %v7840
    %7842 = vmatmul.f32.gmra.mxu0 %v6981
    %v7843 = vpop.f32.mrf.mxu0
    %v7844 = vadd.f32 %v7279, %v7843
    %7845 = vmatmul.f32.gmra.mxu0 %v6985
    %v7846 = vpop.f32.mrf.mxu0
    %v7847 = vadd.f32 %v7279, %v7846
    %7848 = vmatmul.f32.gmra.mxu0 %v6989
    %v7849 = vpop.f32.mrf.mxu0
    %v7850 = vadd.f32 %v7279, %v7849
    %7851 = vmatmul.f32.gmra.mxu0 %v6993
    %v7852 = vpop.f32.mrf.mxu0
    %v7853 = vadd.f32 %v7279, %v7852
    %7854 = vmatmul.f32.gmra.mxu0 %v6997
    %v7855 = vpop.f32.mrf.mxu0
    %v7856 = vadd.f32 %v7279, %v7855
    %7857 = vmatmul.f32.gmra.mxu0 %v7001
    %v7858 = vpop.f32.mrf.mxu0
    %v7859 = vadd.f32 %v7279, %v7858
    %7860 = vmatmul.f32.gmra.mxu0 %v7005
    %v7861 = vpop.f32.mrf.mxu0
    %v7862 = vadd.f32 %v7279, %v7861
    %7863 = vmatmul.f32.gmra.mxu0 %v7009
    %v7864 = vpop.f32.mrf.mxu0
    %v7865 = vadd.f32 %v7279, %v7864
    %7866 = vmatmul.f32.gmra.mxu0 %v7013
    %v7867 = vpop.f32.mrf.mxu0
    %v7868 = vadd.f32 %v7279, %v7867
    %7869 = vdwg.mxu0
    %7870 = vmatpush.msra.mxu0 %v7144
    %7871 = vmatpush.msra.mxu0 %v7140
    %7872 = vmatpush.msra.mxu0 %v7136
    %7873 = vmatpush.msra.mxu0 %v7132
    %7874 = vmatpush.msra.mxu0 %v7128
    %7875 = vmatpush.msra.mxu0 %v7124
    %7876 = vmatpush.msra.mxu0 %v7120
    %7877 = vmatpush.msra.mxu0 %v7116
    %7878 = vmatpush.msra.mxu0 %v7112
    %7879 = vmatpush.msra.mxu0 %v7108
    %7880 = vmatpush.msra.mxu0 %v7104
    %7881 = vmatpush.msra.mxu0 %v7100
    %7882 = vmatpush.msra.mxu0 %v7096
    %7883 = vmatpush.msra.mxu0 %v7092
    %7884 = vmatpush.msra.mxu0 %v7088
    %7885 = vmatpush.msra.mxu0 %v7084
    %7886 = vmatmul.f32.gmra.mxu0 %v6954
    %v7887 = vpop.f32.mrf.mxu0
    %v7888 = vadd.f32 %v7823, %v7887
    %7889 = vmatmul.f32.gmra.mxu0 %v6958
    %v7890 = vpop.f32.mrf.mxu0
    %v7891 = vadd.f32 %v7826, %v7890
    %7892 = vmatmul.f32.gmra.mxu0 %v6962
    %v7893 = vpop.f32.mrf.mxu0
    %v7894 = vadd.f32 %v7829, %v7893
    %7895 = vmatmul.f32.gmra.mxu0 %v6966
    %v7896 = vpop.f32.mrf.mxu0
    %v7897 = vadd.f32 %v7832, %v7896
    %7898 = vmatmul.f32.gmra.mxu0 %v6970
    %v7899 = vpop.f32.mrf.mxu0
    %v7900 = vadd.f32 %v7835, %v7899
    %7901 = vmatmul.f32.gmra.mxu0 %v6974
    %v7902 = vpop.f32.mrf.mxu0
    %v7903 = vadd.f32 %v7838, %v7902
    %7904 = vmatmul.f32.gmra.mxu0 %v6978
    %v7905 = vpop.f32.mrf.mxu0
    %v7906 = vadd.f32 %v7841, %v7905
    %7907 = vmatmul.f32.gmra.mxu0 %v6982
    %v7908 = vpop.f32.mrf.mxu0
    %v7909 = vadd.f32 %v7844, %v7908
    %7910 = vmatmul.f32.gmra.mxu0 %v6986
    %v7911 = vpop.f32.mrf.mxu0
    %v7912 = vadd.f32 %v7847, %v7911
    %7913 = vmatmul.f32.gmra.mxu0 %v6990
    %v7914 = vpop.f32.mrf.mxu0
    %v7915 = vadd.f32 %v7850, %v7914
    %7916 = vmatmul.f32.gmra.mxu0 %v6994
    %v7917 = vpop.f32.mrf.mxu0
    %v7918 = vadd.f32 %v7853, %v7917
    %7919 = vmatmul.f32.gmra.mxu0 %v6998
    %v7920 = vpop.f32.mrf.mxu0
    %v7921 = vadd.f32 %v7856, %v7920
    %7922 = vmatmul.f32.gmra.mxu0 %v7002
    %v7923 = vpop.f32.mrf.mxu0
    %v7924 = vadd.f32 %v7859, %v7923
    %7925 = vmatmul.f32.gmra.mxu0 %v7006
    %v7926 = vpop.f32.mrf.mxu0
    %v7927 = vadd.f32 %v7862, %v7926
    %7928 = vmatmul.f32.gmra.mxu0 %v7010
    %v7929 = vpop.f32.mrf.mxu0
    %v7930 = vadd.f32 %v7865, %v7929
    %7931 = vmatmul.f32.gmra.mxu0 %v7014
    %v7932 = vpop.f32.mrf.mxu0
    %v7933 = vadd.f32 %v7868, %v7932
    %7934 = vdwg.mxu0
    %7935 = vmatpush.msra.mxu0 %v7208
    %7936 = vmatpush.msra.mxu0 %v7204
    %7937 = vmatpush.msra.mxu0 %v7200
    %7938 = vmatpush.msra.mxu0 %v7196
    %7939 = vmatpush.msra.mxu0 %v7192
    %7940 = vmatpush.msra.mxu0 %v7188
    %7941 = vmatpush.msra.mxu0 %v7184
    %7942 = vmatpush.msra.mxu0 %v7180
    %7943 = vmatpush.msra.mxu0 %v7176
    %7944 = vmatpush.msra.mxu0 %v7172
    %7945 = vmatpush.msra.mxu0 %v7168
    %7946 = vmatpush.msra.mxu0 %v7164
    %7947 = vmatpush.msra.mxu0 %v7160
    %7948 = vmatpush.msra.mxu0 %v7156
    %7949 = vmatpush.msra.mxu0 %v7152
    %7950 = vmatpush.msra.mxu0 %v7148
    %7951 = vmatmul.f32.gmra.mxu0 %v6955
    %v7952 = vpop.f32.mrf.mxu0
    %v7953 = vadd.f32 %v7888, %v7952
    %7954 = vmatmul.f32.gmra.mxu0 %v6959
    %v7955 = vpop.f32.mrf.mxu0
    %v7956 = vadd.f32 %v7891, %v7955
    %7957 = vmatmul.f32.gmra.mxu0 %v6963
    %v7958 = vpop.f32.mrf.mxu0
    %v7959 = vadd.f32 %v7894, %v7958
    %7960 = vmatmul.f32.gmra.mxu0 %v6967
    %v7961 = vpop.f32.mrf.mxu0
    %v7962 = vadd.f32 %v7897, %v7961
    %7963 = vmatmul.f32.gmra.mxu0 %v6971
    %v7964 = vpop.f32.mrf.mxu0
    %v7965 = vadd.f32 %v7900, %v7964
    %7966 = vmatmul.f32.gmra.mxu0 %v6975
    %v7967 = vpop.f32.mrf.mxu0
    %v7968 = vadd.f32 %v7903, %v7967
    %7969 = vmatmul.f32.gmra.mxu0 %v6979
    %v7970 = vpop.f32.mrf.mxu0
    %v7971 = vadd.f32 %v7906, %v7970
    %7972 = vmatmul.f32.gmra.mxu0 %v6983
    %v7973 = vpop.f32.mrf.mxu0
    %v7974 = vadd.f32 %v7909, %v7973
    %7975 = vmatmul.f32.gmra.mxu0 %v6987
    %v7976 = vpop.f32.mrf.mxu0
    %v7977 = vadd.f32 %v7912, %v7976
    %7978 = vmatmul.f32.gmra.mxu0 %v6991
    %v7979 = vpop.f32.mrf.mxu0
    %v7980 = vadd.f32 %v7915, %v7979
    %7981 = vmatmul.f32.gmra.mxu0 %v6995
    %v7982 = vpop.f32.mrf.mxu0
    %v7983 = vadd.f32 %v7918, %v7982
    %7984 = vmatmul.f32.gmra.mxu0 %v6999
    %v7985 = vpop.f32.mrf.mxu0
    %v7986 = vadd.f32 %v7921, %v7985
    %7987 = vmatmul.f32.gmra.mxu0 %v7003
    %v7988 = vpop.f32.mrf.mxu0
    %v7989 = vadd.f32 %v7924, %v7988
    %7990 = vmatmul.f32.gmra.mxu0 %v7007
    %v7991 = vpop.f32.mrf.mxu0
    %v7992 = vadd.f32 %v7927, %v7991
    %7993 = vmatmul.f32.gmra.mxu0 %v7011
    %v7994 = vpop.f32.mrf.mxu0
    %v7995 = vadd.f32 %v7930, %v7994
    %7996 = vmatmul.f32.gmra.mxu0 %v7015
    %v7997 = vpop.f32.mrf.mxu0
    %v7998 = vadd.f32 %v7933, %v7997
    %7999 = vdwg.mxu0
    %8000 = vmatpush.msra.mxu0 %v7272
    %8001 = vmatpush.msra.mxu0 %v7268
    %8002 = vmatpush.msra.mxu0 %v7264
    %8003 = vmatpush.msra.mxu0 %v7260
    %8004 = vmatpush.msra.mxu0 %v7256
    %8005 = vmatpush.msra.mxu0 %v7252
    %8006 = vmatpush.msra.mxu0 %v7248
    %8007 = vmatpush.msra.mxu0 %v7244
    %8008 = vmatpush.msra.mxu0 %v7240
    %8009 = vmatpush.msra.mxu0 %v7236
    %8010 = vmatpush.msra.mxu0 %v7232
    %8011 = vmatpush.msra.mxu0 %v7228
    %8012 = vmatpush.msra.mxu0 %v7224
    %8013 = vmatpush.msra.mxu0 %v7220
    %8014 = vmatpush.msra.mxu0 %v7216
    %8015 = vmatpush.msra.mxu0 %v7212
    %8016 = vmatmul.f32.gmra.mxu0 %v6956
    %v8017 = vpop.f32.mrf.mxu0
    %v8018 = vadd.f32 %v7953, %v8017
    %8019 = vmatmul.f32.gmra.mxu0 %v6960
    %v8020 = vpop.f32.mrf.mxu0
    %v8021 = vadd.f32 %v7956, %v8020
    %8022 = vmatmul.f32.gmra.mxu0 %v6964
    %v8023 = vpop.f32.mrf.mxu0
    %v8024 = vadd.f32 %v7959, %v8023
    %8025 = vmatmul.f32.gmra.mxu0 %v6968
    %v8026 = vpop.f32.mrf.mxu0
    %v8027 = vadd.f32 %v7962, %v8026
    %8028 = vmatmul.f32.gmra.mxu0 %v6972
    %v8029 = vpop.f32.mrf.mxu0
    %v8030 = vadd.f32 %v7965, %v8029
    %8031 = vmatmul.f32.gmra.mxu0 %v6976
    %v8032 = vpop.f32.mrf.mxu0
    %v8033 = vadd.f32 %v7968, %v8032
    %8034 = vmatmul.f32.gmra.mxu0 %v6980
    %v8035 = vpop.f32.mrf.mxu0
    %v8036 = vadd.f32 %v7971, %v8035
    %8037 = vmatmul.f32.gmra.mxu0 %v6984
    %v8038 = vpop.f32.mrf.mxu0
    %v8039 = vadd.f32 %v7974, %v8038
    %8040 = vmatmul.f32.gmra.mxu0 %v6988
    %v8041 = vpop.f32.mrf.mxu0
    %v8042 = vadd.f32 %v7977, %v8041
    %8043 = vmatmul.f32.gmra.mxu0 %v6992
    %v8044 = vpop.f32.mrf.mxu0
    %v8045 = vadd.f32 %v7980, %v8044
    %8046 = vmatmul.f32.gmra.mxu0 %v6996
    %v8047 = vpop.f32.mrf.mxu0
    %v8048 = vadd.f32 %v7983, %v8047
    %8049 = vmatmul.f32.gmra.mxu0 %v7000
    %v8050 = vpop.f32.mrf.mxu0
    %v8051 = vadd.f32 %v7986, %v8050
    %8052 = vmatmul.f32.gmra.mxu0 %v7004
    %v8053 = vpop.f32.mrf.mxu0
    %v8054 = vadd.f32 %v7989, %v8053
    %8055 = vmatmul.f32.gmra.mxu0 %v7008
    %v8056 = vpop.f32.mrf.mxu0
    %v8057 = vadd.f32 %v7992, %v8056
    %8058 = vmatmul.f32.gmra.mxu0 %v7012
    %v8059 = vpop.f32.mrf.mxu0
    %v8060 = vadd.f32 %v7995, %v8059
    %8061 = vmatmul.f32.gmra.mxu0 %v7016
    %v8062 = vpop.f32.mrf.mxu0
    %v8063 = vadd.f32 %v7998, %v8062
    %8064 = vdwg.mxu0
    %8065 = vmatpush.msra.mxu0 %v7081
    %8066 = vmatpush.msra.mxu0 %v7077
    %8067 = vmatpush.msra.mxu0 %v7073
    %8068 = vmatpush.msra.mxu0 %v7069
    %8069 = vmatpush.msra.mxu0 %v7065
    %8070 = vmatpush.msra.mxu0 %v7061
    %8071 = vmatpush.msra.mxu0 %v7057
    %8072 = vmatpush.msra.mxu0 %v7053
    %8073 = vmatpush.msra.mxu0 %v7049
    %8074 = vmatpush.msra.mxu0 %v7045
    %8075 = vmatpush.msra.mxu0 %v7041
    %8076 = vmatpush.msra.mxu0 %v7037
    %8077 = vmatpush.msra.mxu0 %v7033
    %8078 = vmatpush.msra.mxu0 %v7029
    %8079 = vmatpush.msra.mxu0 %v7025
    %8080 = vmatpush.msra.mxu0 %v7021
    %8081 = vmatmul.f32.gmra.mxu0 %v6953
    %v8082 = vpop.f32.mrf.mxu0
    %v8083 = vadd.f32 %v7280, %v8082
    %8084 = vmatmul.f32.gmra.mxu0 %v6957
    %v8085 = vpop.f32.mrf.mxu0
    %v8086 = vadd.f32 %v7280, %v8085
    %8087 = vmatmul.f32.gmra.mxu0 %v6961
    %v8088 = vpop.f32.mrf.mxu0
    %v8089 = vadd.f32 %v7280, %v8088
    %8090 = vmatmul.f32.gmra.mxu0 %v6965
    %v8091 = vpop.f32.mrf.mxu0
    %v8092 = vadd.f32 %v7280, %v8091
    %8093 = vmatmul.f32.gmra.mxu0 %v6969
    %v8094 = vpop.f32.mrf.mxu0
    %v8095 = vadd.f32 %v7280, %v8094
    %8096 = vmatmul.f32.gmra.mxu0 %v6973
    %v8097 = vpop.f32.mrf.mxu0
    %v8098 = vadd.f32 %v7280, %v8097
    %8099 = vmatmul.f32.gmra.mxu0 %v6977
    %v8100 = vpop.f32.mrf.mxu0
    %v8101 = vadd.f32 %v7280, %v8100
    %8102 = vmatmul.f32.gmra.mxu0 %v6981
    %v8103 = vpop.f32.mrf.mxu0
    %v8104 = vadd.f32 %v7280, %v8103
    %8105 = vmatmul.f32.gmra.mxu0 %v6985
    %v8106 = vpop.f32.mrf.mxu0
    %v8107 = vadd.f32 %v7280, %v8106
    %8108 = vmatmul.f32.gmra.mxu0 %v6989
    %v8109 = vpop.f32.mrf.mxu0
    %v8110 = vadd.f32 %v7280, %v8109
    %8111 = vmatmul.f32.gmra.mxu0 %v6993
    %v8112 = vpop.f32.mrf.mxu0
    %v8113 = vadd.f32 %v7280, %v8112
    %8114 = vmatmul.f32.gmra.mxu0 %v6997
    %v8115 = vpop.f32.mrf.mxu0
    %v8116 = vadd.f32 %v7280, %v8115
    %8117 = vmatmul.f32.gmra.mxu0 %v7001
    %v8118 = vpop.f32.mrf.mxu0
    %v8119 = vadd.f32 %v7280, %v8118
    %8120 = vmatmul.f32.gmra.mxu0 %v7005
    %v8121 = vpop.f32.mrf.mxu0
    %v8122 = vadd.f32 %v7280, %v8121
    %8123 = vmatmul.f32.gmra.mxu0 %v7009
    %v8124 = vpop.f32.mrf.mxu0
    %v8125 = vadd.f32 %v7280, %v8124
    %8126 = vmatmul.f32.gmra.mxu0 %v7013
    %v8127 = vpop.f32.mrf.mxu0
    %v8128 = vadd.f32 %v7280, %v8127
    %8129 = vdwg.mxu0
    %8130 = vmatpush.msra.mxu0 %v7145
    %8131 = vmatpush.msra.mxu0 %v7141
    %8132 = vmatpush.msra.mxu0 %v7137
    %8133 = vmatpush.msra.mxu0 %v7133
    %8134 = vmatpush.msra.mxu0 %v7129
    %8135 = vmatpush.msra.mxu0 %v7125
    %8136 = vmatpush.msra.mxu0 %v7121
    %8137 = vmatpush.msra.mxu0 %v7117
    %8138 = vmatpush.msra.mxu0 %v7113
    %8139 = vmatpush.msra.mxu0 %v7109
    %8140 = vmatpush.msra.mxu0 %v7105
    %8141 = vmatpush.msra.mxu0 %v7101
    %8142 = vmatpush.msra.mxu0 %v7097
    %8143 = vmatpush.msra.mxu0 %v7093
    %8144 = vmatpush.msra.mxu0 %v7089
    %8145 = vmatpush.msra.mxu0 %v7085
    %8146 = vmatmul.f32.gmra.mxu0 %v6954
    %v8147 = vpop.f32.mrf.mxu0
    %v8148 = vadd.f32 %v8083, %v8147
    %8149 = vmatmul.f32.gmra.mxu0 %v6958
    %v8150 = vpop.f32.mrf.mxu0
    %v8151 = vadd.f32 %v8086, %v8150
    %8152 = vmatmul.f32.gmra.mxu0 %v6962
    %v8153 = vpop.f32.mrf.mxu0
    %v8154 = vadd.f32 %v8089, %v8153
    %8155 = vmatmul.f32.gmra.mxu0 %v6966
    %v8156 = vpop.f32.mrf.mxu0
    %v8157 = vadd.f32 %v8092, %v8156
    %8158 = vmatmul.f32.gmra.mxu0 %v6970
    %v8159 = vpop.f32.mrf.mxu0
    %v8160 = vadd.f32 %v8095, %v8159
    %8161 = vmatmul.f32.gmra.mxu0 %v6974
    %v8162 = vpop.f32.mrf.mxu0
    %v8163 = vadd.f32 %v8098, %v8162
    %8164 = vmatmul.f32.gmra.mxu0 %v6978
    %v8165 = vpop.f32.mrf.mxu0
    %v8166 = vadd.f32 %v8101, %v8165
    %8167 = vmatmul.f32.gmra.mxu0 %v6982
    %v8168 = vpop.f32.mrf.mxu0
    %v8169 = vadd.f32 %v8104, %v8168
    %8170 = vmatmul.f32.gmra.mxu0 %v6986
    %v8171 = vpop.f32.mrf.mxu0
    %v8172 = vadd.f32 %v8107, %v8171
    %8173 = vmatmul.f32.gmra.mxu0 %v6990
    %v8174 = vpop.f32.mrf.mxu0
    %v8175 = vadd.f32 %v8110, %v8174
    %8176 = vmatmul.f32.gmra.mxu0 %v6994
    %v8177 = vpop.f32.mrf.mxu0
    %v8178 = vadd.f32 %v8113, %v8177
    %8179 = vmatmul.f32.gmra.mxu0 %v6998
    %v8180 = vpop.f32.mrf.mxu0
    %v8181 = vadd.f32 %v8116, %v8180
    %8182 = vmatmul.f32.gmra.mxu0 %v7002
    %v8183 = vpop.f32.mrf.mxu0
    %v8184 = vadd.f32 %v8119, %v8183
    %8185 = vmatmul.f32.gmra.mxu0 %v7006
    %v8186 = vpop.f32.mrf.mxu0
    %v8187 = vadd.f32 %v8122, %v8186
    %8188 = vmatmul.f32.gmra.mxu0 %v7010
    %v8189 = vpop.f32.mrf.mxu0
    %v8190 = vadd.f32 %v8125, %v8189
    %8191 = vmatmul.f32.gmra.mxu0 %v7014
    %v8192 = vpop.f32.mrf.mxu0
    %v8193 = vadd.f32 %v8128, %v8192
    %8194 = vdwg.mxu0
    %8195 = vmatpush.msra.mxu0 %v7209
    %8196 = vmatpush.msra.mxu0 %v7205
    %8197 = vmatpush.msra.mxu0 %v7201
    %8198 = vmatpush.msra.mxu0 %v7197
    %8199 = vmatpush.msra.mxu0 %v7193
    %8200 = vmatpush.msra.mxu0 %v7189
    %8201 = vmatpush.msra.mxu0 %v7185
    %8202 = vmatpush.msra.mxu0 %v7181
    %8203 = vmatpush.msra.mxu0 %v7177
    %8204 = vmatpush.msra.mxu0 %v7173
    %8205 = vmatpush.msra.mxu0 %v7169
    %8206 = vmatpush.msra.mxu0 %v7165
    %8207 = vmatpush.msra.mxu0 %v7161
    %8208 = vmatpush.msra.mxu0 %v7157
    %8209 = vmatpush.msra.mxu0 %v7153
    %8210 = vmatpush.msra.mxu0 %v7149
    %8211 = vmatmul.f32.gmra.mxu0 %v6955
    %v8212 = vpop.f32.mrf.mxu0
    %v8213 = vadd.f32 %v8148, %v8212
    %8214 = vmatmul.f32.gmra.mxu0 %v6959
    %v8215 = vpop.f32.mrf.mxu0
    %v8216 = vadd.f32 %v8151, %v8215
    %8217 = vmatmul.f32.gmra.mxu0 %v6963
    %v8218 = vpop.f32.mrf.mxu0
    %v8219 = vadd.f32 %v8154, %v8218
    %8220 = vmatmul.f32.gmra.mxu0 %v6967
    %v8221 = vpop.f32.mrf.mxu0
    %v8222 = vadd.f32 %v8157, %v8221
    %8223 = vmatmul.f32.gmra.mxu0 %v6971
    %v8224 = vpop.f32.mrf.mxu0
    %v8225 = vadd.f32 %v8160, %v8224
    %8226 = vmatmul.f32.gmra.mxu0 %v6975
    %v8227 = vpop.f32.mrf.mxu0
    %v8228 = vadd.f32 %v8163, %v8227
    %8229 = vmatmul.f32.gmra.mxu0 %v6979
    %v8230 = vpop.f32.mrf.mxu0
    %v8231 = vadd.f32 %v8166, %v8230
    %8232 = vmatmul.f32.gmra.mxu0 %v6983
    %v8233 = vpop.f32.mrf.mxu0
    %v8234 = vadd.f32 %v8169, %v8233
    %8235 = vmatmul.f32.gmra.mxu0 %v6987
    %v8236 = vpop.f32.mrf.mxu0
    %v8237 = vadd.f32 %v8172, %v8236
    %8238 = vmatmul.f32.gmra.mxu0 %v6991
    %v8239 = vpop.f32.mrf.mxu0
    %v8240 = vadd.f32 %v8175, %v8239
    %8241 = vmatmul.f32.gmra.mxu0 %v6995
    %v8242 = vpop.f32.mrf.mxu0
    %v8243 = vadd.f32 %v8178, %v8242
    %8244 = vmatmul.f32.gmra.mxu0 %v6999
    %v8245 = vpop.f32.mrf.mxu0
    %v8246 = vadd.f32 %v8181, %v8245
    %8247 = vmatmul.f32.gmra.mxu0 %v7003
    %v8248 = vpop.f32.mrf.mxu0
    %v8249 = vadd.f32 %v8184, %v8248
    %8250 = vmatmul.f32.gmra.mxu0 %v7007
    %v8251 = vpop.f32.mrf.mxu0
    %v8252 = vadd.f32 %v8187, %v8251
    %8253 = vmatmul.f32.gmra.mxu0 %v7011
    %v8254 = vpop.f32.mrf.mxu0
    %v8255 = vadd.f32 %v8190, %v8254
    %8256 = vmatmul.f32.gmra.mxu0 %v7015
    %v8257 = vpop.f32.mrf.mxu0
    %v8258 = vadd.f32 %v8193, %v8257
    %8259 = vdwg.mxu0
    %8260 = vmatpush.msra.mxu0 %v7273
    %8261 = vmatpush.msra.mxu0 %v7269
    %8262 = vmatpush.msra.mxu0 %v7265
    %8263 = vmatpush.msra.mxu0 %v7261
    %8264 = vmatpush.msra.mxu0 %v7257
    %8265 = vmatpush.msra.mxu0 %v7253
    %8266 = vmatpush.msra.mxu0 %v7249
    %8267 = vmatpush.msra.mxu0 %v7245
    %8268 = vmatpush.msra.mxu0 %v7241
    %8269 = vmatpush.msra.mxu0 %v7237
    %8270 = vmatpush.msra.mxu0 %v7233
    %8271 = vmatpush.msra.mxu0 %v7229
    %8272 = vmatpush.msra.mxu0 %v7225
    %8273 = vmatpush.msra.mxu0 %v7221
    %8274 = vmatpush.msra.mxu0 %v7217
    %8275 = vmatpush.msra.mxu0 %v7213
    %8276 = vmatmul.f32.gmra.mxu0 %v6956
    %v8277 = vpop.f32.mrf.mxu0
    %v8278 = vadd.f32 %v8213, %v8277
    %8279 = vmatmul.f32.gmra.mxu0 %v6960
    %v8280 = vpop.f32.mrf.mxu0
    %v8281 = vadd.f32 %v8216, %v8280
    %8282 = vmatmul.f32.gmra.mxu0 %v6964
    %v8283 = vpop.f32.mrf.mxu0
    %v8284 = vadd.f32 %v8219, %v8283
    %8285 = vmatmul.f32.gmra.mxu0 %v6968
    %v8286 = vpop.f32.mrf.mxu0
    %v8287 = vadd.f32 %v8222, %v8286
    %8288 = vmatmul.f32.gmra.mxu0 %v6972
    %v8289 = vpop.f32.mrf.mxu0
    %v8290 = vadd.f32 %v8225, %v8289
    %8291 = vmatmul.f32.gmra.mxu0 %v6976
    %v8292 = vpop.f32.mrf.mxu0
    %v8293 = vadd.f32 %v8228, %v8292
    %8294 = vmatmul.f32.gmra.mxu0 %v6980
    %v8295 = vpop.f32.mrf.mxu0
    %v8296 = vadd.f32 %v8231, %v8295
    %8297 = vmatmul.f32.gmra.mxu0 %v6984
    %v8298 = vpop.f32.mrf.mxu0
    %v8299 = vadd.f32 %v8234, %v8298
    %8300 = vmatmul.f32.gmra.mxu0 %v6988
    %v8301 = vpop.f32.mrf.mxu0
    %v8302 = vadd.f32 %v8237, %v8301
    %8303 = vmatmul.f32.gmra.mxu0 %v6992
    %v8304 = vpop.f32.mrf.mxu0
    %v8305 = vadd.f32 %v8240, %v8304
    %8306 = vmatmul.f32.gmra.mxu0 %v6996
    %v8307 = vpop.f32.mrf.mxu0
    %v8308 = vadd.f32 %v8243, %v8307
    %8309 = vmatmul.f32.gmra.mxu0 %v7000
    %v8310 = vpop.f32.mrf.mxu0
    %v8311 = vadd.f32 %v8246, %v8310
    %8312 = vmatmul.f32.gmra.mxu0 %v7004
    %v8313 = vpop.f32.mrf.mxu0
    %v8314 = vadd.f32 %v8249, %v8313
    %8315 = vmatmul.f32.gmra.mxu0 %v7008
    %v8316 = vpop.f32.mrf.mxu0
    %v8317 = vadd.f32 %v8252, %v8316
    %8318 = vmatmul.f32.gmra.mxu0 %v7012
    %v8319 = vpop.f32.mrf.mxu0
    %v8320 = vadd.f32 %v8255, %v8319
    %8321 = vmatmul.f32.gmra.mxu0 %v7016
    %v8322 = vpop.f32.mrf.mxu0
    %v8323 = vadd.f32 %v8258, %v8322
    %8324 = vdwg.mxu0
    %v8325 = vmax.f32 %v7498, 0.0
    %v8326 = vmax.f32 %v7758, 0.0
    %v8327 = vmax.f32 %v8018, 0.0
    %v8328 = vmax.f32 %v8278, 0.0
    %v8329 = vmax.f32 %v7501, 0.0
    %v8330 = vmax.f32 %v7761, 0.0
    %v8331 = vmax.f32 %v8021, 0.0
    %v8332 = vmax.f32 %v8281, 0.0
    %v8333 = vmax.f32 %v7504, 0.0
    %v8334 = vmax.f32 %v7764, 0.0
    %v8335 = vmax.f32 %v8024, 0.0
    %v8336 = vmax.f32 %v8284, 0.0
    %v8337 = vmax.f32 %v7507, 0.0
    %v8338 = vmax.f32 %v7767, 0.0
    %v8339 = vmax.f32 %v8027, 0.0
    %v8340 = vmax.f32 %v8287, 0.0
    %v8341 = vmax.f32 %v7510, 0.0
    %v8342 = vmax.f32 %v7770, 0.0
    %v8343 = vmax.f32 %v8030, 0.0
    %v8344 = vmax.f32 %v8290, 0.0
    %v8345 = vmax.f32 %v7513, 0.0
    %v8346 = vmax.f32 %v7773, 0.0
    %v8347 = vmax.f32 %v8033, 0.0
    %v8348 = vmax.f32 %v8293, 0.0
    %v8349 = vmax.f32 %v7516, 0.0
    %v8350 = vmax.f32 %v7776, 0.0
    %v8351 = vmax.f32 %v8036, 0.0
    %v8352 = vmax.f32 %v8296, 0.0
    %v8353 = vmax.f32 %v7519, 0.0
    %v8354 = vmax.f32 %v7779, 0.0
    %v8355 = vmax.f32 %v8039, 0.0
    %v8356 = vmax.f32 %v8299, 0.0
    %v8357 = vmax.f32 %v7522, 0.0
    %v8358 = vmax.f32 %v7782, 0.0
    %v8359 = vmax.f32 %v8042, 0.0
    %v8360 = vmax.f32 %v8302, 0.0
    %v8361 = vmax.f32 %v7525, 0.0
    %v8362 = vmax.f32 %v7785, 0.0
    %v8363 = vmax.f32 %v8045, 0.0
    %v8364 = vmax.f32 %v8305, 0.0
    %v8365 = vmax.f32 %v7528, 0.0
    %v8366 = vmax.f32 %v7788, 0.0
    %v8367 = vmax.f32 %v8048, 0.0
    %v8368 = vmax.f32 %v8308, 0.0
    %v8369 = vmax.f32 %v7531, 0.0
    %v8370 = vmax.f32 %v7791, 0.0
    %v8371 = vmax.f32 %v8051, 0.0
    %v8372 = vmax.f32 %v8311, 0.0
    %v8373 = vmax.f32 %v7534, 0.0
    %v8374 = vmax.f32 %v7794, 0.0
    %v8375 = vmax.f32 %v8054, 0.0
    %v8376 = vmax.f32 %v8314, 0.0
    %v8377 = vmax.f32 %v7537, 0.0
    %v8378 = vmax.f32 %v7797, 0.0
    %v8379 = vmax.f32 %v8057, 0.0
    %v8380 = vmax.f32 %v8317, 0.0
    %v8381 = vmax.f32 %v7540, 0.0
    %v8382 = vmax.f32 %v7800, 0.0
    %v8383 = vmax.f32 %v8060, 0.0
    %v8384 = vmax.f32 %v8320, 0.0
    %v8385 = vmax.f32 %v7543, 0.0
    %v8386 = vmax.f32 %v7803, 0.0
    %v8387 = vmax.f32 %v8063, 0.0
    %v8388 = vmax.f32 %v8323, 0.0
    %v8389 = vld [vmem:[#allocation8] sm:$0xff]
    %v8390 = vld [vmem:[#allocation8 + $0x8] sm:$0xff]
    %v8391 = vld [vmem:[#allocation8 + $0x10] sm:$0xff]
    %v8392 = vld [vmem:[#allocation8 + $0x18] sm:$0xff]
    %v8393 = vld [vmem:[#allocation8 + $0x20] sm:$0xff]
    %v8394 = vld [vmem:[#allocation8 + $0x28] sm:$0xff]
    %v8395 = vld [vmem:[#allocation8 + $0x30] sm:$0xff]
    %v8396 = vld [vmem:[#allocation8 + $0x38] sm:$0xff]
    %v8397 = vld [vmem:[#allocation8 + $0x40] sm:$0xff]
    %v8398 = vld [vmem:[#allocation8 + $0x48] sm:$0xff]
    %v8399 = vld [vmem:[#allocation8 + $0x50] sm:$0xff]
    %v8400 = vld [vmem:[#allocation8 + $0x58] sm:$0xff]
    %v8401 = vld [vmem:[#allocation8 + $0x60] sm:$0xff]
    %v8402 = vld [vmem:[#allocation8 + $0x68] sm:$0xff]
    %v8403 = vld [vmem:[#allocation8 + $0x70] sm:$0xff]
    %v8404 = vld [vmem:[#allocation8 + $0x78] sm:$0xff]
    %v8405 = vld [vmem:[#allocation8 + $0x80] sm:$0xff]
    %v8406 = vld [vmem:[#allocation8 + $0x88] sm:$0xff]
    %v8407 = vld [vmem:[#allocation8 + $0x90] sm:$0xff]
    %v8408 = vld [vmem:[#allocation8 + $0x98] sm:$0xff]
    %v8409 = vld [vmem:[#allocation8 + $0xa0] sm:$0xff]
    %v8410 = vld [vmem:[#allocation8 + $0xa8] sm:$0xff]
    %v8411 = vld [vmem:[#allocation8 + $0xb0] sm:$0xff]
    %v8412 = vld [vmem:[#allocation8 + $0xb8] sm:$0xff]
    %v8413 = vld [vmem:[#allocation8 + $0xc0] sm:$0xff]
    %v8414 = vld [vmem:[#allocation8 + $0xc8] sm:$0xff]
    %v8415 = vld [vmem:[#allocation8 + $0xd0] sm:$0xff]
    %v8416 = vld [vmem:[#allocation8 + $0xd8] sm:$0xff]
    %v8417 = vld [vmem:[#allocation8 + $0xe0] sm:$0xff]
    %v8418 = vld [vmem:[#allocation8 + $0xe8] sm:$0xff]
    %v8419 = vld [vmem:[#allocation8 + $0xf0] sm:$0xff]
    %v8420 = vld [vmem:[#allocation8 + $0xf8] sm:$0xff]
    %v8421 = vld [vmem:[#allocation8 + $0x100] sm:$0xff]
    %v8422 = vld [vmem:[#allocation8 + $0x108] sm:$0xff]
    %v8423 = vld [vmem:[#allocation8 + $0x110] sm:$0xff]
    %v8424 = vld [vmem:[#allocation8 + $0x118] sm:$0xff]
    %v8425 = vld [vmem:[#allocation8 + $0x120] sm:$0xff]
    %v8426 = vld [vmem:[#allocation8 + $0x128] sm:$0xff]
    %v8427 = vld [vmem:[#allocation8 + $0x130] sm:$0xff]
    %v8428 = vld [vmem:[#allocation8 + $0x138] sm:$0xff]
    %v8429 = vld [vmem:[#allocation8 + $0x140] sm:$0xff]
    %v8430 = vld [vmem:[#allocation8 + $0x148] sm:$0xff]
    %v8431 = vld [vmem:[#allocation8 + $0x150] sm:$0xff]
    %v8432 = vld [vmem:[#allocation8 + $0x158] sm:$0xff]
    %v8433 = vld [vmem:[#allocation8 + $0x160] sm:$0xff]
    %v8434 = vld [vmem:[#allocation8 + $0x168] sm:$0xff]
    %v8435 = vld [vmem:[#allocation8 + $0x170] sm:$0xff]
    %v8436 = vld [vmem:[#allocation8 + $0x178] sm:$0xff]
    %v8437 = vld [vmem:[#allocation8 + $0x180] sm:$0xff]
    %v8438 = vld [vmem:[#allocation8 + $0x188] sm:$0xff]
    %v8439 = vld [vmem:[#allocation8 + $0x190] sm:$0xff]
    %v8440 = vld [vmem:[#allocation8 + $0x198] sm:$0xff]
    %v8441 = vld [vmem:[#allocation8 + $0x1a0] sm:$0xff]
    %v8442 = vld [vmem:[#allocation8 + $0x1a8] sm:$0xff]
    %v8443 = vld [vmem:[#allocation8 + $0x1b0] sm:$0xff]
    %v8444 = vld [vmem:[#allocation8 + $0x1b8] sm:$0xff]
    %v8445 = vld [vmem:[#allocation8 + $0x1c0] sm:$0xff]
    %v8446 = vld [vmem:[#allocation8 + $0x1c8] sm:$0xff]
    %v8447 = vld [vmem:[#allocation8 + $0x1d0] sm:$0xff]
    %v8448 = vld [vmem:[#allocation8 + $0x1d8] sm:$0xff]
    %v8449 = vld [vmem:[#allocation8 + $0x1e0] sm:$0xff]
    %v8450 = vld [vmem:[#allocation8 + $0x1e8] sm:$0xff]
    %v8451 = vld [vmem:[#allocation8 + $0x1f0] sm:$0xff]
    %v8452 = vld [vmem:[#allocation8 + $0x1f8] sm:$0xff]
    %v8453 = vld [vmem:[#allocation10] sm:$0x1]
    %v8455 = vperm.slane %v8453, 0
    %8457 = vmatpush.msra.mxu0 %v8404
    %8458 = vmatpush.msra.mxu0 %v8403
    %8459 = vmatpush.msra.mxu0 %v8402
    %8460 = vmatpush.msra.mxu0 %v8401
    %8461 = vmatpush.msra.mxu0 %v8400
    %8462 = vmatpush.msra.mxu0 %v8399
    %8463 = vmatpush.msra.mxu0 %v8398
    %8464 = vmatpush.msra.mxu0 %v8397
    %8465 = vmatpush.msra.mxu0 %v8396
    %8466 = vmatpush.msra.mxu0 %v8395
    %8467 = vmatpush.msra.mxu0 %v8394
    %8468 = vmatpush.msra.mxu0 %v8393
    %8469 = vmatpush.msra.mxu0 %v8392
    %8470 = vmatpush.msra.mxu0 %v8391
    %8471 = vmatpush.msra.mxu0 %v8390
    %8472 = vmatpush.msra.mxu0 %v8389
    %8473 = vmatmul.f32.gmra.mxu0 %v8325
    %v8474 = vpop.f32.mrf.mxu0
    %v8475 = vadd.f32 %v8455, %v8474
    %8476 = vmatmul.f32.gmra.mxu0 %v8329
    %v8477 = vpop.f32.mrf.mxu0
    %v8478 = vadd.f32 %v8455, %v8477
    %8479 = vmatmul.f32.gmra.mxu0 %v8333
    %v8480 = vpop.f32.mrf.mxu0
    %v8481 = vadd.f32 %v8455, %v8480
    %8482 = vmatmul.f32.gmra.mxu0 %v8337
    %v8483 = vpop.f32.mrf.mxu0
    %v8484 = vadd.f32 %v8455, %v8483
    %8485 = vmatmul.f32.gmra.mxu0 %v8341
    %v8486 = vpop.f32.mrf.mxu0
    %v8487 = vadd.f32 %v8455, %v8486
    %8488 = vmatmul.f32.gmra.mxu0 %v8345
    %v8489 = vpop.f32.mrf.mxu0
    %v8490 = vadd.f32 %v8455, %v8489
    %8491 = vmatmul.f32.gmra.mxu0 %v8349
    %v8492 = vpop.f32.mrf.mxu0
    %v8493 = vadd.f32 %v8455, %v8492
    %8494 = vmatmul.f32.gmra.mxu0 %v8353
    %v8495 = vpop.f32.mrf.mxu0
    %v8496 = vadd.f32 %v8455, %v8495
    %8497 = vmatmul.f32.gmra.mxu0 %v8357
    %v8498 = vpop.f32.mrf.mxu0
    %v8499 = vadd.f32 %v8455, %v8498
    %8500 = vmatmul.f32.gmra.mxu0 %v8361
    %v8501 = vpop.f32.mrf.mxu0
    %v8502 = vadd.f32 %v8455, %v8501
    %8503 = vmatmul.f32.gmra.mxu0 %v8365
    %v8504 = vpop.f32.mrf.mxu0
    %v8505 = vadd.f32 %v8455, %v8504
    %8506 = vmatmul.f32.gmra.mxu0 %v8369
    %v8507 = vpop.f32.mrf.mxu0
    %v8508 = vadd.f32 %v8455, %v8507
    %8509 = vmatmul.f32.gmra.mxu0 %v8373
    %v8510 = vpop.f32.mrf.mxu0
    %v8511 = vadd.f32 %v8455, %v8510
    %8512 = vmatmul.f32.gmra.mxu0 %v8377
    %v8513 = vpop.f32.mrf.mxu0
    %v8514 = vadd.f32 %v8455, %v8513
    %8515 = vmatmul.f32.gmra.mxu0 %v8381
    %v8516 = vpop.f32.mrf.mxu0
    %v8517 = vadd.f32 %v8455, %v8516
    %8518 = vmatmul.f32.gmra.mxu0 %v8385
    %v8519 = vpop.f32.mrf.mxu0
    %v8520 = vadd.f32 %v8455, %v8519
    %8521 = vdwg.mxu0
    %8522 = vmatpush.msra.mxu0 %v8420
    %8523 = vmatpush.msra.mxu0 %v8419
    %8524 = vmatpush.msra.mxu0 %v8418
    %8525 = vmatpush.msra.mxu0 %v8417
    %8526 = vmatpush.msra.mxu0 %v8416
    %8527 = vmatpush.msra.mxu0 %v8415
    %8528 = vmatpush.msra.mxu0 %v8414
    %8529 = vmatpush.msra.mxu0 %v8413
    %8530 = vmatpush.msra.mxu0 %v8412
    %8531 = vmatpush.msra.mxu0 %v8411
    %8532 = vmatpush.msra.mxu0 %v8410
    %8533 = vmatpush.msra.mxu0 %v8409
    %8534 = vmatpush.msra.mxu0 %v8408
    %8535 = vmatpush.msra.mxu0 %v8407
    %8536 = vmatpush.msra.mxu0 %v8406
    %8537 = vmatpush.msra.mxu0 %v8405
    %8538 = vmatmul.f32.gmra.mxu0 %v8326
    %v8539 = vpop.f32.mrf.mxu0
    %v8540 = vadd.f32 %v8475, %v8539
    %8541 = vmatmul.f32.gmra.mxu0 %v8330
    %v8542 = vpop.f32.mrf.mxu0
    %v8543 = vadd.f32 %v8478, %v8542
    %8544 = vmatmul.f32.gmra.mxu0 %v8334
    %v8545 = vpop.f32.mrf.mxu0
    %v8546 = vadd.f32 %v8481, %v8545
    %8547 = vmatmul.f32.gmra.mxu0 %v8338
    %v8548 = vpop.f32.mrf.mxu0
    %v8549 = vadd.f32 %v8484, %v8548
    %8550 = vmatmul.f32.gmra.mxu0 %v8342
    %v8551 = vpop.f32.mrf.mxu0
    %v8552 = vadd.f32 %v8487, %v8551
    %8553 = vmatmul.f32.gmra.mxu0 %v8346
    %v8554 = vpop.f32.mrf.mxu0
    %v8555 = vadd.f32 %v8490, %v8554
    %8556 = vmatmul.f32.gmra.mxu0 %v8350
    %v8557 = vpop.f32.mrf.mxu0
    %v8558 = vadd.f32 %v8493, %v8557
    %8559 = vmatmul.f32.gmra.mxu0 %v8354
    %v8560 = vpop.f32.mrf.mxu0
    %v8561 = vadd.f32 %v8496, %v8560
    %8562 = vmatmul.f32.gmra.mxu0 %v8358
    %v8563 = vpop.f32.mrf.mxu0
    %v8564 = vadd.f32 %v8499, %v8563
    %8565 = vmatmul.f32.gmra.mxu0 %v8362
    %v8566 = vpop.f32.mrf.mxu0
    %v8567 = vadd.f32 %v8502, %v8566
    %8568 = vmatmul.f32.gmra.mxu0 %v8366
    %v8569 = vpop.f32.mrf.mxu0
    %v8570 = vadd.f32 %v8505, %v8569
    %8571 = vmatmul.f32.gmra.mxu0 %v8370
    %v8572 = vpop.f32.mrf.mxu0
    %v8573 = vadd.f32 %v8508, %v8572
    %8574 = vmatmul.f32.gmra.mxu0 %v8374
    %v8575 = vpop.f32.mrf.mxu0
    %v8576 = vadd.f32 %v8511, %v8575
    %8577 = vmatmul.f32.gmra.mxu0 %v8378
    %v8578 = vpop.f32.mrf.mxu0
    %v8579 = vadd.f32 %v8514, %v8578
    %8580 = vmatmul.f32.gmra.mxu0 %v8382
    %v8581 = vpop.f32.mrf.mxu0
    %v8582 = vadd.f32 %v8517, %v8581
    %8583 = vmatmul.f32.gmra.mxu0 %v8386
    %v8584 = vpop.f32.mrf.mxu0
    %v8585 = vadd.f32 %v8520, %v8584
    %8586 = vdwg.mxu0
    %8587 = vmatpush.msra.mxu0 %v8436
    %8588 = vmatpush.msra.mxu0 %v8435
    %8589 = vmatpush.msra.mxu0 %v8434
    %8590 = vmatpush.msra.mxu0 %v8433
    %8591 = vmatpush.msra.mxu0 %v8432
    %8592 = vmatpush.msra.mxu0 %v8431
    %8593 = vmatpush.msra.mxu0 %v8430
    %8594 = vmatpush.msra.mxu0 %v8429
    %8595 = vmatpush.msra.mxu0 %v8428
    %8596 = vmatpush.msra.mxu0 %v8427
    %8597 = vmatpush.msra.mxu0 %v8426
    %8598 = vmatpush.msra.mxu0 %v8425
    %8599 = vmatpush.msra.mxu0 %v8424
    %8600 = vmatpush.msra.mxu0 %v8423
    %8601 = vmatpush.msra.mxu0 %v8422
    %8602 = vmatpush.msra.mxu0 %v8421
    %8603 = vmatmul.f32.gmra.mxu0 %v8327
    %v8604 = vpop.f32.mrf.mxu0
    %v8605 = vadd.f32 %v8540, %v8604
    %8606 = vmatmul.f32.gmra.mxu0 %v8331
    %v8607 = vpop.f32.mrf.mxu0
    %v8608 = vadd.f32 %v8543, %v8607
    %8609 = vmatmul.f32.gmra.mxu0 %v8335
    %v8610 = vpop.f32.mrf.mxu0
    %v8611 = vadd.f32 %v8546, %v8610
    %8612 = vmatmul.f32.gmra.mxu0 %v8339
    %v8613 = vpop.f32.mrf.mxu0
    %v8614 = vadd.f32 %v8549, %v8613
    %8615 = vmatmul.f32.gmra.mxu0 %v8343
    %v8616 = vpop.f32.mrf.mxu0
    %v8617 = vadd.f32 %v8552, %v8616
    %8618 = vmatmul.f32.gmra.mxu0 %v8347
    %v8619 = vpop.f32.mrf.mxu0
    %v8620 = vadd.f32 %v8555, %v8619
    %8621 = vmatmul.f32.gmra.mxu0 %v8351
    %v8622 = vpop.f32.mrf.mxu0
    %v8623 = vadd.f32 %v8558, %v8622
    %8624 = vmatmul.f32.gmra.mxu0 %v8355
    %v8625 = vpop.f32.mrf.mxu0
    %v8626 = vadd.f32 %v8561, %v8625
    %8627 = vmatmul.f32.gmra.mxu0 %v8359
    %v8628 = vpop.f32.mrf.mxu0
    %v8629 = vadd.f32 %v8564, %v8628
    %8630 = vmatmul.f32.gmra.mxu0 %v8363
    %v8631 = vpop.f32.mrf.mxu0
    %v8632 = vadd.f32 %v8567, %v8631
    %8633 = vmatmul.f32.gmra.mxu0 %v8367
    %v8634 = vpop.f32.mrf.mxu0
    %v8635 = vadd.f32 %v8570, %v8634
    %8636 = vmatmul.f32.gmra.mxu0 %v8371
    %v8637 = vpop.f32.mrf.mxu0
    %v8638 = vadd.f32 %v8573, %v8637
    %8639 = vmatmul.f32.gmra.mxu0 %v8375
    %v8640 = vpop.f32.mrf.mxu0
    %v8641 = vadd.f32 %v8576, %v8640
    %8642 = vmatmul.f32.gmra.mxu0 %v8379
    %v8643 = vpop.f32.mrf.mxu0
    %v8644 = vadd.f32 %v8579, %v8643
    %8645 = vmatmul.f32.gmra.mxu0 %v8383
    %v8646 = vpop.f32.mrf.mxu0
    %v8647 = vadd.f32 %v8582, %v8646
    %8648 = vmatmul.f32.gmra.mxu0 %v8387
    %v8649 = vpop.f32.mrf.mxu0
    %v8650 = vadd.f32 %v8585, %v8649
    %8651 = vdwg.mxu0
    %8652 = vmatpush.msra.mxu0 %v8452
    %8653 = vmatpush.msra.mxu0 %v8451
    %8654 = vmatpush.msra.mxu0 %v8450
    %8655 = vmatpush.msra.mxu0 %v8449
    %8656 = vmatpush.msra.mxu0 %v8448
    %8657 = vmatpush.msra.mxu0 %v8447
    %8658 = vmatpush.msra.mxu0 %v8446
    %8659 = vmatpush.msra.mxu0 %v8445
    %8660 = vmatpush.msra.mxu0 %v8444
    %8661 = vmatpush.msra.mxu0 %v8443
    %8662 = vmatpush.msra.mxu0 %v8442
    %8663 = vmatpush.msra.mxu0 %v8441
    %8664 = vmatpush.msra.mxu0 %v8440
    %8665 = vmatpush.msra.mxu0 %v8439
    %8666 = vmatpush.msra.mxu0 %v8438
    %8667 = vmatpush.msra.mxu0 %v8437
    %8668 = vmatmul.f32.gmra.mxu0 %v8328
    %v8669 = vpop.f32.mrf.mxu0
    %v8670 = vadd.f32 %v8605, %v8669
    %8671 = vmatmul.f32.gmra.mxu0 %v8332
    %v8672 = vpop.f32.mrf.mxu0
    %v8673 = vadd.f32 %v8608, %v8672
    %8674 = vmatmul.f32.gmra.mxu0 %v8336
    %v8675 = vpop.f32.mrf.mxu0
    %v8676 = vadd.f32 %v8611, %v8675
    %8677 = vmatmul.f32.gmra.mxu0 %v8340
    %v8678 = vpop.f32.mrf.mxu0
    %v8679 = vadd.f32 %v8614, %v8678
    %8680 = vmatmul.f32.gmra.mxu0 %v8344
    %v8681 = vpop.f32.mrf.mxu0
    %v8682 = vadd.f32 %v8617, %v8681
    %8683 = vmatmul.f32.gmra.mxu0 %v8348
    %v8684 = vpop.f32.mrf.mxu0
    %v8685 = vadd.f32 %v8620, %v8684
    %8686 = vmatmul.f32.gmra.mxu0 %v8352
    %v8687 = vpop.f32.mrf.mxu0
    %v8688 = vadd.f32 %v8623, %v8687
    %8689 = vmatmul.f32.gmra.mxu0 %v8356
    %v8690 = vpop.f32.mrf.mxu0
    %v8691 = vadd.f32 %v8626, %v8690
    %8692 = vmatmul.f32.gmra.mxu0 %v8360
    %v8693 = vpop.f32.mrf.mxu0
    %v8694 = vadd.f32 %v8629, %v8693
    %8695 = vmatmul.f32.gmra.mxu0 %v8364
    %v8696 = vpop.f32.mrf.mxu0
    %v8697 = vadd.f32 %v8632, %v8696
    %8698 = vmatmul.f32.gmra.mxu0 %v8368
    %v8699 = vpop.f32.mrf.mxu0
    %v8700 = vadd.f32 %v8635, %v8699
    %8701 = vmatmul.f32.gmra.mxu0 %v8372
    %v8702 = vpop.f32.mrf.mxu0
    %v8703 = vadd.f32 %v8638, %v8702
    %8704 = vmatmul.f32.gmra.mxu0 %v8376
    %v8705 = vpop.f32.mrf.mxu0
    %v8706 = vadd.f32 %v8641, %v8705
    %8707 = vmatmul.f32.gmra.mxu0 %v8380
    %v8708 = vpop.f32.mrf.mxu0
    %v8709 = vadd.f32 %v8644, %v8708
    %8710 = vmatmul.f32.gmra.mxu0 %v8384
    %v8711 = vpop.f32.mrf.mxu0
    %v8712 = vadd.f32 %v8647, %v8711
    %8713 = vmatmul.f32.gmra.mxu0 %v8388
    %v8714 = vpop.f32.mrf.mxu0
    %v8715 = vadd.f32 %v8650, %v8714
    %8716 = vdwg.mxu0
    %8717 = vst [vmem:[#allocation11] sm:$0xff] %v8670
    %8718 = vst [vmem:[#allocation11 + $0x8] sm:$0xff] %v8673
    %8719 = vst [vmem:[#allocation11 + $0x10] sm:$0xff] %v8676
    %8720 = vst [vmem:[#allocation11 + $0x18] sm:$0xff] %v8679
    %8721 = vst [vmem:[#allocation11 + $0x20] sm:$0xff] %v8682
    %8722 = vst [vmem:[#allocation11 + $0x28] sm:$0xff] %v8685
    %8723 = vst [vmem:[#allocation11 + $0x30] sm:$0xff] %v8688
    %8724 = vst [vmem:[#allocation11 + $0x38] sm:$0xff] %v8691
    %8725 = vst [vmem:[#allocation11 + $0x40] sm:$0xff] %v8694
    %8726 = vst [vmem:[#allocation11 + $0x48] sm:$0xff] %v8697
    %8727 = vst [vmem:[#allocation11 + $0x50] sm:$0xff] %v8700
    %8728 = vst [vmem:[#allocation11 + $0x58] sm:$0xff] %v8703
    %8729 = vst [vmem:[#allocation11 + $0x60] sm:$0xff] %v8706
    %8730 = vst [vmem:[#allocation11 + $0x68] sm:$0xff] %v8709
    %8731 = vst [vmem:[#allocation11 + $0x70] sm:$0xff] %v8712
    %8732 = vst [vmem:[#allocation11 + $0x78] sm:$0xff] %v8715
    // Predicated region
    $region42: #{tpu_custom_call.1} parent=1 // pred_check
      _
    $region43: #{tpu_custom_call.1} parent=1 // pred_check_branch
      %8734 = sbr.rel (0) target = $region45
    $region44: #{tpu_custom_call.1} parent=1 // pred_region
      %8736 = vsyncadd [#allocation4], 0
      %s8737 = sshll.u32 [#allocation11], 4
      %s8738 = int_to_ptr.vmem [resolvable:$true] %s8737
      %s8739 = sshll.u32 %s5, 4
      %s8740 = int_to_ptr.hbm [resolvable:$true] %s8739
      %8745 = dma.vmem_to_hbm [thread:$0]  %s8738, 2048, %s8740, [#allocation4], 128, 128, 8
    $region45: #{tpu_custom_call.1} parent=1 // pred_fallthru
      _
    // Predicated region
    $region46: #{tpu_custom_call.1} parent=1 // pred_check
      _
    $region47: #{tpu_custom_call.1} parent=1 // pred_check_branch
      %8747 = sbr.rel (0) target = $region49
    $region48: #{tpu_custom_call.1} parent=1 // pred_region
      %8749 = dma.done [#allocation4], 2048
    $region49: #{tpu_custom_call.1} parent=1 // pred_fallthru
      _
    %8750 = vsyncpa [#allocation3], 1
    %8751 = vsyncpa [#allocation6], 1
    %8752 = vsyncpa [#allocation9], 1
    %8753 = vsyncpa [#allocation4], 1

</llo_original>
